<compile_context>
chip_gen: v7x
topology: tpu7x:2x2x1
jax: 0.10.0
libtpu: 0.0.40
codegen_flags: <defaults>
</compile_context>

<pallas_src>
import functools
import math

import jax
import jax.numpy as jnp
from jax.experimental import pallas as pl
from jax.experimental.pallas import tpu as pltpu

# Sentinel used by the hmpai codebase for padded timesteps.
MASKING_VALUE = 999.0

HIDDEN = 256       # nn.LSTM(hidden_size=256)
LIN_HIDDEN = 128   # nn.LazyLinear(128)
LANE = 128
SUBLANE = 8

VMEM_SPEC = pl.BlockSpec(memory_space=pltpu.MemorySpace.VMEM)


def _sigmoid(z):
    # tanh-form sigmoid: single EUP op, saturating (safe for sentinel-padded rows).
    return 0.5 * jnp.tanh(0.5 * z) + 0.5


# ----------------------------- Pallas kernel ------------------------------- #

def _lstm_head_kernel(x_ref, lens_ref, wih_ref, whh_ref, bg_ref,
                      wf_ref, bf_ref, out_ref, xg_ref, *, seq_len, bp):
    """Fused length-masked LSTM + ReLU + fused head linear.

    x_ref:   [T*Bp, 128]  bf16  time-major, batch- and channel-padded input
    lens_ref:[Bp, 1]      int32 valid lengths (0 for batch-pad rows)
    wih_ref: [128, 4H]    bf16  input->gates (rows >= n_channels are zero)
    whh_ref: [256, 4H]    bf16  hidden->gates
    bg_ref:  [1, 4H]      f32   b_ih + b_hh
    wf_ref:  [256, 128]   bf16  fused head weight  (wl @ wo_pad)
    bf_ref:  [1, 128]     f32   fused head bias    (bl @ wo_pad + bo_pad)
    out_ref: [Bp, 128]    f32   lane-padded logits
    xg_ref:  [T*Bp, 4H]   f32   scratch: precomputed input projection
    """
    lens = lens_ref[...]                                       # [Bp, 1] int32

    # ---- Hoisted input projection: one big MXU matmul for all T steps ------
    xg_ref[...] = (
        jnp.dot(x_ref[...], wih_ref[...], preferred_element_type=jnp.float32)
        + bg_ref[...]
    )

    h = jnp.zeros((bp, HIDDEN), jnp.float32)
    c = jnp.zeros((bp, HIDDEN), jnp.float32)

    # ---- Fully unrolled recurrence (seq_len is a static Python int) --------
    # NOTE: a dynamic max(lens) trip count would skip fully-padded tail steps,
    # but at T=16 full unrolling of the static bound is the bigger win.
    for t in range(seq_len):
        gates = xg_ref[t * bp:(t + 1) * bp, :] + jnp.dot(
            # bf16 recurrence matmul with f32 accumulation; drifts slightly
            # from torch's f32 LSTM over very long sequences — tolerance-checked.
            h.astype(jnp.bfloat16), whh_ref[...],
            preferred_element_type=jnp.float32)                # [Bp, 4H] f32
        # torch gate order: input, forget, cell(g), output
        i = _sigmoid(gates[:, 0 * HIDDEN:1 * HIDDEN])
        f = _sigmoid(gates[:, 1 * HIDDEN:2 * HIDDEN])
        g = jnp.tanh(gates[:, 2 * HIDDEN:3 * HIDDEN])
        o = _sigmoid(gates[:, 3 * HIDDEN:4 * HIDDEN])
        c_new = f * c + i * g
        h_new = o * jnp.tanh(c_new)
        valid = t < lens                                       # [Bp, 1] bool
        h = jnp.where(valid, h_new, h)
        c = jnp.where(valid, c_new, c)

    # x = relu(h) ; logits = h_relu @ (wl @ wo) + (bl @ wo + bo)   (fused head)
    hr = jnp.maximum(h, 0.0)
    out_ref[...] = (
        jnp.dot(hr.astype(jnp.bfloat16), wf_ref[...],
                preferred_element_type=jnp.float32)
        + bf_ref[...]
    )


# ------------------------------- wrapper ----------------------------------- #

def _squeeze_keep_batch(x):
    """torch.squeeze analogue that never drops the batch axis (B==1 safe)."""
    new_shape = tuple(d for i, d in enumerate(x.shape) if i == 0 or d != 1)
    return x.reshape(new_shape)


def sat1_lstm_forward(params, x, *, n_classes):
    """x: [B, T, C] float32 (possibly with extra size-1 dims, as in the torch module)."""
    x = _squeeze_keep_batch(x).astype(jnp.float32)             # [B, T, C]
    B, T, C = x.shape
    assert C <= LANE

    # Valid lengths from channel 0: index of the first sentinel timestep, else T
    # (matches torch.max((x==MASKING_VALUE).int(), dim=1) + masked_fill + [:,0]).
    is_pad = x[:, :, 0] == MASKING_VALUE                       # [B, T]
    lens = jnp.where(jnp.any(is_pad, axis=1),
                     jnp.argmax(is_pad, axis=1), T).astype(jnp.int32)

    # Pad batch to the sublane quantum so all VMEM tiles are full-sublane.
    Bp = max(SUBLANE, ((B + SUBLANE - 1) // SUBLANE) * SUBLANE)
    lens_p = jnp.zeros((Bp, 1), jnp.int32).at[:B, 0].set(lens)

    # Time-major, batch+channel padded, flattened to [T*Bp, 128] bf16 (lane-dense).
    x_tm = jnp.transpose(x, (1, 0, 2))                         # [T, B, C]
    x_tm = jnp.pad(x_tm, ((0, 0), (0, Bp - B), (0, LANE - C)))
    x_k = x_tm.reshape(T * Bp, LANE).astype(jnp.bfloat16)

    n_pad = params["wf"].shape[1]                              # 128 (lane-padded logits)

    flops = (2 * T * Bp * LANE * 4 * HIDDEN            # hoisted x @ W_ih
             + T * 2 * Bp * HIDDEN * 4 * HIDDEN        # per-step h @ W_hh
             + 2 * Bp * HIDDEN * n_pad)                # fused head
    transcendentals = T * Bp * 5 * HIDDEN              # 3 sigmoid-tanh + 2 tanh per step
    bytes_accessed = (x_k.size * 2 + lens_p.size * 4
                      + sum(int(params[k].size) * (2 if params[k].dtype == jnp.bfloat16 else 4)
                            for k in ("wih", "whh", "bg", "wf", "bf"))
                      + Bp * n_pad * 4)

    # NOTE: fully VMEM-resident (~1.5 MiB here). For large T*B switch to a
    # time-chunked grid (x BlockSpec over T, h/c carried in scratch) and, on
    # v7x, a batch-parallel grid axis to use both TensorCores.
    out = pl.pallas_call(
        functools.partial(_lstm_head_kernel, seq_len=T, bp=Bp),
        out_shape=jax.ShapeDtypeStruct((Bp, n_pad), jnp.float32),
        in_specs=[VMEM_SPEC] * 7,
        out_specs=VMEM_SPEC,
        scratch_shapes=[pltpu.VMEM((T * Bp, 4 * HIDDEN), jnp.float32)],
        compiler_params=pltpu.CompilerParams(
            vmem_limit_bytes=64 * 1024 * 1024),
        cost_estimate=pl.CostEstimate(flops=int(flops),
                                      transcendentals=int(transcendentals),
                                      bytes_accessed=int(bytes_accessed)),
    )(x_k, lens_p, params["wih"], params["whh"], params["bg"],
      params["wf"], params["bf"])

    return out[:B, :n_classes]


def init_params(key, n_channels, n_classes):
    """Synthetic parameters with torch-like init ranges, pre-laid-out for the kernel."""
    ks = jax.random.split(key, 8)

    def unif(k, shape, bound):
        return jax.random.uniform(k, shape, jnp.float32, -bound, bound)

    hb = 1.0 / math.sqrt(HIDDEN)
    # LSTM weights stored transposed ([in, 4H]) relative to torch's [4H, in].
    wih = unif(ks[0], (n_channels, 4 * HIDDEN), hb)
    whh = unif(ks[1], (HIDDEN, 4 * HIDDEN), hb)
    b_ih = unif(ks[2], (1, 4 * HIDDEN), hb)
    b_hh = unif(ks[3], (1, 4 * HIDDEN), hb)
    # Zero-pad the input-projection K dim to 128 lanes (lane-dense loads).
    wih_p = jnp.zeros((LANE, 4 * HIDDEN), jnp.float32).at[:n_channels].set(wih)

    lb = 1.0 / math.sqrt(HIDDEN)        # LazyLinear in_features = 256
    wl = unif(ks[4], (HIDDEN, LIN_HIDDEN), lb)
    bl = unif(ks[5], (1, LIN_HIDDEN), lb)
    ob = 1.0 / math.sqrt(LIN_HIDDEN)    # LazyLinear in_features = 128
    wo = unif(ks[6], (LIN_HIDDEN, n_classes), ob)
    bo = unif(ks[7], (1, n_classes), ob)
    # Lane-pad the logits width to 128; sliced back to n_classes outside.
    wo_p = jnp.zeros((LIN_HIDDEN, LANE), jnp.float32).at[:, :n_classes].set(wo)
    bo_p = jnp.zeros((1, LANE), jnp.float32).at[:, :n_classes].set(bo)

    # Fuse the two head linears (no nonlinearity between them):
    #   logits = (relu(h) @ wl + bl) @ wo + bo = relu(h) @ (wl @ wo) + (bl @ wo + bo)
    wf = wl @ wo_p                                             # [256, 128]
    bf = bl @ wo_p + bo_p                                      # [1, 128]

    return dict(
        wih=wih_p.astype(jnp.bfloat16),
        whh=whh.astype(jnp.bfloat16),
        bg=(b_ih + b_hh),                                      # combined gate bias, f32
        wf=wf.astype(jnp.bfloat16),
        bf=bf,
    )


if __name__ == "__main__":
    key = jax.random.PRNGKey(0)
    kx, kp = jax.random.split(key)

    B, T, C = 2, 16, 8           # batch, n_samples (seq), n_channels
    n_classes = 4

    x = jax.random.normal(kx, (B, T, C), jnp.float32)
    # Pad (mask) the tail of sequence 0 so the variable-length path is exercised:
    # batch 0 has valid length 12, batch 1 has full length 16.
    x = x.at[0, 12:, :].set(MASKING_VALUE)

    params = init_params(kp, C, n_classes)

    fwd = jax.jit(functools.partial(sat1_lstm_forward, n_classes=n_classes))
    logits = jax.block_until_ready(fwd(params, x))

    assert logits.shape == (B, n_classes)
    assert bool(jnp.all(jnp.isfinite(logits)))
    print("KERNEL_OK")
</pallas_src>

<mosaic_0001>
module attributes {stable_mosaic.version = 11 : i64} {
  func.func @_lstm_head_kernel(%arg0: memref<128x128xbf16, #tpu.memory_space<vmem>>, %arg1: memref<8x1xi32, #tpu.memory_space<vmem>>, %arg2: memref<128x1024xbf16, #tpu.memory_space<vmem>>, %arg3: memref<256x1024xbf16, #tpu.memory_space<vmem>>, %arg4: memref<1x1024xf32, #tpu.memory_space<vmem>>, %arg5: memref<256x128xbf16, #tpu.memory_space<vmem>>, %arg6: memref<1x128xf32, #tpu.memory_space<vmem>>, %arg7: memref<8x128xf32, #tpu.memory_space<vmem>>, %arg8: memref<128x1024xf32, #tpu.memory_space<vmem>>) attributes {dimension_semantics = [], scalar_prefetch = 0 : i64, scratch_operands = 1 : i64, tpu.core_type = #tpu.core_type<tc>} {
    %c0 = arith.constant 0 : index
    %c0_0 = arith.constant 0 : index
    %0 = vector.load %arg1[%c0, %c0_0] : memref<8x1xi32, #tpu.memory_space<vmem>>, vector<8x1xi32>
    %c0_1 = arith.constant 0 : index
    %c0_2 = arith.constant 0 : index
    %1 = vector.load %arg0[%c0_1, %c0_2] : memref<128x128xbf16, #tpu.memory_space<vmem>>, vector<128x128xbf16>
    %c0_3 = arith.constant 0 : index
    %c0_4 = arith.constant 0 : index
    %2 = vector.load %arg2[%c0_3, %c0_4] : memref<128x1024xbf16, #tpu.memory_space<vmem>>, vector<128x1024xbf16>
    %cst = arith.constant dense<0.000000e+00> : vector<128x1024xf32>
    %3 = tpu.matmul %1, %2, %cst {dimension_numbers = #tpu.dot_dimension_numbers<[1], [0], [0], [1], [0, 0, 1, 1], [], []>} : vector<128x128xbf16>, vector<128x1024xbf16>, vector<128x1024xf32> -> vector<128x1024xf32>
    %c0_5 = arith.constant 0 : index
    %c0_6 = arith.constant 0 : index
    %4 = vector.load %arg4[%c0_5, %c0_6] : memref<1x1024xf32, #tpu.memory_space<vmem>>, vector<1x1024xf32>
    %5 = vector.broadcast %4 : vector<1x1024xf32> to vector<128x1024xf32>
    %6 = arith.addf %3, %5 : vector<128x1024xf32>
    %c0_7 = arith.constant 0 : index
    %c0_8 = arith.constant 0 : index
    %7 = vector.load %arg8[%c0_7, %c0_8] : memref<128x1024xf32, #tpu.memory_space<vmem>>, vector<128x1024xf32>
    tpu.vector_store %arg8[%c0_7, %c0_8], %6 {strides = array<i32>} : memref<128x1024xf32, #tpu.memory_space<vmem>>, vector<128x1024xf32>,
    %cst_9 = arith.constant 0.000000e+00 : f32
    %8 = vector.broadcast %cst_9 : f32 to vector<8x256xf32>
    %cst_10 = arith.constant 0.000000e+00 : f32
    %9 = vector.broadcast %cst_10 : f32 to vector<8x256xf32>
    %c0_11 = arith.constant 0 : index
    %c0_12 = arith.constant 0 : index
    %10 = vector.load %arg8[%c0_11, %c0_12] : memref<128x1024xf32, #tpu.memory_space<vmem>>, vector<8x1024xf32>
    %11 = arith.truncf %8 : vector<8x256xf32> to vector<8x256xbf16>
    %c0_13 = arith.constant 0 : index
    %c0_14 = arith.constant 0 : index
    %12 = vector.load %arg3[%c0_13, %c0_14] : memref<256x1024xbf16, #tpu.memory_space<vmem>>, vector<256x1024xbf16>
    %cst_15 = arith.constant dense<0.000000e+00> : vector<8x1024xf32>
    %13 = tpu.matmul %11, %12, %cst_15 {dimension_numbers = #tpu.dot_dimension_numbers<[1], [0], [0], [1], [0, 0, 1, 1], [], []>} : vector<8x256xbf16>, vector<256x1024xbf16>, vector<8x1024xf32> -> vector<8x1024xf32>
    %14 = arith.addf %10, %13 : vector<8x1024xf32>
    %15 = vector.extract_strided_slice %14 {offsets = [0, 0], sizes = [8, 256], strides = [1, 1]} : vector<8x1024xf32> to vector<8x256xf32>
    %cst_16 = arith.constant 5.000000e-01 : f32
    %16 = vector.broadcast %cst_16 : f32 to vector<8x256xf32>
    %17 = arith.mulf %16, %15 : vector<8x256xf32>
    %18 = math.tanh %17 : vector<8x256xf32>
    %cst_17 = arith.constant 5.000000e-01 : f32
    %19 = vector.broadcast %cst_17 : f32 to vector<8x256xf32>
    %20 = arith.mulf %19, %18 : vector<8x256xf32>
    %cst_18 = arith.constant 5.000000e-01 : f32
    %21 = vector.broadcast %cst_18 : f32 to vector<8x256xf32>
    %22 = arith.addf %20, %21 : vector<8x256xf32>
    %23 = vector.extract_strided_slice %14 {offsets = [0, 256], sizes = [8, 256], strides = [1, 1]} : vector<8x1024xf32> to vector<8x256xf32>
    %cst_19 = arith.constant 5.000000e-01 : f32
    %24 = vector.broadcast %cst_19 : f32 to vector<8x256xf32>
    %25 = arith.mulf %24, %23 : vector<8x256xf32>
    %26 = math.tanh %25 : vector<8x256xf32>
    %cst_20 = arith.constant 5.000000e-01 : f32
    %27 = vector.broadcast %cst_20 : f32 to vector<8x256xf32>
    %28 = arith.mulf %27, %26 : vector<8x256xf32>
    %cst_21 = arith.constant 5.000000e-01 : f32
    %29 = vector.broadcast %cst_21 : f32 to vector<8x256xf32>
    %30 = arith.addf %28, %29 : vector<8x256xf32>
    %31 = vector.extract_strided_slice %14 {offsets = [0, 512], sizes = [8, 256], strides = [1, 1]} : vector<8x1024xf32> to vector<8x256xf32>
    %32 = math.tanh %31 : vector<8x256xf32>
    %33 = vector.extract_strided_slice %14 {offsets = [0, 768], sizes = [8, 256], strides = [1, 1]} : vector<8x1024xf32> to vector<8x256xf32>
    %cst_22 = arith.constant 5.000000e-01 : f32
    %34 = vector.broadcast %cst_22 : f32 to vector<8x256xf32>
    %35 = arith.mulf %34, %33 : vector<8x256xf32>
    %36 = math.tanh %35 : vector<8x256xf32>
    %cst_23 = arith.constant 5.000000e-01 : f32
    %37 = vector.broadcast %cst_23 : f32 to vector<8x256xf32>
    %38 = arith.mulf %37, %36 : vector<8x256xf32>
    %cst_24 = arith.constant 5.000000e-01 : f32
    %39 = vector.broadcast %cst_24 : f32 to vector<8x256xf32>
    %40 = arith.addf %38, %39 : vector<8x256xf32>
    %41 = arith.mulf %30, %9 : vector<8x256xf32>
    %42 = arith.mulf %22, %32 : vector<8x256xf32>
    %43 = arith.addf %41, %42 : vector<8x256xf32>
    %44 = math.tanh %43 : vector<8x256xf32>
    %45 = arith.mulf %40, %44 : vector<8x256xf32>
    %c0_i32 = arith.constant 0 : i32
    %46 = vector.broadcast %c0_i32 : i32 to vector<8x1xi32>
    %47 = arith.cmpi sgt, %0, %46 : vector<8x1xi32>
    %48 = vector.shape_cast %47 : vector<8x1xi1> to vector<8x1xi1>
    %49 = vector.broadcast %48 : vector<8x1xi1> to vector<8x256xi1>
    %50 = arith.select %49, %45, %8 : vector<8x256xi1>, vector<8x256xf32>
    %51 = vector.shape_cast %47 : vector<8x1xi1> to vector<8x1xi1>
    %52 = vector.broadcast %51 : vector<8x1xi1> to vector<8x256xi1>
    %53 = arith.select %52, %43, %9 : vector<8x256xi1>, vector<8x256xf32>
    %c8 = arith.constant 8 : index
    %c0_25 = arith.constant 0 : index
    %54 = vector.load %arg8[%c8, %c0_25] : memref<128x1024xf32, #tpu.memory_space<vmem>>, vector<8x1024xf32>
    %55 = arith.truncf %50 : vector<8x256xf32> to vector<8x256xbf16>
    %c0_26 = arith.constant 0 : index
    %c0_27 = arith.constant 0 : index
    %56 = vector.load %arg3[%c0_26, %c0_27] : memref<256x1024xbf16, #tpu.memory_space<vmem>>, vector<256x1024xbf16>
    %cst_28 = arith.constant dense<0.000000e+00> : vector<8x1024xf32>
    %57 = tpu.matmul %55, %56, %cst_28 {dimension_numbers = #tpu.dot_dimension_numbers<[1], [0], [0], [1], [0, 0, 1, 1], [], []>} : vector<8x256xbf16>, vector<256x1024xbf16>, vector<8x1024xf32> -> vector<8x1024xf32>
    %58 = arith.addf %54, %57 : vector<8x1024xf32>
    %59 = vector.extract_strided_slice %58 {offsets = [0, 0], sizes = [8, 256], strides = [1, 1]} : vector<8x1024xf32> to vector<8x256xf32>
    %cst_29 = arith.constant 5.000000e-01 : f32
    %60 = vector.broadcast %cst_29 : f32 to vector<8x256xf32>
    %61 = arith.mulf %60, %59 : vector<8x256xf32>
    %62 = math.tanh %61 : vector<8x256xf32>
    %cst_30 = arith.constant 5.000000e-01 : f32
    %63 = vector.broadcast %cst_30 : f32 to vector<8x256xf32>
    %64 = arith.mulf %63, %62 : vector<8x256xf32>
    %cst_31 = arith.constant 5.000000e-01 : f32
    %65 = vector.broadcast %cst_31 : f32 to vector<8x256xf32>
    %66 = arith.addf %64, %65 : vector<8x256xf32>
    %67 = vector.extract_strided_slice %58 {offsets = [0, 256], sizes = [8, 256], strides = [1, 1]} : vector<8x1024xf32> to vector<8x256xf32>
    %cst_32 = arith.constant 5.000000e-01 : f32
    %68 = vector.broadcast %cst_32 : f32 to vector<8x256xf32>
    %69 = arith.mulf %68, %67 : vector<8x256xf32>
    %70 = math.tanh %69 : vector<8x256xf32>
    %cst_33 = arith.constant 5.000000e-01 : f32
    %71 = vector.broadcast %cst_33 : f32 to vector<8x256xf32>
    %72 = arith.mulf %71, %70 : vector<8x256xf32>
    %cst_34 = arith.constant 5.000000e-01 : f32
    %73 = vector.broadcast %cst_34 : f32 to vector<8x256xf32>
    %74 = arith.addf %72, %73 : vector<8x256xf32>
    %75 = vector.extract_strided_slice %58 {offsets = [0, 512], sizes = [8, 256], strides = [1, 1]} : vector<8x1024xf32> to vector<8x256xf32>
    %76 = math.tanh %75 : vector<8x256xf32>
    %77 = vector.extract_strided_slice %58 {offsets = [0, 768], sizes = [8, 256], strides = [1, 1]} : vector<8x1024xf32> to vector<8x256xf32>
    %cst_35 = arith.constant 5.000000e-01 : f32
    %78 = vector.broadcast %cst_35 : f32 to vector<8x256xf32>
    %79 = arith.mulf %78, %77 : vector<8x256xf32>
    %80 = math.tanh %79 : vector<8x256xf32>
    %cst_36 = arith.constant 5.000000e-01 : f32
    %81 = vector.broadcast %cst_36 : f32 to vector<8x256xf32>
    %82 = arith.mulf %81, %80 : vector<8x256xf32>
    %cst_37 = arith.constant 5.000000e-01 : f32
    %83 = vector.broadcast %cst_37 : f32 to vector<8x256xf32>
    %84 = arith.addf %82, %83 : vector<8x256xf32>
    %85 = arith.mulf %74, %53 : vector<8x256xf32>
    %86 = arith.mulf %66, %76 : vector<8x256xf32>
    %87 = arith.addf %85, %86 : vector<8x256xf32>
    %88 = math.tanh %87 : vector<8x256xf32>
    %89 = arith.mulf %84, %88 : vector<8x256xf32>
    %c1_i32 = arith.constant 1 : i32
    %90 = vector.broadcast %c1_i32 : i32 to vector<8x1xi32>
    %91 = arith.cmpi sgt, %0, %90 : vector<8x1xi32>
    %92 = vector.shape_cast %91 : vector<8x1xi1> to vector<8x1xi1>
    %93 = vector.broadcast %92 : vector<8x1xi1> to vector<8x256xi1>
    %94 = arith.select %93, %89, %50 : vector<8x256xi1>, vector<8x256xf32>
    %95 = vector.shape_cast %91 : vector<8x1xi1> to vector<8x1xi1>
    %96 = vector.broadcast %95 : vector<8x1xi1> to vector<8x256xi1>
    %97 = arith.select %96, %87, %53 : vector<8x256xi1>, vector<8x256xf32>
    %c16 = arith.constant 16 : index
    %c0_38 = arith.constant 0 : index
    %98 = vector.load %arg8[%c16, %c0_38] : memref<128x1024xf32, #tpu.memory_space<vmem>>, vector<8x1024xf32>
    %99 = arith.truncf %94 : vector<8x256xf32> to vector<8x256xbf16>
    %c0_39 = arith.constant 0 : index
    %c0_40 = arith.constant 0 : index
    %100 = vector.load %arg3[%c0_39, %c0_40] : memref<256x1024xbf16, #tpu.memory_space<vmem>>, vector<256x1024xbf16>
    %cst_41 = arith.constant dense<0.000000e+00> : vector<8x1024xf32>
    %101 = tpu.matmul %99, %100, %cst_41 {dimension_numbers = #tpu.dot_dimension_numbers<[1], [0], [0], [1], [0, 0, 1, 1], [], []>} : vector<8x256xbf16>, vector<256x1024xbf16>, vector<8x1024xf32> -> vector<8x1024xf32>
    %102 = arith.addf %98, %101 : vector<8x1024xf32>
    %103 = vector.extract_strided_slice %102 {offsets = [0, 0], sizes = [8, 256], strides = [1, 1]} : vector<8x1024xf32> to vector<8x256xf32>
    %cst_42 = arith.constant 5.000000e-01 : f32
    %104 = vector.broadcast %cst_42 : f32 to vector<8x256xf32>
    %105 = arith.mulf %104, %103 : vector<8x256xf32>
    %106 = math.tanh %105 : vector<8x256xf32>
    %cst_43 = arith.constant 5.000000e-01 : f32
    %107 = vector.broadcast %cst_43 : f32 to vector<8x256xf32>
    %108 = arith.mulf %107, %106 : vector<8x256xf32>
    %cst_44 = arith.constant 5.000000e-01 : f32
    %109 = vector.broadcast %cst_44 : f32 to vector<8x256xf32>
    %110 = arith.addf %108, %109 : vector<8x256xf32>
    %111 = vector.extract_strided_slice %102 {offsets = [0, 256], sizes = [8, 256], strides = [1, 1]} : vector<8x1024xf32> to vector<8x256xf32>
    %cst_45 = arith.constant 5.000000e-01 : f32
    %112 = vector.broadcast %cst_45 : f32 to vector<8x256xf32>
    %113 = arith.mulf %112, %111 : vector<8x256xf32>
    %114 = math.tanh %113 : vector<8x256xf32>
    %cst_46 = arith.constant 5.000000e-01 : f32
    %115 = vector.broadcast %cst_46 : f32 to vector<8x256xf32>
    %116 = arith.mulf %115, %114 : vector<8x256xf32>
    %cst_47 = arith.constant 5.000000e-01 : f32
    %117 = vector.broadcast %cst_47 : f32 to vector<8x256xf32>
    %118 = arith.addf %116, %117 : vector<8x256xf32>
    %119 = vector.extract_strided_slice %102 {offsets = [0, 512], sizes = [8, 256], strides = [1, 1]} : vector<8x1024xf32> to vector<8x256xf32>
    %120 = math.tanh %119 : vector<8x256xf32>
    %121 = vector.extract_strided_slice %102 {offsets = [0, 768], sizes = [8, 256], strides = [1, 1]} : vector<8x1024xf32> to vector<8x256xf32>
    %cst_48 = arith.constant 5.000000e-01 : f32
    %122 = vector.broadcast %cst_48 : f32 to vector<8x256xf32>
    %123 = arith.mulf %122, %121 : vector<8x256xf32>
    %124 = math.tanh %123 : vector<8x256xf32>
    %cst_49 = arith.constant 5.000000e-01 : f32
    %125 = vector.broadcast %cst_49 : f32 to vector<8x256xf32>
    %126 = arith.mulf %125, %124 : vector<8x256xf32>
    %cst_50 = arith.constant 5.000000e-01 : f32
    %127 = vector.broadcast %cst_50 : f32 to vector<8x256xf32>
    %128 = arith.addf %126, %127 : vector<8x256xf32>
    %129 = arith.mulf %118, %97 : vector<8x256xf32>
    %130 = arith.mulf %110, %120 : vector<8x256xf32>
    %131 = arith.addf %129, %130 : vector<8x256xf32>
    %132 = math.tanh %131 : vector<8x256xf32>
    %133 = arith.mulf %128, %132 : vector<8x256xf32>
    %c2_i32 = arith.constant 2 : i32
    %134 = vector.broadcast %c2_i32 : i32 to vector<8x1xi32>
    %135 = arith.cmpi sgt, %0, %134 : vector<8x1xi32>
    %136 = vector.shape_cast %135 : vector<8x1xi1> to vector<8x1xi1>
    %137 = vector.broadcast %136 : vector<8x1xi1> to vector<8x256xi1>
    %138 = arith.select %137, %133, %94 : vector<8x256xi1>, vector<8x256xf32>
    %139 = vector.shape_cast %135 : vector<8x1xi1> to vector<8x1xi1>
    %140 = vector.broadcast %139 : vector<8x1xi1> to vector<8x256xi1>
    %141 = arith.select %140, %131, %97 : vector<8x256xi1>, vector<8x256xf32>
    %c24 = arith.constant 24 : index
    %c0_51 = arith.constant 0 : index
    %142 = vector.load %arg8[%c24, %c0_51] : memref<128x1024xf32, #tpu.memory_space<vmem>>, vector<8x1024xf32>
    %143 = arith.truncf %138 : vector<8x256xf32> to vector<8x256xbf16>
    %c0_52 = arith.constant 0 : index
    %c0_53 = arith.constant 0 : index
    %144 = vector.load %arg3[%c0_52, %c0_53] : memref<256x1024xbf16, #tpu.memory_space<vmem>>, vector<256x1024xbf16>
    %cst_54 = arith.constant dense<0.000000e+00> : vector<8x1024xf32>
    %145 = tpu.matmul %143, %144, %cst_54 {dimension_numbers = #tpu.dot_dimension_numbers<[1], [0], [0], [1], [0, 0, 1, 1], [], []>} : vector<8x256xbf16>, vector<256x1024xbf16>, vector<8x1024xf32> -> vector<8x1024xf32>
    %146 = arith.addf %142, %145 : vector<8x1024xf32>
    %147 = vector.extract_strided_slice %146 {offsets = [0, 0], sizes = [8, 256], strides = [1, 1]} : vector<8x1024xf32> to vector<8x256xf32>
    %cst_55 = arith.constant 5.000000e-01 : f32
    %148 = vector.broadcast %cst_55 : f32 to vector<8x256xf32>
    %149 = arith.mulf %148, %147 : vector<8x256xf32>
    %150 = math.tanh %149 : vector<8x256xf32>
    %cst_56 = arith.constant 5.000000e-01 : f32
    %151 = vector.broadcast %cst_56 : f32 to vector<8x256xf32>
    %152 = arith.mulf %151, %150 : vector<8x256xf32>
    %cst_57 = arith.constant 5.000000e-01 : f32
    %153 = vector.broadcast %cst_57 : f32 to vector<8x256xf32>
    %154 = arith.addf %152, %153 : vector<8x256xf32>
    %155 = vector.extract_strided_slice %146 {offsets = [0, 256], sizes = [8, 256], strides = [1, 1]} : vector<8x1024xf32> to vector<8x256xf32>
    %cst_58 = arith.constant 5.000000e-01 : f32
    %156 = vector.broadcast %cst_58 : f32 to vector<8x256xf32>
    %157 = arith.mulf %156, %155 : vector<8x256xf32>
    %158 = math.tanh %157 : vector<8x256xf32>
    %cst_59 = arith.constant 5.000000e-01 : f32
    %159 = vector.broadcast %cst_59 : f32 to vector<8x256xf32>
    %160 = arith.mulf %159, %158 : vector<8x256xf32>
    %cst_60 = arith.constant 5.000000e-01 : f32
    %161 = vector.broadcast %cst_60 : f32 to vector<8x256xf32>
    %162 = arith.addf %160, %161 : vector<8x256xf32>
    %163 = vector.extract_strided_slice %146 {offsets = [0, 512], sizes = [8, 256], strides = [1, 1]} : vector<8x1024xf32> to vector<8x256xf32>
    %164 = math.tanh %163 : vector<8x256xf32>
    %165 = vector.extract_strided_slice %146 {offsets = [0, 768], sizes = [8, 256], strides = [1, 1]} : vector<8x1024xf32> to vector<8x256xf32>
    %cst_61 = arith.constant 5.000000e-01 : f32
    %166 = vector.broadcast %cst_61 : f32 to vector<8x256xf32>
    %167 = arith.mulf %166, %165 : vector<8x256xf32>
    %168 = math.tanh %167 : vector<8x256xf32>
    %cst_62 = arith.constant 5.000000e-01 : f32
    %169 = vector.broadcast %cst_62 : f32 to vector<8x256xf32>
    %170 = arith.mulf %169, %168 : vector<8x256xf32>
    %cst_63 = arith.constant 5.000000e-01 : f32
    %171 = vector.broadcast %cst_63 : f32 to vector<8x256xf32>
    %172 = arith.addf %170, %171 : vector<8x256xf32>
    %173 = arith.mulf %162, %141 : vector<8x256xf32>
    %174 = arith.mulf %154, %164 : vector<8x256xf32>
    %175 = arith.addf %173, %174 : vector<8x256xf32>
    %176 = math.tanh %175 : vector<8x256xf32>
    %177 = arith.mulf %172, %176 : vector<8x256xf32>
    %c3_i32 = arith.constant 3 : i32
    %178 = vector.broadcast %c3_i32 : i32 to vector<8x1xi32>
    %179 = arith.cmpi sgt, %0, %178 : vector<8x1xi32>
    %180 = vector.shape_cast %179 : vector<8x1xi1> to vector<8x1xi1>
    %181 = vector.broadcast %180 : vector<8x1xi1> to vector<8x256xi1>
    %182 = arith.select %181, %177, %138 : vector<8x256xi1>, vector<8x256xf32>
    %183 = vector.shape_cast %179 : vector<8x1xi1> to vector<8x1xi1>
    %184 = vector.broadcast %183 : vector<8x1xi1> to vector<8x256xi1>
    %185 = arith.select %184, %175, %141 : vector<8x256xi1>, vector<8x256xf32>
    %c32 = arith.constant 32 : index
    %c0_64 = arith.constant 0 : index
    %186 = vector.load %arg8[%c32, %c0_64] : memref<128x1024xf32, #tpu.memory_space<vmem>>, vector<8x1024xf32>
    %187 = arith.truncf %182 : vector<8x256xf32> to vector<8x256xbf16>
    %c0_65 = arith.constant 0 : index
    %c0_66 = arith.constant 0 : index
    %188 = vector.load %arg3[%c0_65, %c0_66] : memref<256x1024xbf16, #tpu.memory_space<vmem>>, vector<256x1024xbf16>
    %cst_67 = arith.constant dense<0.000000e+00> : vector<8x1024xf32>
    %189 = tpu.matmul %187, %188, %cst_67 {dimension_numbers = #tpu.dot_dimension_numbers<[1], [0], [0], [1], [0, 0, 1, 1], [], []>} : vector<8x256xbf16>, vector<256x1024xbf16>, vector<8x1024xf32> -> vector<8x1024xf32>
    %190 = arith.addf %186, %189 : vector<8x1024xf32>
    %191 = vector.extract_strided_slice %190 {offsets = [0, 0], sizes = [8, 256], strides = [1, 1]} : vector<8x1024xf32> to vector<8x256xf32>
    %cst_68 = arith.constant 5.000000e-01 : f32
    %192 = vector.broadcast %cst_68 : f32 to vector<8x256xf32>
    %193 = arith.mulf %192, %191 : vector<8x256xf32>
    %194 = math.tanh %193 : vector<8x256xf32>
    %cst_69 = arith.constant 5.000000e-01 : f32
    %195 = vector.broadcast %cst_69 : f32 to vector<8x256xf32>
    %196 = arith.mulf %195, %194 : vector<8x256xf32>
    %cst_70 = arith.constant 5.000000e-01 : f32
    %197 = vector.broadcast %cst_70 : f32 to vector<8x256xf32>
    %198 = arith.addf %196, %197 : vector<8x256xf32>
    %199 = vector.extract_strided_slice %190 {offsets = [0, 256], sizes = [8, 256], strides = [1, 1]} : vector<8x1024xf32> to vector<8x256xf32>
    %cst_71 = arith.constant 5.000000e-01 : f32
    %200 = vector.broadcast %cst_71 : f32 to vector<8x256xf32>
    %201 = arith.mulf %200, %199 : vector<8x256xf32>
    %202 = math.tanh %201 : vector<8x256xf32>
    %cst_72 = arith.constant 5.000000e-01 : f32
    %203 = vector.broadcast %cst_72 : f32 to vector<8x256xf32>
    %204 = arith.mulf %203, %202 : vector<8x256xf32>
    %cst_73 = arith.constant 5.000000e-01 : f32
    %205 = vector.broadcast %cst_73 : f32 to vector<8x256xf32>
    %206 = arith.addf %204, %205 : vector<8x256xf32>
    %207 = vector.extract_strided_slice %190 {offsets = [0, 512], sizes = [8, 256], strides = [1, 1]} : vector<8x1024xf32> to vector<8x256xf32>
    %208 = math.tanh %207 : vector<8x256xf32>
    %209 = vector.extract_strided_slice %190 {offsets = [0, 768], sizes = [8, 256], strides = [1, 1]} : vector<8x1024xf32> to vector<8x256xf32>
    %cst_74 = arith.constant 5.000000e-01 : f32
    %210 = vector.broadcast %cst_74 : f32 to vector<8x256xf32>
    %211 = arith.mulf %210, %209 : vector<8x256xf32>
    %212 = math.tanh %211 : vector<8x256xf32>
    %cst_75 = arith.constant 5.000000e-01 : f32
    %213 = vector.broadcast %cst_75 : f32 to vector<8x256xf32>
    %214 = arith.mulf %213, %212 : vector<8x256xf32>
    %cst_76 = arith.constant 5.000000e-01 : f32
    %215 = vector.broadcast %cst_76 : f32 to vector<8x256xf32>
    %216 = arith.addf %214, %215 : vector<8x256xf32>
    %217 = arith.mulf %206, %185 : vector<8x256xf32>
    %218 = arith.mulf %198, %208 : vector<8x256xf32>
    %219 = arith.addf %217, %218 : vector<8x256xf32>
    %220 = math.tanh %219 : vector<8x256xf32>
    %221 = arith.mulf %216, %220 : vector<8x256xf32>
    %c4_i32 = arith.constant 4 : i32
    %222 = vector.broadcast %c4_i32 : i32 to vector<8x1xi32>
    %223 = arith.cmpi sgt, %0, %222 : vector<8x1xi32>
    %224 = vector.shape_cast %223 : vector<8x1xi1> to vector<8x1xi1>
    %225 = vector.broadcast %224 : vector<8x1xi1> to vector<8x256xi1>
    %226 = arith.select %225, %221, %182 : vector<8x256xi1>, vector<8x256xf32>
    %227 = vector.shape_cast %223 : vector<8x1xi1> to vector<8x1xi1>
    %228 = vector.broadcast %227 : vector<8x1xi1> to vector<8x256xi1>
    %229 = arith.select %228, %219, %185 : vector<8x256xi1>, vector<8x256xf32>
    %c40 = arith.constant 40 : index
    %c0_77 = arith.constant 0 : index
    %230 = vector.load %arg8[%c40, %c0_77] : memref<128x1024xf32, #tpu.memory_space<vmem>>, vector<8x1024xf32>
    %231 = arith.truncf %226 : vector<8x256xf32> to vector<8x256xbf16>
    %c0_78 = arith.constant 0 : index
    %c0_79 = arith.constant 0 : index
    %232 = vector.load %arg3[%c0_78, %c0_79] : memref<256x1024xbf16, #tpu.memory_space<vmem>>, vector<256x1024xbf16>
    %cst_80 = arith.constant dense<0.000000e+00> : vector<8x1024xf32>
    %233 = tpu.matmul %231, %232, %cst_80 {dimension_numbers = #tpu.dot_dimension_numbers<[1], [0], [0], [1], [0, 0, 1, 1], [], []>} : vector<8x256xbf16>, vector<256x1024xbf16>, vector<8x1024xf32> -> vector<8x1024xf32>
    %234 = arith.addf %230, %233 : vector<8x1024xf32>
    %235 = vector.extract_strided_slice %234 {offsets = [0, 0], sizes = [8, 256], strides = [1, 1]} : vector<8x1024xf32> to vector<8x256xf32>
    %cst_81 = arith.constant 5.000000e-01 : f32
    %236 = vector.broadcast %cst_81 : f32 to vector<8x256xf32>
    %237 = arith.mulf %236, %235 : vector<8x256xf32>
    %238 = math.tanh %237 : vector<8x256xf32>
    %cst_82 = arith.constant 5.000000e-01 : f32
    %239 = vector.broadcast %cst_82 : f32 to vector<8x256xf32>
    %240 = arith.mulf %239, %238 : vector<8x256xf32>
    %cst_83 = arith.constant 5.000000e-01 : f32
    %241 = vector.broadcast %cst_83 : f32 to vector<8x256xf32>
    %242 = arith.addf %240, %241 : vector<8x256xf32>
    %243 = vector.extract_strided_slice %234 {offsets = [0, 256], sizes = [8, 256], strides = [1, 1]} : vector<8x1024xf32> to vector<8x256xf32>
    %cst_84 = arith.constant 5.000000e-01 : f32
    %244 = vector.broadcast %cst_84 : f32 to vector<8x256xf32>
    %245 = arith.mulf %244, %243 : vector<8x256xf32>
    %246 = math.tanh %245 : vector<8x256xf32>
    %cst_85 = arith.constant 5.000000e-01 : f32
    %247 = vector.broadcast %cst_85 : f32 to vector<8x256xf32>
    %248 = arith.mulf %247, %246 : vector<8x256xf32>
    %cst_86 = arith.constant 5.000000e-01 : f32
    %249 = vector.broadcast %cst_86 : f32 to vector<8x256xf32>
    %250 = arith.addf %248, %249 : vector<8x256xf32>
    %251 = vector.extract_strided_slice %234 {offsets = [0, 512], sizes = [8, 256], strides = [1, 1]} : vector<8x1024xf32> to vector<8x256xf32>
    %252 = math.tanh %251 : vector<8x256xf32>
    %253 = vector.extract_strided_slice %234 {offsets = [0, 768], sizes = [8, 256], strides = [1, 1]} : vector<8x1024xf32> to vector<8x256xf32>
    %cst_87 = arith.constant 5.000000e-01 : f32
    %254 = vector.broadcast %cst_87 : f32 to vector<8x256xf32>
    %255 = arith.mulf %254, %253 : vector<8x256xf32>
    %256 = math.tanh %255 : vector<8x256xf32>
    %cst_88 = arith.constant 5.000000e-01 : f32
    %257 = vector.broadcast %cst_88 : f32 to vector<8x256xf32>
    %258 = arith.mulf %257, %256 : vector<8x256xf32>
    %cst_89 = arith.constant 5.000000e-01 : f32
    %259 = vector.broadcast %cst_89 : f32 to vector<8x256xf32>
    %260 = arith.addf %258, %259 : vector<8x256xf32>
    %261 = arith.mulf %250, %229 : vector<8x256xf32>
    %262 = arith.mulf %242, %252 : vector<8x256xf32>
    %263 = arith.addf %261, %262 : vector<8x256xf32>
    %264 = math.tanh %263 : vector<8x256xf32>
    %265 = arith.mulf %260, %264 : vector<8x256xf32>
    %c5_i32 = arith.constant 5 : i32
    %266 = vector.broadcast %c5_i32 : i32 to vector<8x1xi32>
    %267 = arith.cmpi sgt, %0, %266 : vector<8x1xi32>
    %268 = vector.shape_cast %267 : vector<8x1xi1> to vector<8x1xi1>
    %269 = vector.broadcast %268 : vector<8x1xi1> to vector<8x256xi1>
    %270 = arith.select %269, %265, %226 : vector<8x256xi1>, vector<8x256xf32>
    %271 = vector.shape_cast %267 : vector<8x1xi1> to vector<8x1xi1>
    %272 = vector.broadcast %271 : vector<8x1xi1> to vector<8x256xi1>
    %273 = arith.select %272, %263, %229 : vector<8x256xi1>, vector<8x256xf32>
    %c48 = arith.constant 48 : index
    %c0_90 = arith.constant 0 : index
    %274 = vector.load %arg8[%c48, %c0_90] : memref<128x1024xf32, #tpu.memory_space<vmem>>, vector<8x1024xf32>
    %275 = arith.truncf %270 : vector<8x256xf32> to vector<8x256xbf16>
    %c0_91 = arith.constant 0 : index
    %c0_92 = arith.constant 0 : index
    %276 = vector.load %arg3[%c0_91, %c0_92] : memref<256x1024xbf16, #tpu.memory_space<vmem>>, vector<256x1024xbf16>
    %cst_93 = arith.constant dense<0.000000e+00> : vector<8x1024xf32>
    %277 = tpu.matmul %275, %276, %cst_93 {dimension_numbers = #tpu.dot_dimension_numbers<[1], [0], [0], [1], [0, 0, 1, 1], [], []>} : vector<8x256xbf16>, vector<256x1024xbf16>, vector<8x1024xf32> -> vector<8x1024xf32>
    %278 = arith.addf %274, %277 : vector<8x1024xf32>
    %279 = vector.extract_strided_slice %278 {offsets = [0, 0], sizes = [8, 256], strides = [1, 1]} : vector<8x1024xf32> to vector<8x256xf32>
    %cst_94 = arith.constant 5.000000e-01 : f32
    %280 = vector.broadcast %cst_94 : f32 to vector<8x256xf32>
    %281 = arith.mulf %280, %279 : vector<8x256xf32>
    %282 = math.tanh %281 : vector<8x256xf32>
    %cst_95 = arith.constant 5.000000e-01 : f32
    %283 = vector.broadcast %cst_95 : f32 to vector<8x256xf32>
    %284 = arith.mulf %283, %282 : vector<8x256xf32>
    %cst_96 = arith.constant 5.000000e-01 : f32
    %285 = vector.broadcast %cst_96 : f32 to vector<8x256xf32>
    %286 = arith.addf %284, %285 : vector<8x256xf32>
    %287 = vector.extract_strided_slice %278 {offsets = [0, 256], sizes = [8, 256], strides = [1, 1]} : vector<8x1024xf32> to vector<8x256xf32>
    %cst_97 = arith.constant 5.000000e-01 : f32
    %288 = vector.broadcast %cst_97 : f32 to vector<8x256xf32>
    %289 = arith.mulf %288, %287 : vector<8x256xf32>
    %290 = math.tanh %289 : vector<8x256xf32>
    %cst_98 = arith.constant 5.000000e-01 : f32
    %291 = vector.broadcast %cst_98 : f32 to vector<8x256xf32>
    %292 = arith.mulf %291, %290 : vector<8x256xf32>
    %cst_99 = arith.constant 5.000000e-01 : f32
    %293 = vector.broadcast %cst_99 : f32 to vector<8x256xf32>
    %294 = arith.addf %292, %293 : vector<8x256xf32>
    %295 = vector.extract_strided_slice %278 {offsets = [0, 512], sizes = [8, 256], strides = [1, 1]} : vector<8x1024xf32> to vector<8x256xf32>
    %296 = math.tanh %295 : vector<8x256xf32>
    %297 = vector.extract_strided_slice %278 {offsets = [0, 768], sizes = [8, 256], strides = [1, 1]} : vector<8x1024xf32> to vector<8x256xf32>
    %cst_100 = arith.constant 5.000000e-01 : f32
    %298 = vector.broadcast %cst_100 : f32 to vector<8x256xf32>
    %299 = arith.mulf %298, %297 : vector<8x256xf32>
    %300 = math.tanh %299 : vector<8x256xf32>
    %cst_101 = arith.constant 5.000000e-01 : f32
    %301 = vector.broadcast %cst_101 : f32 to vector<8x256xf32>
    %302 = arith.mulf %301, %300 : vector<8x256xf32>
    %cst_102 = arith.constant 5.000000e-01 : f32
    %303 = vector.broadcast %cst_102 : f32 to vector<8x256xf32>
    %304 = arith.addf %302, %303 : vector<8x256xf32>
    %305 = arith.mulf %294, %273 : vector<8x256xf32>
    %306 = arith.mulf %286, %296 : vector<8x256xf32>
    %307 = arith.addf %305, %306 : vector<8x256xf32>
    %308 = math.tanh %307 : vector<8x256xf32>
    %309 = arith.mulf %304, %308 : vector<8x256xf32>
    %c6_i32 = arith.constant 6 : i32
    %310 = vector.broadcast %c6_i32 : i32 to vector<8x1xi32>
    %311 = arith.cmpi sgt, %0, %310 : vector<8x1xi32>
    %312 = vector.shape_cast %311 : vector<8x1xi1> to vector<8x1xi1>
    %313 = vector.broadcast %312 : vector<8x1xi1> to vector<8x256xi1>
    %314 = arith.select %313, %309, %270 : vector<8x256xi1>, vector<8x256xf32>
    %315 = vector.shape_cast %311 : vector<8x1xi1> to vector<8x1xi1>
    %316 = vector.broadcast %315 : vector<8x1xi1> to vector<8x256xi1>
    %317 = arith.select %316, %307, %273 : vector<8x256xi1>, vector<8x256xf32>
    %c56 = arith.constant 56 : index
    %c0_103 = arith.constant 0 : index
    %318 = vector.load %arg8[%c56, %c0_103] : memref<128x1024xf32, #tpu.memory_space<vmem>>, vector<8x1024xf32>
    %319 = arith.truncf %314 : vector<8x256xf32> to vector<8x256xbf16>
    %c0_104 = arith.constant 0 : index
    %c0_105 = arith.constant 0 : index
    %320 = vector.load %arg3[%c0_104, %c0_105] : memref<256x1024xbf16, #tpu.memory_space<vmem>>, vector<256x1024xbf16>
    %cst_106 = arith.constant dense<0.000000e+00> : vector<8x1024xf32>
    %321 = tpu.matmul %319, %320, %cst_106 {dimension_numbers = #tpu.dot_dimension_numbers<[1], [0], [0], [1], [0, 0, 1, 1], [], []>} : vector<8x256xbf16>, vector<256x1024xbf16>, vector<8x1024xf32> -> vector<8x1024xf32>
    %322 = arith.addf %318, %321 : vector<8x1024xf32>
    %323 = vector.extract_strided_slice %322 {offsets = [0, 0], sizes = [8, 256], strides = [1, 1]} : vector<8x1024xf32> to vector<8x256xf32>
    %cst_107 = arith.constant 5.000000e-01 : f32
    %324 = vector.broadcast %cst_107 : f32 to vector<8x256xf32>
    %325 = arith.mulf %324, %323 : vector<8x256xf32>
    %326 = math.tanh %325 : vector<8x256xf32>
    %cst_108 = arith.constant 5.000000e-01 : f32
    %327 = vector.broadcast %cst_108 : f32 to vector<8x256xf32>
    %328 = arith.mulf %327, %326 : vector<8x256xf32>
    %cst_109 = arith.constant 5.000000e-01 : f32
    %329 = vector.broadcast %cst_109 : f32 to vector<8x256xf32>
    %330 = arith.addf %328, %329 : vector<8x256xf32>
    %331 = vector.extract_strided_slice %322 {offsets = [0, 256], sizes = [8, 256], strides = [1, 1]} : vector<8x1024xf32> to vector<8x256xf32>
    %cst_110 = arith.constant 5.000000e-01 : f32
    %332 = vector.broadcast %cst_110 : f32 to vector<8x256xf32>
    %333 = arith.mulf %332, %331 : vector<8x256xf32>
    %334 = math.tanh %333 : vector<8x256xf32>
    %cst_111 = arith.constant 5.000000e-01 : f32
    %335 = vector.broadcast %cst_111 : f32 to vector<8x256xf32>
    %336 = arith.mulf %335, %334 : vector<8x256xf32>
    %cst_112 = arith.constant 5.000000e-01 : f32
    %337 = vector.broadcast %cst_112 : f32 to vector<8x256xf32>
    %338 = arith.addf %336, %337 : vector<8x256xf32>
    %339 = vector.extract_strided_slice %322 {offsets = [0, 512], sizes = [8, 256], strides = [1, 1]} : vector<8x1024xf32> to vector<8x256xf32>
    %340 = math.tanh %339 : vector<8x256xf32>
    %341 = vector.extract_strided_slice %322 {offsets = [0, 768], sizes = [8, 256], strides = [1, 1]} : vector<8x1024xf32> to vector<8x256xf32>
    %cst_113 = arith.constant 5.000000e-01 : f32
    %342 = vector.broadcast %cst_113 : f32 to vector<8x256xf32>
    %343 = arith.mulf %342, %341 : vector<8x256xf32>
    %344 = math.tanh %343 : vector<8x256xf32>
    %cst_114 = arith.constant 5.000000e-01 : f32
    %345 = vector.broadcast %cst_114 : f32 to vector<8x256xf32>
    %346 = arith.mulf %345, %344 : vector<8x256xf32>
    %cst_115 = arith.constant 5.000000e-01 : f32
    %347 = vector.broadcast %cst_115 : f32 to vector<8x256xf32>
    %348 = arith.addf %346, %347 : vector<8x256xf32>
    %349 = arith.mulf %338, %317 : vector<8x256xf32>
    %350 = arith.mulf %330, %340 : vector<8x256xf32>
    %351 = arith.addf %349, %350 : vector<8x256xf32>
    %352 = math.tanh %351 : vector<8x256xf32>
    %353 = arith.mulf %348, %352 : vector<8x256xf32>
    %c7_i32 = arith.constant 7 : i32
    %354 = vector.broadcast %c7_i32 : i32 to vector<8x1xi32>
    %355 = arith.cmpi sgt, %0, %354 : vector<8x1xi32>
    %356 = vector.shape_cast %355 : vector<8x1xi1> to vector<8x1xi1>
    %357 = vector.broadcast %356 : vector<8x1xi1> to vector<8x256xi1>
    %358 = arith.select %357, %353, %314 : vector<8x256xi1>, vector<8x256xf32>
    %359 = vector.shape_cast %355 : vector<8x1xi1> to vector<8x1xi1>
    %360 = vector.broadcast %359 : vector<8x1xi1> to vector<8x256xi1>
    %361 = arith.select %360, %351, %317 : vector<8x256xi1>, vector<8x256xf32>
    %c64 = arith.constant 64 : index
    %c0_116 = arith.constant 0 : index
    %362 = vector.load %arg8[%c64, %c0_116] : memref<128x1024xf32, #tpu.memory_space<vmem>>, vector<8x1024xf32>
    %363 = arith.truncf %358 : vector<8x256xf32> to vector<8x256xbf16>
    %c0_117 = arith.constant 0 : index
    %c0_118 = arith.constant 0 : index
    %364 = vector.load %arg3[%c0_117, %c0_118] : memref<256x1024xbf16, #tpu.memory_space<vmem>>, vector<256x1024xbf16>
    %cst_119 = arith.constant dense<0.000000e+00> : vector<8x1024xf32>
    %365 = tpu.matmul %363, %364, %cst_119 {dimension_numbers = #tpu.dot_dimension_numbers<[1], [0], [0], [1], [0, 0, 1, 1], [], []>} : vector<8x256xbf16>, vector<256x1024xbf16>, vector<8x1024xf32> -> vector<8x1024xf32>
    %366 = arith.addf %362, %365 : vector<8x1024xf32>
    %367 = vector.extract_strided_slice %366 {offsets = [0, 0], sizes = [8, 256], strides = [1, 1]} : vector<8x1024xf32> to vector<8x256xf32>
    %cst_120 = arith.constant 5.000000e-01 : f32
    %368 = vector.broadcast %cst_120 : f32 to vector<8x256xf32>
    %369 = arith.mulf %368, %367 : vector<8x256xf32>
    %370 = math.tanh %369 : vector<8x256xf32>
    %cst_121 = arith.constant 5.000000e-01 : f32
    %371 = vector.broadcast %cst_121 : f32 to vector<8x256xf32>
    %372 = arith.mulf %371, %370 : vector<8x256xf32>
    %cst_122 = arith.constant 5.000000e-01 : f32
    %373 = vector.broadcast %cst_122 : f32 to vector<8x256xf32>
    %374 = arith.addf %372, %373 : vector<8x256xf32>
    %375 = vector.extract_strided_slice %366 {offsets = [0, 256], sizes = [8, 256], strides = [1, 1]} : vector<8x1024xf32> to vector<8x256xf32>
    %cst_123 = arith.constant 5.000000e-01 : f32
    %376 = vector.broadcast %cst_123 : f32 to vector<8x256xf32>
    %377 = arith.mulf %376, %375 : vector<8x256xf32>
    %378 = math.tanh %377 : vector<8x256xf32>
    %cst_124 = arith.constant 5.000000e-01 : f32
    %379 = vector.broadcast %cst_124 : f32 to vector<8x256xf32>
    %380 = arith.mulf %379, %378 : vector<8x256xf32>
    %cst_125 = arith.constant 5.000000e-01 : f32
    %381 = vector.broadcast %cst_125 : f32 to vector<8x256xf32>
    %382 = arith.addf %380, %381 : vector<8x256xf32>
    %383 = vector.extract_strided_slice %366 {offsets = [0, 512], sizes = [8, 256], strides = [1, 1]} : vector<8x1024xf32> to vector<8x256xf32>
    %384 = math.tanh %383 : vector<8x256xf32>
    %385 = vector.extract_strided_slice %366 {offsets = [0, 768], sizes = [8, 256], strides = [1, 1]} : vector<8x1024xf32> to vector<8x256xf32>
    %cst_126 = arith.constant 5.000000e-01 : f32
    %386 = vector.broadcast %cst_126 : f32 to vector<8x256xf32>
    %387 = arith.mulf %386, %385 : vector<8x256xf32>
    %388 = math.tanh %387 : vector<8x256xf32>
    %cst_127 = arith.constant 5.000000e-01 : f32
    %389 = vector.broadcast %cst_127 : f32 to vector<8x256xf32>
    %390 = arith.mulf %389, %388 : vector<8x256xf32>
    %cst_128 = arith.constant 5.000000e-01 : f32
    %391 = vector.broadcast %cst_128 : f32 to vector<8x256xf32>
    %392 = arith.addf %390, %391 : vector<8x256xf32>
    %393 = arith.mulf %382, %361 : vector<8x256xf32>
    %394 = arith.mulf %374, %384 : vector<8x256xf32>
    %395 = arith.addf %393, %394 : vector<8x256xf32>
    %396 = math.tanh %395 : vector<8x256xf32>
    %397 = arith.mulf %392, %396 : vector<8x256xf32>
    %c8_i32 = arith.constant 8 : i32
    %398 = vector.broadcast %c8_i32 : i32 to vector<8x1xi32>
    %399 = arith.cmpi sgt, %0, %398 : vector<8x1xi32>
    %400 = vector.shape_cast %399 : vector<8x1xi1> to vector<8x1xi1>
    %401 = vector.broadcast %400 : vector<8x1xi1> to vector<8x256xi1>
    %402 = arith.select %401, %397, %358 : vector<8x256xi1>, vector<8x256xf32>
    %403 = vector.shape_cast %399 : vector<8x1xi1> to vector<8x1xi1>
    %404 = vector.broadcast %403 : vector<8x1xi1> to vector<8x256xi1>
    %405 = arith.select %404, %395, %361 : vector<8x256xi1>, vector<8x256xf32>
    %c72 = arith.constant 72 : index
    %c0_129 = arith.constant 0 : index
    %406 = vector.load %arg8[%c72, %c0_129] : memref<128x1024xf32, #tpu.memory_space<vmem>>, vector<8x1024xf32>
    %407 = arith.truncf %402 : vector<8x256xf32> to vector<8x256xbf16>
    %c0_130 = arith.constant 0 : index
    %c0_131 = arith.constant 0 : index
    %408 = vector.load %arg3[%c0_130, %c0_131] : memref<256x1024xbf16, #tpu.memory_space<vmem>>, vector<256x1024xbf16>
    %cst_132 = arith.constant dense<0.000000e+00> : vector<8x1024xf32>
    %409 = tpu.matmul %407, %408, %cst_132 {dimension_numbers = #tpu.dot_dimension_numbers<[1], [0], [0], [1], [0, 0, 1, 1], [], []>} : vector<8x256xbf16>, vector<256x1024xbf16>, vector<8x1024xf32> -> vector<8x1024xf32>
    %410 = arith.addf %406, %409 : vector<8x1024xf32>
    %411 = vector.extract_strided_slice %410 {offsets = [0, 0], sizes = [8, 256], strides = [1, 1]} : vector<8x1024xf32> to vector<8x256xf32>
    %cst_133 = arith.constant 5.000000e-01 : f32
    %412 = vector.broadcast %cst_133 : f32 to vector<8x256xf32>
    %413 = arith.mulf %412, %411 : vector<8x256xf32>
    %414 = math.tanh %413 : vector<8x256xf32>
    %cst_134 = arith.constant 5.000000e-01 : f32
    %415 = vector.broadcast %cst_134 : f32 to vector<8x256xf32>
    %416 = arith.mulf %415, %414 : vector<8x256xf32>
    %cst_135 = arith.constant 5.000000e-01 : f32
    %417 = vector.broadcast %cst_135 : f32 to vector<8x256xf32>
    %418 = arith.addf %416, %417 : vector<8x256xf32>
    %419 = vector.extract_strided_slice %410 {offsets = [0, 256], sizes = [8, 256], strides = [1, 1]} : vector<8x1024xf32> to vector<8x256xf32>
    %cst_136 = arith.constant 5.000000e-01 : f32
    %420 = vector.broadcast %cst_136 : f32 to vector<8x256xf32>
    %421 = arith.mulf %420, %419 : vector<8x256xf32>
    %422 = math.tanh %421 : vector<8x256xf32>
    %cst_137 = arith.constant 5.000000e-01 : f32
    %423 = vector.broadcast %cst_137 : f32 to vector<8x256xf32>
    %424 = arith.mulf %423, %422 : vector<8x256xf32>
    %cst_138 = arith.constant 5.000000e-01 : f32
    %425 = vector.broadcast %cst_138 : f32 to vector<8x256xf32>
    %426 = arith.addf %424, %425 : vector<8x256xf32>
    %427 = vector.extract_strided_slice %410 {offsets = [0, 512], sizes = [8, 256], strides = [1, 1]} : vector<8x1024xf32> to vector<8x256xf32>
    %428 = math.tanh %427 : vector<8x256xf32>
    %429 = vector.extract_strided_slice %410 {offsets = [0, 768], sizes = [8, 256], strides = [1, 1]} : vector<8x1024xf32> to vector<8x256xf32>
    %cst_139 = arith.constant 5.000000e-01 : f32
    %430 = vector.broadcast %cst_139 : f32 to vector<8x256xf32>
    %431 = arith.mulf %430, %429 : vector<8x256xf32>
    %432 = math.tanh %431 : vector<8x256xf32>
    %cst_140 = arith.constant 5.000000e-01 : f32
    %433 = vector.broadcast %cst_140 : f32 to vector<8x256xf32>
    %434 = arith.mulf %433, %432 : vector<8x256xf32>
    %cst_141 = arith.constant 5.000000e-01 : f32
    %435 = vector.broadcast %cst_141 : f32 to vector<8x256xf32>
    %436 = arith.addf %434, %435 : vector<8x256xf32>
    %437 = arith.mulf %426, %405 : vector<8x256xf32>
    %438 = arith.mulf %418, %428 : vector<8x256xf32>
    %439 = arith.addf %437, %438 : vector<8x256xf32>
    %440 = math.tanh %439 : vector<8x256xf32>
    %441 = arith.mulf %436, %440 : vector<8x256xf32>
    %c9_i32 = arith.constant 9 : i32
    %442 = vector.broadcast %c9_i32 : i32 to vector<8x1xi32>
    %443 = arith.cmpi sgt, %0, %442 : vector<8x1xi32>
    %444 = vector.shape_cast %443 : vector<8x1xi1> to vector<8x1xi1>
    %445 = vector.broadcast %444 : vector<8x1xi1> to vector<8x256xi1>
    %446 = arith.select %445, %441, %402 : vector<8x256xi1>, vector<8x256xf32>
    %447 = vector.shape_cast %443 : vector<8x1xi1> to vector<8x1xi1>
    %448 = vector.broadcast %447 : vector<8x1xi1> to vector<8x256xi1>
    %449 = arith.select %448, %439, %405 : vector<8x256xi1>, vector<8x256xf32>
    %c80 = arith.constant 80 : index
    %c0_142 = arith.constant 0 : index
    %450 = vector.load %arg8[%c80, %c0_142] : memref<128x1024xf32, #tpu.memory_space<vmem>>, vector<8x1024xf32>
    %451 = arith.truncf %446 : vector<8x256xf32> to vector<8x256xbf16>
    %c0_143 = arith.constant 0 : index
    %c0_144 = arith.constant 0 : index
    %452 = vector.load %arg3[%c0_143, %c0_144] : memref<256x1024xbf16, #tpu.memory_space<vmem>>, vector<256x1024xbf16>
    %cst_145 = arith.constant dense<0.000000e+00> : vector<8x1024xf32>
    %453 = tpu.matmul %451, %452, %cst_145 {dimension_numbers = #tpu.dot_dimension_numbers<[1], [0], [0], [1], [0, 0, 1, 1], [], []>} : vector<8x256xbf16>, vector<256x1024xbf16>, vector<8x1024xf32> -> vector<8x1024xf32>
    %454 = arith.addf %450, %453 : vector<8x1024xf32>
    %455 = vector.extract_strided_slice %454 {offsets = [0, 0], sizes = [8, 256], strides = [1, 1]} : vector<8x1024xf32> to vector<8x256xf32>
    %cst_146 = arith.constant 5.000000e-01 : f32
    %456 = vector.broadcast %cst_146 : f32 to vector<8x256xf32>
    %457 = arith.mulf %456, %455 : vector<8x256xf32>
    %458 = math.tanh %457 : vector<8x256xf32>
    %cst_147 = arith.constant 5.000000e-01 : f32
    %459 = vector.broadcast %cst_147 : f32 to vector<8x256xf32>
    %460 = arith.mulf %459, %458 : vector<8x256xf32>
    %cst_148 = arith.constant 5.000000e-01 : f32
    %461 = vector.broadcast %cst_148 : f32 to vector<8x256xf32>
    %462 = arith.addf %460, %461 : vector<8x256xf32>
    %463 = vector.extract_strided_slice %454 {offsets = [0, 256], sizes = [8, 256], strides = [1, 1]} : vector<8x1024xf32> to vector<8x256xf32>
    %cst_149 = arith.constant 5.000000e-01 : f32
    %464 = vector.broadcast %cst_149 : f32 to vector<8x256xf32>
    %465 = arith.mulf %464, %463 : vector<8x256xf32>
    %466 = math.tanh %465 : vector<8x256xf32>
    %cst_150 = arith.constant 5.000000e-01 : f32
    %467 = vector.broadcast %cst_150 : f32 to vector<8x256xf32>
    %468 = arith.mulf %467, %466 : vector<8x256xf32>
    %cst_151 = arith.constant 5.000000e-01 : f32
    %469 = vector.broadcast %cst_151 : f32 to vector<8x256xf32>
    %470 = arith.addf %468, %469 : vector<8x256xf32>
    %471 = vector.extract_strided_slice %454 {offsets = [0, 512], sizes = [8, 256], strides = [1, 1]} : vector<8x1024xf32> to vector<8x256xf32>
    %472 = math.tanh %471 : vector<8x256xf32>
    %473 = vector.extract_strided_slice %454 {offsets = [0, 768], sizes = [8, 256], strides = [1, 1]} : vector<8x1024xf32> to vector<8x256xf32>
    %cst_152 = arith.constant 5.000000e-01 : f32
    %474 = vector.broadcast %cst_152 : f32 to vector<8x256xf32>
    %475 = arith.mulf %474, %473 : vector<8x256xf32>
    %476 = math.tanh %475 : vector<8x256xf32>
    %cst_153 = arith.constant 5.000000e-01 : f32
    %477 = vector.broadcast %cst_153 : f32 to vector<8x256xf32>
    %478 = arith.mulf %477, %476 : vector<8x256xf32>
    %cst_154 = arith.constant 5.000000e-01 : f32
    %479 = vector.broadcast %cst_154 : f32 to vector<8x256xf32>
    %480 = arith.addf %478, %479 : vector<8x256xf32>
    %481 = arith.mulf %470, %449 : vector<8x256xf32>
    %482 = arith.mulf %462, %472 : vector<8x256xf32>
    %483 = arith.addf %481, %482 : vector<8x256xf32>
    %484 = math.tanh %483 : vector<8x256xf32>
    %485 = arith.mulf %480, %484 : vector<8x256xf32>
    %c10_i32 = arith.constant 10 : i32
    %486 = vector.broadcast %c10_i32 : i32 to vector<8x1xi32>
    %487 = arith.cmpi sgt, %0, %486 : vector<8x1xi32>
    %488 = vector.shape_cast %487 : vector<8x1xi1> to vector<8x1xi1>
    %489 = vector.broadcast %488 : vector<8x1xi1> to vector<8x256xi1>
    %490 = arith.select %489, %485, %446 : vector<8x256xi1>, vector<8x256xf32>
    %491 = vector.shape_cast %487 : vector<8x1xi1> to vector<8x1xi1>
    %492 = vector.broadcast %491 : vector<8x1xi1> to vector<8x256xi1>
    %493 = arith.select %492, %483, %449 : vector<8x256xi1>, vector<8x256xf32>
    %c88 = arith.constant 88 : index
    %c0_155 = arith.constant 0 : index
    %494 = vector.load %arg8[%c88, %c0_155] : memref<128x1024xf32, #tpu.memory_space<vmem>>, vector<8x1024xf32>
    %495 = arith.truncf %490 : vector<8x256xf32> to vector<8x256xbf16>
    %c0_156 = arith.constant 0 : index
    %c0_157 = arith.constant 0 : index
    %496 = vector.load %arg3[%c0_156, %c0_157] : memref<256x1024xbf16, #tpu.memory_space<vmem>>, vector<256x1024xbf16>
    %cst_158 = arith.constant dense<0.000000e+00> : vector<8x1024xf32>
    %497 = tpu.matmul %495, %496, %cst_158 {dimension_numbers = #tpu.dot_dimension_numbers<[1], [0], [0], [1], [0, 0, 1, 1], [], []>} : vector<8x256xbf16>, vector<256x1024xbf16>, vector<8x1024xf32> -> vector<8x1024xf32>
    %498 = arith.addf %494, %497 : vector<8x1024xf32>
    %499 = vector.extract_strided_slice %498 {offsets = [0, 0], sizes = [8, 256], strides = [1, 1]} : vector<8x1024xf32> to vector<8x256xf32>
    %cst_159 = arith.constant 5.000000e-01 : f32
    %500 = vector.broadcast %cst_159 : f32 to vector<8x256xf32>
    %501 = arith.mulf %500, %499 : vector<8x256xf32>
    %502 = math.tanh %501 : vector<8x256xf32>
    %cst_160 = arith.constant 5.000000e-01 : f32
    %503 = vector.broadcast %cst_160 : f32 to vector<8x256xf32>
    %504 = arith.mulf %503, %502 : vector<8x256xf32>
    %cst_161 = arith.constant 5.000000e-01 : f32
    %505 = vector.broadcast %cst_161 : f32 to vector<8x256xf32>
    %506 = arith.addf %504, %505 : vector<8x256xf32>
    %507 = vector.extract_strided_slice %498 {offsets = [0, 256], sizes = [8, 256], strides = [1, 1]} : vector<8x1024xf32> to vector<8x256xf32>
    %cst_162 = arith.constant 5.000000e-01 : f32
    %508 = vector.broadcast %cst_162 : f32 to vector<8x256xf32>
    %509 = arith.mulf %508, %507 : vector<8x256xf32>
    %510 = math.tanh %509 : vector<8x256xf32>
    %cst_163 = arith.constant 5.000000e-01 : f32
    %511 = vector.broadcast %cst_163 : f32 to vector<8x256xf32>
    %512 = arith.mulf %511, %510 : vector<8x256xf32>
    %cst_164 = arith.constant 5.000000e-01 : f32
    %513 = vector.broadcast %cst_164 : f32 to vector<8x256xf32>
    %514 = arith.addf %512, %513 : vector<8x256xf32>
    %515 = vector.extract_strided_slice %498 {offsets = [0, 512], sizes = [8, 256], strides = [1, 1]} : vector<8x1024xf32> to vector<8x256xf32>
    %516 = math.tanh %515 : vector<8x256xf32>
    %517 = vector.extract_strided_slice %498 {offsets = [0, 768], sizes = [8, 256], strides = [1, 1]} : vector<8x1024xf32> to vector<8x256xf32>
    %cst_165 = arith.constant 5.000000e-01 : f32
    %518 = vector.broadcast %cst_165 : f32 to vector<8x256xf32>
    %519 = arith.mulf %518, %517 : vector<8x256xf32>
    %520 = math.tanh %519 : vector<8x256xf32>
    %cst_166 = arith.constant 5.000000e-01 : f32
    %521 = vector.broadcast %cst_166 : f32 to vector<8x256xf32>
    %522 = arith.mulf %521, %520 : vector<8x256xf32>
    %cst_167 = arith.constant 5.000000e-01 : f32
    %523 = vector.broadcast %cst_167 : f32 to vector<8x256xf32>
    %524 = arith.addf %522, %523 : vector<8x256xf32>
    %525 = arith.mulf %514, %493 : vector<8x256xf32>
    %526 = arith.mulf %506, %516 : vector<8x256xf32>
    %527 = arith.addf %525, %526 : vector<8x256xf32>
    %528 = math.tanh %527 : vector<8x256xf32>
    %529 = arith.mulf %524, %528 : vector<8x256xf32>
    %c11_i32 = arith.constant 11 : i32
    %530 = vector.broadcast %c11_i32 : i32 to vector<8x1xi32>
    %531 = arith.cmpi sgt, %0, %530 : vector<8x1xi32>
    %532 = vector.shape_cast %531 : vector<8x1xi1> to vector<8x1xi1>
    %533 = vector.broadcast %532 : vector<8x1xi1> to vector<8x256xi1>
    %534 = arith.select %533, %529, %490 : vector<8x256xi1>, vector<8x256xf32>
    %535 = vector.shape_cast %531 : vector<8x1xi1> to vector<8x1xi1>
    %536 = vector.broadcast %535 : vector<8x1xi1> to vector<8x256xi1>
    %537 = arith.select %536, %527, %493 : vector<8x256xi1>, vector<8x256xf32>
    %c96 = arith.constant 96 : index
    %c0_168 = arith.constant 0 : index
    %538 = vector.load %arg8[%c96, %c0_168] : memref<128x1024xf32, #tpu.memory_space<vmem>>, vector<8x1024xf32>
    %539 = arith.truncf %534 : vector<8x256xf32> to vector<8x256xbf16>
    %c0_169 = arith.constant 0 : index
    %c0_170 = arith.constant 0 : index
    %540 = vector.load %arg3[%c0_169, %c0_170] : memref<256x1024xbf16, #tpu.memory_space<vmem>>, vector<256x1024xbf16>
    %cst_171 = arith.constant dense<0.000000e+00> : vector<8x1024xf32>
    %541 = tpu.matmul %539, %540, %cst_171 {dimension_numbers = #tpu.dot_dimension_numbers<[1], [0], [0], [1], [0, 0, 1, 1], [], []>} : vector<8x256xbf16>, vector<256x1024xbf16>, vector<8x1024xf32> -> vector<8x1024xf32>
    %542 = arith.addf %538, %541 : vector<8x1024xf32>
    %543 = vector.extract_strided_slice %542 {offsets = [0, 0], sizes = [8, 256], strides = [1, 1]} : vector<8x1024xf32> to vector<8x256xf32>
    %cst_172 = arith.constant 5.000000e-01 : f32
    %544 = vector.broadcast %cst_172 : f32 to vector<8x256xf32>
    %545 = arith.mulf %544, %543 : vector<8x256xf32>
    %546 = math.tanh %545 : vector<8x256xf32>
    %cst_173 = arith.constant 5.000000e-01 : f32
    %547 = vector.broadcast %cst_173 : f32 to vector<8x256xf32>
    %548 = arith.mulf %547, %546 : vector<8x256xf32>
    %cst_174 = arith.constant 5.000000e-01 : f32
    %549 = vector.broadcast %cst_174 : f32 to vector<8x256xf32>
    %550 = arith.addf %548, %549 : vector<8x256xf32>
    %551 = vector.extract_strided_slice %542 {offsets = [0, 256], sizes = [8, 256], strides = [1, 1]} : vector<8x1024xf32> to vector<8x256xf32>
    %cst_175 = arith.constant 5.000000e-01 : f32
    %552 = vector.broadcast %cst_175 : f32 to vector<8x256xf32>
    %553 = arith.mulf %552, %551 : vector<8x256xf32>
    %554 = math.tanh %553 : vector<8x256xf32>
    %cst_176 = arith.constant 5.000000e-01 : f32
    %555 = vector.broadcast %cst_176 : f32 to vector<8x256xf32>
    %556 = arith.mulf %555, %554 : vector<8x256xf32>
    %cst_177 = arith.constant 5.000000e-01 : f32
    %557 = vector.broadcast %cst_177 : f32 to vector<8x256xf32>
    %558 = arith.addf %556, %557 : vector<8x256xf32>
    %559 = vector.extract_strided_slice %542 {offsets = [0, 512], sizes = [8, 256], strides = [1, 1]} : vector<8x1024xf32> to vector<8x256xf32>
    %560 = math.tanh %559 : vector<8x256xf32>
    %561 = vector.extract_strided_slice %542 {offsets = [0, 768], sizes = [8, 256], strides = [1, 1]} : vector<8x1024xf32> to vector<8x256xf32>
    %cst_178 = arith.constant 5.000000e-01 : f32
    %562 = vector.broadcast %cst_178 : f32 to vector<8x256xf32>
    %563 = arith.mulf %562, %561 : vector<8x256xf32>
    %564 = math.tanh %563 : vector<8x256xf32>
    %cst_179 = arith.constant 5.000000e-01 : f32
    %565 = vector.broadcast %cst_179 : f32 to vector<8x256xf32>
    %566 = arith.mulf %565, %564 : vector<8x256xf32>
    %cst_180 = arith.constant 5.000000e-01 : f32
    %567 = vector.broadcast %cst_180 : f32 to vector<8x256xf32>
    %568 = arith.addf %566, %567 : vector<8x256xf32>
    %569 = arith.mulf %558, %537 : vector<8x256xf32>
    %570 = arith.mulf %550, %560 : vector<8x256xf32>
    %571 = arith.addf %569, %570 : vector<8x256xf32>
    %572 = math.tanh %571 : vector<8x256xf32>
    %573 = arith.mulf %568, %572 : vector<8x256xf32>
    %c12_i32 = arith.constant 12 : i32
    %574 = vector.broadcast %c12_i32 : i32 to vector<8x1xi32>
    %575 = arith.cmpi sgt, %0, %574 : vector<8x1xi32>
    %576 = vector.shape_cast %575 : vector<8x1xi1> to vector<8x1xi1>
    %577 = vector.broadcast %576 : vector<8x1xi1> to vector<8x256xi1>
    %578 = arith.select %577, %573, %534 : vector<8x256xi1>, vector<8x256xf32>
    %579 = vector.shape_cast %575 : vector<8x1xi1> to vector<8x1xi1>
    %580 = vector.broadcast %579 : vector<8x1xi1> to vector<8x256xi1>
    %581 = arith.select %580, %571, %537 : vector<8x256xi1>, vector<8x256xf32>
    %c104 = arith.constant 104 : index
    %c0_181 = arith.constant 0 : index
    %582 = vector.load %arg8[%c104, %c0_181] : memref<128x1024xf32, #tpu.memory_space<vmem>>, vector<8x1024xf32>
    %583 = arith.truncf %578 : vector<8x256xf32> to vector<8x256xbf16>
    %c0_182 = arith.constant 0 : index
    %c0_183 = arith.constant 0 : index
    %584 = vector.load %arg3[%c0_182, %c0_183] : memref<256x1024xbf16, #tpu.memory_space<vmem>>, vector<256x1024xbf16>
    %cst_184 = arith.constant dense<0.000000e+00> : vector<8x1024xf32>
    %585 = tpu.matmul %583, %584, %cst_184 {dimension_numbers = #tpu.dot_dimension_numbers<[1], [0], [0], [1], [0, 0, 1, 1], [], []>} : vector<8x256xbf16>, vector<256x1024xbf16>, vector<8x1024xf32> -> vector<8x1024xf32>
    %586 = arith.addf %582, %585 : vector<8x1024xf32>
    %587 = vector.extract_strided_slice %586 {offsets = [0, 0], sizes = [8, 256], strides = [1, 1]} : vector<8x1024xf32> to vector<8x256xf32>
    %cst_185 = arith.constant 5.000000e-01 : f32
    %588 = vector.broadcast %cst_185 : f32 to vector<8x256xf32>
    %589 = arith.mulf %588, %587 : vector<8x256xf32>
    %590 = math.tanh %589 : vector<8x256xf32>
    %cst_186 = arith.constant 5.000000e-01 : f32
    %591 = vector.broadcast %cst_186 : f32 to vector<8x256xf32>
    %592 = arith.mulf %591, %590 : vector<8x256xf32>
    %cst_187 = arith.constant 5.000000e-01 : f32
    %593 = vector.broadcast %cst_187 : f32 to vector<8x256xf32>
    %594 = arith.addf %592, %593 : vector<8x256xf32>
    %595 = vector.extract_strided_slice %586 {offsets = [0, 256], sizes = [8, 256], strides = [1, 1]} : vector<8x1024xf32> to vector<8x256xf32>
    %cst_188 = arith.constant 5.000000e-01 : f32
    %596 = vector.broadcast %cst_188 : f32 to vector<8x256xf32>
    %597 = arith.mulf %596, %595 : vector<8x256xf32>
    %598 = math.tanh %597 : vector<8x256xf32>
    %cst_189 = arith.constant 5.000000e-01 : f32
    %599 = vector.broadcast %cst_189 : f32 to vector<8x256xf32>
    %600 = arith.mulf %599, %598 : vector<8x256xf32>
    %cst_190 = arith.constant 5.000000e-01 : f32
    %601 = vector.broadcast %cst_190 : f32 to vector<8x256xf32>
    %602 = arith.addf %600, %601 : vector<8x256xf32>
    %603 = vector.extract_strided_slice %586 {offsets = [0, 512], sizes = [8, 256], strides = [1, 1]} : vector<8x1024xf32> to vector<8x256xf32>
    %604 = math.tanh %603 : vector<8x256xf32>
    %605 = vector.extract_strided_slice %586 {offsets = [0, 768], sizes = [8, 256], strides = [1, 1]} : vector<8x1024xf32> to vector<8x256xf32>
    %cst_191 = arith.constant 5.000000e-01 : f32
    %606 = vector.broadcast %cst_191 : f32 to vector<8x256xf32>
    %607 = arith.mulf %606, %605 : vector<8x256xf32>
    %608 = math.tanh %607 : vector<8x256xf32>
    %cst_192 = arith.constant 5.000000e-01 : f32
    %609 = vector.broadcast %cst_192 : f32 to vector<8x256xf32>
    %610 = arith.mulf %609, %608 : vector<8x256xf32>
    %cst_193 = arith.constant 5.000000e-01 : f32
    %611 = vector.broadcast %cst_193 : f32 to vector<8x256xf32>
    %612 = arith.addf %610, %611 : vector<8x256xf32>
    %613 = arith.mulf %602, %581 : vector<8x256xf32>
    %614 = arith.mulf %594, %604 : vector<8x256xf32>
    %615 = arith.addf %613, %614 : vector<8x256xf32>
    %616 = math.tanh %615 : vector<8x256xf32>
    %617 = arith.mulf %612, %616 : vector<8x256xf32>
    %c13_i32 = arith.constant 13 : i32
    %618 = vector.broadcast %c13_i32 : i32 to vector<8x1xi32>
    %619 = arith.cmpi sgt, %0, %618 : vector<8x1xi32>
    %620 = vector.shape_cast %619 : vector<8x1xi1> to vector<8x1xi1>
    %621 = vector.broadcast %620 : vector<8x1xi1> to vector<8x256xi1>
    %622 = arith.select %621, %617, %578 : vector<8x256xi1>, vector<8x256xf32>
    %623 = vector.shape_cast %619 : vector<8x1xi1> to vector<8x1xi1>
    %624 = vector.broadcast %623 : vector<8x1xi1> to vector<8x256xi1>
    %625 = arith.select %624, %615, %581 : vector<8x256xi1>, vector<8x256xf32>
    %c112 = arith.constant 112 : index
    %c0_194 = arith.constant 0 : index
    %626 = vector.load %arg8[%c112, %c0_194] : memref<128x1024xf32, #tpu.memory_space<vmem>>, vector<8x1024xf32>
    %627 = arith.truncf %622 : vector<8x256xf32> to vector<8x256xbf16>
    %c0_195 = arith.constant 0 : index
    %c0_196 = arith.constant 0 : index
    %628 = vector.load %arg3[%c0_195, %c0_196] : memref<256x1024xbf16, #tpu.memory_space<vmem>>, vector<256x1024xbf16>
    %cst_197 = arith.constant dense<0.000000e+00> : vector<8x1024xf32>
    %629 = tpu.matmul %627, %628, %cst_197 {dimension_numbers = #tpu.dot_dimension_numbers<[1], [0], [0], [1], [0, 0, 1, 1], [], []>} : vector<8x256xbf16>, vector<256x1024xbf16>, vector<8x1024xf32> -> vector<8x1024xf32>
    %630 = arith.addf %626, %629 : vector<8x1024xf32>
    %631 = vector.extract_strided_slice %630 {offsets = [0, 0], sizes = [8, 256], strides = [1, 1]} : vector<8x1024xf32> to vector<8x256xf32>
    %cst_198 = arith.constant 5.000000e-01 : f32
    %632 = vector.broadcast %cst_198 : f32 to vector<8x256xf32>
    %633 = arith.mulf %632, %631 : vector<8x256xf32>
    %634 = math.tanh %633 : vector<8x256xf32>
    %cst_199 = arith.constant 5.000000e-01 : f32
    %635 = vector.broadcast %cst_199 : f32 to vector<8x256xf32>
    %636 = arith.mulf %635, %634 : vector<8x256xf32>
    %cst_200 = arith.constant 5.000000e-01 : f32
    %637 = vector.broadcast %cst_200 : f32 to vector<8x256xf32>
    %638 = arith.addf %636, %637 : vector<8x256xf32>
    %639 = vector.extract_strided_slice %630 {offsets = [0, 256], sizes = [8, 256], strides = [1, 1]} : vector<8x1024xf32> to vector<8x256xf32>
    %cst_201 = arith.constant 5.000000e-01 : f32
    %640 = vector.broadcast %cst_201 : f32 to vector<8x256xf32>
    %641 = arith.mulf %640, %639 : vector<8x256xf32>
    %642 = math.tanh %641 : vector<8x256xf32>
    %cst_202 = arith.constant 5.000000e-01 : f32
    %643 = vector.broadcast %cst_202 : f32 to vector<8x256xf32>
    %644 = arith.mulf %643, %642 : vector<8x256xf32>
    %cst_203 = arith.constant 5.000000e-01 : f32
    %645 = vector.broadcast %cst_203 : f32 to vector<8x256xf32>
    %646 = arith.addf %644, %645 : vector<8x256xf32>
    %647 = vector.extract_strided_slice %630 {offsets = [0, 512], sizes = [8, 256], strides = [1, 1]} : vector<8x1024xf32> to vector<8x256xf32>
    %648 = math.tanh %647 : vector<8x256xf32>
    %649 = vector.extract_strided_slice %630 {offsets = [0, 768], sizes = [8, 256], strides = [1, 1]} : vector<8x1024xf32> to vector<8x256xf32>
    %cst_204 = arith.constant 5.000000e-01 : f32
    %650 = vector.broadcast %cst_204 : f32 to vector<8x256xf32>
    %651 = arith.mulf %650, %649 : vector<8x256xf32>
    %652 = math.tanh %651 : vector<8x256xf32>
    %cst_205 = arith.constant 5.000000e-01 : f32
    %653 = vector.broadcast %cst_205 : f32 to vector<8x256xf32>
    %654 = arith.mulf %653, %652 : vector<8x256xf32>
    %cst_206 = arith.constant 5.000000e-01 : f32
    %655 = vector.broadcast %cst_206 : f32 to vector<8x256xf32>
    %656 = arith.addf %654, %655 : vector<8x256xf32>
    %657 = arith.mulf %646, %625 : vector<8x256xf32>
    %658 = arith.mulf %638, %648 : vector<8x256xf32>
    %659 = arith.addf %657, %658 : vector<8x256xf32>
    %660 = math.tanh %659 : vector<8x256xf32>
    %661 = arith.mulf %656, %660 : vector<8x256xf32>
    %c14_i32 = arith.constant 14 : i32
    %662 = vector.broadcast %c14_i32 : i32 to vector<8x1xi32>
    %663 = arith.cmpi sgt, %0, %662 : vector<8x1xi32>
    %664 = vector.shape_cast %663 : vector<8x1xi1> to vector<8x1xi1>
    %665 = vector.broadcast %664 : vector<8x1xi1> to vector<8x256xi1>
    %666 = arith.select %665, %661, %622 : vector<8x256xi1>, vector<8x256xf32>
    %667 = vector.shape_cast %663 : vector<8x1xi1> to vector<8x1xi1>
    %668 = vector.broadcast %667 : vector<8x1xi1> to vector<8x256xi1>
    %669 = arith.select %668, %659, %625 : vector<8x256xi1>, vector<8x256xf32>
    %c120 = arith.constant 120 : index
    %c0_207 = arith.constant 0 : index
    %670 = vector.load %arg8[%c120, %c0_207] : memref<128x1024xf32, #tpu.memory_space<vmem>>, vector<8x1024xf32>
    %671 = arith.truncf %666 : vector<8x256xf32> to vector<8x256xbf16>
    %c0_208 = arith.constant 0 : index
    %c0_209 = arith.constant 0 : index
    %672 = vector.load %arg3[%c0_208, %c0_209] : memref<256x1024xbf16, #tpu.memory_space<vmem>>, vector<256x1024xbf16>
    %cst_210 = arith.constant dense<0.000000e+00> : vector<8x1024xf32>
    %673 = tpu.matmul %671, %672, %cst_210 {dimension_numbers = #tpu.dot_dimension_numbers<[1], [0], [0], [1], [0, 0, 1, 1], [], []>} : vector<8x256xbf16>, vector<256x1024xbf16>, vector<8x1024xf32> -> vector<8x1024xf32>
    %674 = arith.addf %670, %673 : vector<8x1024xf32>
    %675 = vector.extract_strided_slice %674 {offsets = [0, 0], sizes = [8, 256], strides = [1, 1]} : vector<8x1024xf32> to vector<8x256xf32>
    %cst_211 = arith.constant 5.000000e-01 : f32
    %676 = vector.broadcast %cst_211 : f32 to vector<8x256xf32>
    %677 = arith.mulf %676, %675 : vector<8x256xf32>
    %678 = math.tanh %677 : vector<8x256xf32>
    %cst_212 = arith.constant 5.000000e-01 : f32
    %679 = vector.broadcast %cst_212 : f32 to vector<8x256xf32>
    %680 = arith.mulf %679, %678 : vector<8x256xf32>
    %cst_213 = arith.constant 5.000000e-01 : f32
    %681 = vector.broadcast %cst_213 : f32 to vector<8x256xf32>
    %682 = arith.addf %680, %681 : vector<8x256xf32>
    %683 = vector.extract_strided_slice %674 {offsets = [0, 256], sizes = [8, 256], strides = [1, 1]} : vector<8x1024xf32> to vector<8x256xf32>
    %cst_214 = arith.constant 5.000000e-01 : f32
    %684 = vector.broadcast %cst_214 : f32 to vector<8x256xf32>
    %685 = arith.mulf %684, %683 : vector<8x256xf32>
    %686 = math.tanh %685 : vector<8x256xf32>
    %cst_215 = arith.constant 5.000000e-01 : f32
    %687 = vector.broadcast %cst_215 : f32 to vector<8x256xf32>
    %688 = arith.mulf %687, %686 : vector<8x256xf32>
    %cst_216 = arith.constant 5.000000e-01 : f32
    %689 = vector.broadcast %cst_216 : f32 to vector<8x256xf32>
    %690 = arith.addf %688, %689 : vector<8x256xf32>
    %691 = vector.extract_strided_slice %674 {offsets = [0, 512], sizes = [8, 256], strides = [1, 1]} : vector<8x1024xf32> to vector<8x256xf32>
    %692 = math.tanh %691 : vector<8x256xf32>
    %693 = vector.extract_strided_slice %674 {offsets = [0, 768], sizes = [8, 256], strides = [1, 1]} : vector<8x1024xf32> to vector<8x256xf32>
    %cst_217 = arith.constant 5.000000e-01 : f32
    %694 = vector.broadcast %cst_217 : f32 to vector<8x256xf32>
    %695 = arith.mulf %694, %693 : vector<8x256xf32>
    %696 = math.tanh %695 : vector<8x256xf32>
    %cst_218 = arith.constant 5.000000e-01 : f32
    %697 = vector.broadcast %cst_218 : f32 to vector<8x256xf32>
    %698 = arith.mulf %697, %696 : vector<8x256xf32>
    %cst_219 = arith.constant 5.000000e-01 : f32
    %699 = vector.broadcast %cst_219 : f32 to vector<8x256xf32>
    %700 = arith.addf %698, %699 : vector<8x256xf32>
    %701 = arith.mulf %690, %669 : vector<8x256xf32>
    %702 = arith.mulf %682, %692 : vector<8x256xf32>
    %703 = arith.addf %701, %702 : vector<8x256xf32>
    %704 = math.tanh %703 : vector<8x256xf32>
    %705 = arith.mulf %700, %704 : vector<8x256xf32>
    %c15_i32 = arith.constant 15 : i32
    %706 = vector.broadcast %c15_i32 : i32 to vector<8x1xi32>
    %707 = arith.cmpi sgt, %0, %706 : vector<8x1xi32>
    %708 = vector.shape_cast %707 : vector<8x1xi1> to vector<8x1xi1>
    %709 = vector.broadcast %708 : vector<8x1xi1> to vector<8x256xi1>
    %710 = arith.select %709, %705, %666 : vector<8x256xi1>, vector<8x256xf32>
    %cst_220 = arith.constant 0.000000e+00 : f32
    %711 = vector.broadcast %cst_220 : f32 to vector<8x256xf32>
    %712 = arith.maximumf %710, %711 : vector<8x256xf32>
    %713 = arith.truncf %712 : vector<8x256xf32> to vector<8x256xbf16>
    %c0_221 = arith.constant 0 : index
    %c0_222 = arith.constant 0 : index
    %714 = vector.load %arg5[%c0_221, %c0_222] : memref<256x128xbf16, #tpu.memory_space<vmem>>, vector<256x128xbf16>
    %cst_223 = arith.constant dense<0.000000e+00> : vector<8x128xf32>
    %715 = tpu.matmul %713, %714, %cst_223 {dimension_numbers = #tpu.dot_dimension_numbers<[1], [0], [0], [1], [0, 0, 1, 1], [], []>} : vector<8x256xbf16>, vector<256x128xbf16>, vector<8x128xf32> -> vector<8x128xf32>
    %c0_224 = arith.constant 0 : index
    %c0_225 = arith.constant 0 : index
    %716 = vector.load %arg6[%c0_224, %c0_225] : memref<1x128xf32, #tpu.memory_space<vmem>>, vector<1x128xf32>
    %717 = vector.broadcast %716 : vector<1x128xf32> to vector<8x128xf32>
    %718 = arith.addf %715, %717 : vector<8x128xf32>
    %c0_226 = arith.constant 0 : index
    %c0_227 = arith.constant 0 : index
    %719 = vector.load %arg7[%c0_226, %c0_227] : memref<8x128xf32, #tpu.memory_space<vmem>>, vector<8x128xf32>
    tpu.vector_store %arg7[%c0_226, %c0_227], %718 {strides = array<i32>} : memref<8x128xf32, #tpu.memory_space<vmem>>, vector<8x128xf32>,
    return
  }
}

</mosaic_0001>

<llo_original>
// kernel: sat1_lstm_forward.1
$region0: #{sat1_lstm_forward.1}
  #allocation0 [shape = 'u32[]', space=smem, size = 0x4, offset = 0x4, fixed_abs, tag = 'smem constant byte address 0x4 - core index']
  #allocation1 [shape = 'u32[144,128]{1,0:T(1,128)}', space=vmem, size = 0x12000, scoped, tag = 'internal scratch']
  #allocation2 [shape = 'f32[128,1024]{1,0:T(8,128)}', space=vmem, size = 0x80000, scoped, tag = 'scratch operand']
  %s0 = inlined_call_operand.hbm [shape: bf16[128,128], index: 0, kind: input, shape index: {}]
  %s1 = inlined_call_operand.hbm [shape: s32[8,1], index: 1, kind: input, shape index: {}]
  %s2 = inlined_call_operand.hbm [shape: bf16[128,1024], index: 2, kind: input, shape index: {}]
  %s3 = inlined_call_operand.hbm [shape: bf16[256,1024], index: 3, kind: input, shape index: {}]
  %s4 = inlined_call_operand.hbm [shape: f32[1,1024], index: 4, kind: input, shape index: {}]
  %s5 = inlined_call_operand.hbm [shape: bf16[256,128], index: 5, kind: input, shape index: {}]
  %s6 = inlined_call_operand.hbm [shape: f32[1,128], index: 6, kind: input, shape index: {}]
  %s7 = inlined_call_operand.hbm [shape: f32[8,128], index: 7, kind: output, shape index: {}]
  %s8 = sld [smem:[#allocation0]]
  $region66: #{sat1_lstm_forward.1} parent=0
    _
  %s10 = ssub.s32 1, %s8
  %s11 = scalar_select 0, %s10, %s8
  $region1: #{sat1_lstm_forward.1} parent=0
    #allocation3 [shape = 'u8[32768]{0}', space=vmem, size = 0x8000, scoped, tag = 'input window, operand 0, single buffered']
    #allocation4 [shape = 's32[1]{0}', space=sflag, size = 0x4, scoped, tag = 'scoped memory for sat1_lstm_forward.1']
    #allocation5 [shape = 's32[1]{0}', space=sflag, size = 0x4, scoped, tag = 'scoped memory for sat1_lstm_forward.1']
    #allocation6 [shape = 'u8[4096]{0}', space=vmem, size = 0x1000, scoped, tag = 'input window, operand 1, single buffered']
    #allocation7 [shape = 's32[1]{0}', space=sflag, size = 0x4, scoped, tag = 'scoped memory for sat1_lstm_forward.1']
    #allocation8 [shape = 'u8[262144]{0}', space=vmem, size = 0x40000, scoped, tag = 'input window, operand 2, single buffered']
    #allocation9 [shape = 'u8[524288]{0}', space=vmem, size = 0x80000, scoped, tag = 'input window, operand 3, single buffered']
    #allocation10 [shape = 's32[1]{0}', space=sflag, size = 0x4, scoped, tag = 'scoped memory for sat1_lstm_forward.1']
    #allocation11 [shape = 'u8[4096]{0}', space=vmem, size = 0x1000, scoped, tag = 'input window, operand 4, single buffered']
    #allocation12 [shape = 'u8[65536]{0}', space=vmem, size = 0x10000, scoped, tag = 'input window, operand 5, single buffered']
    #allocation13 [shape = 's32[1]{0}', space=sflag, size = 0x4, scoped, tag = 'scoped memory for sat1_lstm_forward.1']
    #allocation14 [shape = 'u8[512]{0}', space=vmem, size = 0x400, scoped, tag = 'input window, operand 6, single buffered']
    #allocation15 [shape = 'u8[4096]{0}', space=vmem, size = 0x1000, scoped, tag = 'output window, operand 0, single buffered']
    %12 = vsyncpa [#allocation4], 0
    %13 = vsyncpa [#allocation7], 0
    %14 = vsyncpa [#allocation10], 0
    %15 = vsyncpa [#allocation13], 0
    %16 = vsyncpa [#allocation5], 0
    // Predicated region
    $region2: #{sat1_lstm_forward.1} parent=1 // pred_check
      _
    $region3: #{sat1_lstm_forward.1} parent=1 // pred_check_branch
      %18 = sbr.rel (0) target = $region5
    $region4: #{sat1_lstm_forward.1} parent=1 // pred_region
      %s20 = ssub.s32 1024, 1024
      %21 = vsyncadd [#allocation4], %s20
      %s22 = sshll.u32 [#allocation3], 4
      %s23 = int_to_ptr.vmem [resolvable:$true] %s22
      %28 = dma.hbm_to_vmem [thread:$0]  %s0, 1024, %s23, [#allocation4], 64, 64, 4
    $region5: #{sat1_lstm_forward.1} parent=1 // pred_fallthru
      _
    // Predicated region
    $region6: #{sat1_lstm_forward.1} parent=1 // pred_check
      _
    $region7: #{sat1_lstm_forward.1} parent=1 // pred_check_branch
      %30 = sbr.rel (0) target = $region9
    $region8: #{sat1_lstm_forward.1} parent=1 // pred_region
      %s32 = ssub.s32 128, 128
      %33 = vsyncadd [#allocation7], %s32
      %s35 = sshll.u32 [#allocation6], 4
      %s36 = int_to_ptr.vmem [resolvable:$true] %s35
      %38 = dma.hbm_to_vmem [thread:$0]  %s1, 128, %s36, [#allocation7]
    $region9: #{sat1_lstm_forward.1} parent=1 // pred_fallthru
      _
    // Predicated region
    $region10: #{sat1_lstm_forward.1} parent=1 // pred_check
      _
    $region11: #{sat1_lstm_forward.1} parent=1 // pred_check_branch
      %40 = sbr.rel (0) target = $region13
    $region12: #{sat1_lstm_forward.1} parent=1 // pred_region
      %s42 = ssub.s32 8192, 8192
      %43 = vsyncadd [#allocation7], %s42
      %s44 = sshll.u32 [#allocation8], 4
      %s45 = int_to_ptr.vmem [resolvable:$true] %s44
      %50 = dma.hbm_to_vmem [thread:$0]  %s2, 8192, %s45, [#allocation7], 512, 512, 32
    $region13: #{sat1_lstm_forward.1} parent=1 // pred_fallthru
      _
    // Predicated region
    $region14: #{sat1_lstm_forward.1} parent=1 // pred_check
      _
    $region15: #{sat1_lstm_forward.1} parent=1 // pred_check_branch
      %52 = sbr.rel (0) target = $region17
    $region16: #{sat1_lstm_forward.1} parent=1 // pred_region
      %s54 = ssub.s32 16384, 16384
      %55 = vsyncadd [#allocation10], %s54
      %s56 = sshll.u32 [#allocation9], 4
      %s57 = int_to_ptr.vmem [resolvable:$true] %s56
      %62 = dma.hbm_to_vmem [thread:$0]  %s3, 16384, %s57, [#allocation10], 512, 512, 32
    $region17: #{sat1_lstm_forward.1} parent=1 // pred_fallthru
      _
    // Predicated region
    $region18: #{sat1_lstm_forward.1} parent=1 // pred_check
      _
    $region19: #{sat1_lstm_forward.1} parent=1 // pred_check_branch
      %64 = sbr.rel (0) target = $region21
    $region20: #{sat1_lstm_forward.1} parent=1 // pred_region
      %s66 = ssub.s32 128, 128
      %67 = vsyncadd [#allocation10], %s66
      %s69 = sshll.u32 [#allocation11], 4
      %s70 = int_to_ptr.vmem [resolvable:$true] %s69
      %72 = dma.hbm_to_vmem [thread:$0]  %s4, 128, %s70, [#allocation10]
    $region21: #{sat1_lstm_forward.1} parent=1 // pred_fallthru
      _
    // Predicated region
    $region22: #{sat1_lstm_forward.1} parent=1 // pred_check
      _
    $region23: #{sat1_lstm_forward.1} parent=1 // pred_check_branch
      %74 = sbr.rel (0) target = $region25
    $region24: #{sat1_lstm_forward.1} parent=1 // pred_region
      %s76 = ssub.s32 2048, 2048
      %77 = vsyncadd [#allocation13], %s76
      %s78 = sshll.u32 [#allocation12], 4
      %s79 = int_to_ptr.vmem [resolvable:$true] %s78
      %84 = dma.hbm_to_vmem [thread:$0]  %s5, 2048, %s79, [#allocation13], 64, 64, 4
    $region25: #{sat1_lstm_forward.1} parent=1 // pred_fallthru
      _
    // Predicated region
    $region26: #{sat1_lstm_forward.1} parent=1 // pred_check
      _
    $region27: #{sat1_lstm_forward.1} parent=1 // pred_check_branch
      %86 = sbr.rel (0) target = $region29
    $region28: #{sat1_lstm_forward.1} parent=1 // pred_region
      %s88 = ssub.s32 16, 16
      %89 = vsyncadd [#allocation13], %s88
      %s91 = sshll.u32 [#allocation14], 4
      %s92 = int_to_ptr.vmem [resolvable:$true] %s91
      %94 = dma.hbm_to_vmem [thread:$0]  %s6, 16, %s92, [#allocation13]
    $region29: #{sat1_lstm_forward.1} parent=1 // pred_fallthru
      _
    // Predicated region
    $region30: #{sat1_lstm_forward.1} parent=1 // pred_check
      _
    $region31: #{sat1_lstm_forward.1} parent=1 // pred_check_branch
      %96 = sbr.rel (0) target = $region33
    $region32: #{sat1_lstm_forward.1} parent=1 // pred_region
      %97 = dma.done [#allocation4], 1024
    $region33: #{sat1_lstm_forward.1} parent=1 // pred_fallthru
      _
    // Predicated region
    $region34: #{sat1_lstm_forward.1} parent=1 // pred_check
      _
    $region35: #{sat1_lstm_forward.1} parent=1 // pred_check_branch
      %99 = sbr.rel (0) target = $region37
    $region36: #{sat1_lstm_forward.1} parent=1 // pred_region
      %100 = dma.done [#allocation7], 128
    $region37: #{sat1_lstm_forward.1} parent=1 // pred_fallthru
      _
    // Predicated region
    $region38: #{sat1_lstm_forward.1} parent=1 // pred_check
      _
    $region39: #{sat1_lstm_forward.1} parent=1 // pred_check_branch
      %102 = sbr.rel (0) target = $region41
    $region40: #{sat1_lstm_forward.1} parent=1 // pred_region
      %103 = dma.done [#allocation7], 8192
    $region41: #{sat1_lstm_forward.1} parent=1 // pred_fallthru
      _
    // Predicated region
    $region42: #{sat1_lstm_forward.1} parent=1 // pred_check
      _
    $region43: #{sat1_lstm_forward.1} parent=1 // pred_check_branch
      %105 = sbr.rel (0) target = $region45
    $region44: #{sat1_lstm_forward.1} parent=1 // pred_region
      %106 = dma.done [#allocation10], 16384
    $region45: #{sat1_lstm_forward.1} parent=1 // pred_fallthru
      _
    // Predicated region
    $region46: #{sat1_lstm_forward.1} parent=1 // pred_check
      _
    $region47: #{sat1_lstm_forward.1} parent=1 // pred_check_branch
      %108 = sbr.rel (0) target = $region49
    $region48: #{sat1_lstm_forward.1} parent=1 // pred_region
      %109 = dma.done [#allocation10], 128
    $region49: #{sat1_lstm_forward.1} parent=1 // pred_fallthru
      _
    // Predicated region
    $region50: #{sat1_lstm_forward.1} parent=1 // pred_check
      _
    $region51: #{sat1_lstm_forward.1} parent=1 // pred_check_branch
      %111 = sbr.rel (0) target = $region53
    $region52: #{sat1_lstm_forward.1} parent=1 // pred_region
      %112 = dma.done [#allocation13], 2048
    $region53: #{sat1_lstm_forward.1} parent=1 // pred_fallthru
      _
    // Predicated region
    $region54: #{sat1_lstm_forward.1} parent=1 // pred_check
      _
    $region55: #{sat1_lstm_forward.1} parent=1 // pred_check_branch
      %114 = sbr.rel (0) target = $region57
    $region56: #{sat1_lstm_forward.1} parent=1 // pred_region
      %115 = dma.done [#allocation13], 16
    $region57: #{sat1_lstm_forward.1} parent=1 // pred_fallthru
      _
    %v117 = vld [vmem:[#allocation6] sm:$0xff]
    %v118 = vld [vmem:[#allocation3] sm:$0xf]
    %v119 = vld [vmem:[#allocation3 + $0x4] sm:$0xf]
    %v120 = vld [vmem:[#allocation3 + $0x8] sm:$0xf]
    %v121 = vld [vmem:[#allocation3 + $0xc] sm:$0xf]
    %v122 = vld [vmem:[#allocation3 + $0x10] sm:$0xf]
    %v123 = vld [vmem:[#allocation3 + $0x14] sm:$0xf]
    %v124 = vld [vmem:[#allocation3 + $0x18] sm:$0xf]
    %v125 = vld [vmem:[#allocation3 + $0x1c] sm:$0xf]
    %v126 = vld [vmem:[#allocation3 + $0x20] sm:$0xf]
    %v127 = vld [vmem:[#allocation3 + $0x24] sm:$0xf]
    %v128 = vld [vmem:[#allocation3 + $0x28] sm:$0xf]
    %v129 = vld [vmem:[#allocation3 + $0x2c] sm:$0xf]
    %v130 = vld [vmem:[#allocation3 + $0x30] sm:$0xf]
    %v131 = vld [vmem:[#allocation3 + $0x34] sm:$0xf]
    %v132 = vld [vmem:[#allocation3 + $0x38] sm:$0xf]
    %v133 = vld [vmem:[#allocation3 + $0x3c] sm:$0xf]
    %v134 = vld [vmem:[#allocation8] sm:$0xff]
    %v135 = vld [vmem:[#allocation8 + $0x8] sm:$0xff]
    %v136 = vld [vmem:[#allocation8 + $0x10] sm:$0xff]
    %v137 = vld [vmem:[#allocation8 + $0x18] sm:$0xff]
    %v138 = vld [vmem:[#allocation8 + $0x20] sm:$0xff]
    %v139 = vld [vmem:[#allocation8 + $0x28] sm:$0xff]
    %v140 = vld [vmem:[#allocation8 + $0x30] sm:$0xff]
    %v141 = vld [vmem:[#allocation8 + $0x38] sm:$0xff]
    %v142 = vld [vmem:[#allocation8 + $0x40] sm:$0xff]
    %v143 = vld [vmem:[#allocation8 + $0x48] sm:$0xff]
    %v144 = vld [vmem:[#allocation8 + $0x50] sm:$0xff]
    %v145 = vld [vmem:[#allocation8 + $0x58] sm:$0xff]
    %v146 = vld [vmem:[#allocation8 + $0x60] sm:$0xff]
    %v147 = vld [vmem:[#allocation8 + $0x68] sm:$0xff]
    %v148 = vld [vmem:[#allocation8 + $0x70] sm:$0xff]
    %v149 = vld [vmem:[#allocation8 + $0x78] sm:$0xff]
    %v150 = vld [vmem:[#allocation8 + $0x80] sm:$0xff]
    %v151 = vld [vmem:[#allocation8 + $0x88] sm:$0xff]
    %v152 = vld [vmem:[#allocation8 + $0x90] sm:$0xff]
    %v153 = vld [vmem:[#allocation8 + $0x98] sm:$0xff]
    %v154 = vld [vmem:[#allocation8 + $0xa0] sm:$0xff]
    %v155 = vld [vmem:[#allocation8 + $0xa8] sm:$0xff]
    %v156 = vld [vmem:[#allocation8 + $0xb0] sm:$0xff]
    %v157 = vld [vmem:[#allocation8 + $0xb8] sm:$0xff]
    %v158 = vld [vmem:[#allocation8 + $0xc0] sm:$0xff]
    %v159 = vld [vmem:[#allocation8 + $0xc8] sm:$0xff]
    %v160 = vld [vmem:[#allocation8 + $0xd0] sm:$0xff]
    %v161 = vld [vmem:[#allocation8 + $0xd8] sm:$0xff]
    %v162 = vld [vmem:[#allocation8 + $0xe0] sm:$0xff]
    %v163 = vld [vmem:[#allocation8 + $0xe8] sm:$0xff]
    %v164 = vld [vmem:[#allocation8 + $0xf0] sm:$0xff]
    %v165 = vld [vmem:[#allocation8 + $0xf8] sm:$0xff]
    %v166 = vld [vmem:[#allocation8 + $0x100] sm:$0xff]
    %v167 = vld [vmem:[#allocation8 + $0x108] sm:$0xff]
    %v168 = vld [vmem:[#allocation8 + $0x110] sm:$0xff]
    %v169 = vld [vmem:[#allocation8 + $0x118] sm:$0xff]
    %v170 = vld [vmem:[#allocation8 + $0x120] sm:$0xff]
    %v171 = vld [vmem:[#allocation8 + $0x128] sm:$0xff]
    %v172 = vld [vmem:[#allocation8 + $0x130] sm:$0xff]
    %v173 = vld [vmem:[#allocation8 + $0x138] sm:$0xff]
    %v174 = vld [vmem:[#allocation8 + $0x140] sm:$0xff]
    %v175 = vld [vmem:[#allocation8 + $0x148] sm:$0xff]
    %v176 = vld [vmem:[#allocation8 + $0x150] sm:$0xff]
    %v177 = vld [vmem:[#allocation8 + $0x158] sm:$0xff]
    %v178 = vld [vmem:[#allocation8 + $0x160] sm:$0xff]
    %v179 = vld [vmem:[#allocation8 + $0x168] sm:$0xff]
    %v180 = vld [vmem:[#allocation8 + $0x170] sm:$0xff]
    %v181 = vld [vmem:[#allocation8 + $0x178] sm:$0xff]
    %v182 = vld [vmem:[#allocation8 + $0x180] sm:$0xff]
    %v183 = vld [vmem:[#allocation8 + $0x188] sm:$0xff]
    %v184 = vld [vmem:[#allocation8 + $0x190] sm:$0xff]
    %v185 = vld [vmem:[#allocation8 + $0x198] sm:$0xff]
    %v186 = vld [vmem:[#allocation8 + $0x1a0] sm:$0xff]
    %v187 = vld [vmem:[#allocation8 + $0x1a8] sm:$0xff]
    %v188 = vld [vmem:[#allocation8 + $0x1b0] sm:$0xff]
    %v189 = vld [vmem:[#allocation8 + $0x1b8] sm:$0xff]
    %v190 = vld [vmem:[#allocation8 + $0x1c0] sm:$0xff]
    %v191 = vld [vmem:[#allocation8 + $0x1c8] sm:$0xff]
    %v192 = vld [vmem:[#allocation8 + $0x1d0] sm:$0xff]
    %v193 = vld [vmem:[#allocation8 + $0x1d8] sm:$0xff]
    %v194 = vld [vmem:[#allocation8 + $0x1e0] sm:$0xff]
    %v195 = vld [vmem:[#allocation8 + $0x1e8] sm:$0xff]
    %v196 = vld [vmem:[#allocation8 + $0x1f0] sm:$0xff]
    %v197 = vld [vmem:[#allocation8 + $0x1f8] sm:$0xff]
    %v198 = vld [vmem:[#allocation11] sm:$0xff]
    %v200 = vlaneseq
    %v201 = vshrl.u32 %v200, 7
    %v202 = vsub.s32 0, %v201
    %v203 = vrot.slane %v198, %v202
    %v204 = vlaneseq
    %v205 = vshrl.u32 %v204, 7
    %v206 = vsub.s32 1, %v205
    %v207 = vrot.slane %v198, %v206
    %v208 = vlaneseq
    %v209 = vshrl.u32 %v208, 7
    %v210 = vsub.s32 2, %v209
    %v211 = vrot.slane %v198, %v210
    %v212 = vlaneseq
    %v213 = vshrl.u32 %v212, 7
    %v214 = vsub.s32 3, %v213
    %v215 = vrot.slane %v198, %v214
    %v216 = vlaneseq
    %v217 = vshrl.u32 %v216, 7
    %v218 = vsub.s32 4, %v217
    %v219 = vrot.slane %v198, %v218
    %v220 = vlaneseq
    %v221 = vshrl.u32 %v220, 7
    %v222 = vsub.s32 5, %v221
    %v223 = vrot.slane %v198, %v222
    %v224 = vlaneseq
    %v225 = vshrl.u32 %v224, 7
    %v226 = vsub.s32 6, %v225
    %v227 = vrot.slane %v198, %v226
    %v228 = vlaneseq
    %v229 = vshrl.u32 %v228, 7
    %v230 = vsub.s32 7, %v229
    %v231 = vrot.slane %v198, %v230
    %v256 = vunpack.c.l.b16 %v118
    %v257 = vunpack.c.l.b16 %v119
    %v258 = vunpack.c.l.b16 %v120
    %v259 = vunpack.c.l.b16 %v121
    %v260 = vunpack.c.l.b16 %v122
    %v261 = vunpack.c.l.b16 %v123
    %v262 = vunpack.c.l.b16 %v124
    %v263 = vunpack.c.l.b16 %v125
    %v264 = vunpack.c.l.b16 %v126
    %v265 = vunpack.c.l.b16 %v127
    %v266 = vunpack.c.l.b16 %v128
    %v267 = vunpack.c.l.b16 %v129
    %v268 = vunpack.c.l.b16 %v130
    %v269 = vunpack.c.l.b16 %v131
    %v270 = vunpack.c.l.b16 %v132
    %v271 = vunpack.c.l.b16 %v133
    %v272 = vpack.c.b16 %v257, %v256
    %v273 = vpack.c.b16 %v259, %v258
    %v274 = vpack.c.b16 %v261, %v260
    %v275 = vpack.c.b16 %v263, %v262
    %v276 = vpack.c.b16 %v265, %v264
    %v277 = vpack.c.b16 %v267, %v266
    %v278 = vpack.c.b16 %v269, %v268
    %v279 = vpack.c.b16 %v271, %v270
    %v352 = vunpack.c.l.b16 %v134
    %v353 = vunpack.c.h.b16 %v134
    %v354 = vunpack.c.l.b16 %v135
    %v355 = vunpack.c.h.b16 %v135
    %v356 = vunpack.c.l.b16 %v136
    %v357 = vunpack.c.h.b16 %v136
    %v358 = vunpack.c.l.b16 %v137
    %v359 = vunpack.c.h.b16 %v137
    %v360 = vunpack.c.l.b16 %v138
    %v361 = vunpack.c.h.b16 %v138
    %v362 = vunpack.c.l.b16 %v139
    %v363 = vunpack.c.h.b16 %v139
    %v364 = vunpack.c.l.b16 %v140
    %v365 = vunpack.c.h.b16 %v140
    %v366 = vunpack.c.l.b16 %v141
    %v367 = vunpack.c.h.b16 %v141
    %v368 = vunpack.c.l.b16 %v142
    %v369 = vunpack.c.h.b16 %v142
    %v370 = vunpack.c.l.b16 %v143
    %v371 = vunpack.c.h.b16 %v143
    %v372 = vunpack.c.l.b16 %v144
    %v373 = vunpack.c.h.b16 %v144
    %v374 = vunpack.c.l.b16 %v145
    %v375 = vunpack.c.h.b16 %v145
    %v376 = vunpack.c.l.b16 %v146
    %v377 = vunpack.c.h.b16 %v146
    %v378 = vunpack.c.l.b16 %v147
    %v379 = vunpack.c.h.b16 %v147
    %v380 = vunpack.c.l.b16 %v148
    %v381 = vunpack.c.h.b16 %v148
    %v382 = vunpack.c.l.b16 %v149
    %v383 = vunpack.c.h.b16 %v149
    %v384 = vunpack.c.l.b16 %v150
    %v385 = vunpack.c.h.b16 %v150
    %v386 = vunpack.c.l.b16 %v151
    %v387 = vunpack.c.h.b16 %v151
    %v388 = vunpack.c.l.b16 %v152
    %v389 = vunpack.c.h.b16 %v152
    %v390 = vunpack.c.l.b16 %v153
    %v391 = vunpack.c.h.b16 %v153
    %v392 = vunpack.c.l.b16 %v154
    %v393 = vunpack.c.h.b16 %v154
    %v394 = vunpack.c.l.b16 %v155
    %v395 = vunpack.c.h.b16 %v155
    %v396 = vunpack.c.l.b16 %v156
    %v397 = vunpack.c.h.b16 %v156
    %v398 = vunpack.c.l.b16 %v157
    %v399 = vunpack.c.h.b16 %v157
    %v400 = vunpack.c.l.b16 %v158
    %v401 = vunpack.c.h.b16 %v158
    %v402 = vunpack.c.l.b16 %v159
    %v403 = vunpack.c.h.b16 %v159
    %v404 = vunpack.c.l.b16 %v160
    %v405 = vunpack.c.h.b16 %v160
    %v406 = vunpack.c.l.b16 %v161
    %v407 = vunpack.c.h.b16 %v161
    %v408 = vunpack.c.l.b16 %v162
    %v409 = vunpack.c.h.b16 %v162
    %v410 = vunpack.c.l.b16 %v163
    %v411 = vunpack.c.h.b16 %v163
    %v412 = vunpack.c.l.b16 %v164
    %v413 = vunpack.c.h.b16 %v164
    %v414 = vunpack.c.l.b16 %v165
    %v415 = vunpack.c.h.b16 %v165
    %v416 = vunpack.c.l.b16 %v166
    %v417 = vunpack.c.h.b16 %v166
    %v418 = vunpack.c.l.b16 %v167
    %v419 = vunpack.c.h.b16 %v167
    %v420 = vunpack.c.l.b16 %v168
    %v421 = vunpack.c.h.b16 %v168
    %v422 = vunpack.c.l.b16 %v169
    %v423 = vunpack.c.h.b16 %v169
    %v424 = vunpack.c.l.b16 %v170
    %v425 = vunpack.c.h.b16 %v170
    %v426 = vunpack.c.l.b16 %v171
    %v427 = vunpack.c.h.b16 %v171
    %v428 = vunpack.c.l.b16 %v172
    %v429 = vunpack.c.h.b16 %v172
    %v430 = vunpack.c.l.b16 %v173
    %v431 = vunpack.c.h.b16 %v173
    %v432 = vunpack.c.l.b16 %v174
    %v433 = vunpack.c.h.b16 %v174
    %v434 = vunpack.c.l.b16 %v175
    %v435 = vunpack.c.h.b16 %v175
    %v436 = vunpack.c.l.b16 %v176
    %v437 = vunpack.c.h.b16 %v176
    %v438 = vunpack.c.l.b16 %v177
    %v439 = vunpack.c.h.b16 %v177
    %v440 = vunpack.c.l.b16 %v178
    %v441 = vunpack.c.h.b16 %v178
    %v442 = vunpack.c.l.b16 %v179
    %v443 = vunpack.c.h.b16 %v179
    %v444 = vunpack.c.l.b16 %v180
    %v445 = vunpack.c.h.b16 %v180
    %v446 = vunpack.c.l.b16 %v181
    %v447 = vunpack.c.h.b16 %v181
    %v448 = vunpack.c.l.b16 %v182
    %v449 = vunpack.c.h.b16 %v182
    %v450 = vunpack.c.l.b16 %v183
    %v451 = vunpack.c.h.b16 %v183
    %v452 = vunpack.c.l.b16 %v184
    %v453 = vunpack.c.h.b16 %v184
    %v454 = vunpack.c.l.b16 %v185
    %v455 = vunpack.c.h.b16 %v185
    %v456 = vunpack.c.l.b16 %v186
    %v457 = vunpack.c.h.b16 %v186
    %v458 = vunpack.c.l.b16 %v187
    %v459 = vunpack.c.h.b16 %v187
    %v460 = vunpack.c.l.b16 %v188
    %v461 = vunpack.c.h.b16 %v188
    %v462 = vunpack.c.l.b16 %v189
    %v463 = vunpack.c.h.b16 %v189
    %v464 = vunpack.c.l.b16 %v190
    %v465 = vunpack.c.h.b16 %v190
    %v466 = vunpack.c.l.b16 %v191
    %v467 = vunpack.c.h.b16 %v191
    %v468 = vunpack.c.l.b16 %v192
    %v469 = vunpack.c.h.b16 %v192
    %v470 = vunpack.c.l.b16 %v193
    %v471 = vunpack.c.h.b16 %v193
    %v472 = vunpack.c.l.b16 %v194
    %v473 = vunpack.c.h.b16 %v194
    %v474 = vunpack.c.l.b16 %v195
    %v475 = vunpack.c.h.b16 %v195
    %v476 = vunpack.c.l.b16 %v196
    %v477 = vunpack.c.h.b16 %v196
    %v478 = vunpack.c.l.b16 %v197
    %v479 = vunpack.c.h.b16 %v197
    %v480 = vpack.c.b16 %v360, %v352
    %v481 = vpack.c.b16 %v361, %v353
    %v482 = vpack.c.b16 %v362, %v354
    %v483 = vpack.c.b16 %v363, %v355
    %v484 = vpack.c.b16 %v364, %v356
    %v485 = vpack.c.b16 %v365, %v357
    %v486 = vpack.c.b16 %v366, %v358
    %v487 = vpack.c.b16 %v367, %v359
    %v488 = vpack.c.b16 %v376, %v368
    %v489 = vpack.c.b16 %v377, %v369
    %v490 = vpack.c.b16 %v378, %v370
    %v491 = vpack.c.b16 %v379, %v371
    %v492 = vpack.c.b16 %v380, %v372
    %v493 = vpack.c.b16 %v381, %v373
    %v494 = vpack.c.b16 %v382, %v374
    %v495 = vpack.c.b16 %v383, %v375
    %v496 = vpack.c.b16 %v392, %v384
    %v497 = vpack.c.b16 %v393, %v385
    %v498 = vpack.c.b16 %v394, %v386
    %v499 = vpack.c.b16 %v395, %v387
    %v500 = vpack.c.b16 %v396, %v388
    %v501 = vpack.c.b16 %v397, %v389
    %v502 = vpack.c.b16 %v398, %v390
    %v503 = vpack.c.b16 %v399, %v391
    %v504 = vpack.c.b16 %v408, %v400
    %v505 = vpack.c.b16 %v409, %v401
    %v506 = vpack.c.b16 %v410, %v402
    %v507 = vpack.c.b16 %v411, %v403
    %v508 = vpack.c.b16 %v412, %v404
    %v509 = vpack.c.b16 %v413, %v405
    %v510 = vpack.c.b16 %v414, %v406
    %v511 = vpack.c.b16 %v415, %v407
    %v512 = vpack.c.b16 %v424, %v416
    %v513 = vpack.c.b16 %v425, %v417
    %v514 = vpack.c.b16 %v426, %v418
    %v515 = vpack.c.b16 %v427, %v419
    %v516 = vpack.c.b16 %v428, %v420
    %v517 = vpack.c.b16 %v429, %v421
    %v518 = vpack.c.b16 %v430, %v422
    %v519 = vpack.c.b16 %v431, %v423
    %v520 = vpack.c.b16 %v440, %v432
    %v521 = vpack.c.b16 %v441, %v433
    %v522 = vpack.c.b16 %v442, %v434
    %v523 = vpack.c.b16 %v443, %v435
    %v524 = vpack.c.b16 %v444, %v436
    %v525 = vpack.c.b16 %v445, %v437
    %v526 = vpack.c.b16 %v446, %v438
    %v527 = vpack.c.b16 %v447, %v439
    %v528 = vpack.c.b16 %v456, %v448
    %v529 = vpack.c.b16 %v457, %v449
    %v530 = vpack.c.b16 %v458, %v450
    %v531 = vpack.c.b16 %v459, %v451
    %v532 = vpack.c.b16 %v460, %v452
    %v533 = vpack.c.b16 %v461, %v453
    %v534 = vpack.c.b16 %v462, %v454
    %v535 = vpack.c.b16 %v463, %v455
    %v536 = vpack.c.b16 %v472, %v464
    %v537 = vpack.c.b16 %v473, %v465
    %v538 = vpack.c.b16 %v474, %v466
    %v539 = vpack.c.b16 %v475, %v467
    %v540 = vpack.c.b16 %v476, %v468
    %v541 = vpack.c.b16 %v477, %v469
    %v542 = vpack.c.b16 %v478, %v470
    %v543 = vpack.c.b16 %v479, %v471
    %608 = vmatprep.subr.bf16.mxu0 %v481
    %609 = vmatpush1.bf16.msra.mxu0 %v480
    %610 = vmatprep.subr.bf16.mxu0 %v489
    %611 = vmatpush1.bf16.msra.mxu0 %v488
    %612 = vmatprep.subr.bf16.mxu0 %v497
    %613 = vmatpush1.bf16.msra.mxu0 %v496
    %614 = vmatprep.subr.bf16.mxu0 %v505
    %615 = vmatpush1.bf16.msra.mxu0 %v504
    %616 = vmatprep.subr.bf16.mxu0 %v513
    %617 = vmatpush1.bf16.msra.mxu0 %v512
    %618 = vmatprep.subr.bf16.mxu0 %v521
    %619 = vmatpush1.bf16.msra.mxu0 %v520
    %620 = vmatprep.subr.bf16.mxu0 %v529
    %621 = vmatpush1.bf16.msra.mxu0 %v528
    %622 = vmatprep.subr.bf16.mxu0 %v537
    %623 = vmatpush1.bf16.msra.mxu0 %v536
    %624 = vmatprep.subr.bf16.mxu0 0
    %625 = vmatpush1.bf16.msra.mxu0 0
    %626 = vmatprep.subr.bf16.mxu0 0
    %627 = vmatpush1.bf16.msra.mxu0 0
    %628 = vmatprep.subr.bf16.mxu0 0
    %629 = vmatpush1.bf16.msra.mxu0 0
    %630 = vmatprep.subr.bf16.mxu0 0
    %631 = vmatpush1.bf16.msra.mxu0 0
    %632 = vmatprep.subr.bf16.mxu0 0
    %633 = vmatpush1.bf16.msra.mxu0 0
    %634 = vmatprep.subr.bf16.mxu0 0
    %635 = vmatpush1.bf16.msra.mxu0 0
    %636 = vmatprep.subr.bf16.mxu0 0
    %637 = vmatpush1.bf16.msra.mxu0 0
    %638 = vmatprep.subr.bf16.mxu0 0
    %639 = vmatpush1.bf16.msra.mxu0 0
    %640 = vmatprep.mubr.bf16.mxu0 0
    %641 = vmatmul.mubr.bf16.gmra.mrb[0].mxu0 %v272
    %v642 = vpop.f32.mrb[0].mxu0
    %v643 = vadd.f32 %v203, %v642
    %v644 = vpop.f32.mrb[0].mxu0
    %v645 = vadd.f32 %v207, %v644
    %v646 = vpop.f32.mrb[0].mxu0
    %v647 = vadd.f32 %v203, %v646
    %v648 = vpop.f32.mrb[0].mxu0
    %v649 = vadd.f32 %v207, %v648
    %650 = vmatprep.mubr.bf16.mxu0 0
    %651 = vmatmul.mubr.bf16.gmra.mrb[0].mxu0 %v273
    %v652 = vpop.f32.mrb[0].mxu0
    %v653 = vadd.f32 %v203, %v652
    %v654 = vpop.f32.mrb[0].mxu0
    %v655 = vadd.f32 %v207, %v654
    %v656 = vpop.f32.mrb[0].mxu0
    %v657 = vadd.f32 %v203, %v656
    %v658 = vpop.f32.mrb[0].mxu0
    %v659 = vadd.f32 %v207, %v658
    %660 = vmatprep.mubr.bf16.mxu0 0
    %661 = vmatmul.mubr.bf16.gmra.mrb[0].mxu0 %v274
    %v662 = vpop.f32.mrb[0].mxu0
    %v663 = vadd.f32 %v203, %v662
    %v664 = vpop.f32.mrb[0].mxu0
    %v665 = vadd.f32 %v207, %v664
    %v666 = vpop.f32.mrb[0].mxu0
    %v667 = vadd.f32 %v203, %v666
    %v668 = vpop.f32.mrb[0].mxu0
    %v669 = vadd.f32 %v207, %v668
    %670 = vmatprep.mubr.bf16.mxu0 0
    %671 = vmatmul.mubr.bf16.gmra.mrb[0].mxu0 %v275
    %v672 = vpop.f32.mrb[0].mxu0
    %v673 = vadd.f32 %v203, %v672
    %v674 = vpop.f32.mrb[0].mxu0
    %v675 = vadd.f32 %v207, %v674
    %v676 = vpop.f32.mrb[0].mxu0
    %v677 = vadd.f32 %v203, %v676
    %v678 = vpop.f32.mrb[0].mxu0
    %v679 = vadd.f32 %v207, %v678
    %680 = vmatprep.mubr.bf16.mxu0 0
    %681 = vmatmul.mubr.bf16.gmra.mrb[0].mxu0 %v276
    %v682 = vpop.f32.mrb[0].mxu0
    %v683 = vadd.f32 %v203, %v682
    %v684 = vpop.f32.mrb[0].mxu0
    %v685 = vadd.f32 %v207, %v684
    %v686 = vpop.f32.mrb[0].mxu0
    %v687 = vadd.f32 %v203, %v686
    %v688 = vpop.f32.mrb[0].mxu0
    %v689 = vadd.f32 %v207, %v688
    %690 = vmatprep.mubr.bf16.mxu0 0
    %691 = vmatmul.mubr.bf16.gmra.mrb[0].mxu0 %v277
    %v692 = vpop.f32.mrb[0].mxu0
    %v693 = vadd.f32 %v203, %v692
    %v694 = vpop.f32.mrb[0].mxu0
    %v695 = vadd.f32 %v207, %v694
    %v696 = vpop.f32.mrb[0].mxu0
    %v697 = vadd.f32 %v203, %v696
    %v698 = vpop.f32.mrb[0].mxu0
    %v699 = vadd.f32 %v207, %v698
    %700 = vmatprep.mubr.bf16.mxu0 0
    %701 = vmatmul.mubr.bf16.gmra.mrb[0].mxu0 %v278
    %v702 = vpop.f32.mrb[0].mxu0
    %v703 = vadd.f32 %v203, %v702
    %v704 = vpop.f32.mrb[0].mxu0
    %v705 = vadd.f32 %v207, %v704
    %v706 = vpop.f32.mrb[0].mxu0
    %v707 = vadd.f32 %v203, %v706
    %v708 = vpop.f32.mrb[0].mxu0
    %v709 = vadd.f32 %v207, %v708
    %710 = vmatprep.mubr.bf16.mxu0 0
    %711 = vmatmul.mubr.bf16.gmra.mrb[0].mxu0 %v279
    %v712 = vpop.f32.mrb[0].mxu0
    %v713 = vadd.f32 %v203, %v712
    %v714 = vpop.f32.mrb[0].mxu0
    %v715 = vadd.f32 %v207, %v714
    %v716 = vpop.f32.mrb[0].mxu0
    %v717 = vadd.f32 %v203, %v716
    %v718 = vpop.f32.mrb[0].mxu0
    %v719 = vadd.f32 %v207, %v718
    %720 = vdwg.mxu0
    %721 = vmatprep.subr.bf16.mxu0 %v483
    %722 = vmatpush1.bf16.msra.mxu0 %v482
    %723 = vmatprep.subr.bf16.mxu0 %v491
    %724 = vmatpush1.bf16.msra.mxu0 %v490
    %725 = vmatprep.subr.bf16.mxu0 %v499
    %726 = vmatpush1.bf16.msra.mxu0 %v498
    %727 = vmatprep.subr.bf16.mxu0 %v507
    %728 = vmatpush1.bf16.msra.mxu0 %v506
    %729 = vmatprep.subr.bf16.mxu0 %v515
    %730 = vmatpush1.bf16.msra.mxu0 %v514
    %731 = vmatprep.subr.bf16.mxu0 %v523
    %732 = vmatpush1.bf16.msra.mxu0 %v522
    %733 = vmatprep.subr.bf16.mxu0 %v531
    %734 = vmatpush1.bf16.msra.mxu0 %v530
    %735 = vmatprep.subr.bf16.mxu0 %v539
    %736 = vmatpush1.bf16.msra.mxu0 %v538
    %737 = vmatprep.subr.bf16.mxu0 0
    %738 = vmatpush1.bf16.msra.mxu0 0
    %739 = vmatprep.subr.bf16.mxu0 0
    %740 = vmatpush1.bf16.msra.mxu0 0
    %741 = vmatprep.subr.bf16.mxu0 0
    %742 = vmatpush1.bf16.msra.mxu0 0
    %743 = vmatprep.subr.bf16.mxu0 0
    %744 = vmatpush1.bf16.msra.mxu0 0
    %745 = vmatprep.subr.bf16.mxu0 0
    %746 = vmatpush1.bf16.msra.mxu0 0
    %747 = vmatprep.subr.bf16.mxu0 0
    %748 = vmatpush1.bf16.msra.mxu0 0
    %749 = vmatprep.subr.bf16.mxu0 0
    %750 = vmatpush1.bf16.msra.mxu0 0
    %751 = vmatprep.subr.bf16.mxu0 0
    %752 = vmatpush1.bf16.msra.mxu0 0
    %753 = vmatprep.mubr.bf16.mxu0 0
    %754 = vmatmul.mubr.bf16.gmra.mrb[0].mxu0 %v272
    %v755 = vpop.f32.mrb[0].mxu0
    %v756 = vadd.f32 %v211, %v755
    %v757 = vpop.f32.mrb[0].mxu0
    %v758 = vadd.f32 %v215, %v757
    %v759 = vpop.f32.mrb[0].mxu0
    %v760 = vadd.f32 %v211, %v759
    %v761 = vpop.f32.mrb[0].mxu0
    %v762 = vadd.f32 %v215, %v761
    %763 = vmatprep.mubr.bf16.mxu0 0
    %764 = vmatmul.mubr.bf16.gmra.mrb[0].mxu0 %v273
    %v765 = vpop.f32.mrb[0].mxu0
    %v766 = vadd.f32 %v211, %v765
    %v767 = vpop.f32.mrb[0].mxu0
    %v768 = vadd.f32 %v215, %v767
    %v769 = vpop.f32.mrb[0].mxu0
    %v770 = vadd.f32 %v211, %v769
    %v771 = vpop.f32.mrb[0].mxu0
    %v772 = vadd.f32 %v215, %v771
    %773 = vmatprep.mubr.bf16.mxu0 0
    %774 = vmatmul.mubr.bf16.gmra.mrb[0].mxu0 %v274
    %v775 = vpop.f32.mrb[0].mxu0
    %v776 = vadd.f32 %v211, %v775
    %v777 = vpop.f32.mrb[0].mxu0
    %v778 = vadd.f32 %v215, %v777
    %v779 = vpop.f32.mrb[0].mxu0
    %v780 = vadd.f32 %v211, %v779
    %v781 = vpop.f32.mrb[0].mxu0
    %v782 = vadd.f32 %v215, %v781
    %783 = vmatprep.mubr.bf16.mxu0 0
    %784 = vmatmul.mubr.bf16.gmra.mrb[0].mxu0 %v275
    %v785 = vpop.f32.mrb[0].mxu0
    %v786 = vadd.f32 %v211, %v785
    %v787 = vpop.f32.mrb[0].mxu0
    %v788 = vadd.f32 %v215, %v787
    %v789 = vpop.f32.mrb[0].mxu0
    %v790 = vadd.f32 %v211, %v789
    %v791 = vpop.f32.mrb[0].mxu0
    %v792 = vadd.f32 %v215, %v791
    %793 = vmatprep.mubr.bf16.mxu0 0
    %794 = vmatmul.mubr.bf16.gmra.mrb[0].mxu0 %v276
    %v795 = vpop.f32.mrb[0].mxu0
    %v796 = vadd.f32 %v211, %v795
    %v797 = vpop.f32.mrb[0].mxu0
    %v798 = vadd.f32 %v215, %v797
    %v799 = vpop.f32.mrb[0].mxu0
    %v800 = vadd.f32 %v211, %v799
    %v801 = vpop.f32.mrb[0].mxu0
    %v802 = vadd.f32 %v215, %v801
    %803 = vmatprep.mubr.bf16.mxu0 0
    %804 = vmatmul.mubr.bf16.gmra.mrb[0].mxu0 %v277
    %v805 = vpop.f32.mrb[0].mxu0
    %v806 = vadd.f32 %v211, %v805
    %v807 = vpop.f32.mrb[0].mxu0
    %v808 = vadd.f32 %v215, %v807
    %v809 = vpop.f32.mrb[0].mxu0
    %v810 = vadd.f32 %v211, %v809
    %v811 = vpop.f32.mrb[0].mxu0
    %v812 = vadd.f32 %v215, %v811
    %813 = vmatprep.mubr.bf16.mxu0 0
    %814 = vmatmul.mubr.bf16.gmra.mrb[0].mxu0 %v278
    %v815 = vpop.f32.mrb[0].mxu0
    %v816 = vadd.f32 %v211, %v815
    %v817 = vpop.f32.mrb[0].mxu0
    %v818 = vadd.f32 %v215, %v817
    %v819 = vpop.f32.mrb[0].mxu0
    %v820 = vadd.f32 %v211, %v819
    %v821 = vpop.f32.mrb[0].mxu0
    %v822 = vadd.f32 %v215, %v821
    %823 = vmatprep.mubr.bf16.mxu0 0
    %824 = vmatmul.mubr.bf16.gmra.mrb[0].mxu0 %v279
    %v825 = vpop.f32.mrb[0].mxu0
    %v826 = vadd.f32 %v211, %v825
    %v827 = vpop.f32.mrb[0].mxu0
    %v828 = vadd.f32 %v215, %v827
    %v829 = vpop.f32.mrb[0].mxu0
    %v830 = vadd.f32 %v211, %v829
    %v831 = vpop.f32.mrb[0].mxu0
    %v832 = vadd.f32 %v215, %v831
    %833 = vdwg.mxu0
    %834 = vmatprep.subr.bf16.mxu0 %v485
    %835 = vmatpush1.bf16.msra.mxu0 %v484
    %836 = vmatprep.subr.bf16.mxu0 %v493
    %837 = vmatpush1.bf16.msra.mxu0 %v492
    %838 = vmatprep.subr.bf16.mxu0 %v501
    %839 = vmatpush1.bf16.msra.mxu0 %v500
    %840 = vmatprep.subr.bf16.mxu0 %v509
    %841 = vmatpush1.bf16.msra.mxu0 %v508
    %842 = vmatprep.subr.bf16.mxu0 %v517
    %843 = vmatpush1.bf16.msra.mxu0 %v516
    %844 = vmatprep.subr.bf16.mxu0 %v525
    %845 = vmatpush1.bf16.msra.mxu0 %v524
    %846 = vmatprep.subr.bf16.mxu0 %v533
    %847 = vmatpush1.bf16.msra.mxu0 %v532
    %848 = vmatprep.subr.bf16.mxu0 %v541
    %849 = vmatpush1.bf16.msra.mxu0 %v540
    %850 = vmatprep.subr.bf16.mxu0 0
    %851 = vmatpush1.bf16.msra.mxu0 0
    %852 = vmatprep.subr.bf16.mxu0 0
    %853 = vmatpush1.bf16.msra.mxu0 0
    %854 = vmatprep.subr.bf16.mxu0 0
    %855 = vmatpush1.bf16.msra.mxu0 0
    %856 = vmatprep.subr.bf16.mxu0 0
    %857 = vmatpush1.bf16.msra.mxu0 0
    %858 = vmatprep.subr.bf16.mxu0 0
    %859 = vmatpush1.bf16.msra.mxu0 0
    %860 = vmatprep.subr.bf16.mxu0 0
    %861 = vmatpush1.bf16.msra.mxu0 0
    %862 = vmatprep.subr.bf16.mxu0 0
    %863 = vmatpush1.bf16.msra.mxu0 0
    %864 = vmatprep.subr.bf16.mxu0 0
    %865 = vmatpush1.bf16.msra.mxu0 0
    %866 = vmatprep.mubr.bf16.mxu0 0
    %867 = vmatmul.mubr.bf16.gmra.mrb[0].mxu0 %v272
    %v868 = vpop.f32.mrb[0].mxu0
    %v869 = vadd.f32 %v219, %v868
    %v870 = vpop.f32.mrb[0].mxu0
    %v871 = vadd.f32 %v223, %v870
    %v872 = vpop.f32.mrb[0].mxu0
    %v873 = vadd.f32 %v219, %v872
    %v874 = vpop.f32.mrb[0].mxu0
    %v875 = vadd.f32 %v223, %v874
    %876 = vmatprep.mubr.bf16.mxu0 0
    %877 = vmatmul.mubr.bf16.gmra.mrb[0].mxu0 %v273
    %v878 = vpop.f32.mrb[0].mxu0
    %v879 = vadd.f32 %v219, %v878
    %v880 = vpop.f32.mrb[0].mxu0
    %v881 = vadd.f32 %v223, %v880
    %v882 = vpop.f32.mrb[0].mxu0
    %v883 = vadd.f32 %v219, %v882
    %v884 = vpop.f32.mrb[0].mxu0
    %v885 = vadd.f32 %v223, %v884
    %886 = vmatprep.mubr.bf16.mxu0 0
    %887 = vmatmul.mubr.bf16.gmra.mrb[0].mxu0 %v274
    %v888 = vpop.f32.mrb[0].mxu0
    %v889 = vadd.f32 %v219, %v888
    %v890 = vpop.f32.mrb[0].mxu0
    %v891 = vadd.f32 %v223, %v890
    %v892 = vpop.f32.mrb[0].mxu0
    %v893 = vadd.f32 %v219, %v892
    %v894 = vpop.f32.mrb[0].mxu0
    %v895 = vadd.f32 %v223, %v894
    %896 = vmatprep.mubr.bf16.mxu0 0
    %897 = vmatmul.mubr.bf16.gmra.mrb[0].mxu0 %v275
    %v898 = vpop.f32.mrb[0].mxu0
    %v899 = vadd.f32 %v219, %v898
    %v900 = vpop.f32.mrb[0].mxu0
    %v901 = vadd.f32 %v223, %v900
    %v902 = vpop.f32.mrb[0].mxu0
    %v903 = vadd.f32 %v219, %v902
    %v904 = vpop.f32.mrb[0].mxu0
    %v905 = vadd.f32 %v223, %v904
    %906 = vmatprep.mubr.bf16.mxu0 0
    %907 = vmatmul.mubr.bf16.gmra.mrb[0].mxu0 %v276
    %v908 = vpop.f32.mrb[0].mxu0
    %v909 = vadd.f32 %v219, %v908
    %v910 = vpop.f32.mrb[0].mxu0
    %v911 = vadd.f32 %v223, %v910
    %v912 = vpop.f32.mrb[0].mxu0
    %v913 = vadd.f32 %v219, %v912
    %v914 = vpop.f32.mrb[0].mxu0
    %v915 = vadd.f32 %v223, %v914
    %916 = vmatprep.mubr.bf16.mxu0 0
    %917 = vmatmul.mubr.bf16.gmra.mrb[0].mxu0 %v277
    %v918 = vpop.f32.mrb[0].mxu0
    %v919 = vadd.f32 %v219, %v918
    %v920 = vpop.f32.mrb[0].mxu0
    %v921 = vadd.f32 %v223, %v920
    %v922 = vpop.f32.mrb[0].mxu0
    %v923 = vadd.f32 %v219, %v922
    %v924 = vpop.f32.mrb[0].mxu0
    %v925 = vadd.f32 %v223, %v924
    %926 = vmatprep.mubr.bf16.mxu0 0
    %927 = vmatmul.mubr.bf16.gmra.mrb[0].mxu0 %v278
    %v928 = vpop.f32.mrb[0].mxu0
    %v929 = vadd.f32 %v219, %v928
    %v930 = vpop.f32.mrb[0].mxu0
    %v931 = vadd.f32 %v223, %v930
    %v932 = vpop.f32.mrb[0].mxu0
    %v933 = vadd.f32 %v219, %v932
    %v934 = vpop.f32.mrb[0].mxu0
    %v935 = vadd.f32 %v223, %v934
    %936 = vmatprep.mubr.bf16.mxu0 0
    %937 = vmatmul.mubr.bf16.gmra.mrb[0].mxu0 %v279
    %v938 = vpop.f32.mrb[0].mxu0
    %v939 = vadd.f32 %v219, %v938
    %v940 = vpop.f32.mrb[0].mxu0
    %v941 = vadd.f32 %v223, %v940
    %v942 = vpop.f32.mrb[0].mxu0
    %v943 = vadd.f32 %v219, %v942
    %v944 = vpop.f32.mrb[0].mxu0
    %v945 = vadd.f32 %v223, %v944
    %946 = vdwg.mxu0
    %947 = vmatprep.subr.bf16.mxu0 %v487
    %948 = vmatpush1.bf16.msra.mxu0 %v486
    %949 = vmatprep.subr.bf16.mxu0 %v495
    %950 = vmatpush1.bf16.msra.mxu0 %v494
    %951 = vmatprep.subr.bf16.mxu0 %v503
    %952 = vmatpush1.bf16.msra.mxu0 %v502
    %953 = vmatprep.subr.bf16.mxu0 %v511
    %954 = vmatpush1.bf16.msra.mxu0 %v510
    %955 = vmatprep.subr.bf16.mxu0 %v519
    %956 = vmatpush1.bf16.msra.mxu0 %v518
    %957 = vmatprep.subr.bf16.mxu0 %v527
    %958 = vmatpush1.bf16.msra.mxu0 %v526
    %959 = vmatprep.subr.bf16.mxu0 %v535
    %960 = vmatpush1.bf16.msra.mxu0 %v534
    %961 = vmatprep.subr.bf16.mxu0 %v543
    %962 = vmatpush1.bf16.msra.mxu0 %v542
    %963 = vmatprep.subr.bf16.mxu0 0
    %964 = vmatpush1.bf16.msra.mxu0 0
    %965 = vmatprep.subr.bf16.mxu0 0
    %966 = vmatpush1.bf16.msra.mxu0 0
    %967 = vmatprep.subr.bf16.mxu0 0
    %968 = vmatpush1.bf16.msra.mxu0 0
    %969 = vmatprep.subr.bf16.mxu0 0
    %970 = vmatpush1.bf16.msra.mxu0 0
    %971 = vmatprep.subr.bf16.mxu0 0
    %972 = vmatpush1.bf16.msra.mxu0 0
    %973 = vmatprep.subr.bf16.mxu0 0
    %974 = vmatpush1.bf16.msra.mxu0 0
    %975 = vmatprep.subr.bf16.mxu0 0
    %976 = vmatpush1.bf16.msra.mxu0 0
    %977 = vmatprep.subr.bf16.mxu0 0
    %978 = vmatpush1.bf16.msra.mxu0 0
    %979 = vmatprep.mubr.bf16.mxu0 0
    %980 = vmatmul.mubr.bf16.gmra.mrb[0].mxu0 %v272
    %v981 = vpop.f32.mrb[0].mxu0
    %v982 = vadd.f32 %v227, %v981
    %v983 = vpop.f32.mrb[0].mxu0
    %v984 = vadd.f32 %v231, %v983
    %v985 = vpop.f32.mrb[0].mxu0
    %v986 = vadd.f32 %v227, %v985
    %v987 = vpop.f32.mrb[0].mxu0
    %v988 = vadd.f32 %v231, %v987
    %989 = vmatprep.mubr.bf16.mxu0 0
    %990 = vmatmul.mubr.bf16.gmra.mrb[0].mxu0 %v273
    %v991 = vpop.f32.mrb[0].mxu0
    %v992 = vadd.f32 %v227, %v991
    %v993 = vpop.f32.mrb[0].mxu0
    %v994 = vadd.f32 %v231, %v993
    %v995 = vpop.f32.mrb[0].mxu0
    %v996 = vadd.f32 %v227, %v995
    %v997 = vpop.f32.mrb[0].mxu0
    %v998 = vadd.f32 %v231, %v997
    %999 = vmatprep.mubr.bf16.mxu0 0
    %1000 = vmatmul.mubr.bf16.gmra.mrb[0].mxu0 %v274
    %v1001 = vpop.f32.mrb[0].mxu0
    %v1002 = vadd.f32 %v227, %v1001
    %v1003 = vpop.f32.mrb[0].mxu0
    %v1004 = vadd.f32 %v231, %v1003
    %v1005 = vpop.f32.mrb[0].mxu0
    %v1006 = vadd.f32 %v227, %v1005
    %v1007 = vpop.f32.mrb[0].mxu0
    %v1008 = vadd.f32 %v231, %v1007
    %1009 = vmatprep.mubr.bf16.mxu0 0
    %1010 = vmatmul.mubr.bf16.gmra.mrb[0].mxu0 %v275
    %v1011 = vpop.f32.mrb[0].mxu0
    %v1012 = vadd.f32 %v227, %v1011
    %v1013 = vpop.f32.mrb[0].mxu0
    %v1014 = vadd.f32 %v231, %v1013
    %v1015 = vpop.f32.mrb[0].mxu0
    %v1016 = vadd.f32 %v227, %v1015
    %v1017 = vpop.f32.mrb[0].mxu0
    %v1018 = vadd.f32 %v231, %v1017
    %1019 = vmatprep.mubr.bf16.mxu0 0
    %1020 = vmatmul.mubr.bf16.gmra.mrb[0].mxu0 %v276
    %v1021 = vpop.f32.mrb[0].mxu0
    %v1022 = vadd.f32 %v227, %v1021
    %v1023 = vpop.f32.mrb[0].mxu0
    %v1024 = vadd.f32 %v231, %v1023
    %v1025 = vpop.f32.mrb[0].mxu0
    %v1026 = vadd.f32 %v227, %v1025
    %v1027 = vpop.f32.mrb[0].mxu0
    %v1028 = vadd.f32 %v231, %v1027
    %1029 = vmatprep.mubr.bf16.mxu0 0
    %1030 = vmatmul.mubr.bf16.gmra.mrb[0].mxu0 %v277
    %v1031 = vpop.f32.mrb[0].mxu0
    %v1032 = vadd.f32 %v227, %v1031
    %v1033 = vpop.f32.mrb[0].mxu0
    %v1034 = vadd.f32 %v231, %v1033
    %v1035 = vpop.f32.mrb[0].mxu0
    %v1036 = vadd.f32 %v227, %v1035
    %v1037 = vpop.f32.mrb[0].mxu0
    %v1038 = vadd.f32 %v231, %v1037
    %1039 = vmatprep.mubr.bf16.mxu0 0
    %1040 = vmatmul.mubr.bf16.gmra.mrb[0].mxu0 %v278
    %v1041 = vpop.f32.mrb[0].mxu0
    %v1042 = vadd.f32 %v227, %v1041
    %v1043 = vpop.f32.mrb[0].mxu0
    %v1044 = vadd.f32 %v231, %v1043
    %v1045 = vpop.f32.mrb[0].mxu0
    %v1046 = vadd.f32 %v227, %v1045
    %v1047 = vpop.f32.mrb[0].mxu0
    %v1048 = vadd.f32 %v231, %v1047
    %1049 = vmatprep.mubr.bf16.mxu0 0
    %1050 = vmatmul.mubr.bf16.gmra.mrb[0].mxu0 %v279
    %v1051 = vpop.f32.mrb[0].mxu0
    %v1052 = vadd.f32 %v227, %v1051
    %v1053 = vpop.f32.mrb[0].mxu0
    %v1054 = vadd.f32 %v231, %v1053
    %v1055 = vpop.f32.mrb[0].mxu0
    %v1056 = vadd.f32 %v227, %v1055
    %v1057 = vpop.f32.mrb[0].mxu0
    %v1058 = vadd.f32 %v231, %v1057
    %1059 = vdwg.mxu0
    %1060 = vst [vmem:[#allocation2] sm:$0xff] %v643
    %1061 = vst [vmem:[#allocation2 + $0x8] sm:$0xff] %v645
    %1062 = vst [vmem:[#allocation2 + $0x10] sm:$0xff] %v756
    %1063 = vst [vmem:[#allocation2 + $0x18] sm:$0xff] %v758
    %1064 = vst [vmem:[#allocation2 + $0x20] sm:$0xff] %v869
    %1065 = vst [vmem:[#allocation2 + $0x28] sm:$0xff] %v871
    %1066 = vst [vmem:[#allocation2 + $0x30] sm:$0xff] %v982
    %1067 = vst [vmem:[#allocation2 + $0x38] sm:$0xff] %v984
    %1068 = vst [vmem:[#allocation2 + $0x40] sm:$0xff] %v647
    %1069 = vst [vmem:[#allocation2 + $0x48] sm:$0xff] %v649
    %1070 = vst [vmem:[#allocation2 + $0x50] sm:$0xff] %v760
    %1071 = vst [vmem:[#allocation2 + $0x58] sm:$0xff] %v762
    %1072 = vst [vmem:[#allocation2 + $0x60] sm:$0xff] %v873
    %1073 = vst [vmem:[#allocation2 + $0x68] sm:$0xff] %v875
    %1074 = vst [vmem:[#allocation2 + $0x70] sm:$0xff] %v986
    %1075 = vst [vmem:[#allocation2 + $0x78] sm:$0xff] %v988
    %1076 = vst [vmem:[#allocation2 + $0x80] sm:$0xff] %v653
    %1077 = vst [vmem:[#allocation2 + $0x88] sm:$0xff] %v655
    %1078 = vst [vmem:[#allocation2 + $0x90] sm:$0xff] %v766
    %1079 = vst [vmem:[#allocation2 + $0x98] sm:$0xff] %v768
    %1080 = vst [vmem:[#allocation2 + $0xa0] sm:$0xff] %v879
    %1081 = vst [vmem:[#allocation2 + $0xa8] sm:$0xff] %v881
    %1082 = vst [vmem:[#allocation2 + $0xb0] sm:$0xff] %v992
    %1083 = vst [vmem:[#allocation2 + $0xb8] sm:$0xff] %v994
    %1084 = vst [vmem:[#allocation2 + $0xc0] sm:$0xff] %v657
    %1085 = vst [vmem:[#allocation2 + $0xc8] sm:$0xff] %v659
    %1086 = vst [vmem:[#allocation2 + $0xd0] sm:$0xff] %v770
    %1087 = vst [vmem:[#allocation2 + $0xd8] sm:$0xff] %v772
    %1088 = vst [vmem:[#allocation2 + $0xe0] sm:$0xff] %v883
    %1089 = vst [vmem:[#allocation2 + $0xe8] sm:$0xff] %v885
    %1090 = vst [vmem:[#allocation2 + $0xf0] sm:$0xff] %v996
    %1091 = vst [vmem:[#allocation2 + $0xf8] sm:$0xff] %v998
    %1092 = vst [vmem:[#allocation2 + $0x100] sm:$0xff] %v663
    %1093 = vst [vmem:[#allocation2 + $0x108] sm:$0xff] %v665
    %1094 = vst [vmem:[#allocation2 + $0x110] sm:$0xff] %v776
    %1095 = vst [vmem:[#allocation2 + $0x118] sm:$0xff] %v778
    %1096 = vst [vmem:[#allocation2 + $0x120] sm:$0xff] %v889
    %1097 = vst [vmem:[#allocation2 + $0x128] sm:$0xff] %v891
    %1098 = vst [vmem:[#allocation2 + $0x130] sm:$0xff] %v1002
    %1099 = vst [vmem:[#allocation2 + $0x138] sm:$0xff] %v1004
    %1100 = vst [vmem:[#allocation2 + $0x140] sm:$0xff] %v667
    %1101 = vst [vmem:[#allocation2 + $0x148] sm:$0xff] %v669
    %1102 = vst [vmem:[#allocation2 + $0x150] sm:$0xff] %v780
    %1103 = vst [vmem:[#allocation2 + $0x158] sm:$0xff] %v782
    %1104 = vst [vmem:[#allocation2 + $0x160] sm:$0xff] %v893
    %1105 = vst [vmem:[#allocation2 + $0x168] sm:$0xff] %v895
    %1106 = vst [vmem:[#allocation2 + $0x170] sm:$0xff] %v1006
    %1107 = vst [vmem:[#allocation2 + $0x178] sm:$0xff] %v1008
    %1108 = vst [vmem:[#allocation2 + $0x180] sm:$0xff] %v673
    %1109 = vst [vmem:[#allocation2 + $0x188] sm:$0xff] %v675
    %1110 = vst [vmem:[#allocation2 + $0x190] sm:$0xff] %v786
    %1111 = vst [vmem:[#allocation2 + $0x198] sm:$0xff] %v788
    %1112 = vst [vmem:[#allocation2 + $0x1a0] sm:$0xff] %v899
    %1113 = vst [vmem:[#allocation2 + $0x1a8] sm:$0xff] %v901
    %1114 = vst [vmem:[#allocation2 + $0x1b0] sm:$0xff] %v1012
    %1115 = vst [vmem:[#allocation2 + $0x1b8] sm:$0xff] %v1014
    %1116 = vst [vmem:[#allocation2 + $0x1c0] sm:$0xff] %v677
    %1117 = vst [vmem:[#allocation2 + $0x1c8] sm:$0xff] %v679
    %1118 = vst [vmem:[#allocation2 + $0x1d0] sm:$0xff] %v790
    %1119 = vst [vmem:[#allocation2 + $0x1d8] sm:$0xff] %v792
    %1120 = vst [vmem:[#allocation2 + $0x1e0] sm:$0xff] %v903
    %1121 = vst [vmem:[#allocation2 + $0x1e8] sm:$0xff] %v905
    %1122 = vst [vmem:[#allocation2 + $0x1f0] sm:$0xff] %v1016
    %1123 = vst [vmem:[#allocation2 + $0x1f8] sm:$0xff] %v1018
    %1124 = vst [vmem:[#allocation2 + $0x200] sm:$0xff] %v683
    %1125 = vst [vmem:[#allocation2 + $0x208] sm:$0xff] %v685
    %1126 = vst [vmem:[#allocation2 + $0x210] sm:$0xff] %v796
    %1127 = vst [vmem:[#allocation2 + $0x218] sm:$0xff] %v798
    %1128 = vst [vmem:[#allocation2 + $0x220] sm:$0xff] %v909
    %1129 = vst [vmem:[#allocation2 + $0x228] sm:$0xff] %v911
    %1130 = vst [vmem:[#allocation2 + $0x230] sm:$0xff] %v1022
    %1131 = vst [vmem:[#allocation2 + $0x238] sm:$0xff] %v1024
    %1132 = vst [vmem:[#allocation2 + $0x240] sm:$0xff] %v687
    %1133 = vst [vmem:[#allocation2 + $0x248] sm:$0xff] %v689
    %1134 = vst [vmem:[#allocation2 + $0x250] sm:$0xff] %v800
    %1135 = vst [vmem:[#allocation2 + $0x258] sm:$0xff] %v802
    %1136 = vst [vmem:[#allocation2 + $0x260] sm:$0xff] %v913
    %1137 = vst [vmem:[#allocation2 + $0x268] sm:$0xff] %v915
    %1138 = vst [vmem:[#allocation2 + $0x270] sm:$0xff] %v1026
    %1139 = vst [vmem:[#allocation2 + $0x278] sm:$0xff] %v1028
    %1140 = vst [vmem:[#allocation2 + $0x280] sm:$0xff] %v693
    %1141 = vst [vmem:[#allocation2 + $0x288] sm:$0xff] %v695
    %1142 = vst [vmem:[#allocation2 + $0x290] sm:$0xff] %v806
    %1143 = vst [vmem:[#allocation2 + $0x298] sm:$0xff] %v808
    %1144 = vst [vmem:[#allocation2 + $0x2a0] sm:$0xff] %v919
    %1145 = vst [vmem:[#allocation2 + $0x2a8] sm:$0xff] %v921
    %1146 = vst [vmem:[#allocation2 + $0x2b0] sm:$0xff] %v1032
    %1147 = vst [vmem:[#allocation2 + $0x2b8] sm:$0xff] %v1034
    %1148 = vst [vmem:[#allocation2 + $0x2c0] sm:$0xff] %v697
    %1149 = vst [vmem:[#allocation2 + $0x2c8] sm:$0xff] %v699
    %1150 = vst [vmem:[#allocation2 + $0x2d0] sm:$0xff] %v810
    %1151 = vst [vmem:[#allocation2 + $0x2d8] sm:$0xff] %v812
    %1152 = vst [vmem:[#allocation2 + $0x2e0] sm:$0xff] %v923
    %1153 = vst [vmem:[#allocation2 + $0x2e8] sm:$0xff] %v925
    %1154 = vst [vmem:[#allocation2 + $0x2f0] sm:$0xff] %v1036
    %1155 = vst [vmem:[#allocation2 + $0x2f8] sm:$0xff] %v1038
    %1156 = vst [vmem:[#allocation2 + $0x300] sm:$0xff] %v703
    %1157 = vst [vmem:[#allocation2 + $0x308] sm:$0xff] %v705
    %1158 = vst [vmem:[#allocation2 + $0x310] sm:$0xff] %v816
    %1159 = vst [vmem:[#allocation2 + $0x318] sm:$0xff] %v818
    %1160 = vst [vmem:[#allocation2 + $0x320] sm:$0xff] %v929
    %1161 = vst [vmem:[#allocation2 + $0x328] sm:$0xff] %v931
    %1162 = vst [vmem:[#allocation2 + $0x330] sm:$0xff] %v1042
    %1163 = vst [vmem:[#allocation2 + $0x338] sm:$0xff] %v1044
    %1164 = vst [vmem:[#allocation2 + $0x340] sm:$0xff] %v707
    %1165 = vst [vmem:[#allocation2 + $0x348] sm:$0xff] %v709
    %1166 = vst [vmem:[#allocation2 + $0x350] sm:$0xff] %v820
    %1167 = vst [vmem:[#allocation2 + $0x358] sm:$0xff] %v822
    %1168 = vst [vmem:[#allocation2 + $0x360] sm:$0xff] %v933
    %1169 = vst [vmem:[#allocation2 + $0x368] sm:$0xff] %v935
    %1170 = vst [vmem:[#allocation2 + $0x370] sm:$0xff] %v1046
    %1171 = vst [vmem:[#allocation2 + $0x378] sm:$0xff] %v1048
    %1172 = vst [vmem:[#allocation2 + $0x380] sm:$0xff] %v713
    %1173 = vst [vmem:[#allocation2 + $0x388] sm:$0xff] %v715
    %1174 = vst [vmem:[#allocation2 + $0x390] sm:$0xff] %v826
    %1175 = vst [vmem:[#allocation2 + $0x398] sm:$0xff] %v828
    %1176 = vst [vmem:[#allocation2 + $0x3a0] sm:$0xff] %v939
    %1177 = vst [vmem:[#allocation2 + $0x3a8] sm:$0xff] %v941
    %1178 = vst [vmem:[#allocation2 + $0x3b0] sm:$0xff] %v1052
    %1179 = vst [vmem:[#allocation2 + $0x3b8] sm:$0xff] %v1054
    %1180 = vst [vmem:[#allocation2 + $0x3c0] sm:$0xff] %v717
    %1181 = vst [vmem:[#allocation2 + $0x3c8] sm:$0xff] %v719
    %1182 = vst [vmem:[#allocation2 + $0x3d0] sm:$0xff] %v830
    %1183 = vst [vmem:[#allocation2 + $0x3d8] sm:$0xff] %v832
    %1184 = vst [vmem:[#allocation2 + $0x3e0] sm:$0xff] %v943
    %1185 = vst [vmem:[#allocation2 + $0x3e8] sm:$0xff] %v945
    %1186 = vst [vmem:[#allocation2 + $0x3f0] sm:$0xff] %v1056
    %1187 = vst [vmem:[#allocation2 + $0x3f8] sm:$0xff] %v1058
    %v1188 = vld [vmem:[#allocation2] sm:$0xff]
    %v1189 = vld [vmem:[#allocation2 + $0x8] sm:$0xff]
    %v1190 = vld [vmem:[#allocation2 + $0x10] sm:$0xff]
    %v1191 = vld [vmem:[#allocation2 + $0x18] sm:$0xff]
    %v1192 = vld [vmem:[#allocation2 + $0x20] sm:$0xff]
    %v1193 = vld [vmem:[#allocation2 + $0x28] sm:$0xff]
    %v1194 = vld [vmem:[#allocation2 + $0x30] sm:$0xff]
    %v1195 = vld [vmem:[#allocation2 + $0x38] sm:$0xff]
    %v1196 = vld [vmem:[#allocation9] sm:$0xff]
    %v1197 = vld [vmem:[#allocation9 + $0x8] sm:$0xff]
    %v1198 = vld [vmem:[#allocation9 + $0x10] sm:$0xff]
    %v1199 = vld [vmem:[#allocation9 + $0x18] sm:$0xff]
    %v1200 = vld [vmem:[#allocation9 + $0x20] sm:$0xff]
    %v1201 = vld [vmem:[#allocation9 + $0x28] sm:$0xff]
    %v1202 = vld [vmem:[#allocation9 + $0x30] sm:$0xff]
    %v1203 = vld [vmem:[#allocation9 + $0x38] sm:$0xff]
    %v1204 = vld [vmem:[#allocation9 + $0x40] sm:$0xff]
    %v1205 = vld [vmem:[#allocation9 + $0x48] sm:$0xff]
    %v1206 = vld [vmem:[#allocation9 + $0x50] sm:$0xff]
    %v1207 = vld [vmem:[#allocation9 + $0x58] sm:$0xff]
    %v1208 = vld [vmem:[#allocation9 + $0x60] sm:$0xff]
    %v1209 = vld [vmem:[#allocation9 + $0x68] sm:$0xff]
    %v1210 = vld [vmem:[#allocation9 + $0x70] sm:$0xff]
    %v1211 = vld [vmem:[#allocation9 + $0x78] sm:$0xff]
    %v1212 = vld [vmem:[#allocation9 + $0x80] sm:$0xff]
    %v1213 = vld [vmem:[#allocation9 + $0x88] sm:$0xff]
    %v1214 = vld [vmem:[#allocation9 + $0x90] sm:$0xff]
    %v1215 = vld [vmem:[#allocation9 + $0x98] sm:$0xff]
    %v1216 = vld [vmem:[#allocation9 + $0xa0] sm:$0xff]
    %v1217 = vld [vmem:[#allocation9 + $0xa8] sm:$0xff]
    %v1218 = vld [vmem:[#allocation9 + $0xb0] sm:$0xff]
    %v1219 = vld [vmem:[#allocation9 + $0xb8] sm:$0xff]
    %v1220 = vld [vmem:[#allocation9 + $0xc0] sm:$0xff]
    %v1221 = vld [vmem:[#allocation9 + $0xc8] sm:$0xff]
    %v1222 = vld [vmem:[#allocation9 + $0xd0] sm:$0xff]
    %v1223 = vld [vmem:[#allocation9 + $0xd8] sm:$0xff]
    %v1224 = vld [vmem:[#allocation9 + $0xe0] sm:$0xff]
    %v1225 = vld [vmem:[#allocation9 + $0xe8] sm:$0xff]
    %v1226 = vld [vmem:[#allocation9 + $0xf0] sm:$0xff]
    %v1227 = vld [vmem:[#allocation9 + $0xf8] sm:$0xff]
    %v1228 = vld [vmem:[#allocation9 + $0x100] sm:$0xff]
    %v1229 = vld [vmem:[#allocation9 + $0x108] sm:$0xff]
    %v1230 = vld [vmem:[#allocation9 + $0x110] sm:$0xff]
    %v1231 = vld [vmem:[#allocation9 + $0x118] sm:$0xff]
    %v1232 = vld [vmem:[#allocation9 + $0x120] sm:$0xff]
    %v1233 = vld [vmem:[#allocation9 + $0x128] sm:$0xff]
    %v1234 = vld [vmem:[#allocation9 + $0x130] sm:$0xff]
    %v1235 = vld [vmem:[#allocation9 + $0x138] sm:$0xff]
    %v1236 = vld [vmem:[#allocation9 + $0x140] sm:$0xff]
    %v1237 = vld [vmem:[#allocation9 + $0x148] sm:$0xff]
    %v1238 = vld [vmem:[#allocation9 + $0x150] sm:$0xff]
    %v1239 = vld [vmem:[#allocation9 + $0x158] sm:$0xff]
    %v1240 = vld [vmem:[#allocation9 + $0x160] sm:$0xff]
    %v1241 = vld [vmem:[#allocation9 + $0x168] sm:$0xff]
    %v1242 = vld [vmem:[#allocation9 + $0x170] sm:$0xff]
    %v1243 = vld [vmem:[#allocation9 + $0x178] sm:$0xff]
    %v1244 = vld [vmem:[#allocation9 + $0x180] sm:$0xff]
    %v1245 = vld [vmem:[#allocation9 + $0x188] sm:$0xff]
    %v1246 = vld [vmem:[#allocation9 + $0x190] sm:$0xff]
    %v1247 = vld [vmem:[#allocation9 + $0x198] sm:$0xff]
    %v1248 = vld [vmem:[#allocation9 + $0x1a0] sm:$0xff]
    %v1249 = vld [vmem:[#allocation9 + $0x1a8] sm:$0xff]
    %v1250 = vld [vmem:[#allocation9 + $0x1b0] sm:$0xff]
    %v1251 = vld [vmem:[#allocation9 + $0x1b8] sm:$0xff]
    %v1252 = vld [vmem:[#allocation9 + $0x1c0] sm:$0xff]
    %v1253 = vld [vmem:[#allocation9 + $0x1c8] sm:$0xff]
    %v1254 = vld [vmem:[#allocation9 + $0x1d0] sm:$0xff]
    %v1255 = vld [vmem:[#allocation9 + $0x1d8] sm:$0xff]
    %v1256 = vld [vmem:[#allocation9 + $0x1e0] sm:$0xff]
    %v1257 = vld [vmem:[#allocation9 + $0x1e8] sm:$0xff]
    %v1258 = vld [vmem:[#allocation9 + $0x1f0] sm:$0xff]
    %v1259 = vld [vmem:[#allocation9 + $0x1f8] sm:$0xff]
    %v1260 = vld [vmem:[#allocation9 + $0x200] sm:$0xff]
    %v1261 = vld [vmem:[#allocation9 + $0x208] sm:$0xff]
    %v1262 = vld [vmem:[#allocation9 + $0x210] sm:$0xff]
    %v1263 = vld [vmem:[#allocation9 + $0x218] sm:$0xff]
    %v1264 = vld [vmem:[#allocation9 + $0x220] sm:$0xff]
    %v1265 = vld [vmem:[#allocation9 + $0x228] sm:$0xff]
    %v1266 = vld [vmem:[#allocation9 + $0x230] sm:$0xff]
    %v1267 = vld [vmem:[#allocation9 + $0x238] sm:$0xff]
    %v1268 = vld [vmem:[#allocation9 + $0x240] sm:$0xff]
    %v1269 = vld [vmem:[#allocation9 + $0x248] sm:$0xff]
    %v1270 = vld [vmem:[#allocation9 + $0x250] sm:$0xff]
    %v1271 = vld [vmem:[#allocation9 + $0x258] sm:$0xff]
    %v1272 = vld [vmem:[#allocation9 + $0x260] sm:$0xff]
    %v1273 = vld [vmem:[#allocation9 + $0x268] sm:$0xff]
    %v1274 = vld [vmem:[#allocation9 + $0x270] sm:$0xff]
    %v1275 = vld [vmem:[#allocation9 + $0x278] sm:$0xff]
    %v1276 = vld [vmem:[#allocation9 + $0x280] sm:$0xff]
    %v1277 = vld [vmem:[#allocation9 + $0x288] sm:$0xff]
    %v1278 = vld [vmem:[#allocation9 + $0x290] sm:$0xff]
    %v1279 = vld [vmem:[#allocation9 + $0x298] sm:$0xff]
    %v1280 = vld [vmem:[#allocation9 + $0x2a0] sm:$0xff]
    %v1281 = vld [vmem:[#allocation9 + $0x2a8] sm:$0xff]
    %v1282 = vld [vmem:[#allocation9 + $0x2b0] sm:$0xff]
    %v1283 = vld [vmem:[#allocation9 + $0x2b8] sm:$0xff]
    %v1284 = vld [vmem:[#allocation9 + $0x2c0] sm:$0xff]
    %v1285 = vld [vmem:[#allocation9 + $0x2c8] sm:$0xff]
    %v1286 = vld [vmem:[#allocation9 + $0x2d0] sm:$0xff]
    %v1287 = vld [vmem:[#allocation9 + $0x2d8] sm:$0xff]
    %v1288 = vld [vmem:[#allocation9 + $0x2e0] sm:$0xff]
    %v1289 = vld [vmem:[#allocation9 + $0x2e8] sm:$0xff]
    %v1290 = vld [vmem:[#allocation9 + $0x2f0] sm:$0xff]
    %v1291 = vld [vmem:[#allocation9 + $0x2f8] sm:$0xff]
    %v1292 = vld [vmem:[#allocation9 + $0x300] sm:$0xff]
    %v1293 = vld [vmem:[#allocation9 + $0x308] sm:$0xff]
    %v1294 = vld [vmem:[#allocation9 + $0x310] sm:$0xff]
    %v1295 = vld [vmem:[#allocation9 + $0x318] sm:$0xff]
    %v1296 = vld [vmem:[#allocation9 + $0x320] sm:$0xff]
    %v1297 = vld [vmem:[#allocation9 + $0x328] sm:$0xff]
    %v1298 = vld [vmem:[#allocation9 + $0x330] sm:$0xff]
    %v1299 = vld [vmem:[#allocation9 + $0x338] sm:$0xff]
    %v1300 = vld [vmem:[#allocation9 + $0x340] sm:$0xff]
    %v1301 = vld [vmem:[#allocation9 + $0x348] sm:$0xff]
    %v1302 = vld [vmem:[#allocation9 + $0x350] sm:$0xff]
    %v1303 = vld [vmem:[#allocation9 + $0x358] sm:$0xff]
    %v1304 = vld [vmem:[#allocation9 + $0x360] sm:$0xff]
    %v1305 = vld [vmem:[#allocation9 + $0x368] sm:$0xff]
    %v1306 = vld [vmem:[#allocation9 + $0x370] sm:$0xff]
    %v1307 = vld [vmem:[#allocation9 + $0x378] sm:$0xff]
    %v1308 = vld [vmem:[#allocation9 + $0x380] sm:$0xff]
    %v1309 = vld [vmem:[#allocation9 + $0x388] sm:$0xff]
    %v1310 = vld [vmem:[#allocation9 + $0x390] sm:$0xff]
    %v1311 = vld [vmem:[#allocation9 + $0x398] sm:$0xff]
    %v1312 = vld [vmem:[#allocation9 + $0x3a0] sm:$0xff]
    %v1313 = vld [vmem:[#allocation9 + $0x3a8] sm:$0xff]
    %v1314 = vld [vmem:[#allocation9 + $0x3b0] sm:$0xff]
    %v1315 = vld [vmem:[#allocation9 + $0x3b8] sm:$0xff]
    %v1316 = vld [vmem:[#allocation9 + $0x3c0] sm:$0xff]
    %v1317 = vld [vmem:[#allocation9 + $0x3c8] sm:$0xff]
    %v1318 = vld [vmem:[#allocation9 + $0x3d0] sm:$0xff]
    %v1319 = vld [vmem:[#allocation9 + $0x3d8] sm:$0xff]
    %v1320 = vld [vmem:[#allocation9 + $0x3e0] sm:$0xff]
    %v1321 = vld [vmem:[#allocation9 + $0x3e8] sm:$0xff]
    %v1322 = vld [vmem:[#allocation9 + $0x3f0] sm:$0xff]
    %v1323 = vld [vmem:[#allocation9 + $0x3f8] sm:$0xff]
    %v1452 = vunpack.c.l.b16 %v1196
    %v1453 = vunpack.c.h.b16 %v1196
    %v1454 = vunpack.c.l.b16 %v1197
    %v1455 = vunpack.c.h.b16 %v1197
    %v1456 = vunpack.c.l.b16 %v1198
    %v1457 = vunpack.c.h.b16 %v1198
    %v1458 = vunpack.c.l.b16 %v1199
    %v1459 = vunpack.c.h.b16 %v1199
    %v1460 = vunpack.c.l.b16 %v1200
    %v1461 = vunpack.c.h.b16 %v1200
    %v1462 = vunpack.c.l.b16 %v1201
    %v1463 = vunpack.c.h.b16 %v1201
    %v1464 = vunpack.c.l.b16 %v1202
    %v1465 = vunpack.c.h.b16 %v1202
    %v1466 = vunpack.c.l.b16 %v1203
    %v1467 = vunpack.c.h.b16 %v1203
    %v1468 = vunpack.c.l.b16 %v1204
    %v1469 = vunpack.c.h.b16 %v1204
    %v1470 = vunpack.c.l.b16 %v1205
    %v1471 = vunpack.c.h.b16 %v1205
    %v1472 = vunpack.c.l.b16 %v1206
    %v1473 = vunpack.c.h.b16 %v1206
    %v1474 = vunpack.c.l.b16 %v1207
    %v1475 = vunpack.c.h.b16 %v1207
    %v1476 = vunpack.c.l.b16 %v1208
    %v1477 = vunpack.c.h.b16 %v1208
    %v1478 = vunpack.c.l.b16 %v1209
    %v1479 = vunpack.c.h.b16 %v1209
    %v1480 = vunpack.c.l.b16 %v1210
    %v1481 = vunpack.c.h.b16 %v1210
    %v1482 = vunpack.c.l.b16 %v1211
    %v1483 = vunpack.c.h.b16 %v1211
    %v1484 = vunpack.c.l.b16 %v1212
    %v1485 = vunpack.c.h.b16 %v1212
    %v1486 = vunpack.c.l.b16 %v1213
    %v1487 = vunpack.c.h.b16 %v1213
    %v1488 = vunpack.c.l.b16 %v1214
    %v1489 = vunpack.c.h.b16 %v1214
    %v1490 = vunpack.c.l.b16 %v1215
    %v1491 = vunpack.c.h.b16 %v1215
    %v1492 = vunpack.c.l.b16 %v1216
    %v1493 = vunpack.c.h.b16 %v1216
    %v1494 = vunpack.c.l.b16 %v1217
    %v1495 = vunpack.c.h.b16 %v1217
    %v1496 = vunpack.c.l.b16 %v1218
    %v1497 = vunpack.c.h.b16 %v1218
    %v1498 = vunpack.c.l.b16 %v1219
    %v1499 = vunpack.c.h.b16 %v1219
    %v1500 = vunpack.c.l.b16 %v1220
    %v1501 = vunpack.c.h.b16 %v1220
    %v1502 = vunpack.c.l.b16 %v1221
    %v1503 = vunpack.c.h.b16 %v1221
    %v1504 = vunpack.c.l.b16 %v1222
    %v1505 = vunpack.c.h.b16 %v1222
    %v1506 = vunpack.c.l.b16 %v1223
    %v1507 = vunpack.c.h.b16 %v1223
    %v1508 = vunpack.c.l.b16 %v1224
    %v1509 = vunpack.c.h.b16 %v1224
    %v1510 = vunpack.c.l.b16 %v1225
    %v1511 = vunpack.c.h.b16 %v1225
    %v1512 = vunpack.c.l.b16 %v1226
    %v1513 = vunpack.c.h.b16 %v1226
    %v1514 = vunpack.c.l.b16 %v1227
    %v1515 = vunpack.c.h.b16 %v1227
    %v1516 = vunpack.c.l.b16 %v1228
    %v1517 = vunpack.c.h.b16 %v1228
    %v1518 = vunpack.c.l.b16 %v1229
    %v1519 = vunpack.c.h.b16 %v1229
    %v1520 = vunpack.c.l.b16 %v1230
    %v1521 = vunpack.c.h.b16 %v1230
    %v1522 = vunpack.c.l.b16 %v1231
    %v1523 = vunpack.c.h.b16 %v1231
    %v1524 = vunpack.c.l.b16 %v1232
    %v1525 = vunpack.c.h.b16 %v1232
    %v1526 = vunpack.c.l.b16 %v1233
    %v1527 = vunpack.c.h.b16 %v1233
    %v1528 = vunpack.c.l.b16 %v1234
    %v1529 = vunpack.c.h.b16 %v1234
    %v1530 = vunpack.c.l.b16 %v1235
    %v1531 = vunpack.c.h.b16 %v1235
    %v1532 = vunpack.c.l.b16 %v1236
    %v1533 = vunpack.c.h.b16 %v1236
    %v1534 = vunpack.c.l.b16 %v1237
    %v1535 = vunpack.c.h.b16 %v1237
    %v1536 = vunpack.c.l.b16 %v1238
    %v1537 = vunpack.c.h.b16 %v1238
    %v1538 = vunpack.c.l.b16 %v1239
    %v1539 = vunpack.c.h.b16 %v1239
    %v1540 = vunpack.c.l.b16 %v1240
    %v1541 = vunpack.c.h.b16 %v1240
    %v1542 = vunpack.c.l.b16 %v1241
    %v1543 = vunpack.c.h.b16 %v1241
    %v1544 = vunpack.c.l.b16 %v1242
    %v1545 = vunpack.c.h.b16 %v1242
    %v1546 = vunpack.c.l.b16 %v1243
    %v1547 = vunpack.c.h.b16 %v1243
    %v1548 = vunpack.c.l.b16 %v1244
    %v1549 = vunpack.c.h.b16 %v1244
    %v1550 = vunpack.c.l.b16 %v1245
    %v1551 = vunpack.c.h.b16 %v1245
    %v1552 = vunpack.c.l.b16 %v1246
    %v1553 = vunpack.c.h.b16 %v1246
    %v1554 = vunpack.c.l.b16 %v1247
    %v1555 = vunpack.c.h.b16 %v1247
    %v1556 = vunpack.c.l.b16 %v1248
    %v1557 = vunpack.c.h.b16 %v1248
    %v1558 = vunpack.c.l.b16 %v1249
    %v1559 = vunpack.c.h.b16 %v1249
    %v1560 = vunpack.c.l.b16 %v1250
    %v1561 = vunpack.c.h.b16 %v1250
    %v1562 = vunpack.c.l.b16 %v1251
    %v1563 = vunpack.c.h.b16 %v1251
    %v1564 = vunpack.c.l.b16 %v1252
    %v1565 = vunpack.c.h.b16 %v1252
    %v1566 = vunpack.c.l.b16 %v1253
    %v1567 = vunpack.c.h.b16 %v1253
    %v1568 = vunpack.c.l.b16 %v1254
    %v1569 = vunpack.c.h.b16 %v1254
    %v1570 = vunpack.c.l.b16 %v1255
    %v1571 = vunpack.c.h.b16 %v1255
    %v1572 = vunpack.c.l.b16 %v1256
    %v1573 = vunpack.c.h.b16 %v1256
    %v1574 = vunpack.c.l.b16 %v1257
    %v1575 = vunpack.c.h.b16 %v1257
    %v1576 = vunpack.c.l.b16 %v1258
    %v1577 = vunpack.c.h.b16 %v1258
    %v1578 = vunpack.c.l.b16 %v1259
    %v1579 = vunpack.c.h.b16 %v1259
    %v1580 = vunpack.c.l.b16 %v1260
    %v1581 = vunpack.c.h.b16 %v1260
    %v1582 = vunpack.c.l.b16 %v1261
    %v1583 = vunpack.c.h.b16 %v1261
    %v1584 = vunpack.c.l.b16 %v1262
    %v1585 = vunpack.c.h.b16 %v1262
    %v1586 = vunpack.c.l.b16 %v1263
    %v1587 = vunpack.c.h.b16 %v1263
    %v1588 = vunpack.c.l.b16 %v1264
    %v1589 = vunpack.c.h.b16 %v1264
    %v1590 = vunpack.c.l.b16 %v1265
    %v1591 = vunpack.c.h.b16 %v1265
    %v1592 = vunpack.c.l.b16 %v1266
    %v1593 = vunpack.c.h.b16 %v1266
    %v1594 = vunpack.c.l.b16 %v1267
    %v1595 = vunpack.c.h.b16 %v1267
    %v1596 = vunpack.c.l.b16 %v1268
    %v1597 = vunpack.c.h.b16 %v1268
    %v1598 = vunpack.c.l.b16 %v1269
    %v1599 = vunpack.c.h.b16 %v1269
    %v1600 = vunpack.c.l.b16 %v1270
    %v1601 = vunpack.c.h.b16 %v1270
    %v1602 = vunpack.c.l.b16 %v1271
    %v1603 = vunpack.c.h.b16 %v1271
    %v1604 = vunpack.c.l.b16 %v1272
    %v1605 = vunpack.c.h.b16 %v1272
    %v1606 = vunpack.c.l.b16 %v1273
    %v1607 = vunpack.c.h.b16 %v1273
    %v1608 = vunpack.c.l.b16 %v1274
    %v1609 = vunpack.c.h.b16 %v1274
    %v1610 = vunpack.c.l.b16 %v1275
    %v1611 = vunpack.c.h.b16 %v1275
    %v1612 = vunpack.c.l.b16 %v1276
    %v1613 = vunpack.c.h.b16 %v1276
    %v1614 = vunpack.c.l.b16 %v1277
    %v1615 = vunpack.c.h.b16 %v1277
    %v1616 = vunpack.c.l.b16 %v1278
    %v1617 = vunpack.c.h.b16 %v1278
    %v1618 = vunpack.c.l.b16 %v1279
    %v1619 = vunpack.c.h.b16 %v1279
    %v1620 = vunpack.c.l.b16 %v1280
    %v1621 = vunpack.c.h.b16 %v1280
    %v1622 = vunpack.c.l.b16 %v1281
    %v1623 = vunpack.c.h.b16 %v1281
    %v1624 = vunpack.c.l.b16 %v1282
    %v1625 = vunpack.c.h.b16 %v1282
    %v1626 = vunpack.c.l.b16 %v1283
    %v1627 = vunpack.c.h.b16 %v1283
    %v1628 = vunpack.c.l.b16 %v1284
    %v1629 = vunpack.c.h.b16 %v1284
    %v1630 = vunpack.c.l.b16 %v1285
    %v1631 = vunpack.c.h.b16 %v1285
    %v1632 = vunpack.c.l.b16 %v1286
    %v1633 = vunpack.c.h.b16 %v1286
    %v1634 = vunpack.c.l.b16 %v1287
    %v1635 = vunpack.c.h.b16 %v1287
    %v1636 = vunpack.c.l.b16 %v1288
    %v1637 = vunpack.c.h.b16 %v1288
    %v1638 = vunpack.c.l.b16 %v1289
    %v1639 = vunpack.c.h.b16 %v1289
    %v1640 = vunpack.c.l.b16 %v1290
    %v1641 = vunpack.c.h.b16 %v1290
    %v1642 = vunpack.c.l.b16 %v1291
    %v1643 = vunpack.c.h.b16 %v1291
    %v1644 = vunpack.c.l.b16 %v1292
    %v1645 = vunpack.c.h.b16 %v1292
    %v1646 = vunpack.c.l.b16 %v1293
    %v1647 = vunpack.c.h.b16 %v1293
    %v1648 = vunpack.c.l.b16 %v1294
    %v1649 = vunpack.c.h.b16 %v1294
    %v1650 = vunpack.c.l.b16 %v1295
    %v1651 = vunpack.c.h.b16 %v1295
    %v1652 = vunpack.c.l.b16 %v1296
    %v1653 = vunpack.c.h.b16 %v1296
    %v1654 = vunpack.c.l.b16 %v1297
    %v1655 = vunpack.c.h.b16 %v1297
    %v1656 = vunpack.c.l.b16 %v1298
    %v1657 = vunpack.c.h.b16 %v1298
    %v1658 = vunpack.c.l.b16 %v1299
    %v1659 = vunpack.c.h.b16 %v1299
    %v1660 = vunpack.c.l.b16 %v1300
    %v1661 = vunpack.c.h.b16 %v1300
    %v1662 = vunpack.c.l.b16 %v1301
    %v1663 = vunpack.c.h.b16 %v1301
    %v1664 = vunpack.c.l.b16 %v1302
    %v1665 = vunpack.c.h.b16 %v1302
    %v1666 = vunpack.c.l.b16 %v1303
    %v1667 = vunpack.c.h.b16 %v1303
    %v1668 = vunpack.c.l.b16 %v1304
    %v1669 = vunpack.c.h.b16 %v1304
    %v1670 = vunpack.c.l.b16 %v1305
    %v1671 = vunpack.c.h.b16 %v1305
    %v1672 = vunpack.c.l.b16 %v1306
    %v1673 = vunpack.c.h.b16 %v1306
    %v1674 = vunpack.c.l.b16 %v1307
    %v1675 = vunpack.c.h.b16 %v1307
    %v1676 = vunpack.c.l.b16 %v1308
    %v1677 = vunpack.c.h.b16 %v1308
    %v1678 = vunpack.c.l.b16 %v1309
    %v1679 = vunpack.c.h.b16 %v1309
    %v1680 = vunpack.c.l.b16 %v1310
    %v1681 = vunpack.c.h.b16 %v1310
    %v1682 = vunpack.c.l.b16 %v1311
    %v1683 = vunpack.c.h.b16 %v1311
    %v1684 = vunpack.c.l.b16 %v1312
    %v1685 = vunpack.c.h.b16 %v1312
    %v1686 = vunpack.c.l.b16 %v1313
    %v1687 = vunpack.c.h.b16 %v1313
    %v1688 = vunpack.c.l.b16 %v1314
    %v1689 = vunpack.c.h.b16 %v1314
    %v1690 = vunpack.c.l.b16 %v1315
    %v1691 = vunpack.c.h.b16 %v1315
    %v1692 = vunpack.c.l.b16 %v1316
    %v1693 = vunpack.c.h.b16 %v1316
    %v1694 = vunpack.c.l.b16 %v1317
    %v1695 = vunpack.c.h.b16 %v1317
    %v1696 = vunpack.c.l.b16 %v1318
    %v1697 = vunpack.c.h.b16 %v1318
    %v1698 = vunpack.c.l.b16 %v1319
    %v1699 = vunpack.c.h.b16 %v1319
    %v1700 = vunpack.c.l.b16 %v1320
    %v1701 = vunpack.c.h.b16 %v1320
    %v1702 = vunpack.c.l.b16 %v1321
    %v1703 = vunpack.c.h.b16 %v1321
    %v1704 = vunpack.c.l.b16 %v1322
    %v1705 = vunpack.c.h.b16 %v1322
    %v1706 = vunpack.c.l.b16 %v1323
    %v1707 = vunpack.c.h.b16 %v1323
    %v1708 = vpack.c.b16 %v1460, %v1452
    %v1709 = vpack.c.b16 %v1461, %v1453
    %v1710 = vpack.c.b16 %v1462, %v1454
    %v1711 = vpack.c.b16 %v1463, %v1455
    %v1712 = vpack.c.b16 %v1464, %v1456
    %v1713 = vpack.c.b16 %v1465, %v1457
    %v1714 = vpack.c.b16 %v1466, %v1458
    %v1715 = vpack.c.b16 %v1467, %v1459
    %v1716 = vpack.c.b16 %v1476, %v1468
    %v1717 = vpack.c.b16 %v1477, %v1469
    %v1718 = vpack.c.b16 %v1478, %v1470
    %v1719 = vpack.c.b16 %v1479, %v1471
    %v1720 = vpack.c.b16 %v1480, %v1472
    %v1721 = vpack.c.b16 %v1481, %v1473
    %v1722 = vpack.c.b16 %v1482, %v1474
    %v1723 = vpack.c.b16 %v1483, %v1475
    %v1724 = vpack.c.b16 %v1492, %v1484
    %v1725 = vpack.c.b16 %v1493, %v1485
    %v1726 = vpack.c.b16 %v1494, %v1486
    %v1727 = vpack.c.b16 %v1495, %v1487
    %v1728 = vpack.c.b16 %v1496, %v1488
    %v1729 = vpack.c.b16 %v1497, %v1489
    %v1730 = vpack.c.b16 %v1498, %v1490
    %v1731 = vpack.c.b16 %v1499, %v1491
    %v1732 = vpack.c.b16 %v1508, %v1500
    %v1733 = vpack.c.b16 %v1509, %v1501
    %v1734 = vpack.c.b16 %v1510, %v1502
    %v1735 = vpack.c.b16 %v1511, %v1503
    %v1736 = vpack.c.b16 %v1512, %v1504
    %v1737 = vpack.c.b16 %v1513, %v1505
    %v1738 = vpack.c.b16 %v1514, %v1506
    %v1739 = vpack.c.b16 %v1515, %v1507
    %v1740 = vpack.c.b16 %v1524, %v1516
    %v1741 = vpack.c.b16 %v1525, %v1517
    %v1742 = vpack.c.b16 %v1526, %v1518
    %v1743 = vpack.c.b16 %v1527, %v1519
    %v1744 = vpack.c.b16 %v1528, %v1520
    %v1745 = vpack.c.b16 %v1529, %v1521
    %v1746 = vpack.c.b16 %v1530, %v1522
    %v1747 = vpack.c.b16 %v1531, %v1523
    %v1748 = vpack.c.b16 %v1540, %v1532
    %v1749 = vpack.c.b16 %v1541, %v1533
    %v1750 = vpack.c.b16 %v1542, %v1534
    %v1751 = vpack.c.b16 %v1543, %v1535
    %v1752 = vpack.c.b16 %v1544, %v1536
    %v1753 = vpack.c.b16 %v1545, %v1537
    %v1754 = vpack.c.b16 %v1546, %v1538
    %v1755 = vpack.c.b16 %v1547, %v1539
    %v1756 = vpack.c.b16 %v1556, %v1548
    %v1757 = vpack.c.b16 %v1557, %v1549
    %v1758 = vpack.c.b16 %v1558, %v1550
    %v1759 = vpack.c.b16 %v1559, %v1551
    %v1760 = vpack.c.b16 %v1560, %v1552
    %v1761 = vpack.c.b16 %v1561, %v1553
    %v1762 = vpack.c.b16 %v1562, %v1554
    %v1763 = vpack.c.b16 %v1563, %v1555
    %v1764 = vpack.c.b16 %v1572, %v1564
    %v1765 = vpack.c.b16 %v1573, %v1565
    %v1766 = vpack.c.b16 %v1574, %v1566
    %v1767 = vpack.c.b16 %v1575, %v1567
    %v1768 = vpack.c.b16 %v1576, %v1568
    %v1769 = vpack.c.b16 %v1577, %v1569
    %v1770 = vpack.c.b16 %v1578, %v1570
    %v1771 = vpack.c.b16 %v1579, %v1571
    %v1772 = vpack.c.b16 %v1588, %v1580
    %v1773 = vpack.c.b16 %v1589, %v1581
    %v1774 = vpack.c.b16 %v1590, %v1582
    %v1775 = vpack.c.b16 %v1591, %v1583
    %v1776 = vpack.c.b16 %v1592, %v1584
    %v1777 = vpack.c.b16 %v1593, %v1585
    %v1778 = vpack.c.b16 %v1594, %v1586
    %v1779 = vpack.c.b16 %v1595, %v1587
    %v1780 = vpack.c.b16 %v1604, %v1596
    %v1781 = vpack.c.b16 %v1605, %v1597
    %v1782 = vpack.c.b16 %v1606, %v1598
    %v1783 = vpack.c.b16 %v1607, %v1599
    %v1784 = vpack.c.b16 %v1608, %v1600
    %v1785 = vpack.c.b16 %v1609, %v1601
    %v1786 = vpack.c.b16 %v1610, %v1602
    %v1787 = vpack.c.b16 %v1611, %v1603
    %v1788 = vpack.c.b16 %v1620, %v1612
    %v1789 = vpack.c.b16 %v1621, %v1613
    %v1790 = vpack.c.b16 %v1622, %v1614
    %v1791 = vpack.c.b16 %v1623, %v1615
    %v1792 = vpack.c.b16 %v1624, %v1616
    %v1793 = vpack.c.b16 %v1625, %v1617
    %v1794 = vpack.c.b16 %v1626, %v1618
    %v1795 = vpack.c.b16 %v1627, %v1619
    %v1796 = vpack.c.b16 %v1636, %v1628
    %v1797 = vpack.c.b16 %v1637, %v1629
    %v1798 = vpack.c.b16 %v1638, %v1630
    %v1799 = vpack.c.b16 %v1639, %v1631
    %v1800 = vpack.c.b16 %v1640, %v1632
    %v1801 = vpack.c.b16 %v1641, %v1633
    %v1802 = vpack.c.b16 %v1642, %v1634
    %v1803 = vpack.c.b16 %v1643, %v1635
    %v1804 = vpack.c.b16 %v1652, %v1644
    %v1805 = vpack.c.b16 %v1653, %v1645
    %v1806 = vpack.c.b16 %v1654, %v1646
    %v1807 = vpack.c.b16 %v1655, %v1647
    %v1808 = vpack.c.b16 %v1656, %v1648
    %v1809 = vpack.c.b16 %v1657, %v1649
    %v1810 = vpack.c.b16 %v1658, %v1650
    %v1811 = vpack.c.b16 %v1659, %v1651
    %v1812 = vpack.c.b16 %v1668, %v1660
    %v1813 = vpack.c.b16 %v1669, %v1661
    %v1814 = vpack.c.b16 %v1670, %v1662
    %v1815 = vpack.c.b16 %v1671, %v1663
    %v1816 = vpack.c.b16 %v1672, %v1664
    %v1817 = vpack.c.b16 %v1673, %v1665
    %v1818 = vpack.c.b16 %v1674, %v1666
    %v1819 = vpack.c.b16 %v1675, %v1667
    %v1820 = vpack.c.b16 %v1684, %v1676
    %v1821 = vpack.c.b16 %v1685, %v1677
    %v1822 = vpack.c.b16 %v1686, %v1678
    %v1823 = vpack.c.b16 %v1687, %v1679
    %v1824 = vpack.c.b16 %v1688, %v1680
    %v1825 = vpack.c.b16 %v1689, %v1681
    %v1826 = vpack.c.b16 %v1690, %v1682
    %v1827 = vpack.c.b16 %v1691, %v1683
    %v1828 = vpack.c.b16 %v1700, %v1692
    %v1829 = vpack.c.b16 %v1701, %v1693
    %v1830 = vpack.c.b16 %v1702, %v1694
    %v1831 = vpack.c.b16 %v1703, %v1695
    %v1832 = vpack.c.b16 %v1704, %v1696
    %v1833 = vpack.c.b16 %v1705, %v1697
    %v1834 = vpack.c.b16 %v1706, %v1698
    %v1835 = vpack.c.b16 %v1707, %v1699
    %1964 = vmatprep.subr.bf16.mxu0 %v1709
    %1965 = vmatpush1.bf16.msra.mxu0 %v1708
    %1966 = vmatprep.subr.bf16.mxu0 %v1717
    %1967 = vmatpush1.bf16.msra.mxu0 %v1716
    %1968 = vmatprep.subr.bf16.mxu0 %v1725
    %1969 = vmatpush1.bf16.msra.mxu0 %v1724
    %1970 = vmatprep.subr.bf16.mxu0 %v1733
    %1971 = vmatpush1.bf16.msra.mxu0 %v1732
    %1972 = vmatprep.subr.bf16.mxu0 %v1741
    %1973 = vmatpush1.bf16.msra.mxu0 %v1740
    %1974 = vmatprep.subr.bf16.mxu0 %v1749
    %1975 = vmatpush1.bf16.msra.mxu0 %v1748
    %1976 = vmatprep.subr.bf16.mxu0 %v1757
    %1977 = vmatpush1.bf16.msra.mxu0 %v1756
    %1978 = vmatprep.subr.bf16.mxu0 %v1765
    %1979 = vmatpush1.bf16.msra.mxu0 %v1764
    %1980 = vmatprep.subr.bf16.mxu0 %v1773
    %1981 = vmatpush1.bf16.msra.mxu0 %v1772
    %1982 = vmatprep.subr.bf16.mxu0 %v1781
    %1983 = vmatpush1.bf16.msra.mxu0 %v1780
    %1984 = vmatprep.subr.bf16.mxu0 %v1789
    %1985 = vmatpush1.bf16.msra.mxu0 %v1788
    %1986 = vmatprep.subr.bf16.mxu0 %v1797
    %1987 = vmatpush1.bf16.msra.mxu0 %v1796
    %1988 = vmatprep.subr.bf16.mxu0 %v1805
    %1989 = vmatpush1.bf16.msra.mxu0 %v1804
    %1990 = vmatprep.subr.bf16.mxu0 %v1813
    %1991 = vmatpush1.bf16.msra.mxu0 %v1812
    %1992 = vmatprep.subr.bf16.mxu0 %v1821
    %1993 = vmatpush1.bf16.msra.mxu0 %v1820
    %1994 = vmatprep.subr.bf16.mxu0 %v1829
    %1995 = vmatpush1.bf16.msra.mxu0 %v1828
    %1996 = vmatprep.mubr.bf16.mxu0 0
    %1997 = vmatmul.mubr.bf16.gmra.mrb[0].mxu0 0
    %v1998 = vpop.f32.mrb[0].mxu0
    %v1999 = vadd.f32 0.0, %v1998
    %v2000 = vpop.f32.mrb[0].mxu0
    %v2001 = vadd.f32 0.0, %v2000
    %v2002 = vpop.f32.mrb[0].mxu0
    %v2003 = vpop.f32.mrb[0].mxu0
    %2004 = vdwg.mxu0
    %2005 = vmatprep.subr.bf16.mxu0 %v1711
    %2006 = vmatpush1.bf16.msra.mxu0 %v1710
    %2007 = vmatprep.subr.bf16.mxu0 %v1719
    %2008 = vmatpush1.bf16.msra.mxu0 %v1718
    %2009 = vmatprep.subr.bf16.mxu0 %v1727
    %2010 = vmatpush1.bf16.msra.mxu0 %v1726
    %2011 = vmatprep.subr.bf16.mxu0 %v1735
    %2012 = vmatpush1.bf16.msra.mxu0 %v1734
    %2013 = vmatprep.subr.bf16.mxu0 %v1743
    %2014 = vmatpush1.bf16.msra.mxu0 %v1742
    %2015 = vmatprep.subr.bf16.mxu0 %v1751
    %2016 = vmatpush1.bf16.msra.mxu0 %v1750
    %2017 = vmatprep.subr.bf16.mxu0 %v1759
    %2018 = vmatpush1.bf16.msra.mxu0 %v1758
    %2019 = vmatprep.subr.bf16.mxu0 %v1767
    %2020 = vmatpush1.bf16.msra.mxu0 %v1766
    %2021 = vmatprep.subr.bf16.mxu0 %v1775
    %2022 = vmatpush1.bf16.msra.mxu0 %v1774
    %2023 = vmatprep.subr.bf16.mxu0 %v1783
    %2024 = vmatpush1.bf16.msra.mxu0 %v1782
    %2025 = vmatprep.subr.bf16.mxu0 %v1791
    %2026 = vmatpush1.bf16.msra.mxu0 %v1790
    %2027 = vmatprep.subr.bf16.mxu0 %v1799
    %2028 = vmatpush1.bf16.msra.mxu0 %v1798
    %2029 = vmatprep.subr.bf16.mxu0 %v1807
    %2030 = vmatpush1.bf16.msra.mxu0 %v1806
    %2031 = vmatprep.subr.bf16.mxu0 %v1815
    %2032 = vmatpush1.bf16.msra.mxu0 %v1814
    %2033 = vmatprep.subr.bf16.mxu0 %v1823
    %2034 = vmatpush1.bf16.msra.mxu0 %v1822
    %2035 = vmatprep.subr.bf16.mxu0 %v1831
    %2036 = vmatpush1.bf16.msra.mxu0 %v1830
    %2037 = vmatprep.mubr.bf16.mxu0 0
    %2038 = vmatmul.mubr.bf16.gmra.mrb[0].mxu0 0
    %v2039 = vpop.f32.mrb[0].mxu0
    %v2040 = vadd.f32 0.0, %v2039
    %v2041 = vpop.f32.mrb[0].mxu0
    %v2042 = vadd.f32 0.0, %v2041
    %v2043 = vpop.f32.mrb[0].mxu0
    %v2044 = vpop.f32.mrb[0].mxu0
    %2045 = vdwg.mxu0
    %2046 = vmatprep.subr.bf16.mxu0 %v1713
    %2047 = vmatpush1.bf16.msra.mxu0 %v1712
    %2048 = vmatprep.subr.bf16.mxu0 %v1721
    %2049 = vmatpush1.bf16.msra.mxu0 %v1720
    %2050 = vmatprep.subr.bf16.mxu0 %v1729
    %2051 = vmatpush1.bf16.msra.mxu0 %v1728
    %2052 = vmatprep.subr.bf16.mxu0 %v1737
    %2053 = vmatpush1.bf16.msra.mxu0 %v1736
    %2054 = vmatprep.subr.bf16.mxu0 %v1745
    %2055 = vmatpush1.bf16.msra.mxu0 %v1744
    %2056 = vmatprep.subr.bf16.mxu0 %v1753
    %2057 = vmatpush1.bf16.msra.mxu0 %v1752
    %2058 = vmatprep.subr.bf16.mxu0 %v1761
    %2059 = vmatpush1.bf16.msra.mxu0 %v1760
    %2060 = vmatprep.subr.bf16.mxu0 %v1769
    %2061 = vmatpush1.bf16.msra.mxu0 %v1768
    %2062 = vmatprep.subr.bf16.mxu0 %v1777
    %2063 = vmatpush1.bf16.msra.mxu0 %v1776
    %2064 = vmatprep.subr.bf16.mxu0 %v1785
    %2065 = vmatpush1.bf16.msra.mxu0 %v1784
    %2066 = vmatprep.subr.bf16.mxu0 %v1793
    %2067 = vmatpush1.bf16.msra.mxu0 %v1792
    %2068 = vmatprep.subr.bf16.mxu0 %v1801
    %2069 = vmatpush1.bf16.msra.mxu0 %v1800
    %2070 = vmatprep.subr.bf16.mxu0 %v1809
    %2071 = vmatpush1.bf16.msra.mxu0 %v1808
    %2072 = vmatprep.subr.bf16.mxu0 %v1817
    %2073 = vmatpush1.bf16.msra.mxu0 %v1816
    %2074 = vmatprep.subr.bf16.mxu0 %v1825
    %2075 = vmatpush1.bf16.msra.mxu0 %v1824
    %2076 = vmatprep.subr.bf16.mxu0 %v1833
    %2077 = vmatpush1.bf16.msra.mxu0 %v1832
    %2078 = vmatprep.mubr.bf16.mxu0 0
    %2079 = vmatmul.mubr.bf16.gmra.mrb[0].mxu0 0
    %v2080 = vpop.f32.mrb[0].mxu0
    %v2081 = vadd.f32 0.0, %v2080
    %v2082 = vpop.f32.mrb[0].mxu0
    %v2083 = vadd.f32 0.0, %v2082
    %v2084 = vpop.f32.mrb[0].mxu0
    %v2085 = vpop.f32.mrb[0].mxu0
    %2086 = vdwg.mxu0
    %2087 = vmatprep.subr.bf16.mxu0 %v1715
    %2088 = vmatpush1.bf16.msra.mxu0 %v1714
    %2089 = vmatprep.subr.bf16.mxu0 %v1723
    %2090 = vmatpush1.bf16.msra.mxu0 %v1722
    %2091 = vmatprep.subr.bf16.mxu0 %v1731
    %2092 = vmatpush1.bf16.msra.mxu0 %v1730
    %2093 = vmatprep.subr.bf16.mxu0 %v1739
    %2094 = vmatpush1.bf16.msra.mxu0 %v1738
    %2095 = vmatprep.subr.bf16.mxu0 %v1747
    %2096 = vmatpush1.bf16.msra.mxu0 %v1746
    %2097 = vmatprep.subr.bf16.mxu0 %v1755
    %2098 = vmatpush1.bf16.msra.mxu0 %v1754
    %2099 = vmatprep.subr.bf16.mxu0 %v1763
    %2100 = vmatpush1.bf16.msra.mxu0 %v1762
    %2101 = vmatprep.subr.bf16.mxu0 %v1771
    %2102 = vmatpush1.bf16.msra.mxu0 %v1770
    %2103 = vmatprep.subr.bf16.mxu0 %v1779
    %2104 = vmatpush1.bf16.msra.mxu0 %v1778
    %2105 = vmatprep.subr.bf16.mxu0 %v1787
    %2106 = vmatpush1.bf16.msra.mxu0 %v1786
    %2107 = vmatprep.subr.bf16.mxu0 %v1795
    %2108 = vmatpush1.bf16.msra.mxu0 %v1794
    %2109 = vmatprep.subr.bf16.mxu0 %v1803
    %2110 = vmatpush1.bf16.msra.mxu0 %v1802
    %2111 = vmatprep.subr.bf16.mxu0 %v1811
    %2112 = vmatpush1.bf16.msra.mxu0 %v1810
    %2113 = vmatprep.subr.bf16.mxu0 %v1819
    %2114 = vmatpush1.bf16.msra.mxu0 %v1818
    %2115 = vmatprep.subr.bf16.mxu0 %v1827
    %2116 = vmatpush1.bf16.msra.mxu0 %v1826
    %2117 = vmatprep.subr.bf16.mxu0 %v1835
    %2118 = vmatpush1.bf16.msra.mxu0 %v1834
    %2119 = vmatprep.mubr.bf16.mxu0 0
    %2120 = vmatmul.mubr.bf16.gmra.mrb[0].mxu0 0
    %v2121 = vpop.f32.mrb[0].mxu0
    %v2122 = vadd.f32 0.0, %v2121
    %v2123 = vpop.f32.mrb[0].mxu0
    %v2124 = vadd.f32 0.0, %v2123
    %v2125 = vpop.f32.mrb[0].mxu0
    %v2126 = vpop.f32.mrb[0].mxu0
    %2127 = vdwg.mxu0
    %v2128 = vadd.f32 %v1188, %v1999
    %v2129 = vadd.f32 %v1189, %v2001
    %v2130 = vadd.f32 %v1190, %v2040
    %v2131 = vadd.f32 %v1191, %v2042
    %v2132 = vadd.f32 %v1192, %v2081
    %v2133 = vadd.f32 %v1193, %v2083
    %v2134 = vadd.f32 %v1194, %v2122
    %v2135 = vadd.f32 %v1195, %v2124
    %v2136 = vmul.f32 %v2128, 0.5
    %v2137 = vmul.f32 %v2129, 0.5
    %v2138 = vtanh.pop %v2136
    %v2139 = vtanh.pop %v2137
    %v2140 = vmul.f32 %v2138, 0.5
    %v2141 = vmul.f32 %v2139, 0.5
    %v2142 = vadd.f32 %v2140, 0.5
    %v2143 = vadd.f32 %v2141, 0.5
    %v2144 = vmul.f32 %v2130, 0.5
    %v2145 = vmul.f32 %v2131, 0.5
    %v2146 = vtanh.pop %v2144
    %v2147 = vtanh.pop %v2145
    %v2148 = vmul.f32 %v2146, 0.5
    %v2149 = vmul.f32 %v2147, 0.5
    %v2150 = vadd.f32 %v2148, 0.5
    %v2151 = vadd.f32 %v2149, 0.5
    %v2152 = vtanh.pop %v2132
    %v2153 = vtanh.pop %v2133
    %v2154 = vmul.f32 %v2134, 0.5
    %v2155 = vmul.f32 %v2135, 0.5
    %v2156 = vtanh.pop %v2154
    %v2157 = vtanh.pop %v2155
    %v2158 = vmul.f32 %v2156, 0.5
    %v2159 = vmul.f32 %v2157, 0.5
    %v2160 = vadd.f32 %v2158, 0.5
    %v2161 = vadd.f32 %v2159, 0.5
    %v2162 = vmul.f32 %v2150, 0.0
    %v2163 = vmul.f32 %v2151, 0.0
    %v2164 = vmul.f32 %v2142, %v2152
    %v2165 = vmul.f32 %v2143, %v2153
    %v2166 = vadd.f32 %v2162, %v2164
    %v2167 = vadd.f32 %v2163, %v2165
    %v2168 = vtanh.pop %v2166
    %v2169 = vtanh.pop %v2167
    %v2170 = vmul.f32 %v2160, %v2168
    %v2171 = vmul.f32 %v2161, %v2169
    %vm2172 = vcmp.gt.s32.totalorder %v117, 0
    %v2173 = vsel %vm2172, 1, 0
    %2174 = vset.pattern.permute.xlu0 0
    %2175 = vperm.xlu0 %2174, %v2173
    %v2176 = vpop.permute.xlu0 %2175
    %vm2177 = vcmp.eq.s32.totalorder %v2176, 1
    %v2178 = vsel %vm2177, %v2170, 0.0
    %v2179 = vsel %vm2177, %v2171, 0.0
    %v2180 = vsel %vm2177, %v2166, 0.0
    %v2181 = vsel %vm2177, %v2167, 0.0
    %v2182 = vld [vmem:[#allocation2 + $0x40] sm:$0xff]
    %v2183 = vld [vmem:[#allocation2 + $0x48] sm:$0xff]
    %v2184 = vld [vmem:[#allocation2 + $0x50] sm:$0xff]
    %v2185 = vld [vmem:[#allocation2 + $0x58] sm:$0xff]
    %v2186 = vld [vmem:[#allocation2 + $0x60] sm:$0xff]
    %v2187 = vld [vmem:[#allocation2 + $0x68] sm:$0xff]
    %v2188 = vld [vmem:[#allocation2 + $0x70] sm:$0xff]
    %v2189 = vld [vmem:[#allocation2 + $0x78] sm:$0xff]
    %v2190 = vpack.c.bf16 %v2178, %v2178
    %v2191 = vpack.c.bf16 %v2179, %v2179
    %2192 = vmatprep.subr.bf16.mxu0 %v1709
    %2193 = vmatpush1.bf16.msra.mxu0 %v1708
    %2194 = vmatprep.subr.bf16.mxu0 %v1717
    %2195 = vmatpush1.bf16.msra.mxu0 %v1716
    %2196 = vmatprep.subr.bf16.mxu0 %v1725
    %2197 = vmatpush1.bf16.msra.mxu0 %v1724
    %2198 = vmatprep.subr.bf16.mxu0 %v1733
    %2199 = vmatpush1.bf16.msra.mxu0 %v1732
    %2200 = vmatprep.subr.bf16.mxu0 %v1741
    %2201 = vmatpush1.bf16.msra.mxu0 %v1740
    %2202 = vmatprep.subr.bf16.mxu0 %v1749
    %2203 = vmatpush1.bf16.msra.mxu0 %v1748
    %2204 = vmatprep.subr.bf16.mxu0 %v1757
    %2205 = vmatpush1.bf16.msra.mxu0 %v1756
    %2206 = vmatprep.subr.bf16.mxu0 %v1765
    %2207 = vmatpush1.bf16.msra.mxu0 %v1764
    %2208 = vmatprep.subr.bf16.mxu0 %v1773
    %2209 = vmatpush1.bf16.msra.mxu0 %v1772
    %2210 = vmatprep.subr.bf16.mxu0 %v1781
    %2211 = vmatpush1.bf16.msra.mxu0 %v1780
    %2212 = vmatprep.subr.bf16.mxu0 %v1789
    %2213 = vmatpush1.bf16.msra.mxu0 %v1788
    %2214 = vmatprep.subr.bf16.mxu0 %v1797
    %2215 = vmatpush1.bf16.msra.mxu0 %v1796
    %2216 = vmatprep.subr.bf16.mxu0 %v1805
    %2217 = vmatpush1.bf16.msra.mxu0 %v1804
    %2218 = vmatprep.subr.bf16.mxu0 %v1813
    %2219 = vmatpush1.bf16.msra.mxu0 %v1812
    %2220 = vmatprep.subr.bf16.mxu0 %v1821
    %2221 = vmatpush1.bf16.msra.mxu0 %v1820
    %2222 = vmatprep.subr.bf16.mxu0 %v1829
    %2223 = vmatpush1.bf16.msra.mxu0 %v1828
    %2224 = vmatprep.mubr.bf16.mxu0 %v2191
    %2225 = vmatmul.mubr.bf16.gmra.mrb[0].mxu0 %v2190
    %v2226 = vpop.f32.mrb[0].mxu0
    %v2227 = vadd.f32 0.0, %v2226
    %v2228 = vpop.f32.mrb[0].mxu0
    %v2229 = vadd.f32 0.0, %v2228
    %v2230 = vpop.f32.mrb[0].mxu0
    %v2231 = vpop.f32.mrb[0].mxu0
    %2232 = vdwg.mxu0
    %2233 = vmatprep.subr.bf16.mxu0 %v1711
    %2234 = vmatpush1.bf16.msra.mxu0 %v1710
    %2235 = vmatprep.subr.bf16.mxu0 %v1719
    %2236 = vmatpush1.bf16.msra.mxu0 %v1718
    %2237 = vmatprep.subr.bf16.mxu0 %v1727
    %2238 = vmatpush1.bf16.msra.mxu0 %v1726
    %2239 = vmatprep.subr.bf16.mxu0 %v1735
    %2240 = vmatpush1.bf16.msra.mxu0 %v1734
    %2241 = vmatprep.subr.bf16.mxu0 %v1743
    %2242 = vmatpush1.bf16.msra.mxu0 %v1742
    %2243 = vmatprep.subr.bf16.mxu0 %v1751
    %2244 = vmatpush1.bf16.msra.mxu0 %v1750
    %2245 = vmatprep.subr.bf16.mxu0 %v1759
    %2246 = vmatpush1.bf16.msra.mxu0 %v1758
    %2247 = vmatprep.subr.bf16.mxu0 %v1767
    %2248 = vmatpush1.bf16.msra.mxu0 %v1766
    %2249 = vmatprep.subr.bf16.mxu0 %v1775
    %2250 = vmatpush1.bf16.msra.mxu0 %v1774
    %2251 = vmatprep.subr.bf16.mxu0 %v1783
    %2252 = vmatpush1.bf16.msra.mxu0 %v1782
    %2253 = vmatprep.subr.bf16.mxu0 %v1791
    %2254 = vmatpush1.bf16.msra.mxu0 %v1790
    %2255 = vmatprep.subr.bf16.mxu0 %v1799
    %2256 = vmatpush1.bf16.msra.mxu0 %v1798
    %2257 = vmatprep.subr.bf16.mxu0 %v1807
    %2258 = vmatpush1.bf16.msra.mxu0 %v1806
    %2259 = vmatprep.subr.bf16.mxu0 %v1815
    %2260 = vmatpush1.bf16.msra.mxu0 %v1814
    %2261 = vmatprep.subr.bf16.mxu0 %v1823
    %2262 = vmatpush1.bf16.msra.mxu0 %v1822
    %2263 = vmatprep.subr.bf16.mxu0 %v1831
    %2264 = vmatpush1.bf16.msra.mxu0 %v1830
    %2265 = vmatprep.mubr.bf16.mxu0 %v2191
    %2266 = vmatmul.mubr.bf16.gmra.mrb[0].mxu0 %v2190
    %v2267 = vpop.f32.mrb[0].mxu0
    %v2268 = vadd.f32 0.0, %v2267
    %v2269 = vpop.f32.mrb[0].mxu0
    %v2270 = vadd.f32 0.0, %v2269
    %v2271 = vpop.f32.mrb[0].mxu0
    %v2272 = vpop.f32.mrb[0].mxu0
    %2273 = vdwg.mxu0
    %2274 = vmatprep.subr.bf16.mxu0 %v1713
    %2275 = vmatpush1.bf16.msra.mxu0 %v1712
    %2276 = vmatprep.subr.bf16.mxu0 %v1721
    %2277 = vmatpush1.bf16.msra.mxu0 %v1720
    %2278 = vmatprep.subr.bf16.mxu0 %v1729
    %2279 = vmatpush1.bf16.msra.mxu0 %v1728
    %2280 = vmatprep.subr.bf16.mxu0 %v1737
    %2281 = vmatpush1.bf16.msra.mxu0 %v1736
    %2282 = vmatprep.subr.bf16.mxu0 %v1745
    %2283 = vmatpush1.bf16.msra.mxu0 %v1744
    %2284 = vmatprep.subr.bf16.mxu0 %v1753
    %2285 = vmatpush1.bf16.msra.mxu0 %v1752
    %2286 = vmatprep.subr.bf16.mxu0 %v1761
    %2287 = vmatpush1.bf16.msra.mxu0 %v1760
    %2288 = vmatprep.subr.bf16.mxu0 %v1769
    %2289 = vmatpush1.bf16.msra.mxu0 %v1768
    %2290 = vmatprep.subr.bf16.mxu0 %v1777
    %2291 = vmatpush1.bf16.msra.mxu0 %v1776
    %2292 = vmatprep.subr.bf16.mxu0 %v1785
    %2293 = vmatpush1.bf16.msra.mxu0 %v1784
    %2294 = vmatprep.subr.bf16.mxu0 %v1793
    %2295 = vmatpush1.bf16.msra.mxu0 %v1792
    %2296 = vmatprep.subr.bf16.mxu0 %v1801
    %2297 = vmatpush1.bf16.msra.mxu0 %v1800
    %2298 = vmatprep.subr.bf16.mxu0 %v1809
    %2299 = vmatpush1.bf16.msra.mxu0 %v1808
    %2300 = vmatprep.subr.bf16.mxu0 %v1817
    %2301 = vmatpush1.bf16.msra.mxu0 %v1816
    %2302 = vmatprep.subr.bf16.mxu0 %v1825
    %2303 = vmatpush1.bf16.msra.mxu0 %v1824
    %2304 = vmatprep.subr.bf16.mxu0 %v1833
    %2305 = vmatpush1.bf16.msra.mxu0 %v1832
    %2306 = vmatprep.mubr.bf16.mxu0 %v2191
    %2307 = vmatmul.mubr.bf16.gmra.mrb[0].mxu0 %v2190
    %v2308 = vpop.f32.mrb[0].mxu0
    %v2309 = vadd.f32 0.0, %v2308
    %v2310 = vpop.f32.mrb[0].mxu0
    %v2311 = vadd.f32 0.0, %v2310
    %v2312 = vpop.f32.mrb[0].mxu0
    %v2313 = vpop.f32.mrb[0].mxu0
    %2314 = vdwg.mxu0
    %2315 = vmatprep.subr.bf16.mxu0 %v1715
    %2316 = vmatpush1.bf16.msra.mxu0 %v1714
    %2317 = vmatprep.subr.bf16.mxu0 %v1723
    %2318 = vmatpush1.bf16.msra.mxu0 %v1722
    %2319 = vmatprep.subr.bf16.mxu0 %v1731
    %2320 = vmatpush1.bf16.msra.mxu0 %v1730
    %2321 = vmatprep.subr.bf16.mxu0 %v1739
    %2322 = vmatpush1.bf16.msra.mxu0 %v1738
    %2323 = vmatprep.subr.bf16.mxu0 %v1747
    %2324 = vmatpush1.bf16.msra.mxu0 %v1746
    %2325 = vmatprep.subr.bf16.mxu0 %v1755
    %2326 = vmatpush1.bf16.msra.mxu0 %v1754
    %2327 = vmatprep.subr.bf16.mxu0 %v1763
    %2328 = vmatpush1.bf16.msra.mxu0 %v1762
    %2329 = vmatprep.subr.bf16.mxu0 %v1771
    %2330 = vmatpush1.bf16.msra.mxu0 %v1770
    %2331 = vmatprep.subr.bf16.mxu0 %v1779
    %2332 = vmatpush1.bf16.msra.mxu0 %v1778
    %2333 = vmatprep.subr.bf16.mxu0 %v1787
    %2334 = vmatpush1.bf16.msra.mxu0 %v1786
    %2335 = vmatprep.subr.bf16.mxu0 %v1795
    %2336 = vmatpush1.bf16.msra.mxu0 %v1794
    %2337 = vmatprep.subr.bf16.mxu0 %v1803
    %2338 = vmatpush1.bf16.msra.mxu0 %v1802
    %2339 = vmatprep.subr.bf16.mxu0 %v1811
    %2340 = vmatpush1.bf16.msra.mxu0 %v1810
    %2341 = vmatprep.subr.bf16.mxu0 %v1819
    %2342 = vmatpush1.bf16.msra.mxu0 %v1818
    %2343 = vmatprep.subr.bf16.mxu0 %v1827
    %2344 = vmatpush1.bf16.msra.mxu0 %v1826
    %2345 = vmatprep.subr.bf16.mxu0 %v1835
    %2346 = vmatpush1.bf16.msra.mxu0 %v1834
    %2347 = vmatprep.mubr.bf16.mxu0 %v2191
    %2348 = vmatmul.mubr.bf16.gmra.mrb[0].mxu0 %v2190
    %v2349 = vpop.f32.mrb[0].mxu0
    %v2350 = vadd.f32 0.0, %v2349
    %v2351 = vpop.f32.mrb[0].mxu0
    %v2352 = vadd.f32 0.0, %v2351
    %v2353 = vpop.f32.mrb[0].mxu0
    %v2354 = vpop.f32.mrb[0].mxu0
    %2355 = vdwg.mxu0
    %v2356 = vadd.f32 %v2182, %v2227
    %v2357 = vadd.f32 %v2183, %v2229
    %v2358 = vadd.f32 %v2184, %v2268
    %v2359 = vadd.f32 %v2185, %v2270
    %v2360 = vadd.f32 %v2186, %v2309
    %v2361 = vadd.f32 %v2187, %v2311
    %v2362 = vadd.f32 %v2188, %v2350
    %v2363 = vadd.f32 %v2189, %v2352
    %v2364 = vmul.f32 %v2356, 0.5
    %v2365 = vmul.f32 %v2357, 0.5
    %v2366 = vtanh.pop %v2364
    %v2367 = vtanh.pop %v2365
    %v2368 = vmul.f32 %v2366, 0.5
    %v2369 = vmul.f32 %v2367, 0.5
    %v2370 = vadd.f32 %v2368, 0.5
    %v2371 = vadd.f32 %v2369, 0.5
    %v2372 = vmul.f32 %v2358, 0.5
    %v2373 = vmul.f32 %v2359, 0.5
    %v2374 = vtanh.pop %v2372
    %v2375 = vtanh.pop %v2373
    %v2376 = vmul.f32 %v2374, 0.5
    %v2377 = vmul.f32 %v2375, 0.5
    %v2378 = vadd.f32 %v2376, 0.5
    %v2379 = vadd.f32 %v2377, 0.5
    %v2380 = vtanh.pop %v2360
    %v2381 = vtanh.pop %v2361
    %v2382 = vmul.f32 %v2362, 0.5
    %v2383 = vmul.f32 %v2363, 0.5
    %v2384 = vtanh.pop %v2382
    %v2385 = vtanh.pop %v2383
    %v2386 = vmul.f32 %v2384, 0.5
    %v2387 = vmul.f32 %v2385, 0.5
    %v2388 = vadd.f32 %v2386, 0.5
    %v2389 = vadd.f32 %v2387, 0.5
    %v2390 = vmul.f32 %v2378, %v2180
    %v2391 = vmul.f32 %v2379, %v2181
    %v2392 = vmul.f32 %v2370, %v2380
    %v2393 = vmul.f32 %v2371, %v2381
    %v2394 = vadd.f32 %v2390, %v2392
    %v2395 = vadd.f32 %v2391, %v2393
    %v2396 = vtanh.pop %v2394
    %v2397 = vtanh.pop %v2395
    %v2398 = vmul.f32 %v2388, %v2396
    %v2399 = vmul.f32 %v2389, %v2397
    %vm2400 = vcmp.gt.s32.totalorder %v117, 1
    %v2401 = vsel %vm2400, 1, 0
    %2402 = vset.pattern.permute.xlu0 0
    %2403 = vperm.xlu0 %2402, %v2401
    %v2404 = vpop.permute.xlu0 %2403
    %vm2405 = vcmp.eq.s32.totalorder %v2404, 1
    %v2406 = vsel %vm2405, %v2398, %v2178
    %v2407 = vsel %vm2405, %v2399, %v2179
    %v2408 = vsel %vm2405, %v2394, %v2180
    %v2409 = vsel %vm2405, %v2395, %v2181
    %v2410 = vld [vmem:[#allocation2 + $0x80] sm:$0xff]
    %v2411 = vld [vmem:[#allocation2 + $0x88] sm:$0xff]
    %v2412 = vld [vmem:[#allocation2 + $0x90] sm:$0xff]
    %v2413 = vld [vmem:[#allocation2 + $0x98] sm:$0xff]
    %v2414 = vld [vmem:[#allocation2 + $0xa0] sm:$0xff]
    %v2415 = vld [vmem:[#allocation2 + $0xa8] sm:$0xff]
    %v2416 = vld [vmem:[#allocation2 + $0xb0] sm:$0xff]
    %v2417 = vld [vmem:[#allocation2 + $0xb8] sm:$0xff]
    %v2418 = vpack.c.bf16 %v2406, %v2406
    %v2419 = vpack.c.bf16 %v2407, %v2407
    %2420 = vmatprep.subr.bf16.mxu0 %v1709
    %2421 = vmatpush1.bf16.msra.mxu0 %v1708
    %2422 = vmatprep.subr.bf16.mxu0 %v1717
    %2423 = vmatpush1.bf16.msra.mxu0 %v1716
    %2424 = vmatprep.subr.bf16.mxu0 %v1725
    %2425 = vmatpush1.bf16.msra.mxu0 %v1724
    %2426 = vmatprep.subr.bf16.mxu0 %v1733
    %2427 = vmatpush1.bf16.msra.mxu0 %v1732
    %2428 = vmatprep.subr.bf16.mxu0 %v1741
    %2429 = vmatpush1.bf16.msra.mxu0 %v1740
    %2430 = vmatprep.subr.bf16.mxu0 %v1749
    %2431 = vmatpush1.bf16.msra.mxu0 %v1748
    %2432 = vmatprep.subr.bf16.mxu0 %v1757
    %2433 = vmatpush1.bf16.msra.mxu0 %v1756
    %2434 = vmatprep.subr.bf16.mxu0 %v1765
    %2435 = vmatpush1.bf16.msra.mxu0 %v1764
    %2436 = vmatprep.subr.bf16.mxu0 %v1773
    %2437 = vmatpush1.bf16.msra.mxu0 %v1772
    %2438 = vmatprep.subr.bf16.mxu0 %v1781
    %2439 = vmatpush1.bf16.msra.mxu0 %v1780
    %2440 = vmatprep.subr.bf16.mxu0 %v1789
    %2441 = vmatpush1.bf16.msra.mxu0 %v1788
    %2442 = vmatprep.subr.bf16.mxu0 %v1797
    %2443 = vmatpush1.bf16.msra.mxu0 %v1796
    %2444 = vmatprep.subr.bf16.mxu0 %v1805
    %2445 = vmatpush1.bf16.msra.mxu0 %v1804
    %2446 = vmatprep.subr.bf16.mxu0 %v1813
    %2447 = vmatpush1.bf16.msra.mxu0 %v1812
    %2448 = vmatprep.subr.bf16.mxu0 %v1821
    %2449 = vmatpush1.bf16.msra.mxu0 %v1820
    %2450 = vmatprep.subr.bf16.mxu0 %v1829
    %2451 = vmatpush1.bf16.msra.mxu0 %v1828
    %2452 = vmatprep.mubr.bf16.mxu0 %v2419
    %2453 = vmatmul.mubr.bf16.gmra.mrb[0].mxu0 %v2418
    %v2454 = vpop.f32.mrb[0].mxu0
    %v2455 = vadd.f32 0.0, %v2454
    %v2456 = vpop.f32.mrb[0].mxu0
    %v2457 = vadd.f32 0.0, %v2456
    %v2458 = vpop.f32.mrb[0].mxu0
    %v2459 = vpop.f32.mrb[0].mxu0
    %2460 = vdwg.mxu0
    %2461 = vmatprep.subr.bf16.mxu0 %v1711
    %2462 = vmatpush1.bf16.msra.mxu0 %v1710
    %2463 = vmatprep.subr.bf16.mxu0 %v1719
    %2464 = vmatpush1.bf16.msra.mxu0 %v1718
    %2465 = vmatprep.subr.bf16.mxu0 %v1727
    %2466 = vmatpush1.bf16.msra.mxu0 %v1726
    %2467 = vmatprep.subr.bf16.mxu0 %v1735
    %2468 = vmatpush1.bf16.msra.mxu0 %v1734
    %2469 = vmatprep.subr.bf16.mxu0 %v1743
    %2470 = vmatpush1.bf16.msra.mxu0 %v1742
    %2471 = vmatprep.subr.bf16.mxu0 %v1751
    %2472 = vmatpush1.bf16.msra.mxu0 %v1750
    %2473 = vmatprep.subr.bf16.mxu0 %v1759
    %2474 = vmatpush1.bf16.msra.mxu0 %v1758
    %2475 = vmatprep.subr.bf16.mxu0 %v1767
    %2476 = vmatpush1.bf16.msra.mxu0 %v1766
    %2477 = vmatprep.subr.bf16.mxu0 %v1775
    %2478 = vmatpush1.bf16.msra.mxu0 %v1774
    %2479 = vmatprep.subr.bf16.mxu0 %v1783
    %2480 = vmatpush1.bf16.msra.mxu0 %v1782
    %2481 = vmatprep.subr.bf16.mxu0 %v1791
    %2482 = vmatpush1.bf16.msra.mxu0 %v1790
    %2483 = vmatprep.subr.bf16.mxu0 %v1799
    %2484 = vmatpush1.bf16.msra.mxu0 %v1798
    %2485 = vmatprep.subr.bf16.mxu0 %v1807
    %2486 = vmatpush1.bf16.msra.mxu0 %v1806
    %2487 = vmatprep.subr.bf16.mxu0 %v1815
    %2488 = vmatpush1.bf16.msra.mxu0 %v1814
    %2489 = vmatprep.subr.bf16.mxu0 %v1823
    %2490 = vmatpush1.bf16.msra.mxu0 %v1822
    %2491 = vmatprep.subr.bf16.mxu0 %v1831
    %2492 = vmatpush1.bf16.msra.mxu0 %v1830
    %2493 = vmatprep.mubr.bf16.mxu0 %v2419
    %2494 = vmatmul.mubr.bf16.gmra.mrb[0].mxu0 %v2418
    %v2495 = vpop.f32.mrb[0].mxu0
    %v2496 = vadd.f32 0.0, %v2495
    %v2497 = vpop.f32.mrb[0].mxu0
    %v2498 = vadd.f32 0.0, %v2497
    %v2499 = vpop.f32.mrb[0].mxu0
    %v2500 = vpop.f32.mrb[0].mxu0
    %2501 = vdwg.mxu0
    %2502 = vmatprep.subr.bf16.mxu0 %v1713
    %2503 = vmatpush1.bf16.msra.mxu0 %v1712
    %2504 = vmatprep.subr.bf16.mxu0 %v1721
    %2505 = vmatpush1.bf16.msra.mxu0 %v1720
    %2506 = vmatprep.subr.bf16.mxu0 %v1729
    %2507 = vmatpush1.bf16.msra.mxu0 %v1728
    %2508 = vmatprep.subr.bf16.mxu0 %v1737
    %2509 = vmatpush1.bf16.msra.mxu0 %v1736
    %2510 = vmatprep.subr.bf16.mxu0 %v1745
    %2511 = vmatpush1.bf16.msra.mxu0 %v1744
    %2512 = vmatprep.subr.bf16.mxu0 %v1753
    %2513 = vmatpush1.bf16.msra.mxu0 %v1752
    %2514 = vmatprep.subr.bf16.mxu0 %v1761
    %2515 = vmatpush1.bf16.msra.mxu0 %v1760
    %2516 = vmatprep.subr.bf16.mxu0 %v1769
    %2517 = vmatpush1.bf16.msra.mxu0 %v1768
    %2518 = vmatprep.subr.bf16.mxu0 %v1777
    %2519 = vmatpush1.bf16.msra.mxu0 %v1776
    %2520 = vmatprep.subr.bf16.mxu0 %v1785
    %2521 = vmatpush1.bf16.msra.mxu0 %v1784
    %2522 = vmatprep.subr.bf16.mxu0 %v1793
    %2523 = vmatpush1.bf16.msra.mxu0 %v1792
    %2524 = vmatprep.subr.bf16.mxu0 %v1801
    %2525 = vmatpush1.bf16.msra.mxu0 %v1800
    %2526 = vmatprep.subr.bf16.mxu0 %v1809
    %2527 = vmatpush1.bf16.msra.mxu0 %v1808
    %2528 = vmatprep.subr.bf16.mxu0 %v1817
    %2529 = vmatpush1.bf16.msra.mxu0 %v1816
    %2530 = vmatprep.subr.bf16.mxu0 %v1825
    %2531 = vmatpush1.bf16.msra.mxu0 %v1824
    %2532 = vmatprep.subr.bf16.mxu0 %v1833
    %2533 = vmatpush1.bf16.msra.mxu0 %v1832
    %2534 = vmatprep.mubr.bf16.mxu0 %v2419
    %2535 = vmatmul.mubr.bf16.gmra.mrb[0].mxu0 %v2418
    %v2536 = vpop.f32.mrb[0].mxu0
    %v2537 = vadd.f32 0.0, %v2536
    %v2538 = vpop.f32.mrb[0].mxu0
    %v2539 = vadd.f32 0.0, %v2538
    %v2540 = vpop.f32.mrb[0].mxu0
    %v2541 = vpop.f32.mrb[0].mxu0
    %2542 = vdwg.mxu0
    %2543 = vmatprep.subr.bf16.mxu0 %v1715
    %2544 = vmatpush1.bf16.msra.mxu0 %v1714
    %2545 = vmatprep.subr.bf16.mxu0 %v1723
    %2546 = vmatpush1.bf16.msra.mxu0 %v1722
    %2547 = vmatprep.subr.bf16.mxu0 %v1731
    %2548 = vmatpush1.bf16.msra.mxu0 %v1730
    %2549 = vmatprep.subr.bf16.mxu0 %v1739
    %2550 = vmatpush1.bf16.msra.mxu0 %v1738
    %2551 = vmatprep.subr.bf16.mxu0 %v1747
    %2552 = vmatpush1.bf16.msra.mxu0 %v1746
    %2553 = vmatprep.subr.bf16.mxu0 %v1755
    %2554 = vmatpush1.bf16.msra.mxu0 %v1754
    %2555 = vmatprep.subr.bf16.mxu0 %v1763
    %2556 = vmatpush1.bf16.msra.mxu0 %v1762
    %2557 = vmatprep.subr.bf16.mxu0 %v1771
    %2558 = vmatpush1.bf16.msra.mxu0 %v1770
    %2559 = vmatprep.subr.bf16.mxu0 %v1779
    %2560 = vmatpush1.bf16.msra.mxu0 %v1778
    %2561 = vmatprep.subr.bf16.mxu0 %v1787
    %2562 = vmatpush1.bf16.msra.mxu0 %v1786
    %2563 = vmatprep.subr.bf16.mxu0 %v1795
    %2564 = vmatpush1.bf16.msra.mxu0 %v1794
    %2565 = vmatprep.subr.bf16.mxu0 %v1803
    %2566 = vmatpush1.bf16.msra.mxu0 %v1802
    %2567 = vmatprep.subr.bf16.mxu0 %v1811
    %2568 = vmatpush1.bf16.msra.mxu0 %v1810
    %2569 = vmatprep.subr.bf16.mxu0 %v1819
    %2570 = vmatpush1.bf16.msra.mxu0 %v1818
    %2571 = vmatprep.subr.bf16.mxu0 %v1827
    %2572 = vmatpush1.bf16.msra.mxu0 %v1826
    %2573 = vmatprep.subr.bf16.mxu0 %v1835
    %2574 = vmatpush1.bf16.msra.mxu0 %v1834
    %2575 = vmatprep.mubr.bf16.mxu0 %v2419
    %2576 = vmatmul.mubr.bf16.gmra.mrb[0].mxu0 %v2418
    %v2577 = vpop.f32.mrb[0].mxu0
    %v2578 = vadd.f32 0.0, %v2577
    %v2579 = vpop.f32.mrb[0].mxu0
    %v2580 = vadd.f32 0.0, %v2579
    %v2581 = vpop.f32.mrb[0].mxu0
    %v2582 = vpop.f32.mrb[0].mxu0
    %2583 = vdwg.mxu0
    %v2584 = vadd.f32 %v2410, %v2455
    %v2585 = vadd.f32 %v2411, %v2457
    %v2586 = vadd.f32 %v2412, %v2496
    %v2587 = vadd.f32 %v2413, %v2498
    %v2588 = vadd.f32 %v2414, %v2537
    %v2589 = vadd.f32 %v2415, %v2539
    %v2590 = vadd.f32 %v2416, %v2578
    %v2591 = vadd.f32 %v2417, %v2580
    %v2592 = vmul.f32 %v2584, 0.5
    %v2593 = vmul.f32 %v2585, 0.5
    %v2594 = vtanh.pop %v2592
    %v2595 = vtanh.pop %v2593
    %v2596 = vmul.f32 %v2594, 0.5
    %v2597 = vmul.f32 %v2595, 0.5
    %v2598 = vadd.f32 %v2596, 0.5
    %v2599 = vadd.f32 %v2597, 0.5
    %v2600 = vmul.f32 %v2586, 0.5
    %v2601 = vmul.f32 %v2587, 0.5
    %v2602 = vtanh.pop %v2600
    %v2603 = vtanh.pop %v2601
    %v2604 = vmul.f32 %v2602, 0.5
    %v2605 = vmul.f32 %v2603, 0.5
    %v2606 = vadd.f32 %v2604, 0.5
    %v2607 = vadd.f32 %v2605, 0.5
    %v2608 = vtanh.pop %v2588
    %v2609 = vtanh.pop %v2589
    %v2610 = vmul.f32 %v2590, 0.5
    %v2611 = vmul.f32 %v2591, 0.5
    %v2612 = vtanh.pop %v2610
    %v2613 = vtanh.pop %v2611
    %v2614 = vmul.f32 %v2612, 0.5
    %v2615 = vmul.f32 %v2613, 0.5
    %v2616 = vadd.f32 %v2614, 0.5
    %v2617 = vadd.f32 %v2615, 0.5
    %v2618 = vmul.f32 %v2606, %v2408
    %v2619 = vmul.f32 %v2607, %v2409
    %v2620 = vmul.f32 %v2598, %v2608
    %v2621 = vmul.f32 %v2599, %v2609
    %v2622 = vadd.f32 %v2618, %v2620
    %v2623 = vadd.f32 %v2619, %v2621
    %v2624 = vtanh.pop %v2622
    %v2625 = vtanh.pop %v2623
    %v2626 = vmul.f32 %v2616, %v2624
    %v2627 = vmul.f32 %v2617, %v2625
    %vm2628 = vcmp.gt.s32.totalorder %v117, 2
    %v2629 = vsel %vm2628, 1, 0
    %2630 = vset.pattern.permute.xlu0 0
    %2631 = vperm.xlu0 %2630, %v2629
    %v2632 = vpop.permute.xlu0 %2631
    %vm2633 = vcmp.eq.s32.totalorder %v2632, 1
    %v2634 = vsel %vm2633, %v2626, %v2406
    %v2635 = vsel %vm2633, %v2627, %v2407
    %v2636 = vsel %vm2633, %v2622, %v2408
    %v2637 = vsel %vm2633, %v2623, %v2409
    %v2638 = vld [vmem:[#allocation2 + $0xc0] sm:$0xff]
    %v2639 = vld [vmem:[#allocation2 + $0xc8] sm:$0xff]
    %v2640 = vld [vmem:[#allocation2 + $0xd0] sm:$0xff]
    %v2641 = vld [vmem:[#allocation2 + $0xd8] sm:$0xff]
    %v2642 = vld [vmem:[#allocation2 + $0xe0] sm:$0xff]
    %v2643 = vld [vmem:[#allocation2 + $0xe8] sm:$0xff]
    %v2644 = vld [vmem:[#allocation2 + $0xf0] sm:$0xff]
    %v2645 = vld [vmem:[#allocation2 + $0xf8] sm:$0xff]
    %v2646 = vpack.c.bf16 %v2634, %v2634
    %v2647 = vpack.c.bf16 %v2635, %v2635
    %2648 = vmatprep.subr.bf16.mxu0 %v1709
    %2649 = vmatpush1.bf16.msra.mxu0 %v1708
    %2650 = vmatprep.subr.bf16.mxu0 %v1717
    %2651 = vmatpush1.bf16.msra.mxu0 %v1716
    %2652 = vmatprep.subr.bf16.mxu0 %v1725
    %2653 = vmatpush1.bf16.msra.mxu0 %v1724
    %2654 = vmatprep.subr.bf16.mxu0 %v1733
    %2655 = vmatpush1.bf16.msra.mxu0 %v1732
    %2656 = vmatprep.subr.bf16.mxu0 %v1741
    %2657 = vmatpush1.bf16.msra.mxu0 %v1740
    %2658 = vmatprep.subr.bf16.mxu0 %v1749
    %2659 = vmatpush1.bf16.msra.mxu0 %v1748
    %2660 = vmatprep.subr.bf16.mxu0 %v1757
    %2661 = vmatpush1.bf16.msra.mxu0 %v1756
    %2662 = vmatprep.subr.bf16.mxu0 %v1765
    %2663 = vmatpush1.bf16.msra.mxu0 %v1764
    %2664 = vmatprep.subr.bf16.mxu0 %v1773
    %2665 = vmatpush1.bf16.msra.mxu0 %v1772
    %2666 = vmatprep.subr.bf16.mxu0 %v1781
    %2667 = vmatpush1.bf16.msra.mxu0 %v1780
    %2668 = vmatprep.subr.bf16.mxu0 %v1789
    %2669 = vmatpush1.bf16.msra.mxu0 %v1788
    %2670 = vmatprep.subr.bf16.mxu0 %v1797
    %2671 = vmatpush1.bf16.msra.mxu0 %v1796
    %2672 = vmatprep.subr.bf16.mxu0 %v1805
    %2673 = vmatpush1.bf16.msra.mxu0 %v1804
    %2674 = vmatprep.subr.bf16.mxu0 %v1813
    %2675 = vmatpush1.bf16.msra.mxu0 %v1812
    %2676 = vmatprep.subr.bf16.mxu0 %v1821
    %2677 = vmatpush1.bf16.msra.mxu0 %v1820
    %2678 = vmatprep.subr.bf16.mxu0 %v1829
    %2679 = vmatpush1.bf16.msra.mxu0 %v1828
    %2680 = vmatprep.mubr.bf16.mxu0 %v2647
    %2681 = vmatmul.mubr.bf16.gmra.mrb[0].mxu0 %v2646
    %v2682 = vpop.f32.mrb[0].mxu0
    %v2683 = vadd.f32 0.0, %v2682
    %v2684 = vpop.f32.mrb[0].mxu0
    %v2685 = vadd.f32 0.0, %v2684
    %v2686 = vpop.f32.mrb[0].mxu0
    %v2687 = vpop.f32.mrb[0].mxu0
    %2688 = vdwg.mxu0
    %2689 = vmatprep.subr.bf16.mxu0 %v1711
    %2690 = vmatpush1.bf16.msra.mxu0 %v1710
    %2691 = vmatprep.subr.bf16.mxu0 %v1719
    %2692 = vmatpush1.bf16.msra.mxu0 %v1718
    %2693 = vmatprep.subr.bf16.mxu0 %v1727
    %2694 = vmatpush1.bf16.msra.mxu0 %v1726
    %2695 = vmatprep.subr.bf16.mxu0 %v1735
    %2696 = vmatpush1.bf16.msra.mxu0 %v1734
    %2697 = vmatprep.subr.bf16.mxu0 %v1743
    %2698 = vmatpush1.bf16.msra.mxu0 %v1742
    %2699 = vmatprep.subr.bf16.mxu0 %v1751
    %2700 = vmatpush1.bf16.msra.mxu0 %v1750
    %2701 = vmatprep.subr.bf16.mxu0 %v1759
    %2702 = vmatpush1.bf16.msra.mxu0 %v1758
    %2703 = vmatprep.subr.bf16.mxu0 %v1767
    %2704 = vmatpush1.bf16.msra.mxu0 %v1766
    %2705 = vmatprep.subr.bf16.mxu0 %v1775
    %2706 = vmatpush1.bf16.msra.mxu0 %v1774
    %2707 = vmatprep.subr.bf16.mxu0 %v1783
    %2708 = vmatpush1.bf16.msra.mxu0 %v1782
    %2709 = vmatprep.subr.bf16.mxu0 %v1791
    %2710 = vmatpush1.bf16.msra.mxu0 %v1790
    %2711 = vmatprep.subr.bf16.mxu0 %v1799
    %2712 = vmatpush1.bf16.msra.mxu0 %v1798
    %2713 = vmatprep.subr.bf16.mxu0 %v1807
    %2714 = vmatpush1.bf16.msra.mxu0 %v1806
    %2715 = vmatprep.subr.bf16.mxu0 %v1815
    %2716 = vmatpush1.bf16.msra.mxu0 %v1814
    %2717 = vmatprep.subr.bf16.mxu0 %v1823
    %2718 = vmatpush1.bf16.msra.mxu0 %v1822
    %2719 = vmatprep.subr.bf16.mxu0 %v1831
    %2720 = vmatpush1.bf16.msra.mxu0 %v1830
    %2721 = vmatprep.mubr.bf16.mxu0 %v2647
    %2722 = vmatmul.mubr.bf16.gmra.mrb[0].mxu0 %v2646
    %v2723 = vpop.f32.mrb[0].mxu0
    %v2724 = vadd.f32 0.0, %v2723
    %v2725 = vpop.f32.mrb[0].mxu0
    %v2726 = vadd.f32 0.0, %v2725
    %v2727 = vpop.f32.mrb[0].mxu0
    %v2728 = vpop.f32.mrb[0].mxu0
    %2729 = vdwg.mxu0
    %2730 = vmatprep.subr.bf16.mxu0 %v1713
    %2731 = vmatpush1.bf16.msra.mxu0 %v1712
    %2732 = vmatprep.subr.bf16.mxu0 %v1721
    %2733 = vmatpush1.bf16.msra.mxu0 %v1720
    %2734 = vmatprep.subr.bf16.mxu0 %v1729
    %2735 = vmatpush1.bf16.msra.mxu0 %v1728
    %2736 = vmatprep.subr.bf16.mxu0 %v1737
    %2737 = vmatpush1.bf16.msra.mxu0 %v1736
    %2738 = vmatprep.subr.bf16.mxu0 %v1745
    %2739 = vmatpush1.bf16.msra.mxu0 %v1744
    %2740 = vmatprep.subr.bf16.mxu0 %v1753
    %2741 = vmatpush1.bf16.msra.mxu0 %v1752
    %2742 = vmatprep.subr.bf16.mxu0 %v1761
    %2743 = vmatpush1.bf16.msra.mxu0 %v1760
    %2744 = vmatprep.subr.bf16.mxu0 %v1769
    %2745 = vmatpush1.bf16.msra.mxu0 %v1768
    %2746 = vmatprep.subr.bf16.mxu0 %v1777
    %2747 = vmatpush1.bf16.msra.mxu0 %v1776
    %2748 = vmatprep.subr.bf16.mxu0 %v1785
    %2749 = vmatpush1.bf16.msra.mxu0 %v1784
    %2750 = vmatprep.subr.bf16.mxu0 %v1793
    %2751 = vmatpush1.bf16.msra.mxu0 %v1792
    %2752 = vmatprep.subr.bf16.mxu0 %v1801
    %2753 = vmatpush1.bf16.msra.mxu0 %v1800
    %2754 = vmatprep.subr.bf16.mxu0 %v1809
    %2755 = vmatpush1.bf16.msra.mxu0 %v1808
    %2756 = vmatprep.subr.bf16.mxu0 %v1817
    %2757 = vmatpush1.bf16.msra.mxu0 %v1816
    %2758 = vmatprep.subr.bf16.mxu0 %v1825
    %2759 = vmatpush1.bf16.msra.mxu0 %v1824
    %2760 = vmatprep.subr.bf16.mxu0 %v1833
    %2761 = vmatpush1.bf16.msra.mxu0 %v1832
    %2762 = vmatprep.mubr.bf16.mxu0 %v2647
    %2763 = vmatmul.mubr.bf16.gmra.mrb[0].mxu0 %v2646
    %v2764 = vpop.f32.mrb[0].mxu0
    %v2765 = vadd.f32 0.0, %v2764
    %v2766 = vpop.f32.mrb[0].mxu0
    %v2767 = vadd.f32 0.0, %v2766
    %v2768 = vpop.f32.mrb[0].mxu0
    %v2769 = vpop.f32.mrb[0].mxu0
    %2770 = vdwg.mxu0
    %2771 = vmatprep.subr.bf16.mxu0 %v1715
    %2772 = vmatpush1.bf16.msra.mxu0 %v1714
    %2773 = vmatprep.subr.bf16.mxu0 %v1723
    %2774 = vmatpush1.bf16.msra.mxu0 %v1722
    %2775 = vmatprep.subr.bf16.mxu0 %v1731
    %2776 = vmatpush1.bf16.msra.mxu0 %v1730
    %2777 = vmatprep.subr.bf16.mxu0 %v1739
    %2778 = vmatpush1.bf16.msra.mxu0 %v1738
    %2779 = vmatprep.subr.bf16.mxu0 %v1747
    %2780 = vmatpush1.bf16.msra.mxu0 %v1746
    %2781 = vmatprep.subr.bf16.mxu0 %v1755
    %2782 = vmatpush1.bf16.msra.mxu0 %v1754
    %2783 = vmatprep.subr.bf16.mxu0 %v1763
    %2784 = vmatpush1.bf16.msra.mxu0 %v1762
    %2785 = vmatprep.subr.bf16.mxu0 %v1771
    %2786 = vmatpush1.bf16.msra.mxu0 %v1770
    %2787 = vmatprep.subr.bf16.mxu0 %v1779
    %2788 = vmatpush1.bf16.msra.mxu0 %v1778
    %2789 = vmatprep.subr.bf16.mxu0 %v1787
    %2790 = vmatpush1.bf16.msra.mxu0 %v1786
    %2791 = vmatprep.subr.bf16.mxu0 %v1795
    %2792 = vmatpush1.bf16.msra.mxu0 %v1794
    %2793 = vmatprep.subr.bf16.mxu0 %v1803
    %2794 = vmatpush1.bf16.msra.mxu0 %v1802
    %2795 = vmatprep.subr.bf16.mxu0 %v1811
    %2796 = vmatpush1.bf16.msra.mxu0 %v1810
    %2797 = vmatprep.subr.bf16.mxu0 %v1819
    %2798 = vmatpush1.bf16.msra.mxu0 %v1818
    %2799 = vmatprep.subr.bf16.mxu0 %v1827
    %2800 = vmatpush1.bf16.msra.mxu0 %v1826
    %2801 = vmatprep.subr.bf16.mxu0 %v1835
    %2802 = vmatpush1.bf16.msra.mxu0 %v1834
    %2803 = vmatprep.mubr.bf16.mxu0 %v2647
    %2804 = vmatmul.mubr.bf16.gmra.mrb[0].mxu0 %v2646
    %v2805 = vpop.f32.mrb[0].mxu0
    %v2806 = vadd.f32 0.0, %v2805
    %v2807 = vpop.f32.mrb[0].mxu0
    %v2808 = vadd.f32 0.0, %v2807
    %v2809 = vpop.f32.mrb[0].mxu0
    %v2810 = vpop.f32.mrb[0].mxu0
    %2811 = vdwg.mxu0
    %v2812 = vadd.f32 %v2638, %v2683
    %v2813 = vadd.f32 %v2639, %v2685
    %v2814 = vadd.f32 %v2640, %v2724
    %v2815 = vadd.f32 %v2641, %v2726
    %v2816 = vadd.f32 %v2642, %v2765
    %v2817 = vadd.f32 %v2643, %v2767
    %v2818 = vadd.f32 %v2644, %v2806
    %v2819 = vadd.f32 %v2645, %v2808
    %v2820 = vmul.f32 %v2812, 0.5
    %v2821 = vmul.f32 %v2813, 0.5
    %v2822 = vtanh.pop %v2820
    %v2823 = vtanh.pop %v2821
    %v2824 = vmul.f32 %v2822, 0.5
    %v2825 = vmul.f32 %v2823, 0.5
    %v2826 = vadd.f32 %v2824, 0.5
    %v2827 = vadd.f32 %v2825, 0.5
    %v2828 = vmul.f32 %v2814, 0.5
    %v2829 = vmul.f32 %v2815, 0.5
    %v2830 = vtanh.pop %v2828
    %v2831 = vtanh.pop %v2829
    %v2832 = vmul.f32 %v2830, 0.5
    %v2833 = vmul.f32 %v2831, 0.5
    %v2834 = vadd.f32 %v2832, 0.5
    %v2835 = vadd.f32 %v2833, 0.5
    %v2836 = vtanh.pop %v2816
    %v2837 = vtanh.pop %v2817
    %v2838 = vmul.f32 %v2818, 0.5
    %v2839 = vmul.f32 %v2819, 0.5
    %v2840 = vtanh.pop %v2838
    %v2841 = vtanh.pop %v2839
    %v2842 = vmul.f32 %v2840, 0.5
    %v2843 = vmul.f32 %v2841, 0.5
    %v2844 = vadd.f32 %v2842, 0.5
    %v2845 = vadd.f32 %v2843, 0.5
    %v2846 = vmul.f32 %v2834, %v2636
    %v2847 = vmul.f32 %v2835, %v2637
    %v2848 = vmul.f32 %v2826, %v2836
    %v2849 = vmul.f32 %v2827, %v2837
    %v2850 = vadd.f32 %v2846, %v2848
    %v2851 = vadd.f32 %v2847, %v2849
    %v2852 = vtanh.pop %v2850
    %v2853 = vtanh.pop %v2851
    %v2854 = vmul.f32 %v2844, %v2852
    %v2855 = vmul.f32 %v2845, %v2853
    %vm2856 = vcmp.gt.s32.totalorder %v117, 3
    %v2857 = vsel %vm2856, 1, 0
    %2858 = vset.pattern.permute.xlu0 0
    %2859 = vperm.xlu0 %2858, %v2857
    %v2860 = vpop.permute.xlu0 %2859
    %vm2861 = vcmp.eq.s32.totalorder %v2860, 1
    %v2862 = vsel %vm2861, %v2854, %v2634
    %v2863 = vsel %vm2861, %v2855, %v2635
    %v2864 = vsel %vm2861, %v2850, %v2636
    %v2865 = vsel %vm2861, %v2851, %v2637
    %v2866 = vld [vmem:[#allocation2 + $0x100] sm:$0xff]
    %v2867 = vld [vmem:[#allocation2 + $0x108] sm:$0xff]
    %v2868 = vld [vmem:[#allocation2 + $0x110] sm:$0xff]
    %v2869 = vld [vmem:[#allocation2 + $0x118] sm:$0xff]
    %v2870 = vld [vmem:[#allocation2 + $0x120] sm:$0xff]
    %v2871 = vld [vmem:[#allocation2 + $0x128] sm:$0xff]
    %v2872 = vld [vmem:[#allocation2 + $0x130] sm:$0xff]
    %v2873 = vld [vmem:[#allocation2 + $0x138] sm:$0xff]
    %v2874 = vpack.c.bf16 %v2862, %v2862
    %v2875 = vpack.c.bf16 %v2863, %v2863
    %2876 = vmatprep.subr.bf16.mxu0 %v1709
    %2877 = vmatpush1.bf16.msra.mxu0 %v1708
    %2878 = vmatprep.subr.bf16.mxu0 %v1717
    %2879 = vmatpush1.bf16.msra.mxu0 %v1716
    %2880 = vmatprep.subr.bf16.mxu0 %v1725
    %2881 = vmatpush1.bf16.msra.mxu0 %v1724
    %2882 = vmatprep.subr.bf16.mxu0 %v1733
    %2883 = vmatpush1.bf16.msra.mxu0 %v1732
    %2884 = vmatprep.subr.bf16.mxu0 %v1741
    %2885 = vmatpush1.bf16.msra.mxu0 %v1740
    %2886 = vmatprep.subr.bf16.mxu0 %v1749
    %2887 = vmatpush1.bf16.msra.mxu0 %v1748
    %2888 = vmatprep.subr.bf16.mxu0 %v1757
    %2889 = vmatpush1.bf16.msra.mxu0 %v1756
    %2890 = vmatprep.subr.bf16.mxu0 %v1765
    %2891 = vmatpush1.bf16.msra.mxu0 %v1764
    %2892 = vmatprep.subr.bf16.mxu0 %v1773
    %2893 = vmatpush1.bf16.msra.mxu0 %v1772
    %2894 = vmatprep.subr.bf16.mxu0 %v1781
    %2895 = vmatpush1.bf16.msra.mxu0 %v1780
    %2896 = vmatprep.subr.bf16.mxu0 %v1789
    %2897 = vmatpush1.bf16.msra.mxu0 %v1788
    %2898 = vmatprep.subr.bf16.mxu0 %v1797
    %2899 = vmatpush1.bf16.msra.mxu0 %v1796
    %2900 = vmatprep.subr.bf16.mxu0 %v1805
    %2901 = vmatpush1.bf16.msra.mxu0 %v1804
    %2902 = vmatprep.subr.bf16.mxu0 %v1813
    %2903 = vmatpush1.bf16.msra.mxu0 %v1812
    %2904 = vmatprep.subr.bf16.mxu0 %v1821
    %2905 = vmatpush1.bf16.msra.mxu0 %v1820
    %2906 = vmatprep.subr.bf16.mxu0 %v1829
    %2907 = vmatpush1.bf16.msra.mxu0 %v1828
    %2908 = vmatprep.mubr.bf16.mxu0 %v2875
    %2909 = vmatmul.mubr.bf16.gmra.mrb[0].mxu0 %v2874
    %v2910 = vpop.f32.mrb[0].mxu0
    %v2911 = vadd.f32 0.0, %v2910
    %v2912 = vpop.f32.mrb[0].mxu0
    %v2913 = vadd.f32 0.0, %v2912
    %v2914 = vpop.f32.mrb[0].mxu0
    %v2915 = vpop.f32.mrb[0].mxu0
    %2916 = vdwg.mxu0
    %2917 = vmatprep.subr.bf16.mxu0 %v1711
    %2918 = vmatpush1.bf16.msra.mxu0 %v1710
    %2919 = vmatprep.subr.bf16.mxu0 %v1719
    %2920 = vmatpush1.bf16.msra.mxu0 %v1718
    %2921 = vmatprep.subr.bf16.mxu0 %v1727
    %2922 = vmatpush1.bf16.msra.mxu0 %v1726
    %2923 = vmatprep.subr.bf16.mxu0 %v1735
    %2924 = vmatpush1.bf16.msra.mxu0 %v1734
    %2925 = vmatprep.subr.bf16.mxu0 %v1743
    %2926 = vmatpush1.bf16.msra.mxu0 %v1742
    %2927 = vmatprep.subr.bf16.mxu0 %v1751
    %2928 = vmatpush1.bf16.msra.mxu0 %v1750
    %2929 = vmatprep.subr.bf16.mxu0 %v1759
    %2930 = vmatpush1.bf16.msra.mxu0 %v1758
    %2931 = vmatprep.subr.bf16.mxu0 %v1767
    %2932 = vmatpush1.bf16.msra.mxu0 %v1766
    %2933 = vmatprep.subr.bf16.mxu0 %v1775
    %2934 = vmatpush1.bf16.msra.mxu0 %v1774
    %2935 = vmatprep.subr.bf16.mxu0 %v1783
    %2936 = vmatpush1.bf16.msra.mxu0 %v1782
    %2937 = vmatprep.subr.bf16.mxu0 %v1791
    %2938 = vmatpush1.bf16.msra.mxu0 %v1790
    %2939 = vmatprep.subr.bf16.mxu0 %v1799
    %2940 = vmatpush1.bf16.msra.mxu0 %v1798
    %2941 = vmatprep.subr.bf16.mxu0 %v1807
    %2942 = vmatpush1.bf16.msra.mxu0 %v1806
    %2943 = vmatprep.subr.bf16.mxu0 %v1815
    %2944 = vmatpush1.bf16.msra.mxu0 %v1814
    %2945 = vmatprep.subr.bf16.mxu0 %v1823
    %2946 = vmatpush1.bf16.msra.mxu0 %v1822
    %2947 = vmatprep.subr.bf16.mxu0 %v1831
    %2948 = vmatpush1.bf16.msra.mxu0 %v1830
    %2949 = vmatprep.mubr.bf16.mxu0 %v2875
    %2950 = vmatmul.mubr.bf16.gmra.mrb[0].mxu0 %v2874
    %v2951 = vpop.f32.mrb[0].mxu0
    %v2952 = vadd.f32 0.0, %v2951
    %v2953 = vpop.f32.mrb[0].mxu0
    %v2954 = vadd.f32 0.0, %v2953
    %v2955 = vpop.f32.mrb[0].mxu0
    %v2956 = vpop.f32.mrb[0].mxu0
    %2957 = vdwg.mxu0
    %2958 = vmatprep.subr.bf16.mxu0 %v1713
    %2959 = vmatpush1.bf16.msra.mxu0 %v1712
    %2960 = vmatprep.subr.bf16.mxu0 %v1721
    %2961 = vmatpush1.bf16.msra.mxu0 %v1720
    %2962 = vmatprep.subr.bf16.mxu0 %v1729
    %2963 = vmatpush1.bf16.msra.mxu0 %v1728
    %2964 = vmatprep.subr.bf16.mxu0 %v1737
    %2965 = vmatpush1.bf16.msra.mxu0 %v1736
    %2966 = vmatprep.subr.bf16.mxu0 %v1745
    %2967 = vmatpush1.bf16.msra.mxu0 %v1744
    %2968 = vmatprep.subr.bf16.mxu0 %v1753
    %2969 = vmatpush1.bf16.msra.mxu0 %v1752
    %2970 = vmatprep.subr.bf16.mxu0 %v1761
    %2971 = vmatpush1.bf16.msra.mxu0 %v1760
    %2972 = vmatprep.subr.bf16.mxu0 %v1769
    %2973 = vmatpush1.bf16.msra.mxu0 %v1768
    %2974 = vmatprep.subr.bf16.mxu0 %v1777
    %2975 = vmatpush1.bf16.msra.mxu0 %v1776
    %2976 = vmatprep.subr.bf16.mxu0 %v1785
    %2977 = vmatpush1.bf16.msra.mxu0 %v1784
    %2978 = vmatprep.subr.bf16.mxu0 %v1793
    %2979 = vmatpush1.bf16.msra.mxu0 %v1792
    %2980 = vmatprep.subr.bf16.mxu0 %v1801
    %2981 = vmatpush1.bf16.msra.mxu0 %v1800
    %2982 = vmatprep.subr.bf16.mxu0 %v1809
    %2983 = vmatpush1.bf16.msra.mxu0 %v1808
    %2984 = vmatprep.subr.bf16.mxu0 %v1817
    %2985 = vmatpush1.bf16.msra.mxu0 %v1816
    %2986 = vmatprep.subr.bf16.mxu0 %v1825
    %2987 = vmatpush1.bf16.msra.mxu0 %v1824
    %2988 = vmatprep.subr.bf16.mxu0 %v1833
    %2989 = vmatpush1.bf16.msra.mxu0 %v1832
    %2990 = vmatprep.mubr.bf16.mxu0 %v2875
    %2991 = vmatmul.mubr.bf16.gmra.mrb[0].mxu0 %v2874
    %v2992 = vpop.f32.mrb[0].mxu0
    %v2993 = vadd.f32 0.0, %v2992
    %v2994 = vpop.f32.mrb[0].mxu0
    %v2995 = vadd.f32 0.0, %v2994
    %v2996 = vpop.f32.mrb[0].mxu0
    %v2997 = vpop.f32.mrb[0].mxu0
    %2998 = vdwg.mxu0
    %2999 = vmatprep.subr.bf16.mxu0 %v1715
    %3000 = vmatpush1.bf16.msra.mxu0 %v1714
    %3001 = vmatprep.subr.bf16.mxu0 %v1723
    %3002 = vmatpush1.bf16.msra.mxu0 %v1722
    %3003 = vmatprep.subr.bf16.mxu0 %v1731
    %3004 = vmatpush1.bf16.msra.mxu0 %v1730
    %3005 = vmatprep.subr.bf16.mxu0 %v1739
    %3006 = vmatpush1.bf16.msra.mxu0 %v1738
    %3007 = vmatprep.subr.bf16.mxu0 %v1747
    %3008 = vmatpush1.bf16.msra.mxu0 %v1746
    %3009 = vmatprep.subr.bf16.mxu0 %v1755
    %3010 = vmatpush1.bf16.msra.mxu0 %v1754
    %3011 = vmatprep.subr.bf16.mxu0 %v1763
    %3012 = vmatpush1.bf16.msra.mxu0 %v1762
    %3013 = vmatprep.subr.bf16.mxu0 %v1771
    %3014 = vmatpush1.bf16.msra.mxu0 %v1770
    %3015 = vmatprep.subr.bf16.mxu0 %v1779
    %3016 = vmatpush1.bf16.msra.mxu0 %v1778
    %3017 = vmatprep.subr.bf16.mxu0 %v1787
    %3018 = vmatpush1.bf16.msra.mxu0 %v1786
    %3019 = vmatprep.subr.bf16.mxu0 %v1795
    %3020 = vmatpush1.bf16.msra.mxu0 %v1794
    %3021 = vmatprep.subr.bf16.mxu0 %v1803
    %3022 = vmatpush1.bf16.msra.mxu0 %v1802
    %3023 = vmatprep.subr.bf16.mxu0 %v1811
    %3024 = vmatpush1.bf16.msra.mxu0 %v1810
    %3025 = vmatprep.subr.bf16.mxu0 %v1819
    %3026 = vmatpush1.bf16.msra.mxu0 %v1818
    %3027 = vmatprep.subr.bf16.mxu0 %v1827
    %3028 = vmatpush1.bf16.msra.mxu0 %v1826
    %3029 = vmatprep.subr.bf16.mxu0 %v1835
    %3030 = vmatpush1.bf16.msra.mxu0 %v1834
    %3031 = vmatprep.mubr.bf16.mxu0 %v2875
    %3032 = vmatmul.mubr.bf16.gmra.mrb[0].mxu0 %v2874
    %v3033 = vpop.f32.mrb[0].mxu0
    %v3034 = vadd.f32 0.0, %v3033
    %v3035 = vpop.f32.mrb[0].mxu0
    %v3036 = vadd.f32 0.0, %v3035
    %v3037 = vpop.f32.mrb[0].mxu0
    %v3038 = vpop.f32.mrb[0].mxu0
    %3039 = vdwg.mxu0
    %v3040 = vadd.f32 %v2866, %v2911
    %v3041 = vadd.f32 %v2867, %v2913
    %v3042 = vadd.f32 %v2868, %v2952
    %v3043 = vadd.f32 %v2869, %v2954
    %v3044 = vadd.f32 %v2870, %v2993
    %v3045 = vadd.f32 %v2871, %v2995
    %v3046 = vadd.f32 %v2872, %v3034
    %v3047 = vadd.f32 %v2873, %v3036
    %v3048 = vmul.f32 %v3040, 0.5
    %v3049 = vmul.f32 %v3041, 0.5
    %v3050 = vtanh.pop %v3048
    %v3051 = vtanh.pop %v3049
    %v3052 = vmul.f32 %v3050, 0.5
    %v3053 = vmul.f32 %v3051, 0.5
    %v3054 = vadd.f32 %v3052, 0.5
    %v3055 = vadd.f32 %v3053, 0.5
    %v3056 = vmul.f32 %v3042, 0.5
    %v3057 = vmul.f32 %v3043, 0.5
    %v3058 = vtanh.pop %v3056
    %v3059 = vtanh.pop %v3057
    %v3060 = vmul.f32 %v3058, 0.5
    %v3061 = vmul.f32 %v3059, 0.5
    %v3062 = vadd.f32 %v3060, 0.5
    %v3063 = vadd.f32 %v3061, 0.5
    %v3064 = vtanh.pop %v3044
    %v3065 = vtanh.pop %v3045
    %v3066 = vmul.f32 %v3046, 0.5
    %v3067 = vmul.f32 %v3047, 0.5
    %v3068 = vtanh.pop %v3066
    %v3069 = vtanh.pop %v3067
    %v3070 = vmul.f32 %v3068, 0.5
    %v3071 = vmul.f32 %v3069, 0.5
    %v3072 = vadd.f32 %v3070, 0.5
    %v3073 = vadd.f32 %v3071, 0.5
    %v3074 = vmul.f32 %v3062, %v2864
    %v3075 = vmul.f32 %v3063, %v2865
    %v3076 = vmul.f32 %v3054, %v3064
    %v3077 = vmul.f32 %v3055, %v3065
    %v3078 = vadd.f32 %v3074, %v3076
    %v3079 = vadd.f32 %v3075, %v3077
    %v3080 = vtanh.pop %v3078
    %v3081 = vtanh.pop %v3079
    %v3082 = vmul.f32 %v3072, %v3080
    %v3083 = vmul.f32 %v3073, %v3081
    %vm3084 = vcmp.gt.s32.totalorder %v117, 4
    %v3085 = vsel %vm3084, 1, 0
    %3086 = vset.pattern.permute.xlu0 0
    %3087 = vperm.xlu0 %3086, %v3085
    %v3088 = vpop.permute.xlu0 %3087
    %vm3089 = vcmp.eq.s32.totalorder %v3088, 1
    %v3090 = vsel %vm3089, %v3082, %v2862
    %v3091 = vsel %vm3089, %v3083, %v2863
    %v3092 = vsel %vm3089, %v3078, %v2864
    %v3093 = vsel %vm3089, %v3079, %v2865
    %v3094 = vld [vmem:[#allocation2 + $0x140] sm:$0xff]
    %v3095 = vld [vmem:[#allocation2 + $0x148] sm:$0xff]
    %v3096 = vld [vmem:[#allocation2 + $0x150] sm:$0xff]
    %v3097 = vld [vmem:[#allocation2 + $0x158] sm:$0xff]
    %v3098 = vld [vmem:[#allocation2 + $0x160] sm:$0xff]
    %v3099 = vld [vmem:[#allocation2 + $0x168] sm:$0xff]
    %v3100 = vld [vmem:[#allocation2 + $0x170] sm:$0xff]
    %v3101 = vld [vmem:[#allocation2 + $0x178] sm:$0xff]
    %v3102 = vpack.c.bf16 %v3090, %v3090
    %v3103 = vpack.c.bf16 %v3091, %v3091
    %3104 = vmatprep.subr.bf16.mxu0 %v1709
    %3105 = vmatpush1.bf16.msra.mxu0 %v1708
    %3106 = vmatprep.subr.bf16.mxu0 %v1717
    %3107 = vmatpush1.bf16.msra.mxu0 %v1716
    %3108 = vmatprep.subr.bf16.mxu0 %v1725
    %3109 = vmatpush1.bf16.msra.mxu0 %v1724
    %3110 = vmatprep.subr.bf16.mxu0 %v1733
    %3111 = vmatpush1.bf16.msra.mxu0 %v1732
    %3112 = vmatprep.subr.bf16.mxu0 %v1741
    %3113 = vmatpush1.bf16.msra.mxu0 %v1740
    %3114 = vmatprep.subr.bf16.mxu0 %v1749
    %3115 = vmatpush1.bf16.msra.mxu0 %v1748
    %3116 = vmatprep.subr.bf16.mxu0 %v1757
    %3117 = vmatpush1.bf16.msra.mxu0 %v1756
    %3118 = vmatprep.subr.bf16.mxu0 %v1765
    %3119 = vmatpush1.bf16.msra.mxu0 %v1764
    %3120 = vmatprep.subr.bf16.mxu0 %v1773
    %3121 = vmatpush1.bf16.msra.mxu0 %v1772
    %3122 = vmatprep.subr.bf16.mxu0 %v1781
    %3123 = vmatpush1.bf16.msra.mxu0 %v1780
    %3124 = vmatprep.subr.bf16.mxu0 %v1789
    %3125 = vmatpush1.bf16.msra.mxu0 %v1788
    %3126 = vmatprep.subr.bf16.mxu0 %v1797
    %3127 = vmatpush1.bf16.msra.mxu0 %v1796
    %3128 = vmatprep.subr.bf16.mxu0 %v1805
    %3129 = vmatpush1.bf16.msra.mxu0 %v1804
    %3130 = vmatprep.subr.bf16.mxu0 %v1813
    %3131 = vmatpush1.bf16.msra.mxu0 %v1812
    %3132 = vmatprep.subr.bf16.mxu0 %v1821
    %3133 = vmatpush1.bf16.msra.mxu0 %v1820
    %3134 = vmatprep.subr.bf16.mxu0 %v1829
    %3135 = vmatpush1.bf16.msra.mxu0 %v1828
    %3136 = vmatprep.mubr.bf16.mxu0 %v3103
    %3137 = vmatmul.mubr.bf16.gmra.mrb[0].mxu0 %v3102
    %v3138 = vpop.f32.mrb[0].mxu0
    %v3139 = vadd.f32 0.0, %v3138
    %v3140 = vpop.f32.mrb[0].mxu0
    %v3141 = vadd.f32 0.0, %v3140
    %v3142 = vpop.f32.mrb[0].mxu0
    %v3143 = vpop.f32.mrb[0].mxu0
    %3144 = vdwg.mxu0
    %3145 = vmatprep.subr.bf16.mxu0 %v1711
    %3146 = vmatpush1.bf16.msra.mxu0 %v1710
    %3147 = vmatprep.subr.bf16.mxu0 %v1719
    %3148 = vmatpush1.bf16.msra.mxu0 %v1718
    %3149 = vmatprep.subr.bf16.mxu0 %v1727
    %3150 = vmatpush1.bf16.msra.mxu0 %v1726
    %3151 = vmatprep.subr.bf16.mxu0 %v1735
    %3152 = vmatpush1.bf16.msra.mxu0 %v1734
    %3153 = vmatprep.subr.bf16.mxu0 %v1743
    %3154 = vmatpush1.bf16.msra.mxu0 %v1742
    %3155 = vmatprep.subr.bf16.mxu0 %v1751
    %3156 = vmatpush1.bf16.msra.mxu0 %v1750
    %3157 = vmatprep.subr.bf16.mxu0 %v1759
    %3158 = vmatpush1.bf16.msra.mxu0 %v1758
    %3159 = vmatprep.subr.bf16.mxu0 %v1767
    %3160 = vmatpush1.bf16.msra.mxu0 %v1766
    %3161 = vmatprep.subr.bf16.mxu0 %v1775
    %3162 = vmatpush1.bf16.msra.mxu0 %v1774
    %3163 = vmatprep.subr.bf16.mxu0 %v1783
    %3164 = vmatpush1.bf16.msra.mxu0 %v1782
    %3165 = vmatprep.subr.bf16.mxu0 %v1791
    %3166 = vmatpush1.bf16.msra.mxu0 %v1790
    %3167 = vmatprep.subr.bf16.mxu0 %v1799
    %3168 = vmatpush1.bf16.msra.mxu0 %v1798
    %3169 = vmatprep.subr.bf16.mxu0 %v1807
    %3170 = vmatpush1.bf16.msra.mxu0 %v1806
    %3171 = vmatprep.subr.bf16.mxu0 %v1815
    %3172 = vmatpush1.bf16.msra.mxu0 %v1814
    %3173 = vmatprep.subr.bf16.mxu0 %v1823
    %3174 = vmatpush1.bf16.msra.mxu0 %v1822
    %3175 = vmatprep.subr.bf16.mxu0 %v1831
    %3176 = vmatpush1.bf16.msra.mxu0 %v1830
    %3177 = vmatprep.mubr.bf16.mxu0 %v3103
    %3178 = vmatmul.mubr.bf16.gmra.mrb[0].mxu0 %v3102
    %v3179 = vpop.f32.mrb[0].mxu0
    %v3180 = vadd.f32 0.0, %v3179
    %v3181 = vpop.f32.mrb[0].mxu0
    %v3182 = vadd.f32 0.0, %v3181
    %v3183 = vpop.f32.mrb[0].mxu0
    %v3184 = vpop.f32.mrb[0].mxu0
    %3185 = vdwg.mxu0
    %3186 = vmatprep.subr.bf16.mxu0 %v1713
    %3187 = vmatpush1.bf16.msra.mxu0 %v1712
    %3188 = vmatprep.subr.bf16.mxu0 %v1721
    %3189 = vmatpush1.bf16.msra.mxu0 %v1720
    %3190 = vmatprep.subr.bf16.mxu0 %v1729
    %3191 = vmatpush1.bf16.msra.mxu0 %v1728
    %3192 = vmatprep.subr.bf16.mxu0 %v1737
    %3193 = vmatpush1.bf16.msra.mxu0 %v1736
    %3194 = vmatprep.subr.bf16.mxu0 %v1745
    %3195 = vmatpush1.bf16.msra.mxu0 %v1744
    %3196 = vmatprep.subr.bf16.mxu0 %v1753
    %3197 = vmatpush1.bf16.msra.mxu0 %v1752
    %3198 = vmatprep.subr.bf16.mxu0 %v1761
    %3199 = vmatpush1.bf16.msra.mxu0 %v1760
    %3200 = vmatprep.subr.bf16.mxu0 %v1769
    %3201 = vmatpush1.bf16.msra.mxu0 %v1768
    %3202 = vmatprep.subr.bf16.mxu0 %v1777
    %3203 = vmatpush1.bf16.msra.mxu0 %v1776
    %3204 = vmatprep.subr.bf16.mxu0 %v1785
    %3205 = vmatpush1.bf16.msra.mxu0 %v1784
    %3206 = vmatprep.subr.bf16.mxu0 %v1793
    %3207 = vmatpush1.bf16.msra.mxu0 %v1792
    %3208 = vmatprep.subr.bf16.mxu0 %v1801
    %3209 = vmatpush1.bf16.msra.mxu0 %v1800
    %3210 = vmatprep.subr.bf16.mxu0 %v1809
    %3211 = vmatpush1.bf16.msra.mxu0 %v1808
    %3212 = vmatprep.subr.bf16.mxu0 %v1817
    %3213 = vmatpush1.bf16.msra.mxu0 %v1816
    %3214 = vmatprep.subr.bf16.mxu0 %v1825
    %3215 = vmatpush1.bf16.msra.mxu0 %v1824
    %3216 = vmatprep.subr.bf16.mxu0 %v1833
    %3217 = vmatpush1.bf16.msra.mxu0 %v1832
    %3218 = vmatprep.mubr.bf16.mxu0 %v3103
    %3219 = vmatmul.mubr.bf16.gmra.mrb[0].mxu0 %v3102
    %v3220 = vpop.f32.mrb[0].mxu0
    %v3221 = vadd.f32 0.0, %v3220
    %v3222 = vpop.f32.mrb[0].mxu0
    %v3223 = vadd.f32 0.0, %v3222
    %v3224 = vpop.f32.mrb[0].mxu0
    %v3225 = vpop.f32.mrb[0].mxu0
    %3226 = vdwg.mxu0
    %3227 = vmatprep.subr.bf16.mxu0 %v1715
    %3228 = vmatpush1.bf16.msra.mxu0 %v1714
    %3229 = vmatprep.subr.bf16.mxu0 %v1723
    %3230 = vmatpush1.bf16.msra.mxu0 %v1722
    %3231 = vmatprep.subr.bf16.mxu0 %v1731
    %3232 = vmatpush1.bf16.msra.mxu0 %v1730
    %3233 = vmatprep.subr.bf16.mxu0 %v1739
    %3234 = vmatpush1.bf16.msra.mxu0 %v1738
    %3235 = vmatprep.subr.bf16.mxu0 %v1747
    %3236 = vmatpush1.bf16.msra.mxu0 %v1746
    %3237 = vmatprep.subr.bf16.mxu0 %v1755
    %3238 = vmatpush1.bf16.msra.mxu0 %v1754
    %3239 = vmatprep.subr.bf16.mxu0 %v1763
    %3240 = vmatpush1.bf16.msra.mxu0 %v1762
    %3241 = vmatprep.subr.bf16.mxu0 %v1771
    %3242 = vmatpush1.bf16.msra.mxu0 %v1770
    %3243 = vmatprep.subr.bf16.mxu0 %v1779
    %3244 = vmatpush1.bf16.msra.mxu0 %v1778
    %3245 = vmatprep.subr.bf16.mxu0 %v1787
    %3246 = vmatpush1.bf16.msra.mxu0 %v1786
    %3247 = vmatprep.subr.bf16.mxu0 %v1795
    %3248 = vmatpush1.bf16.msra.mxu0 %v1794
    %3249 = vmatprep.subr.bf16.mxu0 %v1803
    %3250 = vmatpush1.bf16.msra.mxu0 %v1802
    %3251 = vmatprep.subr.bf16.mxu0 %v1811
    %3252 = vmatpush1.bf16.msra.mxu0 %v1810
    %3253 = vmatprep.subr.bf16.mxu0 %v1819
    %3254 = vmatpush1.bf16.msra.mxu0 %v1818
    %3255 = vmatprep.subr.bf16.mxu0 %v1827
    %3256 = vmatpush1.bf16.msra.mxu0 %v1826
    %3257 = vmatprep.subr.bf16.mxu0 %v1835
    %3258 = vmatpush1.bf16.msra.mxu0 %v1834
    %3259 = vmatprep.mubr.bf16.mxu0 %v3103
    %3260 = vmatmul.mubr.bf16.gmra.mrb[0].mxu0 %v3102
    %v3261 = vpop.f32.mrb[0].mxu0
    %v3262 = vadd.f32 0.0, %v3261
    %v3263 = vpop.f32.mrb[0].mxu0
    %v3264 = vadd.f32 0.0, %v3263
    %v3265 = vpop.f32.mrb[0].mxu0
    %v3266 = vpop.f32.mrb[0].mxu0
    %3267 = vdwg.mxu0
    %v3268 = vadd.f32 %v3094, %v3139
    %v3269 = vadd.f32 %v3095, %v3141
    %v3270 = vadd.f32 %v3096, %v3180
    %v3271 = vadd.f32 %v3097, %v3182
    %v3272 = vadd.f32 %v3098, %v3221
    %v3273 = vadd.f32 %v3099, %v3223
    %v3274 = vadd.f32 %v3100, %v3262
    %v3275 = vadd.f32 %v3101, %v3264
    %v3276 = vmul.f32 %v3268, 0.5
    %v3277 = vmul.f32 %v3269, 0.5
    %v3278 = vtanh.pop %v3276
    %v3279 = vtanh.pop %v3277
    %v3280 = vmul.f32 %v3278, 0.5
    %v3281 = vmul.f32 %v3279, 0.5
    %v3282 = vadd.f32 %v3280, 0.5
    %v3283 = vadd.f32 %v3281, 0.5
    %v3284 = vmul.f32 %v3270, 0.5
    %v3285 = vmul.f32 %v3271, 0.5
    %v3286 = vtanh.pop %v3284
    %v3287 = vtanh.pop %v3285
    %v3288 = vmul.f32 %v3286, 0.5
    %v3289 = vmul.f32 %v3287, 0.5
    %v3290 = vadd.f32 %v3288, 0.5
    %v3291 = vadd.f32 %v3289, 0.5
    %v3292 = vtanh.pop %v3272
    %v3293 = vtanh.pop %v3273
    %v3294 = vmul.f32 %v3274, 0.5
    %v3295 = vmul.f32 %v3275, 0.5
    %v3296 = vtanh.pop %v3294
    %v3297 = vtanh.pop %v3295
    %v3298 = vmul.f32 %v3296, 0.5
    %v3299 = vmul.f32 %v3297, 0.5
    %v3300 = vadd.f32 %v3298, 0.5
    %v3301 = vadd.f32 %v3299, 0.5
    %v3302 = vmul.f32 %v3290, %v3092
    %v3303 = vmul.f32 %v3291, %v3093
    %v3304 = vmul.f32 %v3282, %v3292
    %v3305 = vmul.f32 %v3283, %v3293
    %v3306 = vadd.f32 %v3302, %v3304
    %v3307 = vadd.f32 %v3303, %v3305
    %v3308 = vtanh.pop %v3306
    %v3309 = vtanh.pop %v3307
    %v3310 = vmul.f32 %v3300, %v3308
    %v3311 = vmul.f32 %v3301, %v3309
    %vm3312 = vcmp.gt.s32.totalorder %v117, 5
    %v3313 = vsel %vm3312, 1, 0
    %3314 = vset.pattern.permute.xlu0 0
    %3315 = vperm.xlu0 %3314, %v3313
    %v3316 = vpop.permute.xlu0 %3315
    %vm3317 = vcmp.eq.s32.totalorder %v3316, 1
    %v3318 = vsel %vm3317, %v3310, %v3090
    %v3319 = vsel %vm3317, %v3311, %v3091
    %v3320 = vsel %vm3317, %v3306, %v3092
    %v3321 = vsel %vm3317, %v3307, %v3093
    %v3322 = vld [vmem:[#allocation2 + $0x180] sm:$0xff]
    %v3323 = vld [vmem:[#allocation2 + $0x188] sm:$0xff]
    %v3324 = vld [vmem:[#allocation2 + $0x190] sm:$0xff]
    %v3325 = vld [vmem:[#allocation2 + $0x198] sm:$0xff]
    %v3326 = vld [vmem:[#allocation2 + $0x1a0] sm:$0xff]
    %v3327 = vld [vmem:[#allocation2 + $0x1a8] sm:$0xff]
    %v3328 = vld [vmem:[#allocation2 + $0x1b0] sm:$0xff]
    %v3329 = vld [vmem:[#allocation2 + $0x1b8] sm:$0xff]
    %v3330 = vpack.c.bf16 %v3318, %v3318
    %v3331 = vpack.c.bf16 %v3319, %v3319
    %3332 = vmatprep.subr.bf16.mxu0 %v1709
    %3333 = vmatpush1.bf16.msra.mxu0 %v1708
    %3334 = vmatprep.subr.bf16.mxu0 %v1717
    %3335 = vmatpush1.bf16.msra.mxu0 %v1716
    %3336 = vmatprep.subr.bf16.mxu0 %v1725
    %3337 = vmatpush1.bf16.msra.mxu0 %v1724
    %3338 = vmatprep.subr.bf16.mxu0 %v1733
    %3339 = vmatpush1.bf16.msra.mxu0 %v1732
    %3340 = vmatprep.subr.bf16.mxu0 %v1741
    %3341 = vmatpush1.bf16.msra.mxu0 %v1740
    %3342 = vmatprep.subr.bf16.mxu0 %v1749
    %3343 = vmatpush1.bf16.msra.mxu0 %v1748
    %3344 = vmatprep.subr.bf16.mxu0 %v1757
    %3345 = vmatpush1.bf16.msra.mxu0 %v1756
    %3346 = vmatprep.subr.bf16.mxu0 %v1765
    %3347 = vmatpush1.bf16.msra.mxu0 %v1764
    %3348 = vmatprep.subr.bf16.mxu0 %v1773
    %3349 = vmatpush1.bf16.msra.mxu0 %v1772
    %3350 = vmatprep.subr.bf16.mxu0 %v1781
    %3351 = vmatpush1.bf16.msra.mxu0 %v1780
    %3352 = vmatprep.subr.bf16.mxu0 %v1789
    %3353 = vmatpush1.bf16.msra.mxu0 %v1788
    %3354 = vmatprep.subr.bf16.mxu0 %v1797
    %3355 = vmatpush1.bf16.msra.mxu0 %v1796
    %3356 = vmatprep.subr.bf16.mxu0 %v1805
    %3357 = vmatpush1.bf16.msra.mxu0 %v1804
    %3358 = vmatprep.subr.bf16.mxu0 %v1813
    %3359 = vmatpush1.bf16.msra.mxu0 %v1812
    %3360 = vmatprep.subr.bf16.mxu0 %v1821
    %3361 = vmatpush1.bf16.msra.mxu0 %v1820
    %3362 = vmatprep.subr.bf16.mxu0 %v1829
    %3363 = vmatpush1.bf16.msra.mxu0 %v1828
    %3364 = vmatprep.mubr.bf16.mxu0 %v3331
    %3365 = vmatmul.mubr.bf16.gmra.mrb[0].mxu0 %v3330
    %v3366 = vpop.f32.mrb[0].mxu0
    %v3367 = vadd.f32 0.0, %v3366
    %v3368 = vpop.f32.mrb[0].mxu0
    %v3369 = vadd.f32 0.0, %v3368
    %v3370 = vpop.f32.mrb[0].mxu0
    %v3371 = vpop.f32.mrb[0].mxu0
    %3372 = vdwg.mxu0
    %3373 = vmatprep.subr.bf16.mxu0 %v1711
    %3374 = vmatpush1.bf16.msra.mxu0 %v1710
    %3375 = vmatprep.subr.bf16.mxu0 %v1719
    %3376 = vmatpush1.bf16.msra.mxu0 %v1718
    %3377 = vmatprep.subr.bf16.mxu0 %v1727
    %3378 = vmatpush1.bf16.msra.mxu0 %v1726
    %3379 = vmatprep.subr.bf16.mxu0 %v1735
    %3380 = vmatpush1.bf16.msra.mxu0 %v1734
    %3381 = vmatprep.subr.bf16.mxu0 %v1743
    %3382 = vmatpush1.bf16.msra.mxu0 %v1742
    %3383 = vmatprep.subr.bf16.mxu0 %v1751
    %3384 = vmatpush1.bf16.msra.mxu0 %v1750
    %3385 = vmatprep.subr.bf16.mxu0 %v1759
    %3386 = vmatpush1.bf16.msra.mxu0 %v1758
    %3387 = vmatprep.subr.bf16.mxu0 %v1767
    %3388 = vmatpush1.bf16.msra.mxu0 %v1766
    %3389 = vmatprep.subr.bf16.mxu0 %v1775
    %3390 = vmatpush1.bf16.msra.mxu0 %v1774
    %3391 = vmatprep.subr.bf16.mxu0 %v1783
    %3392 = vmatpush1.bf16.msra.mxu0 %v1782
    %3393 = vmatprep.subr.bf16.mxu0 %v1791
    %3394 = vmatpush1.bf16.msra.mxu0 %v1790
    %3395 = vmatprep.subr.bf16.mxu0 %v1799
    %3396 = vmatpush1.bf16.msra.mxu0 %v1798
    %3397 = vmatprep.subr.bf16.mxu0 %v1807
    %3398 = vmatpush1.bf16.msra.mxu0 %v1806
    %3399 = vmatprep.subr.bf16.mxu0 %v1815
    %3400 = vmatpush1.bf16.msra.mxu0 %v1814
    %3401 = vmatprep.subr.bf16.mxu0 %v1823
    %3402 = vmatpush1.bf16.msra.mxu0 %v1822
    %3403 = vmatprep.subr.bf16.mxu0 %v1831
    %3404 = vmatpush1.bf16.msra.mxu0 %v1830
    %3405 = vmatprep.mubr.bf16.mxu0 %v3331
    %3406 = vmatmul.mubr.bf16.gmra.mrb[0].mxu0 %v3330
    %v3407 = vpop.f32.mrb[0].mxu0
    %v3408 = vadd.f32 0.0, %v3407
    %v3409 = vpop.f32.mrb[0].mxu0
    %v3410 = vadd.f32 0.0, %v3409
    %v3411 = vpop.f32.mrb[0].mxu0
    %v3412 = vpop.f32.mrb[0].mxu0
    %3413 = vdwg.mxu0
    %3414 = vmatprep.subr.bf16.mxu0 %v1713
    %3415 = vmatpush1.bf16.msra.mxu0 %v1712
    %3416 = vmatprep.subr.bf16.mxu0 %v1721
    %3417 = vmatpush1.bf16.msra.mxu0 %v1720
    %3418 = vmatprep.subr.bf16.mxu0 %v1729
    %3419 = vmatpush1.bf16.msra.mxu0 %v1728
    %3420 = vmatprep.subr.bf16.mxu0 %v1737
    %3421 = vmatpush1.bf16.msra.mxu0 %v1736
    %3422 = vmatprep.subr.bf16.mxu0 %v1745
    %3423 = vmatpush1.bf16.msra.mxu0 %v1744
    %3424 = vmatprep.subr.bf16.mxu0 %v1753
    %3425 = vmatpush1.bf16.msra.mxu0 %v1752
    %3426 = vmatprep.subr.bf16.mxu0 %v1761
    %3427 = vmatpush1.bf16.msra.mxu0 %v1760
    %3428 = vmatprep.subr.bf16.mxu0 %v1769
    %3429 = vmatpush1.bf16.msra.mxu0 %v1768
    %3430 = vmatprep.subr.bf16.mxu0 %v1777
    %3431 = vmatpush1.bf16.msra.mxu0 %v1776
    %3432 = vmatprep.subr.bf16.mxu0 %v1785
    %3433 = vmatpush1.bf16.msra.mxu0 %v1784
    %3434 = vmatprep.subr.bf16.mxu0 %v1793
    %3435 = vmatpush1.bf16.msra.mxu0 %v1792
    %3436 = vmatprep.subr.bf16.mxu0 %v1801
    %3437 = vmatpush1.bf16.msra.mxu0 %v1800
    %3438 = vmatprep.subr.bf16.mxu0 %v1809
    %3439 = vmatpush1.bf16.msra.mxu0 %v1808
    %3440 = vmatprep.subr.bf16.mxu0 %v1817
    %3441 = vmatpush1.bf16.msra.mxu0 %v1816
    %3442 = vmatprep.subr.bf16.mxu0 %v1825
    %3443 = vmatpush1.bf16.msra.mxu0 %v1824
    %3444 = vmatprep.subr.bf16.mxu0 %v1833
    %3445 = vmatpush1.bf16.msra.mxu0 %v1832
    %3446 = vmatprep.mubr.bf16.mxu0 %v3331
    %3447 = vmatmul.mubr.bf16.gmra.mrb[0].mxu0 %v3330
    %v3448 = vpop.f32.mrb[0].mxu0
    %v3449 = vadd.f32 0.0, %v3448
    %v3450 = vpop.f32.mrb[0].mxu0
    %v3451 = vadd.f32 0.0, %v3450
    %v3452 = vpop.f32.mrb[0].mxu0
    %v3453 = vpop.f32.mrb[0].mxu0
    %3454 = vdwg.mxu0
    %3455 = vmatprep.subr.bf16.mxu0 %v1715
    %3456 = vmatpush1.bf16.msra.mxu0 %v1714
    %3457 = vmatprep.subr.bf16.mxu0 %v1723
    %3458 = vmatpush1.bf16.msra.mxu0 %v1722
    %3459 = vmatprep.subr.bf16.mxu0 %v1731
    %3460 = vmatpush1.bf16.msra.mxu0 %v1730
    %3461 = vmatprep.subr.bf16.mxu0 %v1739
    %3462 = vmatpush1.bf16.msra.mxu0 %v1738
    %3463 = vmatprep.subr.bf16.mxu0 %v1747
    %3464 = vmatpush1.bf16.msra.mxu0 %v1746
    %3465 = vmatprep.subr.bf16.mxu0 %v1755
    %3466 = vmatpush1.bf16.msra.mxu0 %v1754
    %3467 = vmatprep.subr.bf16.mxu0 %v1763
    %3468 = vmatpush1.bf16.msra.mxu0 %v1762
    %3469 = vmatprep.subr.bf16.mxu0 %v1771
    %3470 = vmatpush1.bf16.msra.mxu0 %v1770
    %3471 = vmatprep.subr.bf16.mxu0 %v1779
    %3472 = vmatpush1.bf16.msra.mxu0 %v1778
    %3473 = vmatprep.subr.bf16.mxu0 %v1787
    %3474 = vmatpush1.bf16.msra.mxu0 %v1786
    %3475 = vmatprep.subr.bf16.mxu0 %v1795
    %3476 = vmatpush1.bf16.msra.mxu0 %v1794
    %3477 = vmatprep.subr.bf16.mxu0 %v1803
    %3478 = vmatpush1.bf16.msra.mxu0 %v1802
    %3479 = vmatprep.subr.bf16.mxu0 %v1811
    %3480 = vmatpush1.bf16.msra.mxu0 %v1810
    %3481 = vmatprep.subr.bf16.mxu0 %v1819
    %3482 = vmatpush1.bf16.msra.mxu0 %v1818
    %3483 = vmatprep.subr.bf16.mxu0 %v1827
    %3484 = vmatpush1.bf16.msra.mxu0 %v1826
    %3485 = vmatprep.subr.bf16.mxu0 %v1835
    %3486 = vmatpush1.bf16.msra.mxu0 %v1834
    %3487 = vmatprep.mubr.bf16.mxu0 %v3331
    %3488 = vmatmul.mubr.bf16.gmra.mrb[0].mxu0 %v3330
    %v3489 = vpop.f32.mrb[0].mxu0
    %v3490 = vadd.f32 0.0, %v3489
    %v3491 = vpop.f32.mrb[0].mxu0
    %v3492 = vadd.f32 0.0, %v3491
    %v3493 = vpop.f32.mrb[0].mxu0
    %v3494 = vpop.f32.mrb[0].mxu0
    %3495 = vdwg.mxu0
    %v3496 = vadd.f32 %v3322, %v3367
    %v3497 = vadd.f32 %v3323, %v3369
    %v3498 = vadd.f32 %v3324, %v3408
    %v3499 = vadd.f32 %v3325, %v3410
    %v3500 = vadd.f32 %v3326, %v3449
    %v3501 = vadd.f32 %v3327, %v3451
    %v3502 = vadd.f32 %v3328, %v3490
    %v3503 = vadd.f32 %v3329, %v3492
    %v3504 = vmul.f32 %v3496, 0.5
    %v3505 = vmul.f32 %v3497, 0.5
    %v3506 = vtanh.pop %v3504
    %v3507 = vtanh.pop %v3505
    %v3508 = vmul.f32 %v3506, 0.5
    %v3509 = vmul.f32 %v3507, 0.5
    %v3510 = vadd.f32 %v3508, 0.5
    %v3511 = vadd.f32 %v3509, 0.5
    %v3512 = vmul.f32 %v3498, 0.5
    %v3513 = vmul.f32 %v3499, 0.5
    %v3514 = vtanh.pop %v3512
    %v3515 = vtanh.pop %v3513
    %v3516 = vmul.f32 %v3514, 0.5
    %v3517 = vmul.f32 %v3515, 0.5
    %v3518 = vadd.f32 %v3516, 0.5
    %v3519 = vadd.f32 %v3517, 0.5
    %v3520 = vtanh.pop %v3500
    %v3521 = vtanh.pop %v3501
    %v3522 = vmul.f32 %v3502, 0.5
    %v3523 = vmul.f32 %v3503, 0.5
    %v3524 = vtanh.pop %v3522
    %v3525 = vtanh.pop %v3523
    %v3526 = vmul.f32 %v3524, 0.5
    %v3527 = vmul.f32 %v3525, 0.5
    %v3528 = vadd.f32 %v3526, 0.5
    %v3529 = vadd.f32 %v3527, 0.5
    %v3530 = vmul.f32 %v3518, %v3320
    %v3531 = vmul.f32 %v3519, %v3321
    %v3532 = vmul.f32 %v3510, %v3520
    %v3533 = vmul.f32 %v3511, %v3521
    %v3534 = vadd.f32 %v3530, %v3532
    %v3535 = vadd.f32 %v3531, %v3533
    %v3536 = vtanh.pop %v3534
    %v3537 = vtanh.pop %v3535
    %v3538 = vmul.f32 %v3528, %v3536
    %v3539 = vmul.f32 %v3529, %v3537
    %vm3540 = vcmp.gt.s32.totalorder %v117, 6
    %v3541 = vsel %vm3540, 1, 0
    %3542 = vset.pattern.permute.xlu0 0
    %3543 = vperm.xlu0 %3542, %v3541
    %v3544 = vpop.permute.xlu0 %3543
    %vm3545 = vcmp.eq.s32.totalorder %v3544, 1
    %v3546 = vsel %vm3545, %v3538, %v3318
    %v3547 = vsel %vm3545, %v3539, %v3319
    %v3548 = vsel %vm3545, %v3534, %v3320
    %v3549 = vsel %vm3545, %v3535, %v3321
    %v3550 = vld [vmem:[#allocation2 + $0x1c0] sm:$0xff]
    %v3551 = vld [vmem:[#allocation2 + $0x1c8] sm:$0xff]
    %v3552 = vld [vmem:[#allocation2 + $0x1d0] sm:$0xff]
    %v3553 = vld [vmem:[#allocation2 + $0x1d8] sm:$0xff]
    %v3554 = vld [vmem:[#allocation2 + $0x1e0] sm:$0xff]
    %v3555 = vld [vmem:[#allocation2 + $0x1e8] sm:$0xff]
    %v3556 = vld [vmem:[#allocation2 + $0x1f0] sm:$0xff]
    %v3557 = vld [vmem:[#allocation2 + $0x1f8] sm:$0xff]
    %v3558 = vpack.c.bf16 %v3546, %v3546
    %v3559 = vpack.c.bf16 %v3547, %v3547
    %3560 = vmatprep.subr.bf16.mxu0 %v1709
    %3561 = vmatpush1.bf16.msra.mxu0 %v1708
    %3562 = vmatprep.subr.bf16.mxu0 %v1717
    %3563 = vmatpush1.bf16.msra.mxu0 %v1716
    %3564 = vmatprep.subr.bf16.mxu0 %v1725
    %3565 = vmatpush1.bf16.msra.mxu0 %v1724
    %3566 = vmatprep.subr.bf16.mxu0 %v1733
    %3567 = vmatpush1.bf16.msra.mxu0 %v1732
    %3568 = vmatprep.subr.bf16.mxu0 %v1741
    %3569 = vmatpush1.bf16.msra.mxu0 %v1740
    %3570 = vmatprep.subr.bf16.mxu0 %v1749
    %3571 = vmatpush1.bf16.msra.mxu0 %v1748
    %3572 = vmatprep.subr.bf16.mxu0 %v1757
    %3573 = vmatpush1.bf16.msra.mxu0 %v1756
    %3574 = vmatprep.subr.bf16.mxu0 %v1765
    %3575 = vmatpush1.bf16.msra.mxu0 %v1764
    %3576 = vmatprep.subr.bf16.mxu0 %v1773
    %3577 = vmatpush1.bf16.msra.mxu0 %v1772
    %3578 = vmatprep.subr.bf16.mxu0 %v1781
    %3579 = vmatpush1.bf16.msra.mxu0 %v1780
    %3580 = vmatprep.subr.bf16.mxu0 %v1789
    %3581 = vmatpush1.bf16.msra.mxu0 %v1788
    %3582 = vmatprep.subr.bf16.mxu0 %v1797
    %3583 = vmatpush1.bf16.msra.mxu0 %v1796
    %3584 = vmatprep.subr.bf16.mxu0 %v1805
    %3585 = vmatpush1.bf16.msra.mxu0 %v1804
    %3586 = vmatprep.subr.bf16.mxu0 %v1813
    %3587 = vmatpush1.bf16.msra.mxu0 %v1812
    %3588 = vmatprep.subr.bf16.mxu0 %v1821
    %3589 = vmatpush1.bf16.msra.mxu0 %v1820
    %3590 = vmatprep.subr.bf16.mxu0 %v1829
    %3591 = vmatpush1.bf16.msra.mxu0 %v1828
    %3592 = vmatprep.mubr.bf16.mxu0 %v3559
    %3593 = vmatmul.mubr.bf16.gmra.mrb[0].mxu0 %v3558
    %v3594 = vpop.f32.mrb[0].mxu0
    %v3595 = vadd.f32 0.0, %v3594
    %v3596 = vpop.f32.mrb[0].mxu0
    %v3597 = vadd.f32 0.0, %v3596
    %v3598 = vpop.f32.mrb[0].mxu0
    %v3599 = vpop.f32.mrb[0].mxu0
    %3600 = vdwg.mxu0
    %3601 = vmatprep.subr.bf16.mxu0 %v1711
    %3602 = vmatpush1.bf16.msra.mxu0 %v1710
    %3603 = vmatprep.subr.bf16.mxu0 %v1719
    %3604 = vmatpush1.bf16.msra.mxu0 %v1718
    %3605 = vmatprep.subr.bf16.mxu0 %v1727
    %3606 = vmatpush1.bf16.msra.mxu0 %v1726
    %3607 = vmatprep.subr.bf16.mxu0 %v1735
    %3608 = vmatpush1.bf16.msra.mxu0 %v1734
    %3609 = vmatprep.subr.bf16.mxu0 %v1743
    %3610 = vmatpush1.bf16.msra.mxu0 %v1742
    %3611 = vmatprep.subr.bf16.mxu0 %v1751
    %3612 = vmatpush1.bf16.msra.mxu0 %v1750
    %3613 = vmatprep.subr.bf16.mxu0 %v1759
    %3614 = vmatpush1.bf16.msra.mxu0 %v1758
    %3615 = vmatprep.subr.bf16.mxu0 %v1767
    %3616 = vmatpush1.bf16.msra.mxu0 %v1766
    %3617 = vmatprep.subr.bf16.mxu0 %v1775
    %3618 = vmatpush1.bf16.msra.mxu0 %v1774
    %3619 = vmatprep.subr.bf16.mxu0 %v1783
    %3620 = vmatpush1.bf16.msra.mxu0 %v1782
    %3621 = vmatprep.subr.bf16.mxu0 %v1791
    %3622 = vmatpush1.bf16.msra.mxu0 %v1790
    %3623 = vmatprep.subr.bf16.mxu0 %v1799
    %3624 = vmatpush1.bf16.msra.mxu0 %v1798
    %3625 = vmatprep.subr.bf16.mxu0 %v1807
    %3626 = vmatpush1.bf16.msra.mxu0 %v1806
    %3627 = vmatprep.subr.bf16.mxu0 %v1815
    %3628 = vmatpush1.bf16.msra.mxu0 %v1814
    %3629 = vmatprep.subr.bf16.mxu0 %v1823
    %3630 = vmatpush1.bf16.msra.mxu0 %v1822
    %3631 = vmatprep.subr.bf16.mxu0 %v1831
    %3632 = vmatpush1.bf16.msra.mxu0 %v1830
    %3633 = vmatprep.mubr.bf16.mxu0 %v3559
    %3634 = vmatmul.mubr.bf16.gmra.mrb[0].mxu0 %v3558
    %v3635 = vpop.f32.mrb[0].mxu0
    %v3636 = vadd.f32 0.0, %v3635
    %v3637 = vpop.f32.mrb[0].mxu0
    %v3638 = vadd.f32 0.0, %v3637
    %v3639 = vpop.f32.mrb[0].mxu0
    %v3640 = vpop.f32.mrb[0].mxu0
    %3641 = vdwg.mxu0
    %3642 = vmatprep.subr.bf16.mxu0 %v1713
    %3643 = vmatpush1.bf16.msra.mxu0 %v1712
    %3644 = vmatprep.subr.bf16.mxu0 %v1721
    %3645 = vmatpush1.bf16.msra.mxu0 %v1720
    %3646 = vmatprep.subr.bf16.mxu0 %v1729
    %3647 = vmatpush1.bf16.msra.mxu0 %v1728
    %3648 = vmatprep.subr.bf16.mxu0 %v1737
    %3649 = vmatpush1.bf16.msra.mxu0 %v1736
    %3650 = vmatprep.subr.bf16.mxu0 %v1745
    %3651 = vmatpush1.bf16.msra.mxu0 %v1744
    %3652 = vmatprep.subr.bf16.mxu0 %v1753
    %3653 = vmatpush1.bf16.msra.mxu0 %v1752
    %3654 = vmatprep.subr.bf16.mxu0 %v1761
    %3655 = vmatpush1.bf16.msra.mxu0 %v1760
    %3656 = vmatprep.subr.bf16.mxu0 %v1769
    %3657 = vmatpush1.bf16.msra.mxu0 %v1768
    %3658 = vmatprep.subr.bf16.mxu0 %v1777
    %3659 = vmatpush1.bf16.msra.mxu0 %v1776
    %3660 = vmatprep.subr.bf16.mxu0 %v1785
    %3661 = vmatpush1.bf16.msra.mxu0 %v1784
    %3662 = vmatprep.subr.bf16.mxu0 %v1793
    %3663 = vmatpush1.bf16.msra.mxu0 %v1792
    %3664 = vmatprep.subr.bf16.mxu0 %v1801
    %3665 = vmatpush1.bf16.msra.mxu0 %v1800
    %3666 = vmatprep.subr.bf16.mxu0 %v1809
    %3667 = vmatpush1.bf16.msra.mxu0 %v1808
    %3668 = vmatprep.subr.bf16.mxu0 %v1817
    %3669 = vmatpush1.bf16.msra.mxu0 %v1816
    %3670 = vmatprep.subr.bf16.mxu0 %v1825
    %3671 = vmatpush1.bf16.msra.mxu0 %v1824
    %3672 = vmatprep.subr.bf16.mxu0 %v1833
    %3673 = vmatpush1.bf16.msra.mxu0 %v1832
    %3674 = vmatprep.mubr.bf16.mxu0 %v3559
    %3675 = vmatmul.mubr.bf16.gmra.mrb[0].mxu0 %v3558
    %v3676 = vpop.f32.mrb[0].mxu0
    %v3677 = vadd.f32 0.0, %v3676
    %v3678 = vpop.f32.mrb[0].mxu0
    %v3679 = vadd.f32 0.0, %v3678
    %v3680 = vpop.f32.mrb[0].mxu0
    %v3681 = vpop.f32.mrb[0].mxu0
    %3682 = vdwg.mxu0
    %3683 = vmatprep.subr.bf16.mxu0 %v1715
    %3684 = vmatpush1.bf16.msra.mxu0 %v1714
    %3685 = vmatprep.subr.bf16.mxu0 %v1723
    %3686 = vmatpush1.bf16.msra.mxu0 %v1722
    %3687 = vmatprep.subr.bf16.mxu0 %v1731
    %3688 = vmatpush1.bf16.msra.mxu0 %v1730
    %3689 = vmatprep.subr.bf16.mxu0 %v1739
    %3690 = vmatpush1.bf16.msra.mxu0 %v1738
    %3691 = vmatprep.subr.bf16.mxu0 %v1747
    %3692 = vmatpush1.bf16.msra.mxu0 %v1746
    %3693 = vmatprep.subr.bf16.mxu0 %v1755
    %3694 = vmatpush1.bf16.msra.mxu0 %v1754
    %3695 = vmatprep.subr.bf16.mxu0 %v1763
    %3696 = vmatpush1.bf16.msra.mxu0 %v1762
    %3697 = vmatprep.subr.bf16.mxu0 %v1771
    %3698 = vmatpush1.bf16.msra.mxu0 %v1770
    %3699 = vmatprep.subr.bf16.mxu0 %v1779
    %3700 = vmatpush1.bf16.msra.mxu0 %v1778
    %3701 = vmatprep.subr.bf16.mxu0 %v1787
    %3702 = vmatpush1.bf16.msra.mxu0 %v1786
    %3703 = vmatprep.subr.bf16.mxu0 %v1795
    %3704 = vmatpush1.bf16.msra.mxu0 %v1794
    %3705 = vmatprep.subr.bf16.mxu0 %v1803
    %3706 = vmatpush1.bf16.msra.mxu0 %v1802
    %3707 = vmatprep.subr.bf16.mxu0 %v1811
    %3708 = vmatpush1.bf16.msra.mxu0 %v1810
    %3709 = vmatprep.subr.bf16.mxu0 %v1819
    %3710 = vmatpush1.bf16.msra.mxu0 %v1818
    %3711 = vmatprep.subr.bf16.mxu0 %v1827
    %3712 = vmatpush1.bf16.msra.mxu0 %v1826
    %3713 = vmatprep.subr.bf16.mxu0 %v1835
    %3714 = vmatpush1.bf16.msra.mxu0 %v1834
    %3715 = vmatprep.mubr.bf16.mxu0 %v3559
    %3716 = vmatmul.mubr.bf16.gmra.mrb[0].mxu0 %v3558
    %v3717 = vpop.f32.mrb[0].mxu0
    %v3718 = vadd.f32 0.0, %v3717
    %v3719 = vpop.f32.mrb[0].mxu0
    %v3720 = vadd.f32 0.0, %v3719
    %v3721 = vpop.f32.mrb[0].mxu0
    %v3722 = vpop.f32.mrb[0].mxu0
    %3723 = vdwg.mxu0
    %v3724 = vadd.f32 %v3550, %v3595
    %v3725 = vadd.f32 %v3551, %v3597
    %v3726 = vadd.f32 %v3552, %v3636
    %v3727 = vadd.f32 %v3553, %v3638
    %v3728 = vadd.f32 %v3554, %v3677
    %v3729 = vadd.f32 %v3555, %v3679
    %v3730 = vadd.f32 %v3556, %v3718
    %v3731 = vadd.f32 %v3557, %v3720
    %v3732 = vmul.f32 %v3724, 0.5
    %v3733 = vmul.f32 %v3725, 0.5
    %v3734 = vtanh.pop %v3732
    %v3735 = vtanh.pop %v3733
    %v3736 = vmul.f32 %v3734, 0.5
    %v3737 = vmul.f32 %v3735, 0.5
    %v3738 = vadd.f32 %v3736, 0.5
    %v3739 = vadd.f32 %v3737, 0.5
    %v3740 = vmul.f32 %v3726, 0.5
    %v3741 = vmul.f32 %v3727, 0.5
    %v3742 = vtanh.pop %v3740
    %v3743 = vtanh.pop %v3741
    %v3744 = vmul.f32 %v3742, 0.5
    %v3745 = vmul.f32 %v3743, 0.5
    %v3746 = vadd.f32 %v3744, 0.5
    %v3747 = vadd.f32 %v3745, 0.5
    %v3748 = vtanh.pop %v3728
    %v3749 = vtanh.pop %v3729
    %v3750 = vmul.f32 %v3730, 0.5
    %v3751 = vmul.f32 %v3731, 0.5
    %v3752 = vtanh.pop %v3750
    %v3753 = vtanh.pop %v3751
    %v3754 = vmul.f32 %v3752, 0.5
    %v3755 = vmul.f32 %v3753, 0.5
    %v3756 = vadd.f32 %v3754, 0.5
    %v3757 = vadd.f32 %v3755, 0.5
    %v3758 = vmul.f32 %v3746, %v3548
    %v3759 = vmul.f32 %v3747, %v3549
    %v3760 = vmul.f32 %v3738, %v3748
    %v3761 = vmul.f32 %v3739, %v3749
    %v3762 = vadd.f32 %v3758, %v3760
    %v3763 = vadd.f32 %v3759, %v3761
    %v3764 = vtanh.pop %v3762
    %v3765 = vtanh.pop %v3763
    %v3766 = vmul.f32 %v3756, %v3764
    %v3767 = vmul.f32 %v3757, %v3765
    %vm3768 = vcmp.gt.s32.totalorder %v117, 7
    %v3769 = vsel %vm3768, 1, 0
    %3770 = vset.pattern.permute.xlu0 0
    %3771 = vperm.xlu0 %3770, %v3769
    %v3772 = vpop.permute.xlu0 %3771
    %vm3773 = vcmp.eq.s32.totalorder %v3772, 1
    %v3774 = vsel %vm3773, %v3766, %v3546
    %v3775 = vsel %vm3773, %v3767, %v3547
    %v3776 = vsel %vm3773, %v3762, %v3548
    %v3777 = vsel %vm3773, %v3763, %v3549
    %v3778 = vld [vmem:[#allocation2 + $0x200] sm:$0xff]
    %v3779 = vld [vmem:[#allocation2 + $0x208] sm:$0xff]
    %v3780 = vld [vmem:[#allocation2 + $0x210] sm:$0xff]
    %v3781 = vld [vmem:[#allocation2 + $0x218] sm:$0xff]
    %v3782 = vld [vmem:[#allocation2 + $0x220] sm:$0xff]
    %v3783 = vld [vmem:[#allocation2 + $0x228] sm:$0xff]
    %v3784 = vld [vmem:[#allocation2 + $0x230] sm:$0xff]
    %v3785 = vld [vmem:[#allocation2 + $0x238] sm:$0xff]
    %v3786 = vpack.c.bf16 %v3774, %v3774
    %v3787 = vpack.c.bf16 %v3775, %v3775
    %3788 = vmatprep.subr.bf16.mxu0 %v1709
    %3789 = vmatpush1.bf16.msra.mxu0 %v1708
    %3790 = vmatprep.subr.bf16.mxu0 %v1717
    %3791 = vmatpush1.bf16.msra.mxu0 %v1716
    %3792 = vmatprep.subr.bf16.mxu0 %v1725
    %3793 = vmatpush1.bf16.msra.mxu0 %v1724
    %3794 = vmatprep.subr.bf16.mxu0 %v1733
    %3795 = vmatpush1.bf16.msra.mxu0 %v1732
    %3796 = vmatprep.subr.bf16.mxu0 %v1741
    %3797 = vmatpush1.bf16.msra.mxu0 %v1740
    %3798 = vmatprep.subr.bf16.mxu0 %v1749
    %3799 = vmatpush1.bf16.msra.mxu0 %v1748
    %3800 = vmatprep.subr.bf16.mxu0 %v1757
    %3801 = vmatpush1.bf16.msra.mxu0 %v1756
    %3802 = vmatprep.subr.bf16.mxu0 %v1765
    %3803 = vmatpush1.bf16.msra.mxu0 %v1764
    %3804 = vmatprep.subr.bf16.mxu0 %v1773
    %3805 = vmatpush1.bf16.msra.mxu0 %v1772
    %3806 = vmatprep.subr.bf16.mxu0 %v1781
    %3807 = vmatpush1.bf16.msra.mxu0 %v1780
    %3808 = vmatprep.subr.bf16.mxu0 %v1789
    %3809 = vmatpush1.bf16.msra.mxu0 %v1788
    %3810 = vmatprep.subr.bf16.mxu0 %v1797
    %3811 = vmatpush1.bf16.msra.mxu0 %v1796
    %3812 = vmatprep.subr.bf16.mxu0 %v1805
    %3813 = vmatpush1.bf16.msra.mxu0 %v1804
    %3814 = vmatprep.subr.bf16.mxu0 %v1813
    %3815 = vmatpush1.bf16.msra.mxu0 %v1812
    %3816 = vmatprep.subr.bf16.mxu0 %v1821
    %3817 = vmatpush1.bf16.msra.mxu0 %v1820
    %3818 = vmatprep.subr.bf16.mxu0 %v1829
    %3819 = vmatpush1.bf16.msra.mxu0 %v1828
    %3820 = vmatprep.mubr.bf16.mxu0 %v3787
    %3821 = vmatmul.mubr.bf16.gmra.mrb[0].mxu0 %v3786
    %v3822 = vpop.f32.mrb[0].mxu0
    %v3823 = vadd.f32 0.0, %v3822
    %v3824 = vpop.f32.mrb[0].mxu0
    %v3825 = vadd.f32 0.0, %v3824
    %v3826 = vpop.f32.mrb[0].mxu0
    %v3827 = vpop.f32.mrb[0].mxu0
    %3828 = vdwg.mxu0
    %3829 = vmatprep.subr.bf16.mxu0 %v1711
    %3830 = vmatpush1.bf16.msra.mxu0 %v1710
    %3831 = vmatprep.subr.bf16.mxu0 %v1719
    %3832 = vmatpush1.bf16.msra.mxu0 %v1718
    %3833 = vmatprep.subr.bf16.mxu0 %v1727
    %3834 = vmatpush1.bf16.msra.mxu0 %v1726
    %3835 = vmatprep.subr.bf16.mxu0 %v1735
    %3836 = vmatpush1.bf16.msra.mxu0 %v1734
    %3837 = vmatprep.subr.bf16.mxu0 %v1743
    %3838 = vmatpush1.bf16.msra.mxu0 %v1742
    %3839 = vmatprep.subr.bf16.mxu0 %v1751
    %3840 = vmatpush1.bf16.msra.mxu0 %v1750
    %3841 = vmatprep.subr.bf16.mxu0 %v1759
    %3842 = vmatpush1.bf16.msra.mxu0 %v1758
    %3843 = vmatprep.subr.bf16.mxu0 %v1767
    %3844 = vmatpush1.bf16.msra.mxu0 %v1766
    %3845 = vmatprep.subr.bf16.mxu0 %v1775
    %3846 = vmatpush1.bf16.msra.mxu0 %v1774
    %3847 = vmatprep.subr.bf16.mxu0 %v1783
    %3848 = vmatpush1.bf16.msra.mxu0 %v1782
    %3849 = vmatprep.subr.bf16.mxu0 %v1791
    %3850 = vmatpush1.bf16.msra.mxu0 %v1790
    %3851 = vmatprep.subr.bf16.mxu0 %v1799
    %3852 = vmatpush1.bf16.msra.mxu0 %v1798
    %3853 = vmatprep.subr.bf16.mxu0 %v1807
    %3854 = vmatpush1.bf16.msra.mxu0 %v1806
    %3855 = vmatprep.subr.bf16.mxu0 %v1815
    %3856 = vmatpush1.bf16.msra.mxu0 %v1814
    %3857 = vmatprep.subr.bf16.mxu0 %v1823
    %3858 = vmatpush1.bf16.msra.mxu0 %v1822
    %3859 = vmatprep.subr.bf16.mxu0 %v1831
    %3860 = vmatpush1.bf16.msra.mxu0 %v1830
    %3861 = vmatprep.mubr.bf16.mxu0 %v3787
    %3862 = vmatmul.mubr.bf16.gmra.mrb[0].mxu0 %v3786
    %v3863 = vpop.f32.mrb[0].mxu0
    %v3864 = vadd.f32 0.0, %v3863
    %v3865 = vpop.f32.mrb[0].mxu0
    %v3866 = vadd.f32 0.0, %v3865
    %v3867 = vpop.f32.mrb[0].mxu0
    %v3868 = vpop.f32.mrb[0].mxu0
    %3869 = vdwg.mxu0
    %3870 = vmatprep.subr.bf16.mxu0 %v1713
    %3871 = vmatpush1.bf16.msra.mxu0 %v1712
    %3872 = vmatprep.subr.bf16.mxu0 %v1721
    %3873 = vmatpush1.bf16.msra.mxu0 %v1720
    %3874 = vmatprep.subr.bf16.mxu0 %v1729
    %3875 = vmatpush1.bf16.msra.mxu0 %v1728
    %3876 = vmatprep.subr.bf16.mxu0 %v1737
    %3877 = vmatpush1.bf16.msra.mxu0 %v1736
    %3878 = vmatprep.subr.bf16.mxu0 %v1745
    %3879 = vmatpush1.bf16.msra.mxu0 %v1744
    %3880 = vmatprep.subr.bf16.mxu0 %v1753
    %3881 = vmatpush1.bf16.msra.mxu0 %v1752
    %3882 = vmatprep.subr.bf16.mxu0 %v1761
    %3883 = vmatpush1.bf16.msra.mxu0 %v1760
    %3884 = vmatprep.subr.bf16.mxu0 %v1769
    %3885 = vmatpush1.bf16.msra.mxu0 %v1768
    %3886 = vmatprep.subr.bf16.mxu0 %v1777
    %3887 = vmatpush1.bf16.msra.mxu0 %v1776
    %3888 = vmatprep.subr.bf16.mxu0 %v1785
    %3889 = vmatpush1.bf16.msra.mxu0 %v1784
    %3890 = vmatprep.subr.bf16.mxu0 %v1793
    %3891 = vmatpush1.bf16.msra.mxu0 %v1792
    %3892 = vmatprep.subr.bf16.mxu0 %v1801
    %3893 = vmatpush1.bf16.msra.mxu0 %v1800
    %3894 = vmatprep.subr.bf16.mxu0 %v1809
    %3895 = vmatpush1.bf16.msra.mxu0 %v1808
    %3896 = vmatprep.subr.bf16.mxu0 %v1817
    %3897 = vmatpush1.bf16.msra.mxu0 %v1816
    %3898 = vmatprep.subr.bf16.mxu0 %v1825
    %3899 = vmatpush1.bf16.msra.mxu0 %v1824
    %3900 = vmatprep.subr.bf16.mxu0 %v1833
    %3901 = vmatpush1.bf16.msra.mxu0 %v1832
    %3902 = vmatprep.mubr.bf16.mxu0 %v3787
    %3903 = vmatmul.mubr.bf16.gmra.mrb[0].mxu0 %v3786
    %v3904 = vpop.f32.mrb[0].mxu0
    %v3905 = vadd.f32 0.0, %v3904
    %v3906 = vpop.f32.mrb[0].mxu0
    %v3907 = vadd.f32 0.0, %v3906
    %v3908 = vpop.f32.mrb[0].mxu0
    %v3909 = vpop.f32.mrb[0].mxu0
    %3910 = vdwg.mxu0
    %3911 = vmatprep.subr.bf16.mxu0 %v1715
    %3912 = vmatpush1.bf16.msra.mxu0 %v1714
    %3913 = vmatprep.subr.bf16.mxu0 %v1723
    %3914 = vmatpush1.bf16.msra.mxu0 %v1722
    %3915 = vmatprep.subr.bf16.mxu0 %v1731
    %3916 = vmatpush1.bf16.msra.mxu0 %v1730
    %3917 = vmatprep.subr.bf16.mxu0 %v1739
    %3918 = vmatpush1.bf16.msra.mxu0 %v1738
    %3919 = vmatprep.subr.bf16.mxu0 %v1747
    %3920 = vmatpush1.bf16.msra.mxu0 %v1746
    %3921 = vmatprep.subr.bf16.mxu0 %v1755
    %3922 = vmatpush1.bf16.msra.mxu0 %v1754
    %3923 = vmatprep.subr.bf16.mxu0 %v1763
    %3924 = vmatpush1.bf16.msra.mxu0 %v1762
    %3925 = vmatprep.subr.bf16.mxu0 %v1771
    %3926 = vmatpush1.bf16.msra.mxu0 %v1770
    %3927 = vmatprep.subr.bf16.mxu0 %v1779
    %3928 = vmatpush1.bf16.msra.mxu0 %v1778
    %3929 = vmatprep.subr.bf16.mxu0 %v1787
    %3930 = vmatpush1.bf16.msra.mxu0 %v1786
    %3931 = vmatprep.subr.bf16.mxu0 %v1795
    %3932 = vmatpush1.bf16.msra.mxu0 %v1794
    %3933 = vmatprep.subr.bf16.mxu0 %v1803
    %3934 = vmatpush1.bf16.msra.mxu0 %v1802
    %3935 = vmatprep.subr.bf16.mxu0 %v1811
    %3936 = vmatpush1.bf16.msra.mxu0 %v1810
    %3937 = vmatprep.subr.bf16.mxu0 %v1819
    %3938 = vmatpush1.bf16.msra.mxu0 %v1818
    %3939 = vmatprep.subr.bf16.mxu0 %v1827
    %3940 = vmatpush1.bf16.msra.mxu0 %v1826
    %3941 = vmatprep.subr.bf16.mxu0 %v1835
    %3942 = vmatpush1.bf16.msra.mxu0 %v1834
    %3943 = vmatprep.mubr.bf16.mxu0 %v3787
    %3944 = vmatmul.mubr.bf16.gmra.mrb[0].mxu0 %v3786
    %v3945 = vpop.f32.mrb[0].mxu0
    %v3946 = vadd.f32 0.0, %v3945
    %v3947 = vpop.f32.mrb[0].mxu0
    %v3948 = vadd.f32 0.0, %v3947
    %v3949 = vpop.f32.mrb[0].mxu0
    %v3950 = vpop.f32.mrb[0].mxu0
    %3951 = vdwg.mxu0
    %v3952 = vadd.f32 %v3778, %v3823
    %v3953 = vadd.f32 %v3779, %v3825
    %v3954 = vadd.f32 %v3780, %v3864
    %v3955 = vadd.f32 %v3781, %v3866
    %v3956 = vadd.f32 %v3782, %v3905
    %v3957 = vadd.f32 %v3783, %v3907
    %v3958 = vadd.f32 %v3784, %v3946
    %v3959 = vadd.f32 %v3785, %v3948
    %v3960 = vmul.f32 %v3952, 0.5
    %v3961 = vmul.f32 %v3953, 0.5
    %v3962 = vtanh.pop %v3960
    %v3963 = vtanh.pop %v3961
    %v3964 = vmul.f32 %v3962, 0.5
    %v3965 = vmul.f32 %v3963, 0.5
    %v3966 = vadd.f32 %v3964, 0.5
    %v3967 = vadd.f32 %v3965, 0.5
    %v3968 = vmul.f32 %v3954, 0.5
    %v3969 = vmul.f32 %v3955, 0.5
    %v3970 = vtanh.pop %v3968
    %v3971 = vtanh.pop %v3969
    %v3972 = vmul.f32 %v3970, 0.5
    %v3973 = vmul.f32 %v3971, 0.5
    %v3974 = vadd.f32 %v3972, 0.5
    %v3975 = vadd.f32 %v3973, 0.5
    %v3976 = vtanh.pop %v3956
    %v3977 = vtanh.pop %v3957
    %v3978 = vmul.f32 %v3958, 0.5
    %v3979 = vmul.f32 %v3959, 0.5
    %v3980 = vtanh.pop %v3978
    %v3981 = vtanh.pop %v3979
    %v3982 = vmul.f32 %v3980, 0.5
    %v3983 = vmul.f32 %v3981, 0.5
    %v3984 = vadd.f32 %v3982, 0.5
    %v3985 = vadd.f32 %v3983, 0.5
    %v3986 = vmul.f32 %v3974, %v3776
    %v3987 = vmul.f32 %v3975, %v3777
    %v3988 = vmul.f32 %v3966, %v3976
    %v3989 = vmul.f32 %v3967, %v3977
    %v3990 = vadd.f32 %v3986, %v3988
    %v3991 = vadd.f32 %v3987, %v3989
    %v3992 = vtanh.pop %v3990
    %v3993 = vtanh.pop %v3991
    %v3994 = vmul.f32 %v3984, %v3992
    %v3995 = vmul.f32 %v3985, %v3993
    %vm3996 = vcmp.gt.s32.totalorder %v117, 8
    %v3997 = vsel %vm3996, 1, 0
    %3998 = vset.pattern.permute.xlu0 0
    %3999 = vperm.xlu0 %3998, %v3997
    %v4000 = vpop.permute.xlu0 %3999
    %vm4001 = vcmp.eq.s32.totalorder %v4000, 1
    %v4002 = vsel %vm4001, %v3994, %v3774
    %v4003 = vsel %vm4001, %v3995, %v3775
    %v4004 = vsel %vm4001, %v3990, %v3776
    %v4005 = vsel %vm4001, %v3991, %v3777
    %v4006 = vld [vmem:[#allocation2 + $0x240] sm:$0xff]
    %v4007 = vld [vmem:[#allocation2 + $0x248] sm:$0xff]
    %v4008 = vld [vmem:[#allocation2 + $0x250] sm:$0xff]
    %v4009 = vld [vmem:[#allocation2 + $0x258] sm:$0xff]
    %v4010 = vld [vmem:[#allocation2 + $0x260] sm:$0xff]
    %v4011 = vld [vmem:[#allocation2 + $0x268] sm:$0xff]
    %v4012 = vld [vmem:[#allocation2 + $0x270] sm:$0xff]
    %v4013 = vld [vmem:[#allocation2 + $0x278] sm:$0xff]
    %v4014 = vpack.c.bf16 %v4002, %v4002
    %v4015 = vpack.c.bf16 %v4003, %v4003
    %4016 = vmatprep.subr.bf16.mxu0 %v1709
    %4017 = vmatpush1.bf16.msra.mxu0 %v1708
    %4018 = vmatprep.subr.bf16.mxu0 %v1717
    %4019 = vmatpush1.bf16.msra.mxu0 %v1716
    %4020 = vmatprep.subr.bf16.mxu0 %v1725
    %4021 = vmatpush1.bf16.msra.mxu0 %v1724
    %4022 = vmatprep.subr.bf16.mxu0 %v1733
    %4023 = vmatpush1.bf16.msra.mxu0 %v1732
    %4024 = vmatprep.subr.bf16.mxu0 %v1741
    %4025 = vmatpush1.bf16.msra.mxu0 %v1740
    %4026 = vmatprep.subr.bf16.mxu0 %v1749
    %4027 = vmatpush1.bf16.msra.mxu0 %v1748
    %4028 = vmatprep.subr.bf16.mxu0 %v1757
    %4029 = vmatpush1.bf16.msra.mxu0 %v1756
    %4030 = vmatprep.subr.bf16.mxu0 %v1765
    %4031 = vmatpush1.bf16.msra.mxu0 %v1764
    %4032 = vmatprep.subr.bf16.mxu0 %v1773
    %4033 = vmatpush1.bf16.msra.mxu0 %v1772
    %4034 = vmatprep.subr.bf16.mxu0 %v1781
    %4035 = vmatpush1.bf16.msra.mxu0 %v1780
    %4036 = vmatprep.subr.bf16.mxu0 %v1789
    %4037 = vmatpush1.bf16.msra.mxu0 %v1788
    %4038 = vmatprep.subr.bf16.mxu0 %v1797
    %4039 = vmatpush1.bf16.msra.mxu0 %v1796
    %4040 = vmatprep.subr.bf16.mxu0 %v1805
    %4041 = vmatpush1.bf16.msra.mxu0 %v1804
    %4042 = vmatprep.subr.bf16.mxu0 %v1813
    %4043 = vmatpush1.bf16.msra.mxu0 %v1812
    %4044 = vmatprep.subr.bf16.mxu0 %v1821
    %4045 = vmatpush1.bf16.msra.mxu0 %v1820
    %4046 = vmatprep.subr.bf16.mxu0 %v1829
    %4047 = vmatpush1.bf16.msra.mxu0 %v1828
    %4048 = vmatprep.mubr.bf16.mxu0 %v4015
    %4049 = vmatmul.mubr.bf16.gmra.mrb[0].mxu0 %v4014
    %v4050 = vpop.f32.mrb[0].mxu0
    %v4051 = vadd.f32 0.0, %v4050
    %v4052 = vpop.f32.mrb[0].mxu0
    %v4053 = vadd.f32 0.0, %v4052
    %v4054 = vpop.f32.mrb[0].mxu0
    %v4055 = vpop.f32.mrb[0].mxu0
    %4056 = vdwg.mxu0
    %4057 = vmatprep.subr.bf16.mxu0 %v1711
    %4058 = vmatpush1.bf16.msra.mxu0 %v1710
    %4059 = vmatprep.subr.bf16.mxu0 %v1719
    %4060 = vmatpush1.bf16.msra.mxu0 %v1718
    %4061 = vmatprep.subr.bf16.mxu0 %v1727
    %4062 = vmatpush1.bf16.msra.mxu0 %v1726
    %4063 = vmatprep.subr.bf16.mxu0 %v1735
    %4064 = vmatpush1.bf16.msra.mxu0 %v1734
    %4065 = vmatprep.subr.bf16.mxu0 %v1743
    %4066 = vmatpush1.bf16.msra.mxu0 %v1742
    %4067 = vmatprep.subr.bf16.mxu0 %v1751
    %4068 = vmatpush1.bf16.msra.mxu0 %v1750
    %4069 = vmatprep.subr.bf16.mxu0 %v1759
    %4070 = vmatpush1.bf16.msra.mxu0 %v1758
    %4071 = vmatprep.subr.bf16.mxu0 %v1767
    %4072 = vmatpush1.bf16.msra.mxu0 %v1766
    %4073 = vmatprep.subr.bf16.mxu0 %v1775
    %4074 = vmatpush1.bf16.msra.mxu0 %v1774
    %4075 = vmatprep.subr.bf16.mxu0 %v1783
    %4076 = vmatpush1.bf16.msra.mxu0 %v1782
    %4077 = vmatprep.subr.bf16.mxu0 %v1791
    %4078 = vmatpush1.bf16.msra.mxu0 %v1790
    %4079 = vmatprep.subr.bf16.mxu0 %v1799
    %4080 = vmatpush1.bf16.msra.mxu0 %v1798
    %4081 = vmatprep.subr.bf16.mxu0 %v1807
    %4082 = vmatpush1.bf16.msra.mxu0 %v1806
    %4083 = vmatprep.subr.bf16.mxu0 %v1815
    %4084 = vmatpush1.bf16.msra.mxu0 %v1814
    %4085 = vmatprep.subr.bf16.mxu0 %v1823
    %4086 = vmatpush1.bf16.msra.mxu0 %v1822
    %4087 = vmatprep.subr.bf16.mxu0 %v1831
    %4088 = vmatpush1.bf16.msra.mxu0 %v1830
    %4089 = vmatprep.mubr.bf16.mxu0 %v4015
    %4090 = vmatmul.mubr.bf16.gmra.mrb[0].mxu0 %v4014
    %v4091 = vpop.f32.mrb[0].mxu0
    %v4092 = vadd.f32 0.0, %v4091
    %v4093 = vpop.f32.mrb[0].mxu0
    %v4094 = vadd.f32 0.0, %v4093
    %v4095 = vpop.f32.mrb[0].mxu0
    %v4096 = vpop.f32.mrb[0].mxu0
    %4097 = vdwg.mxu0
    %4098 = vmatprep.subr.bf16.mxu0 %v1713
    %4099 = vmatpush1.bf16.msra.mxu0 %v1712
    %4100 = vmatprep.subr.bf16.mxu0 %v1721
    %4101 = vmatpush1.bf16.msra.mxu0 %v1720
    %4102 = vmatprep.subr.bf16.mxu0 %v1729
    %4103 = vmatpush1.bf16.msra.mxu0 %v1728
    %4104 = vmatprep.subr.bf16.mxu0 %v1737
    %4105 = vmatpush1.bf16.msra.mxu0 %v1736
    %4106 = vmatprep.subr.bf16.mxu0 %v1745
    %4107 = vmatpush1.bf16.msra.mxu0 %v1744
    %4108 = vmatprep.subr.bf16.mxu0 %v1753
    %4109 = vmatpush1.bf16.msra.mxu0 %v1752
    %4110 = vmatprep.subr.bf16.mxu0 %v1761
    %4111 = vmatpush1.bf16.msra.mxu0 %v1760
    %4112 = vmatprep.subr.bf16.mxu0 %v1769
    %4113 = vmatpush1.bf16.msra.mxu0 %v1768
    %4114 = vmatprep.subr.bf16.mxu0 %v1777
    %4115 = vmatpush1.bf16.msra.mxu0 %v1776
    %4116 = vmatprep.subr.bf16.mxu0 %v1785
    %4117 = vmatpush1.bf16.msra.mxu0 %v1784
    %4118 = vmatprep.subr.bf16.mxu0 %v1793
    %4119 = vmatpush1.bf16.msra.mxu0 %v1792
    %4120 = vmatprep.subr.bf16.mxu0 %v1801
    %4121 = vmatpush1.bf16.msra.mxu0 %v1800
    %4122 = vmatprep.subr.bf16.mxu0 %v1809
    %4123 = vmatpush1.bf16.msra.mxu0 %v1808
    %4124 = vmatprep.subr.bf16.mxu0 %v1817
    %4125 = vmatpush1.bf16.msra.mxu0 %v1816
    %4126 = vmatprep.subr.bf16.mxu0 %v1825
    %4127 = vmatpush1.bf16.msra.mxu0 %v1824
    %4128 = vmatprep.subr.bf16.mxu0 %v1833
    %4129 = vmatpush1.bf16.msra.mxu0 %v1832
    %4130 = vmatprep.mubr.bf16.mxu0 %v4015
    %4131 = vmatmul.mubr.bf16.gmra.mrb[0].mxu0 %v4014
    %v4132 = vpop.f32.mrb[0].mxu0
    %v4133 = vadd.f32 0.0, %v4132
    %v4134 = vpop.f32.mrb[0].mxu0
    %v4135 = vadd.f32 0.0, %v4134
    %v4136 = vpop.f32.mrb[0].mxu0
    %v4137 = vpop.f32.mrb[0].mxu0
    %4138 = vdwg.mxu0
    %4139 = vmatprep.subr.bf16.mxu0 %v1715
    %4140 = vmatpush1.bf16.msra.mxu0 %v1714
    %4141 = vmatprep.subr.bf16.mxu0 %v1723
    %4142 = vmatpush1.bf16.msra.mxu0 %v1722
    %4143 = vmatprep.subr.bf16.mxu0 %v1731
    %4144 = vmatpush1.bf16.msra.mxu0 %v1730
    %4145 = vmatprep.subr.bf16.mxu0 %v1739
    %4146 = vmatpush1.bf16.msra.mxu0 %v1738
    %4147 = vmatprep.subr.bf16.mxu0 %v1747
    %4148 = vmatpush1.bf16.msra.mxu0 %v1746
    %4149 = vmatprep.subr.bf16.mxu0 %v1755
    %4150 = vmatpush1.bf16.msra.mxu0 %v1754
    %4151 = vmatprep.subr.bf16.mxu0 %v1763
    %4152 = vmatpush1.bf16.msra.mxu0 %v1762
    %4153 = vmatprep.subr.bf16.mxu0 %v1771
    %4154 = vmatpush1.bf16.msra.mxu0 %v1770
    %4155 = vmatprep.subr.bf16.mxu0 %v1779
    %4156 = vmatpush1.bf16.msra.mxu0 %v1778
    %4157 = vmatprep.subr.bf16.mxu0 %v1787
    %4158 = vmatpush1.bf16.msra.mxu0 %v1786
    %4159 = vmatprep.subr.bf16.mxu0 %v1795
    %4160 = vmatpush1.bf16.msra.mxu0 %v1794
    %4161 = vmatprep.subr.bf16.mxu0 %v1803
    %4162 = vmatpush1.bf16.msra.mxu0 %v1802
    %4163 = vmatprep.subr.bf16.mxu0 %v1811
    %4164 = vmatpush1.bf16.msra.mxu0 %v1810
    %4165 = vmatprep.subr.bf16.mxu0 %v1819
    %4166 = vmatpush1.bf16.msra.mxu0 %v1818
    %4167 = vmatprep.subr.bf16.mxu0 %v1827
    %4168 = vmatpush1.bf16.msra.mxu0 %v1826
    %4169 = vmatprep.subr.bf16.mxu0 %v1835
    %4170 = vmatpush1.bf16.msra.mxu0 %v1834
    %4171 = vmatprep.mubr.bf16.mxu0 %v4015
    %4172 = vmatmul.mubr.bf16.gmra.mrb[0].mxu0 %v4014
    %v4173 = vpop.f32.mrb[0].mxu0
    %v4174 = vadd.f32 0.0, %v4173
    %v4175 = vpop.f32.mrb[0].mxu0
    %v4176 = vadd.f32 0.0, %v4175
    %v4177 = vpop.f32.mrb[0].mxu0
    %v4178 = vpop.f32.mrb[0].mxu0
    %4179 = vdwg.mxu0
    %v4180 = vadd.f32 %v4006, %v4051
    %v4181 = vadd.f32 %v4007, %v4053
    %v4182 = vadd.f32 %v4008, %v4092
    %v4183 = vadd.f32 %v4009, %v4094
    %v4184 = vadd.f32 %v4010, %v4133
    %v4185 = vadd.f32 %v4011, %v4135
    %v4186 = vadd.f32 %v4012, %v4174
    %v4187 = vadd.f32 %v4013, %v4176
    %v4188 = vmul.f32 %v4180, 0.5
    %v4189 = vmul.f32 %v4181, 0.5
    %v4190 = vtanh.pop %v4188
    %v4191 = vtanh.pop %v4189
    %v4192 = vmul.f32 %v4190, 0.5
    %v4193 = vmul.f32 %v4191, 0.5
    %v4194 = vadd.f32 %v4192, 0.5
    %v4195 = vadd.f32 %v4193, 0.5
    %v4196 = vmul.f32 %v4182, 0.5
    %v4197 = vmul.f32 %v4183, 0.5
    %v4198 = vtanh.pop %v4196
    %v4199 = vtanh.pop %v4197
    %v4200 = vmul.f32 %v4198, 0.5
    %v4201 = vmul.f32 %v4199, 0.5
    %v4202 = vadd.f32 %v4200, 0.5
    %v4203 = vadd.f32 %v4201, 0.5
    %v4204 = vtanh.pop %v4184
    %v4205 = vtanh.pop %v4185
    %v4206 = vmul.f32 %v4186, 0.5
    %v4207 = vmul.f32 %v4187, 0.5
    %v4208 = vtanh.pop %v4206
    %v4209 = vtanh.pop %v4207
    %v4210 = vmul.f32 %v4208, 0.5
    %v4211 = vmul.f32 %v4209, 0.5
    %v4212 = vadd.f32 %v4210, 0.5
    %v4213 = vadd.f32 %v4211, 0.5
    %v4214 = vmul.f32 %v4202, %v4004
    %v4215 = vmul.f32 %v4203, %v4005
    %v4216 = vmul.f32 %v4194, %v4204
    %v4217 = vmul.f32 %v4195, %v4205
    %v4218 = vadd.f32 %v4214, %v4216
    %v4219 = vadd.f32 %v4215, %v4217
    %v4220 = vtanh.pop %v4218
    %v4221 = vtanh.pop %v4219
    %v4222 = vmul.f32 %v4212, %v4220
    %v4223 = vmul.f32 %v4213, %v4221
    %vm4224 = vcmp.gt.s32.totalorder %v117, 9
    %v4225 = vsel %vm4224, 1, 0
    %4226 = vset.pattern.permute.xlu0 0
    %4227 = vperm.xlu0 %4226, %v4225
    %v4228 = vpop.permute.xlu0 %4227
    %vm4229 = vcmp.eq.s32.totalorder %v4228, 1
    %v4230 = vsel %vm4229, %v4222, %v4002
    %v4231 = vsel %vm4229, %v4223, %v4003
    %v4232 = vsel %vm4229, %v4218, %v4004
    %v4233 = vsel %vm4229, %v4219, %v4005
    %v4234 = vld [vmem:[#allocation2 + $0x280] sm:$0xff]
    %v4235 = vld [vmem:[#allocation2 + $0x288] sm:$0xff]
    %v4236 = vld [vmem:[#allocation2 + $0x290] sm:$0xff]
    %v4237 = vld [vmem:[#allocation2 + $0x298] sm:$0xff]
    %v4238 = vld [vmem:[#allocation2 + $0x2a0] sm:$0xff]
    %v4239 = vld [vmem:[#allocation2 + $0x2a8] sm:$0xff]
    %v4240 = vld [vmem:[#allocation2 + $0x2b0] sm:$0xff]
    %v4241 = vld [vmem:[#allocation2 + $0x2b8] sm:$0xff]
    %v4242 = vpack.c.bf16 %v4230, %v4230
    %v4243 = vpack.c.bf16 %v4231, %v4231
    %4244 = vmatprep.subr.bf16.mxu0 %v1709
    %4245 = vmatpush1.bf16.msra.mxu0 %v1708
    %4246 = vmatprep.subr.bf16.mxu0 %v1717
    %4247 = vmatpush1.bf16.msra.mxu0 %v1716
    %4248 = vmatprep.subr.bf16.mxu0 %v1725
    %4249 = vmatpush1.bf16.msra.mxu0 %v1724
    %4250 = vmatprep.subr.bf16.mxu0 %v1733
    %4251 = vmatpush1.bf16.msra.mxu0 %v1732
    %4252 = vmatprep.subr.bf16.mxu0 %v1741
    %4253 = vmatpush1.bf16.msra.mxu0 %v1740
    %4254 = vmatprep.subr.bf16.mxu0 %v1749
    %4255 = vmatpush1.bf16.msra.mxu0 %v1748
    %4256 = vmatprep.subr.bf16.mxu0 %v1757
    %4257 = vmatpush1.bf16.msra.mxu0 %v1756
    %4258 = vmatprep.subr.bf16.mxu0 %v1765
    %4259 = vmatpush1.bf16.msra.mxu0 %v1764
    %4260 = vmatprep.subr.bf16.mxu0 %v1773
    %4261 = vmatpush1.bf16.msra.mxu0 %v1772
    %4262 = vmatprep.subr.bf16.mxu0 %v1781
    %4263 = vmatpush1.bf16.msra.mxu0 %v1780
    %4264 = vmatprep.subr.bf16.mxu0 %v1789
    %4265 = vmatpush1.bf16.msra.mxu0 %v1788
    %4266 = vmatprep.subr.bf16.mxu0 %v1797
    %4267 = vmatpush1.bf16.msra.mxu0 %v1796
    %4268 = vmatprep.subr.bf16.mxu0 %v1805
    %4269 = vmatpush1.bf16.msra.mxu0 %v1804
    %4270 = vmatprep.subr.bf16.mxu0 %v1813
    %4271 = vmatpush1.bf16.msra.mxu0 %v1812
    %4272 = vmatprep.subr.bf16.mxu0 %v1821
    %4273 = vmatpush1.bf16.msra.mxu0 %v1820
    %4274 = vmatprep.subr.bf16.mxu0 %v1829
    %4275 = vmatpush1.bf16.msra.mxu0 %v1828
    %4276 = vmatprep.mubr.bf16.mxu0 %v4243
    %4277 = vmatmul.mubr.bf16.gmra.mrb[0].mxu0 %v4242
    %v4278 = vpop.f32.mrb[0].mxu0
    %v4279 = vadd.f32 0.0, %v4278
    %v4280 = vpop.f32.mrb[0].mxu0
    %v4281 = vadd.f32 0.0, %v4280
    %v4282 = vpop.f32.mrb[0].mxu0
    %v4283 = vpop.f32.mrb[0].mxu0
    %4284 = vdwg.mxu0
    %4285 = vmatprep.subr.bf16.mxu0 %v1711
    %4286 = vmatpush1.bf16.msra.mxu0 %v1710
    %4287 = vmatprep.subr.bf16.mxu0 %v1719
    %4288 = vmatpush1.bf16.msra.mxu0 %v1718
    %4289 = vmatprep.subr.bf16.mxu0 %v1727
    %4290 = vmatpush1.bf16.msra.mxu0 %v1726
    %4291 = vmatprep.subr.bf16.mxu0 %v1735
    %4292 = vmatpush1.bf16.msra.mxu0 %v1734
    %4293 = vmatprep.subr.bf16.mxu0 %v1743
    %4294 = vmatpush1.bf16.msra.mxu0 %v1742
    %4295 = vmatprep.subr.bf16.mxu0 %v1751
    %4296 = vmatpush1.bf16.msra.mxu0 %v1750
    %4297 = vmatprep.subr.bf16.mxu0 %v1759
    %4298 = vmatpush1.bf16.msra.mxu0 %v1758
    %4299 = vmatprep.subr.bf16.mxu0 %v1767
    %4300 = vmatpush1.bf16.msra.mxu0 %v1766
    %4301 = vmatprep.subr.bf16.mxu0 %v1775
    %4302 = vmatpush1.bf16.msra.mxu0 %v1774
    %4303 = vmatprep.subr.bf16.mxu0 %v1783
    %4304 = vmatpush1.bf16.msra.mxu0 %v1782
    %4305 = vmatprep.subr.bf16.mxu0 %v1791
    %4306 = vmatpush1.bf16.msra.mxu0 %v1790
    %4307 = vmatprep.subr.bf16.mxu0 %v1799
    %4308 = vmatpush1.bf16.msra.mxu0 %v1798
    %4309 = vmatprep.subr.bf16.mxu0 %v1807
    %4310 = vmatpush1.bf16.msra.mxu0 %v1806
    %4311 = vmatprep.subr.bf16.mxu0 %v1815
    %4312 = vmatpush1.bf16.msra.mxu0 %v1814
    %4313 = vmatprep.subr.bf16.mxu0 %v1823
    %4314 = vmatpush1.bf16.msra.mxu0 %v1822
    %4315 = vmatprep.subr.bf16.mxu0 %v1831
    %4316 = vmatpush1.bf16.msra.mxu0 %v1830
    %4317 = vmatprep.mubr.bf16.mxu0 %v4243
    %4318 = vmatmul.mubr.bf16.gmra.mrb[0].mxu0 %v4242
    %v4319 = vpop.f32.mrb[0].mxu0
    %v4320 = vadd.f32 0.0, %v4319
    %v4321 = vpop.f32.mrb[0].mxu0
    %v4322 = vadd.f32 0.0, %v4321
    %v4323 = vpop.f32.mrb[0].mxu0
    %v4324 = vpop.f32.mrb[0].mxu0
    %4325 = vdwg.mxu0
    %4326 = vmatprep.subr.bf16.mxu0 %v1713
    %4327 = vmatpush1.bf16.msra.mxu0 %v1712
    %4328 = vmatprep.subr.bf16.mxu0 %v1721
    %4329 = vmatpush1.bf16.msra.mxu0 %v1720
    %4330 = vmatprep.subr.bf16.mxu0 %v1729
    %4331 = vmatpush1.bf16.msra.mxu0 %v1728
    %4332 = vmatprep.subr.bf16.mxu0 %v1737
    %4333 = vmatpush1.bf16.msra.mxu0 %v1736
    %4334 = vmatprep.subr.bf16.mxu0 %v1745
    %4335 = vmatpush1.bf16.msra.mxu0 %v1744
    %4336 = vmatprep.subr.bf16.mxu0 %v1753
    %4337 = vmatpush1.bf16.msra.mxu0 %v1752
    %4338 = vmatprep.subr.bf16.mxu0 %v1761
    %4339 = vmatpush1.bf16.msra.mxu0 %v1760
    %4340 = vmatprep.subr.bf16.mxu0 %v1769
    %4341 = vmatpush1.bf16.msra.mxu0 %v1768
    %4342 = vmatprep.subr.bf16.mxu0 %v1777
    %4343 = vmatpush1.bf16.msra.mxu0 %v1776
    %4344 = vmatprep.subr.bf16.mxu0 %v1785
    %4345 = vmatpush1.bf16.msra.mxu0 %v1784
    %4346 = vmatprep.subr.bf16.mxu0 %v1793
    %4347 = vmatpush1.bf16.msra.mxu0 %v1792
    %4348 = vmatprep.subr.bf16.mxu0 %v1801
    %4349 = vmatpush1.bf16.msra.mxu0 %v1800
    %4350 = vmatprep.subr.bf16.mxu0 %v1809
    %4351 = vmatpush1.bf16.msra.mxu0 %v1808
    %4352 = vmatprep.subr.bf16.mxu0 %v1817
    %4353 = vmatpush1.bf16.msra.mxu0 %v1816
    %4354 = vmatprep.subr.bf16.mxu0 %v1825
    %4355 = vmatpush1.bf16.msra.mxu0 %v1824
    %4356 = vmatprep.subr.bf16.mxu0 %v1833
    %4357 = vmatpush1.bf16.msra.mxu0 %v1832
    %4358 = vmatprep.mubr.bf16.mxu0 %v4243
    %4359 = vmatmul.mubr.bf16.gmra.mrb[0].mxu0 %v4242
    %v4360 = vpop.f32.mrb[0].mxu0
    %v4361 = vadd.f32 0.0, %v4360
    %v4362 = vpop.f32.mrb[0].mxu0
    %v4363 = vadd.f32 0.0, %v4362
    %v4364 = vpop.f32.mrb[0].mxu0
    %v4365 = vpop.f32.mrb[0].mxu0
    %4366 = vdwg.mxu0
    %4367 = vmatprep.subr.bf16.mxu0 %v1715
    %4368 = vmatpush1.bf16.msra.mxu0 %v1714
    %4369 = vmatprep.subr.bf16.mxu0 %v1723
    %4370 = vmatpush1.bf16.msra.mxu0 %v1722
    %4371 = vmatprep.subr.bf16.mxu0 %v1731
    %4372 = vmatpush1.bf16.msra.mxu0 %v1730
    %4373 = vmatprep.subr.bf16.mxu0 %v1739
    %4374 = vmatpush1.bf16.msra.mxu0 %v1738
    %4375 = vmatprep.subr.bf16.mxu0 %v1747
    %4376 = vmatpush1.bf16.msra.mxu0 %v1746
    %4377 = vmatprep.subr.bf16.mxu0 %v1755
    %4378 = vmatpush1.bf16.msra.mxu0 %v1754
    %4379 = vmatprep.subr.bf16.mxu0 %v1763
    %4380 = vmatpush1.bf16.msra.mxu0 %v1762
    %4381 = vmatprep.subr.bf16.mxu0 %v1771
    %4382 = vmatpush1.bf16.msra.mxu0 %v1770
    %4383 = vmatprep.subr.bf16.mxu0 %v1779
    %4384 = vmatpush1.bf16.msra.mxu0 %v1778
    %4385 = vmatprep.subr.bf16.mxu0 %v1787
    %4386 = vmatpush1.bf16.msra.mxu0 %v1786
    %4387 = vmatprep.subr.bf16.mxu0 %v1795
    %4388 = vmatpush1.bf16.msra.mxu0 %v1794
    %4389 = vmatprep.subr.bf16.mxu0 %v1803
    %4390 = vmatpush1.bf16.msra.mxu0 %v1802
    %4391 = vmatprep.subr.bf16.mxu0 %v1811
    %4392 = vmatpush1.bf16.msra.mxu0 %v1810
    %4393 = vmatprep.subr.bf16.mxu0 %v1819
    %4394 = vmatpush1.bf16.msra.mxu0 %v1818
    %4395 = vmatprep.subr.bf16.mxu0 %v1827
    %4396 = vmatpush1.bf16.msra.mxu0 %v1826
    %4397 = vmatprep.subr.bf16.mxu0 %v1835
    %4398 = vmatpush1.bf16.msra.mxu0 %v1834
    %4399 = vmatprep.mubr.bf16.mxu0 %v4243
    %4400 = vmatmul.mubr.bf16.gmra.mrb[0].mxu0 %v4242
    %v4401 = vpop.f32.mrb[0].mxu0
    %v4402 = vadd.f32 0.0, %v4401
    %v4403 = vpop.f32.mrb[0].mxu0
    %v4404 = vadd.f32 0.0, %v4403
    %v4405 = vpop.f32.mrb[0].mxu0
    %v4406 = vpop.f32.mrb[0].mxu0
    %4407 = vdwg.mxu0
    %v4408 = vadd.f32 %v4234, %v4279
    %v4409 = vadd.f32 %v4235, %v4281
    %v4410 = vadd.f32 %v4236, %v4320
    %v4411 = vadd.f32 %v4237, %v4322
    %v4412 = vadd.f32 %v4238, %v4361
    %v4413 = vadd.f32 %v4239, %v4363
    %v4414 = vadd.f32 %v4240, %v4402
    %v4415 = vadd.f32 %v4241, %v4404
    %v4416 = vmul.f32 %v4408, 0.5
    %v4417 = vmul.f32 %v4409, 0.5
    %v4418 = vtanh.pop %v4416
    %v4419 = vtanh.pop %v4417
    %v4420 = vmul.f32 %v4418, 0.5
    %v4421 = vmul.f32 %v4419, 0.5
    %v4422 = vadd.f32 %v4420, 0.5
    %v4423 = vadd.f32 %v4421, 0.5
    %v4424 = vmul.f32 %v4410, 0.5
    %v4425 = vmul.f32 %v4411, 0.5
    %v4426 = vtanh.pop %v4424
    %v4427 = vtanh.pop %v4425
    %v4428 = vmul.f32 %v4426, 0.5
    %v4429 = vmul.f32 %v4427, 0.5
    %v4430 = vadd.f32 %v4428, 0.5
    %v4431 = vadd.f32 %v4429, 0.5
    %v4432 = vtanh.pop %v4412
    %v4433 = vtanh.pop %v4413
    %v4434 = vmul.f32 %v4414, 0.5
    %v4435 = vmul.f32 %v4415, 0.5
    %v4436 = vtanh.pop %v4434
    %v4437 = vtanh.pop %v4435
    %v4438 = vmul.f32 %v4436, 0.5
    %v4439 = vmul.f32 %v4437, 0.5
    %v4440 = vadd.f32 %v4438, 0.5
    %v4441 = vadd.f32 %v4439, 0.5
    %v4442 = vmul.f32 %v4430, %v4232
    %v4443 = vmul.f32 %v4431, %v4233
    %v4444 = vmul.f32 %v4422, %v4432
    %v4445 = vmul.f32 %v4423, %v4433
    %v4446 = vadd.f32 %v4442, %v4444
    %v4447 = vadd.f32 %v4443, %v4445
    %v4448 = vtanh.pop %v4446
    %v4449 = vtanh.pop %v4447
    %v4450 = vmul.f32 %v4440, %v4448
    %v4451 = vmul.f32 %v4441, %v4449
    %vm4452 = vcmp.gt.s32.totalorder %v117, 10
    %v4453 = vsel %vm4452, 1, 0
    %4454 = vset.pattern.permute.xlu0 0
    %4455 = vperm.xlu0 %4454, %v4453
    %v4456 = vpop.permute.xlu0 %4455
    %vm4457 = vcmp.eq.s32.totalorder %v4456, 1
    %v4458 = vsel %vm4457, %v4450, %v4230
    %v4459 = vsel %vm4457, %v4451, %v4231
    %v4460 = vsel %vm4457, %v4446, %v4232
    %v4461 = vsel %vm4457, %v4447, %v4233
    %v4462 = vld [vmem:[#allocation2 + $0x2c0] sm:$0xff]
    %v4463 = vld [vmem:[#allocation2 + $0x2c8] sm:$0xff]
    %v4464 = vld [vmem:[#allocation2 + $0x2d0] sm:$0xff]
    %v4465 = vld [vmem:[#allocation2 + $0x2d8] sm:$0xff]
    %v4466 = vld [vmem:[#allocation2 + $0x2e0] sm:$0xff]
    %v4467 = vld [vmem:[#allocation2 + $0x2e8] sm:$0xff]
    %v4468 = vld [vmem:[#allocation2 + $0x2f0] sm:$0xff]
    %v4469 = vld [vmem:[#allocation2 + $0x2f8] sm:$0xff]
    %v4470 = vpack.c.bf16 %v4458, %v4458
    %v4471 = vpack.c.bf16 %v4459, %v4459
    %4472 = vmatprep.subr.bf16.mxu0 %v1709
    %4473 = vmatpush1.bf16.msra.mxu0 %v1708
    %4474 = vmatprep.subr.bf16.mxu0 %v1717
    %4475 = vmatpush1.bf16.msra.mxu0 %v1716
    %4476 = vmatprep.subr.bf16.mxu0 %v1725
    %4477 = vmatpush1.bf16.msra.mxu0 %v1724
    %4478 = vmatprep.subr.bf16.mxu0 %v1733
    %4479 = vmatpush1.bf16.msra.mxu0 %v1732
    %4480 = vmatprep.subr.bf16.mxu0 %v1741
    %4481 = vmatpush1.bf16.msra.mxu0 %v1740
    %4482 = vmatprep.subr.bf16.mxu0 %v1749
    %4483 = vmatpush1.bf16.msra.mxu0 %v1748
    %4484 = vmatprep.subr.bf16.mxu0 %v1757
    %4485 = vmatpush1.bf16.msra.mxu0 %v1756
    %4486 = vmatprep.subr.bf16.mxu0 %v1765
    %4487 = vmatpush1.bf16.msra.mxu0 %v1764
    %4488 = vmatprep.subr.bf16.mxu0 %v1773
    %4489 = vmatpush1.bf16.msra.mxu0 %v1772
    %4490 = vmatprep.subr.bf16.mxu0 %v1781
    %4491 = vmatpush1.bf16.msra.mxu0 %v1780
    %4492 = vmatprep.subr.bf16.mxu0 %v1789
    %4493 = vmatpush1.bf16.msra.mxu0 %v1788
    %4494 = vmatprep.subr.bf16.mxu0 %v1797
    %4495 = vmatpush1.bf16.msra.mxu0 %v1796
    %4496 = vmatprep.subr.bf16.mxu0 %v1805
    %4497 = vmatpush1.bf16.msra.mxu0 %v1804
    %4498 = vmatprep.subr.bf16.mxu0 %v1813
    %4499 = vmatpush1.bf16.msra.mxu0 %v1812
    %4500 = vmatprep.subr.bf16.mxu0 %v1821
    %4501 = vmatpush1.bf16.msra.mxu0 %v1820
    %4502 = vmatprep.subr.bf16.mxu0 %v1829
    %4503 = vmatpush1.bf16.msra.mxu0 %v1828
    %4504 = vmatprep.mubr.bf16.mxu0 %v4471
    %4505 = vmatmul.mubr.bf16.gmra.mrb[0].mxu0 %v4470
    %v4506 = vpop.f32.mrb[0].mxu0
    %v4507 = vadd.f32 0.0, %v4506
    %v4508 = vpop.f32.mrb[0].mxu0
    %v4509 = vadd.f32 0.0, %v4508
    %v4510 = vpop.f32.mrb[0].mxu0
    %v4511 = vpop.f32.mrb[0].mxu0
    %4512 = vdwg.mxu0
    %4513 = vmatprep.subr.bf16.mxu0 %v1711
    %4514 = vmatpush1.bf16.msra.mxu0 %v1710
    %4515 = vmatprep.subr.bf16.mxu0 %v1719
    %4516 = vmatpush1.bf16.msra.mxu0 %v1718
    %4517 = vmatprep.subr.bf16.mxu0 %v1727
    %4518 = vmatpush1.bf16.msra.mxu0 %v1726
    %4519 = vmatprep.subr.bf16.mxu0 %v1735
    %4520 = vmatpush1.bf16.msra.mxu0 %v1734
    %4521 = vmatprep.subr.bf16.mxu0 %v1743
    %4522 = vmatpush1.bf16.msra.mxu0 %v1742
    %4523 = vmatprep.subr.bf16.mxu0 %v1751
    %4524 = vmatpush1.bf16.msra.mxu0 %v1750
    %4525 = vmatprep.subr.bf16.mxu0 %v1759
    %4526 = vmatpush1.bf16.msra.mxu0 %v1758
    %4527 = vmatprep.subr.bf16.mxu0 %v1767
    %4528 = vmatpush1.bf16.msra.mxu0 %v1766
    %4529 = vmatprep.subr.bf16.mxu0 %v1775
    %4530 = vmatpush1.bf16.msra.mxu0 %v1774
    %4531 = vmatprep.subr.bf16.mxu0 %v1783
    %4532 = vmatpush1.bf16.msra.mxu0 %v1782
    %4533 = vmatprep.subr.bf16.mxu0 %v1791
    %4534 = vmatpush1.bf16.msra.mxu0 %v1790
    %4535 = vmatprep.subr.bf16.mxu0 %v1799
    %4536 = vmatpush1.bf16.msra.mxu0 %v1798
    %4537 = vmatprep.subr.bf16.mxu0 %v1807
    %4538 = vmatpush1.bf16.msra.mxu0 %v1806
    %4539 = vmatprep.subr.bf16.mxu0 %v1815
    %4540 = vmatpush1.bf16.msra.mxu0 %v1814
    %4541 = vmatprep.subr.bf16.mxu0 %v1823
    %4542 = vmatpush1.bf16.msra.mxu0 %v1822
    %4543 = vmatprep.subr.bf16.mxu0 %v1831
    %4544 = vmatpush1.bf16.msra.mxu0 %v1830
    %4545 = vmatprep.mubr.bf16.mxu0 %v4471
    %4546 = vmatmul.mubr.bf16.gmra.mrb[0].mxu0 %v4470
    %v4547 = vpop.f32.mrb[0].mxu0
    %v4548 = vadd.f32 0.0, %v4547
    %v4549 = vpop.f32.mrb[0].mxu0
    %v4550 = vadd.f32 0.0, %v4549
    %v4551 = vpop.f32.mrb[0].mxu0
    %v4552 = vpop.f32.mrb[0].mxu0
    %4553 = vdwg.mxu0
    %4554 = vmatprep.subr.bf16.mxu0 %v1713
    %4555 = vmatpush1.bf16.msra.mxu0 %v1712
    %4556 = vmatprep.subr.bf16.mxu0 %v1721
    %4557 = vmatpush1.bf16.msra.mxu0 %v1720
    %4558 = vmatprep.subr.bf16.mxu0 %v1729
    %4559 = vmatpush1.bf16.msra.mxu0 %v1728
    %4560 = vmatprep.subr.bf16.mxu0 %v1737
    %4561 = vmatpush1.bf16.msra.mxu0 %v1736
    %4562 = vmatprep.subr.bf16.mxu0 %v1745
    %4563 = vmatpush1.bf16.msra.mxu0 %v1744
    %4564 = vmatprep.subr.bf16.mxu0 %v1753
    %4565 = vmatpush1.bf16.msra.mxu0 %v1752
    %4566 = vmatprep.subr.bf16.mxu0 %v1761
    %4567 = vmatpush1.bf16.msra.mxu0 %v1760
    %4568 = vmatprep.subr.bf16.mxu0 %v1769
    %4569 = vmatpush1.bf16.msra.mxu0 %v1768
    %4570 = vmatprep.subr.bf16.mxu0 %v1777
    %4571 = vmatpush1.bf16.msra.mxu0 %v1776
    %4572 = vmatprep.subr.bf16.mxu0 %v1785
    %4573 = vmatpush1.bf16.msra.mxu0 %v1784
    %4574 = vmatprep.subr.bf16.mxu0 %v1793
    %4575 = vmatpush1.bf16.msra.mxu0 %v1792
    %4576 = vmatprep.subr.bf16.mxu0 %v1801
    %4577 = vmatpush1.bf16.msra.mxu0 %v1800
    %4578 = vmatprep.subr.bf16.mxu0 %v1809
    %4579 = vmatpush1.bf16.msra.mxu0 %v1808
    %4580 = vmatprep.subr.bf16.mxu0 %v1817
    %4581 = vmatpush1.bf16.msra.mxu0 %v1816
    %4582 = vmatprep.subr.bf16.mxu0 %v1825
    %4583 = vmatpush1.bf16.msra.mxu0 %v1824
    %4584 = vmatprep.subr.bf16.mxu0 %v1833
    %4585 = vmatpush1.bf16.msra.mxu0 %v1832
    %4586 = vmatprep.mubr.bf16.mxu0 %v4471
    %4587 = vmatmul.mubr.bf16.gmra.mrb[0].mxu0 %v4470
    %v4588 = vpop.f32.mrb[0].mxu0
    %v4589 = vadd.f32 0.0, %v4588
    %v4590 = vpop.f32.mrb[0].mxu0
    %v4591 = vadd.f32 0.0, %v4590
    %v4592 = vpop.f32.mrb[0].mxu0
    %v4593 = vpop.f32.mrb[0].mxu0
    %4594 = vdwg.mxu0
    %4595 = vmatprep.subr.bf16.mxu0 %v1715
    %4596 = vmatpush1.bf16.msra.mxu0 %v1714
    %4597 = vmatprep.subr.bf16.mxu0 %v1723
    %4598 = vmatpush1.bf16.msra.mxu0 %v1722
    %4599 = vmatprep.subr.bf16.mxu0 %v1731
    %4600 = vmatpush1.bf16.msra.mxu0 %v1730
    %4601 = vmatprep.subr.bf16.mxu0 %v1739
    %4602 = vmatpush1.bf16.msra.mxu0 %v1738
    %4603 = vmatprep.subr.bf16.mxu0 %v1747
    %4604 = vmatpush1.bf16.msra.mxu0 %v1746
    %4605 = vmatprep.subr.bf16.mxu0 %v1755
    %4606 = vmatpush1.bf16.msra.mxu0 %v1754
    %4607 = vmatprep.subr.bf16.mxu0 %v1763
    %4608 = vmatpush1.bf16.msra.mxu0 %v1762
    %4609 = vmatprep.subr.bf16.mxu0 %v1771
    %4610 = vmatpush1.bf16.msra.mxu0 %v1770
    %4611 = vmatprep.subr.bf16.mxu0 %v1779
    %4612 = vmatpush1.bf16.msra.mxu0 %v1778
    %4613 = vmatprep.subr.bf16.mxu0 %v1787
    %4614 = vmatpush1.bf16.msra.mxu0 %v1786
    %4615 = vmatprep.subr.bf16.mxu0 %v1795
    %4616 = vmatpush1.bf16.msra.mxu0 %v1794
    %4617 = vmatprep.subr.bf16.mxu0 %v1803
    %4618 = vmatpush1.bf16.msra.mxu0 %v1802
    %4619 = vmatprep.subr.bf16.mxu0 %v1811
    %4620 = vmatpush1.bf16.msra.mxu0 %v1810
    %4621 = vmatprep.subr.bf16.mxu0 %v1819
    %4622 = vmatpush1.bf16.msra.mxu0 %v1818
    %4623 = vmatprep.subr.bf16.mxu0 %v1827
    %4624 = vmatpush1.bf16.msra.mxu0 %v1826
    %4625 = vmatprep.subr.bf16.mxu0 %v1835
    %4626 = vmatpush1.bf16.msra.mxu0 %v1834
    %4627 = vmatprep.mubr.bf16.mxu0 %v4471
    %4628 = vmatmul.mubr.bf16.gmra.mrb[0].mxu0 %v4470
    %v4629 = vpop.f32.mrb[0].mxu0
    %v4630 = vadd.f32 0.0, %v4629
    %v4631 = vpop.f32.mrb[0].mxu0
    %v4632 = vadd.f32 0.0, %v4631
    %v4633 = vpop.f32.mrb[0].mxu0
    %v4634 = vpop.f32.mrb[0].mxu0
    %4635 = vdwg.mxu0
    %v4636 = vadd.f32 %v4462, %v4507
    %v4637 = vadd.f32 %v4463, %v4509
    %v4638 = vadd.f32 %v4464, %v4548
    %v4639 = vadd.f32 %v4465, %v4550
    %v4640 = vadd.f32 %v4466, %v4589
    %v4641 = vadd.f32 %v4467, %v4591
    %v4642 = vadd.f32 %v4468, %v4630
    %v4643 = vadd.f32 %v4469, %v4632
    %v4644 = vmul.f32 %v4636, 0.5
    %v4645 = vmul.f32 %v4637, 0.5
    %v4646 = vtanh.pop %v4644
    %v4647 = vtanh.pop %v4645
    %v4648 = vmul.f32 %v4646, 0.5
    %v4649 = vmul.f32 %v4647, 0.5
    %v4650 = vadd.f32 %v4648, 0.5
    %v4651 = vadd.f32 %v4649, 0.5
    %v4652 = vmul.f32 %v4638, 0.5
    %v4653 = vmul.f32 %v4639, 0.5
    %v4654 = vtanh.pop %v4652
    %v4655 = vtanh.pop %v4653
    %v4656 = vmul.f32 %v4654, 0.5
    %v4657 = vmul.f32 %v4655, 0.5
    %v4658 = vadd.f32 %v4656, 0.5
    %v4659 = vadd.f32 %v4657, 0.5
    %v4660 = vtanh.pop %v4640
    %v4661 = vtanh.pop %v4641
    %v4662 = vmul.f32 %v4642, 0.5
    %v4663 = vmul.f32 %v4643, 0.5
    %v4664 = vtanh.pop %v4662
    %v4665 = vtanh.pop %v4663
    %v4666 = vmul.f32 %v4664, 0.5
    %v4667 = vmul.f32 %v4665, 0.5
    %v4668 = vadd.f32 %v4666, 0.5
    %v4669 = vadd.f32 %v4667, 0.5
    %v4670 = vmul.f32 %v4658, %v4460
    %v4671 = vmul.f32 %v4659, %v4461
    %v4672 = vmul.f32 %v4650, %v4660
    %v4673 = vmul.f32 %v4651, %v4661
    %v4674 = vadd.f32 %v4670, %v4672
    %v4675 = vadd.f32 %v4671, %v4673
    %v4676 = vtanh.pop %v4674
    %v4677 = vtanh.pop %v4675
    %v4678 = vmul.f32 %v4668, %v4676
    %v4679 = vmul.f32 %v4669, %v4677
    %vm4680 = vcmp.gt.s32.totalorder %v117, 11
    %v4681 = vsel %vm4680, 1, 0
    %4682 = vset.pattern.permute.xlu0 0
    %4683 = vperm.xlu0 %4682, %v4681
    %v4684 = vpop.permute.xlu0 %4683
    %vm4685 = vcmp.eq.s32.totalorder %v4684, 1
    %v4686 = vsel %vm4685, %v4678, %v4458
    %v4687 = vsel %vm4685, %v4679, %v4459
    %v4688 = vsel %vm4685, %v4674, %v4460
    %v4689 = vsel %vm4685, %v4675, %v4461
    %v4690 = vld [vmem:[#allocation2 + $0x300] sm:$0xff]
    %v4691 = vld [vmem:[#allocation2 + $0x308] sm:$0xff]
    %v4692 = vld [vmem:[#allocation2 + $0x310] sm:$0xff]
    %v4693 = vld [vmem:[#allocation2 + $0x318] sm:$0xff]
    %v4694 = vld [vmem:[#allocation2 + $0x320] sm:$0xff]
    %v4695 = vld [vmem:[#allocation2 + $0x328] sm:$0xff]
    %v4696 = vld [vmem:[#allocation2 + $0x330] sm:$0xff]
    %v4697 = vld [vmem:[#allocation2 + $0x338] sm:$0xff]
    %v4698 = vpack.c.bf16 %v4686, %v4686
    %v4699 = vpack.c.bf16 %v4687, %v4687
    %4700 = vmatprep.subr.bf16.mxu0 %v1709
    %4701 = vmatpush1.bf16.msra.mxu0 %v1708
    %4702 = vmatprep.subr.bf16.mxu0 %v1717
    %4703 = vmatpush1.bf16.msra.mxu0 %v1716
    %4704 = vmatprep.subr.bf16.mxu0 %v1725
    %4705 = vmatpush1.bf16.msra.mxu0 %v1724
    %4706 = vmatprep.subr.bf16.mxu0 %v1733
    %4707 = vmatpush1.bf16.msra.mxu0 %v1732
    %4708 = vmatprep.subr.bf16.mxu0 %v1741
    %4709 = vmatpush1.bf16.msra.mxu0 %v1740
    %4710 = vmatprep.subr.bf16.mxu0 %v1749
    %4711 = vmatpush1.bf16.msra.mxu0 %v1748
    %4712 = vmatprep.subr.bf16.mxu0 %v1757
    %4713 = vmatpush1.bf16.msra.mxu0 %v1756
    %4714 = vmatprep.subr.bf16.mxu0 %v1765
    %4715 = vmatpush1.bf16.msra.mxu0 %v1764
    %4716 = vmatprep.subr.bf16.mxu0 %v1773
    %4717 = vmatpush1.bf16.msra.mxu0 %v1772
    %4718 = vmatprep.subr.bf16.mxu0 %v1781
    %4719 = vmatpush1.bf16.msra.mxu0 %v1780
    %4720 = vmatprep.subr.bf16.mxu0 %v1789
    %4721 = vmatpush1.bf16.msra.mxu0 %v1788
    %4722 = vmatprep.subr.bf16.mxu0 %v1797
    %4723 = vmatpush1.bf16.msra.mxu0 %v1796
    %4724 = vmatprep.subr.bf16.mxu0 %v1805
    %4725 = vmatpush1.bf16.msra.mxu0 %v1804
    %4726 = vmatprep.subr.bf16.mxu0 %v1813
    %4727 = vmatpush1.bf16.msra.mxu0 %v1812
    %4728 = vmatprep.subr.bf16.mxu0 %v1821
    %4729 = vmatpush1.bf16.msra.mxu0 %v1820
    %4730 = vmatprep.subr.bf16.mxu0 %v1829
    %4731 = vmatpush1.bf16.msra.mxu0 %v1828
    %4732 = vmatprep.mubr.bf16.mxu0 %v4699
    %4733 = vmatmul.mubr.bf16.gmra.mrb[0].mxu0 %v4698
    %v4734 = vpop.f32.mrb[0].mxu0
    %v4735 = vadd.f32 0.0, %v4734
    %v4736 = vpop.f32.mrb[0].mxu0
    %v4737 = vadd.f32 0.0, %v4736
    %v4738 = vpop.f32.mrb[0].mxu0
    %v4739 = vpop.f32.mrb[0].mxu0
    %4740 = vdwg.mxu0
    %4741 = vmatprep.subr.bf16.mxu0 %v1711
    %4742 = vmatpush1.bf16.msra.mxu0 %v1710
    %4743 = vmatprep.subr.bf16.mxu0 %v1719
    %4744 = vmatpush1.bf16.msra.mxu0 %v1718
    %4745 = vmatprep.subr.bf16.mxu0 %v1727
    %4746 = vmatpush1.bf16.msra.mxu0 %v1726
    %4747 = vmatprep.subr.bf16.mxu0 %v1735
    %4748 = vmatpush1.bf16.msra.mxu0 %v1734
    %4749 = vmatprep.subr.bf16.mxu0 %v1743
    %4750 = vmatpush1.bf16.msra.mxu0 %v1742
    %4751 = vmatprep.subr.bf16.mxu0 %v1751
    %4752 = vmatpush1.bf16.msra.mxu0 %v1750
    %4753 = vmatprep.subr.bf16.mxu0 %v1759
    %4754 = vmatpush1.bf16.msra.mxu0 %v1758
    %4755 = vmatprep.subr.bf16.mxu0 %v1767
    %4756 = vmatpush1.bf16.msra.mxu0 %v1766
    %4757 = vmatprep.subr.bf16.mxu0 %v1775
    %4758 = vmatpush1.bf16.msra.mxu0 %v1774
    %4759 = vmatprep.subr.bf16.mxu0 %v1783
    %4760 = vmatpush1.bf16.msra.mxu0 %v1782
    %4761 = vmatprep.subr.bf16.mxu0 %v1791
    %4762 = vmatpush1.bf16.msra.mxu0 %v1790
    %4763 = vmatprep.subr.bf16.mxu0 %v1799
    %4764 = vmatpush1.bf16.msra.mxu0 %v1798
    %4765 = vmatprep.subr.bf16.mxu0 %v1807
    %4766 = vmatpush1.bf16.msra.mxu0 %v1806
    %4767 = vmatprep.subr.bf16.mxu0 %v1815
    %4768 = vmatpush1.bf16.msra.mxu0 %v1814
    %4769 = vmatprep.subr.bf16.mxu0 %v1823
    %4770 = vmatpush1.bf16.msra.mxu0 %v1822
    %4771 = vmatprep.subr.bf16.mxu0 %v1831
    %4772 = vmatpush1.bf16.msra.mxu0 %v1830
    %4773 = vmatprep.mubr.bf16.mxu0 %v4699
    %4774 = vmatmul.mubr.bf16.gmra.mrb[0].mxu0 %v4698
    %v4775 = vpop.f32.mrb[0].mxu0
    %v4776 = vadd.f32 0.0, %v4775
    %v4777 = vpop.f32.mrb[0].mxu0
    %v4778 = vadd.f32 0.0, %v4777
    %v4779 = vpop.f32.mrb[0].mxu0
    %v4780 = vpop.f32.mrb[0].mxu0
    %4781 = vdwg.mxu0
    %4782 = vmatprep.subr.bf16.mxu0 %v1713
    %4783 = vmatpush1.bf16.msra.mxu0 %v1712
    %4784 = vmatprep.subr.bf16.mxu0 %v1721
    %4785 = vmatpush1.bf16.msra.mxu0 %v1720
    %4786 = vmatprep.subr.bf16.mxu0 %v1729
    %4787 = vmatpush1.bf16.msra.mxu0 %v1728
    %4788 = vmatprep.subr.bf16.mxu0 %v1737
    %4789 = vmatpush1.bf16.msra.mxu0 %v1736
    %4790 = vmatprep.subr.bf16.mxu0 %v1745
    %4791 = vmatpush1.bf16.msra.mxu0 %v1744
    %4792 = vmatprep.subr.bf16.mxu0 %v1753
    %4793 = vmatpush1.bf16.msra.mxu0 %v1752
    %4794 = vmatprep.subr.bf16.mxu0 %v1761
    %4795 = vmatpush1.bf16.msra.mxu0 %v1760
    %4796 = vmatprep.subr.bf16.mxu0 %v1769
    %4797 = vmatpush1.bf16.msra.mxu0 %v1768
    %4798 = vmatprep.subr.bf16.mxu0 %v1777
    %4799 = vmatpush1.bf16.msra.mxu0 %v1776
    %4800 = vmatprep.subr.bf16.mxu0 %v1785
    %4801 = vmatpush1.bf16.msra.mxu0 %v1784
    %4802 = vmatprep.subr.bf16.mxu0 %v1793
    %4803 = vmatpush1.bf16.msra.mxu0 %v1792
    %4804 = vmatprep.subr.bf16.mxu0 %v1801
    %4805 = vmatpush1.bf16.msra.mxu0 %v1800
    %4806 = vmatprep.subr.bf16.mxu0 %v1809
    %4807 = vmatpush1.bf16.msra.mxu0 %v1808
    %4808 = vmatprep.subr.bf16.mxu0 %v1817
    %4809 = vmatpush1.bf16.msra.mxu0 %v1816
    %4810 = vmatprep.subr.bf16.mxu0 %v1825
    %4811 = vmatpush1.bf16.msra.mxu0 %v1824
    %4812 = vmatprep.subr.bf16.mxu0 %v1833
    %4813 = vmatpush1.bf16.msra.mxu0 %v1832
    %4814 = vmatprep.mubr.bf16.mxu0 %v4699
    %4815 = vmatmul.mubr.bf16.gmra.mrb[0].mxu0 %v4698
    %v4816 = vpop.f32.mrb[0].mxu0
    %v4817 = vadd.f32 0.0, %v4816
    %v4818 = vpop.f32.mrb[0].mxu0
    %v4819 = vadd.f32 0.0, %v4818
    %v4820 = vpop.f32.mrb[0].mxu0
    %v4821 = vpop.f32.mrb[0].mxu0
    %4822 = vdwg.mxu0
    %4823 = vmatprep.subr.bf16.mxu0 %v1715
    %4824 = vmatpush1.bf16.msra.mxu0 %v1714
    %4825 = vmatprep.subr.bf16.mxu0 %v1723
    %4826 = vmatpush1.bf16.msra.mxu0 %v1722
    %4827 = vmatprep.subr.bf16.mxu0 %v1731
    %4828 = vmatpush1.bf16.msra.mxu0 %v1730
    %4829 = vmatprep.subr.bf16.mxu0 %v1739
    %4830 = vmatpush1.bf16.msra.mxu0 %v1738
    %4831 = vmatprep.subr.bf16.mxu0 %v1747
    %4832 = vmatpush1.bf16.msra.mxu0 %v1746
    %4833 = vmatprep.subr.bf16.mxu0 %v1755
    %4834 = vmatpush1.bf16.msra.mxu0 %v1754
    %4835 = vmatprep.subr.bf16.mxu0 %v1763
    %4836 = vmatpush1.bf16.msra.mxu0 %v1762
    %4837 = vmatprep.subr.bf16.mxu0 %v1771
    %4838 = vmatpush1.bf16.msra.mxu0 %v1770
    %4839 = vmatprep.subr.bf16.mxu0 %v1779
    %4840 = vmatpush1.bf16.msra.mxu0 %v1778
    %4841 = vmatprep.subr.bf16.mxu0 %v1787
    %4842 = vmatpush1.bf16.msra.mxu0 %v1786
    %4843 = vmatprep.subr.bf16.mxu0 %v1795
    %4844 = vmatpush1.bf16.msra.mxu0 %v1794
    %4845 = vmatprep.subr.bf16.mxu0 %v1803
    %4846 = vmatpush1.bf16.msra.mxu0 %v1802
    %4847 = vmatprep.subr.bf16.mxu0 %v1811
    %4848 = vmatpush1.bf16.msra.mxu0 %v1810
    %4849 = vmatprep.subr.bf16.mxu0 %v1819
    %4850 = vmatpush1.bf16.msra.mxu0 %v1818
    %4851 = vmatprep.subr.bf16.mxu0 %v1827
    %4852 = vmatpush1.bf16.msra.mxu0 %v1826
    %4853 = vmatprep.subr.bf16.mxu0 %v1835
    %4854 = vmatpush1.bf16.msra.mxu0 %v1834
    %4855 = vmatprep.mubr.bf16.mxu0 %v4699
    %4856 = vmatmul.mubr.bf16.gmra.mrb[0].mxu0 %v4698
    %v4857 = vpop.f32.mrb[0].mxu0
    %v4858 = vadd.f32 0.0, %v4857
    %v4859 = vpop.f32.mrb[0].mxu0
    %v4860 = vadd.f32 0.0, %v4859
    %v4861 = vpop.f32.mrb[0].mxu0
    %v4862 = vpop.f32.mrb[0].mxu0
    %4863 = vdwg.mxu0
    %v4864 = vadd.f32 %v4690, %v4735
    %v4865 = vadd.f32 %v4691, %v4737
    %v4866 = vadd.f32 %v4692, %v4776
    %v4867 = vadd.f32 %v4693, %v4778
    %v4868 = vadd.f32 %v4694, %v4817
    %v4869 = vadd.f32 %v4695, %v4819
    %v4870 = vadd.f32 %v4696, %v4858
    %v4871 = vadd.f32 %v4697, %v4860
    %v4872 = vmul.f32 %v4864, 0.5
    %v4873 = vmul.f32 %v4865, 0.5
    %v4874 = vtanh.pop %v4872
    %v4875 = vtanh.pop %v4873
    %v4876 = vmul.f32 %v4874, 0.5
    %v4877 = vmul.f32 %v4875, 0.5
    %v4878 = vadd.f32 %v4876, 0.5
    %v4879 = vadd.f32 %v4877, 0.5
    %v4880 = vmul.f32 %v4866, 0.5
    %v4881 = vmul.f32 %v4867, 0.5
    %v4882 = vtanh.pop %v4880
    %v4883 = vtanh.pop %v4881
    %v4884 = vmul.f32 %v4882, 0.5
    %v4885 = vmul.f32 %v4883, 0.5
    %v4886 = vadd.f32 %v4884, 0.5
    %v4887 = vadd.f32 %v4885, 0.5
    %v4888 = vtanh.pop %v4868
    %v4889 = vtanh.pop %v4869
    %v4890 = vmul.f32 %v4870, 0.5
    %v4891 = vmul.f32 %v4871, 0.5
    %v4892 = vtanh.pop %v4890
    %v4893 = vtanh.pop %v4891
    %v4894 = vmul.f32 %v4892, 0.5
    %v4895 = vmul.f32 %v4893, 0.5
    %v4896 = vadd.f32 %v4894, 0.5
    %v4897 = vadd.f32 %v4895, 0.5
    %v4898 = vmul.f32 %v4886, %v4688
    %v4899 = vmul.f32 %v4887, %v4689
    %v4900 = vmul.f32 %v4878, %v4888
    %v4901 = vmul.f32 %v4879, %v4889
    %v4902 = vadd.f32 %v4898, %v4900
    %v4903 = vadd.f32 %v4899, %v4901
    %v4904 = vtanh.pop %v4902
    %v4905 = vtanh.pop %v4903
    %v4906 = vmul.f32 %v4896, %v4904
    %v4907 = vmul.f32 %v4897, %v4905
    %vm4908 = vcmp.gt.s32.totalorder %v117, 12
    %v4909 = vsel %vm4908, 1, 0
    %4910 = vset.pattern.permute.xlu0 0
    %4911 = vperm.xlu0 %4910, %v4909
    %v4912 = vpop.permute.xlu0 %4911
    %vm4913 = vcmp.eq.s32.totalorder %v4912, 1
    %v4914 = vsel %vm4913, %v4906, %v4686
    %v4915 = vsel %vm4913, %v4907, %v4687
    %v4916 = vsel %vm4913, %v4902, %v4688
    %v4917 = vsel %vm4913, %v4903, %v4689
    %v4918 = vld [vmem:[#allocation2 + $0x340] sm:$0xff]
    %v4919 = vld [vmem:[#allocation2 + $0x348] sm:$0xff]
    %v4920 = vld [vmem:[#allocation2 + $0x350] sm:$0xff]
    %v4921 = vld [vmem:[#allocation2 + $0x358] sm:$0xff]
    %v4922 = vld [vmem:[#allocation2 + $0x360] sm:$0xff]
    %v4923 = vld [vmem:[#allocation2 + $0x368] sm:$0xff]
    %v4924 = vld [vmem:[#allocation2 + $0x370] sm:$0xff]
    %v4925 = vld [vmem:[#allocation2 + $0x378] sm:$0xff]
    %v4926 = vpack.c.bf16 %v4914, %v4914
    %v4927 = vpack.c.bf16 %v4915, %v4915
    %4928 = vmatprep.subr.bf16.mxu0 %v1709
    %4929 = vmatpush1.bf16.msra.mxu0 %v1708
    %4930 = vmatprep.subr.bf16.mxu0 %v1717
    %4931 = vmatpush1.bf16.msra.mxu0 %v1716
    %4932 = vmatprep.subr.bf16.mxu0 %v1725
    %4933 = vmatpush1.bf16.msra.mxu0 %v1724
    %4934 = vmatprep.subr.bf16.mxu0 %v1733
    %4935 = vmatpush1.bf16.msra.mxu0 %v1732
    %4936 = vmatprep.subr.bf16.mxu0 %v1741
    %4937 = vmatpush1.bf16.msra.mxu0 %v1740
    %4938 = vmatprep.subr.bf16.mxu0 %v1749
    %4939 = vmatpush1.bf16.msra.mxu0 %v1748
    %4940 = vmatprep.subr.bf16.mxu0 %v1757
    %4941 = vmatpush1.bf16.msra.mxu0 %v1756
    %4942 = vmatprep.subr.bf16.mxu0 %v1765
    %4943 = vmatpush1.bf16.msra.mxu0 %v1764
    %4944 = vmatprep.subr.bf16.mxu0 %v1773
    %4945 = vmatpush1.bf16.msra.mxu0 %v1772
    %4946 = vmatprep.subr.bf16.mxu0 %v1781
    %4947 = vmatpush1.bf16.msra.mxu0 %v1780
    %4948 = vmatprep.subr.bf16.mxu0 %v1789
    %4949 = vmatpush1.bf16.msra.mxu0 %v1788
    %4950 = vmatprep.subr.bf16.mxu0 %v1797
    %4951 = vmatpush1.bf16.msra.mxu0 %v1796
    %4952 = vmatprep.subr.bf16.mxu0 %v1805
    %4953 = vmatpush1.bf16.msra.mxu0 %v1804
    %4954 = vmatprep.subr.bf16.mxu0 %v1813
    %4955 = vmatpush1.bf16.msra.mxu0 %v1812
    %4956 = vmatprep.subr.bf16.mxu0 %v1821
    %4957 = vmatpush1.bf16.msra.mxu0 %v1820
    %4958 = vmatprep.subr.bf16.mxu0 %v1829
    %4959 = vmatpush1.bf16.msra.mxu0 %v1828
    %4960 = vmatprep.mubr.bf16.mxu0 %v4927
    %4961 = vmatmul.mubr.bf16.gmra.mrb[0].mxu0 %v4926
    %v4962 = vpop.f32.mrb[0].mxu0
    %v4963 = vadd.f32 0.0, %v4962
    %v4964 = vpop.f32.mrb[0].mxu0
    %v4965 = vadd.f32 0.0, %v4964
    %v4966 = vpop.f32.mrb[0].mxu0
    %v4967 = vpop.f32.mrb[0].mxu0
    %4968 = vdwg.mxu0
    %4969 = vmatprep.subr.bf16.mxu0 %v1711
    %4970 = vmatpush1.bf16.msra.mxu0 %v1710
    %4971 = vmatprep.subr.bf16.mxu0 %v1719
    %4972 = vmatpush1.bf16.msra.mxu0 %v1718
    %4973 = vmatprep.subr.bf16.mxu0 %v1727
    %4974 = vmatpush1.bf16.msra.mxu0 %v1726
    %4975 = vmatprep.subr.bf16.mxu0 %v1735
    %4976 = vmatpush1.bf16.msra.mxu0 %v1734
    %4977 = vmatprep.subr.bf16.mxu0 %v1743
    %4978 = vmatpush1.bf16.msra.mxu0 %v1742
    %4979 = vmatprep.subr.bf16.mxu0 %v1751
    %4980 = vmatpush1.bf16.msra.mxu0 %v1750
    %4981 = vmatprep.subr.bf16.mxu0 %v1759
    %4982 = vmatpush1.bf16.msra.mxu0 %v1758
    %4983 = vmatprep.subr.bf16.mxu0 %v1767
    %4984 = vmatpush1.bf16.msra.mxu0 %v1766
    %4985 = vmatprep.subr.bf16.mxu0 %v1775
    %4986 = vmatpush1.bf16.msra.mxu0 %v1774
    %4987 = vmatprep.subr.bf16.mxu0 %v1783
    %4988 = vmatpush1.bf16.msra.mxu0 %v1782
    %4989 = vmatprep.subr.bf16.mxu0 %v1791
    %4990 = vmatpush1.bf16.msra.mxu0 %v1790
    %4991 = vmatprep.subr.bf16.mxu0 %v1799
    %4992 = vmatpush1.bf16.msra.mxu0 %v1798
    %4993 = vmatprep.subr.bf16.mxu0 %v1807
    %4994 = vmatpush1.bf16.msra.mxu0 %v1806
    %4995 = vmatprep.subr.bf16.mxu0 %v1815
    %4996 = vmatpush1.bf16.msra.mxu0 %v1814
    %4997 = vmatprep.subr.bf16.mxu0 %v1823
    %4998 = vmatpush1.bf16.msra.mxu0 %v1822
    %4999 = vmatprep.subr.bf16.mxu0 %v1831
    %5000 = vmatpush1.bf16.msra.mxu0 %v1830
    %5001 = vmatprep.mubr.bf16.mxu0 %v4927
    %5002 = vmatmul.mubr.bf16.gmra.mrb[0].mxu0 %v4926
    %v5003 = vpop.f32.mrb[0].mxu0
    %v5004 = vadd.f32 0.0, %v5003
    %v5005 = vpop.f32.mrb[0].mxu0
    %v5006 = vadd.f32 0.0, %v5005
    %v5007 = vpop.f32.mrb[0].mxu0
    %v5008 = vpop.f32.mrb[0].mxu0
    %5009 = vdwg.mxu0
    %5010 = vmatprep.subr.bf16.mxu0 %v1713
    %5011 = vmatpush1.bf16.msra.mxu0 %v1712
    %5012 = vmatprep.subr.bf16.mxu0 %v1721
    %5013 = vmatpush1.bf16.msra.mxu0 %v1720
    %5014 = vmatprep.subr.bf16.mxu0 %v1729
    %5015 = vmatpush1.bf16.msra.mxu0 %v1728
    %5016 = vmatprep.subr.bf16.mxu0 %v1737
    %5017 = vmatpush1.bf16.msra.mxu0 %v1736
    %5018 = vmatprep.subr.bf16.mxu0 %v1745
    %5019 = vmatpush1.bf16.msra.mxu0 %v1744
    %5020 = vmatprep.subr.bf16.mxu0 %v1753
    %5021 = vmatpush1.bf16.msra.mxu0 %v1752
    %5022 = vmatprep.subr.bf16.mxu0 %v1761
    %5023 = vmatpush1.bf16.msra.mxu0 %v1760
    %5024 = vmatprep.subr.bf16.mxu0 %v1769
    %5025 = vmatpush1.bf16.msra.mxu0 %v1768
    %5026 = vmatprep.subr.bf16.mxu0 %v1777
    %5027 = vmatpush1.bf16.msra.mxu0 %v1776
    %5028 = vmatprep.subr.bf16.mxu0 %v1785
    %5029 = vmatpush1.bf16.msra.mxu0 %v1784
    %5030 = vmatprep.subr.bf16.mxu0 %v1793
    %5031 = vmatpush1.bf16.msra.mxu0 %v1792
    %5032 = vmatprep.subr.bf16.mxu0 %v1801
    %5033 = vmatpush1.bf16.msra.mxu0 %v1800
    %5034 = vmatprep.subr.bf16.mxu0 %v1809
    %5035 = vmatpush1.bf16.msra.mxu0 %v1808
    %5036 = vmatprep.subr.bf16.mxu0 %v1817
    %5037 = vmatpush1.bf16.msra.mxu0 %v1816
    %5038 = vmatprep.subr.bf16.mxu0 %v1825
    %5039 = vmatpush1.bf16.msra.mxu0 %v1824
    %5040 = vmatprep.subr.bf16.mxu0 %v1833
    %5041 = vmatpush1.bf16.msra.mxu0 %v1832
    %5042 = vmatprep.mubr.bf16.mxu0 %v4927
    %5043 = vmatmul.mubr.bf16.gmra.mrb[0].mxu0 %v4926
    %v5044 = vpop.f32.mrb[0].mxu0
    %v5045 = vadd.f32 0.0, %v5044
    %v5046 = vpop.f32.mrb[0].mxu0
    %v5047 = vadd.f32 0.0, %v5046
    %v5048 = vpop.f32.mrb[0].mxu0
    %v5049 = vpop.f32.mrb[0].mxu0
    %5050 = vdwg.mxu0
    %5051 = vmatprep.subr.bf16.mxu0 %v1715
    %5052 = vmatpush1.bf16.msra.mxu0 %v1714
    %5053 = vmatprep.subr.bf16.mxu0 %v1723
    %5054 = vmatpush1.bf16.msra.mxu0 %v1722
    %5055 = vmatprep.subr.bf16.mxu0 %v1731
    %5056 = vmatpush1.bf16.msra.mxu0 %v1730
    %5057 = vmatprep.subr.bf16.mxu0 %v1739
    %5058 = vmatpush1.bf16.msra.mxu0 %v1738
    %5059 = vmatprep.subr.bf16.mxu0 %v1747
    %5060 = vmatpush1.bf16.msra.mxu0 %v1746
    %5061 = vmatprep.subr.bf16.mxu0 %v1755
    %5062 = vmatpush1.bf16.msra.mxu0 %v1754
    %5063 = vmatprep.subr.bf16.mxu0 %v1763
    %5064 = vmatpush1.bf16.msra.mxu0 %v1762
    %5065 = vmatprep.subr.bf16.mxu0 %v1771
    %5066 = vmatpush1.bf16.msra.mxu0 %v1770
    %5067 = vmatprep.subr.bf16.mxu0 %v1779
    %5068 = vmatpush1.bf16.msra.mxu0 %v1778
    %5069 = vmatprep.subr.bf16.mxu0 %v1787
    %5070 = vmatpush1.bf16.msra.mxu0 %v1786
    %5071 = vmatprep.subr.bf16.mxu0 %v1795
    %5072 = vmatpush1.bf16.msra.mxu0 %v1794
    %5073 = vmatprep.subr.bf16.mxu0 %v1803
    %5074 = vmatpush1.bf16.msra.mxu0 %v1802
    %5075 = vmatprep.subr.bf16.mxu0 %v1811
    %5076 = vmatpush1.bf16.msra.mxu0 %v1810
    %5077 = vmatprep.subr.bf16.mxu0 %v1819
    %5078 = vmatpush1.bf16.msra.mxu0 %v1818
    %5079 = vmatprep.subr.bf16.mxu0 %v1827
    %5080 = vmatpush1.bf16.msra.mxu0 %v1826
    %5081 = vmatprep.subr.bf16.mxu0 %v1835
    %5082 = vmatpush1.bf16.msra.mxu0 %v1834
    %5083 = vmatprep.mubr.bf16.mxu0 %v4927
    %5084 = vmatmul.mubr.bf16.gmra.mrb[0].mxu0 %v4926
    %v5085 = vpop.f32.mrb[0].mxu0
    %v5086 = vadd.f32 0.0, %v5085
    %v5087 = vpop.f32.mrb[0].mxu0
    %v5088 = vadd.f32 0.0, %v5087
    %v5089 = vpop.f32.mrb[0].mxu0
    %v5090 = vpop.f32.mrb[0].mxu0
    %5091 = vdwg.mxu0
    %v5092 = vadd.f32 %v4918, %v4963
    %v5093 = vadd.f32 %v4919, %v4965
    %v5094 = vadd.f32 %v4920, %v5004
    %v5095 = vadd.f32 %v4921, %v5006
    %v5096 = vadd.f32 %v4922, %v5045
    %v5097 = vadd.f32 %v4923, %v5047
    %v5098 = vadd.f32 %v4924, %v5086
    %v5099 = vadd.f32 %v4925, %v5088
    %v5100 = vmul.f32 %v5092, 0.5
    %v5101 = vmul.f32 %v5093, 0.5
    %v5102 = vtanh.pop %v5100
    %v5103 = vtanh.pop %v5101
    %v5104 = vmul.f32 %v5102, 0.5
    %v5105 = vmul.f32 %v5103, 0.5
    %v5106 = vadd.f32 %v5104, 0.5
    %v5107 = vadd.f32 %v5105, 0.5
    %v5108 = vmul.f32 %v5094, 0.5
    %v5109 = vmul.f32 %v5095, 0.5
    %v5110 = vtanh.pop %v5108
    %v5111 = vtanh.pop %v5109
    %v5112 = vmul.f32 %v5110, 0.5
    %v5113 = vmul.f32 %v5111, 0.5
    %v5114 = vadd.f32 %v5112, 0.5
    %v5115 = vadd.f32 %v5113, 0.5
    %v5116 = vtanh.pop %v5096
    %v5117 = vtanh.pop %v5097
    %v5118 = vmul.f32 %v5098, 0.5
    %v5119 = vmul.f32 %v5099, 0.5
    %v5120 = vtanh.pop %v5118
    %v5121 = vtanh.pop %v5119
    %v5122 = vmul.f32 %v5120, 0.5
    %v5123 = vmul.f32 %v5121, 0.5
    %v5124 = vadd.f32 %v5122, 0.5
    %v5125 = vadd.f32 %v5123, 0.5
    %v5126 = vmul.f32 %v5114, %v4916
    %v5127 = vmul.f32 %v5115, %v4917
    %v5128 = vmul.f32 %v5106, %v5116
    %v5129 = vmul.f32 %v5107, %v5117
    %v5130 = vadd.f32 %v5126, %v5128
    %v5131 = vadd.f32 %v5127, %v5129
    %v5132 = vtanh.pop %v5130
    %v5133 = vtanh.pop %v5131
    %v5134 = vmul.f32 %v5124, %v5132
    %v5135 = vmul.f32 %v5125, %v5133
    %vm5136 = vcmp.gt.s32.totalorder %v117, 13
    %v5137 = vsel %vm5136, 1, 0
    %5138 = vset.pattern.permute.xlu0 0
    %5139 = vperm.xlu0 %5138, %v5137
    %v5140 = vpop.permute.xlu0 %5139
    %vm5141 = vcmp.eq.s32.totalorder %v5140, 1
    %v5142 = vsel %vm5141, %v5134, %v4914
    %v5143 = vsel %vm5141, %v5135, %v4915
    %v5144 = vsel %vm5141, %v5130, %v4916
    %v5145 = vsel %vm5141, %v5131, %v4917
    %v5146 = vld [vmem:[#allocation2 + $0x380] sm:$0xff]
    %v5147 = vld [vmem:[#allocation2 + $0x388] sm:$0xff]
    %v5148 = vld [vmem:[#allocation2 + $0x390] sm:$0xff]
    %v5149 = vld [vmem:[#allocation2 + $0x398] sm:$0xff]
    %v5150 = vld [vmem:[#allocation2 + $0x3a0] sm:$0xff]
    %v5151 = vld [vmem:[#allocation2 + $0x3a8] sm:$0xff]
    %v5152 = vld [vmem:[#allocation2 + $0x3b0] sm:$0xff]
    %v5153 = vld [vmem:[#allocation2 + $0x3b8] sm:$0xff]
    %v5154 = vpack.c.bf16 %v5142, %v5142
    %v5155 = vpack.c.bf16 %v5143, %v5143
    %5156 = vmatprep.subr.bf16.mxu0 %v1709
    %5157 = vmatpush1.bf16.msra.mxu0 %v1708
    %5158 = vmatprep.subr.bf16.mxu0 %v1717
    %5159 = vmatpush1.bf16.msra.mxu0 %v1716
    %5160 = vmatprep.subr.bf16.mxu0 %v1725
    %5161 = vmatpush1.bf16.msra.mxu0 %v1724
    %5162 = vmatprep.subr.bf16.mxu0 %v1733
    %5163 = vmatpush1.bf16.msra.mxu0 %v1732
    %5164 = vmatprep.subr.bf16.mxu0 %v1741
    %5165 = vmatpush1.bf16.msra.mxu0 %v1740
    %5166 = vmatprep.subr.bf16.mxu0 %v1749
    %5167 = vmatpush1.bf16.msra.mxu0 %v1748
    %5168 = vmatprep.subr.bf16.mxu0 %v1757
    %5169 = vmatpush1.bf16.msra.mxu0 %v1756
    %5170 = vmatprep.subr.bf16.mxu0 %v1765
    %5171 = vmatpush1.bf16.msra.mxu0 %v1764
    %5172 = vmatprep.subr.bf16.mxu0 %v1773
    %5173 = vmatpush1.bf16.msra.mxu0 %v1772
    %5174 = vmatprep.subr.bf16.mxu0 %v1781
    %5175 = vmatpush1.bf16.msra.mxu0 %v1780
    %5176 = vmatprep.subr.bf16.mxu0 %v1789
    %5177 = vmatpush1.bf16.msra.mxu0 %v1788
    %5178 = vmatprep.subr.bf16.mxu0 %v1797
    %5179 = vmatpush1.bf16.msra.mxu0 %v1796
    %5180 = vmatprep.subr.bf16.mxu0 %v1805
    %5181 = vmatpush1.bf16.msra.mxu0 %v1804
    %5182 = vmatprep.subr.bf16.mxu0 %v1813
    %5183 = vmatpush1.bf16.msra.mxu0 %v1812
    %5184 = vmatprep.subr.bf16.mxu0 %v1821
    %5185 = vmatpush1.bf16.msra.mxu0 %v1820
    %5186 = vmatprep.subr.bf16.mxu0 %v1829
    %5187 = vmatpush1.bf16.msra.mxu0 %v1828
    %5188 = vmatprep.mubr.bf16.mxu0 %v5155
    %5189 = vmatmul.mubr.bf16.gmra.mrb[0].mxu0 %v5154
    %v5190 = vpop.f32.mrb[0].mxu0
    %v5191 = vadd.f32 0.0, %v5190
    %v5192 = vpop.f32.mrb[0].mxu0
    %v5193 = vadd.f32 0.0, %v5192
    %v5194 = vpop.f32.mrb[0].mxu0
    %v5195 = vpop.f32.mrb[0].mxu0
    %5196 = vdwg.mxu0
    %5197 = vmatprep.subr.bf16.mxu0 %v1711
    %5198 = vmatpush1.bf16.msra.mxu0 %v1710
    %5199 = vmatprep.subr.bf16.mxu0 %v1719
    %5200 = vmatpush1.bf16.msra.mxu0 %v1718
    %5201 = vmatprep.subr.bf16.mxu0 %v1727
    %5202 = vmatpush1.bf16.msra.mxu0 %v1726
    %5203 = vmatprep.subr.bf16.mxu0 %v1735
    %5204 = vmatpush1.bf16.msra.mxu0 %v1734
    %5205 = vmatprep.subr.bf16.mxu0 %v1743
    %5206 = vmatpush1.bf16.msra.mxu0 %v1742
    %5207 = vmatprep.subr.bf16.mxu0 %v1751
    %5208 = vmatpush1.bf16.msra.mxu0 %v1750
    %5209 = vmatprep.subr.bf16.mxu0 %v1759
    %5210 = vmatpush1.bf16.msra.mxu0 %v1758
    %5211 = vmatprep.subr.bf16.mxu0 %v1767
    %5212 = vmatpush1.bf16.msra.mxu0 %v1766
    %5213 = vmatprep.subr.bf16.mxu0 %v1775
    %5214 = vmatpush1.bf16.msra.mxu0 %v1774
    %5215 = vmatprep.subr.bf16.mxu0 %v1783
    %5216 = vmatpush1.bf16.msra.mxu0 %v1782
    %5217 = vmatprep.subr.bf16.mxu0 %v1791
    %5218 = vmatpush1.bf16.msra.mxu0 %v1790
    %5219 = vmatprep.subr.bf16.mxu0 %v1799
    %5220 = vmatpush1.bf16.msra.mxu0 %v1798
    %5221 = vmatprep.subr.bf16.mxu0 %v1807
    %5222 = vmatpush1.bf16.msra.mxu0 %v1806
    %5223 = vmatprep.subr.bf16.mxu0 %v1815
    %5224 = vmatpush1.bf16.msra.mxu0 %v1814
    %5225 = vmatprep.subr.bf16.mxu0 %v1823
    %5226 = vmatpush1.bf16.msra.mxu0 %v1822
    %5227 = vmatprep.subr.bf16.mxu0 %v1831
    %5228 = vmatpush1.bf16.msra.mxu0 %v1830
    %5229 = vmatprep.mubr.bf16.mxu0 %v5155
    %5230 = vmatmul.mubr.bf16.gmra.mrb[0].mxu0 %v5154
    %v5231 = vpop.f32.mrb[0].mxu0
    %v5232 = vadd.f32 0.0, %v5231
    %v5233 = vpop.f32.mrb[0].mxu0
    %v5234 = vadd.f32 0.0, %v5233
    %v5235 = vpop.f32.mrb[0].mxu0
    %v5236 = vpop.f32.mrb[0].mxu0
    %5237 = vdwg.mxu0
    %5238 = vmatprep.subr.bf16.mxu0 %v1713
    %5239 = vmatpush1.bf16.msra.mxu0 %v1712
    %5240 = vmatprep.subr.bf16.mxu0 %v1721
    %5241 = vmatpush1.bf16.msra.mxu0 %v1720
    %5242 = vmatprep.subr.bf16.mxu0 %v1729
    %5243 = vmatpush1.bf16.msra.mxu0 %v1728
    %5244 = vmatprep.subr.bf16.mxu0 %v1737
    %5245 = vmatpush1.bf16.msra.mxu0 %v1736
    %5246 = vmatprep.subr.bf16.mxu0 %v1745
    %5247 = vmatpush1.bf16.msra.mxu0 %v1744
    %5248 = vmatprep.subr.bf16.mxu0 %v1753
    %5249 = vmatpush1.bf16.msra.mxu0 %v1752
    %5250 = vmatprep.subr.bf16.mxu0 %v1761
    %5251 = vmatpush1.bf16.msra.mxu0 %v1760
    %5252 = vmatprep.subr.bf16.mxu0 %v1769
    %5253 = vmatpush1.bf16.msra.mxu0 %v1768
    %5254 = vmatprep.subr.bf16.mxu0 %v1777
    %5255 = vmatpush1.bf16.msra.mxu0 %v1776
    %5256 = vmatprep.subr.bf16.mxu0 %v1785
    %5257 = vmatpush1.bf16.msra.mxu0 %v1784
    %5258 = vmatprep.subr.bf16.mxu0 %v1793
    %5259 = vmatpush1.bf16.msra.mxu0 %v1792
    %5260 = vmatprep.subr.bf16.mxu0 %v1801
    %5261 = vmatpush1.bf16.msra.mxu0 %v1800
    %5262 = vmatprep.subr.bf16.mxu0 %v1809
    %5263 = vmatpush1.bf16.msra.mxu0 %v1808
    %5264 = vmatprep.subr.bf16.mxu0 %v1817
    %5265 = vmatpush1.bf16.msra.mxu0 %v1816
    %5266 = vmatprep.subr.bf16.mxu0 %v1825
    %5267 = vmatpush1.bf16.msra.mxu0 %v1824
    %5268 = vmatprep.subr.bf16.mxu0 %v1833
    %5269 = vmatpush1.bf16.msra.mxu0 %v1832
    %5270 = vmatprep.mubr.bf16.mxu0 %v5155
    %5271 = vmatmul.mubr.bf16.gmra.mrb[0].mxu0 %v5154
    %v5272 = vpop.f32.mrb[0].mxu0
    %v5273 = vadd.f32 0.0, %v5272
    %v5274 = vpop.f32.mrb[0].mxu0
    %v5275 = vadd.f32 0.0, %v5274
    %v5276 = vpop.f32.mrb[0].mxu0
    %v5277 = vpop.f32.mrb[0].mxu0
    %5278 = vdwg.mxu0
    %5279 = vmatprep.subr.bf16.mxu0 %v1715
    %5280 = vmatpush1.bf16.msra.mxu0 %v1714
    %5281 = vmatprep.subr.bf16.mxu0 %v1723
    %5282 = vmatpush1.bf16.msra.mxu0 %v1722
    %5283 = vmatprep.subr.bf16.mxu0 %v1731
    %5284 = vmatpush1.bf16.msra.mxu0 %v1730
    %5285 = vmatprep.subr.bf16.mxu0 %v1739
    %5286 = vmatpush1.bf16.msra.mxu0 %v1738
    %5287 = vmatprep.subr.bf16.mxu0 %v1747
    %5288 = vmatpush1.bf16.msra.mxu0 %v1746
    %5289 = vmatprep.subr.bf16.mxu0 %v1755
    %5290 = vmatpush1.bf16.msra.mxu0 %v1754
    %5291 = vmatprep.subr.bf16.mxu0 %v1763
    %5292 = vmatpush1.bf16.msra.mxu0 %v1762
    %5293 = vmatprep.subr.bf16.mxu0 %v1771
    %5294 = vmatpush1.bf16.msra.mxu0 %v1770
    %5295 = vmatprep.subr.bf16.mxu0 %v1779
    %5296 = vmatpush1.bf16.msra.mxu0 %v1778
    %5297 = vmatprep.subr.bf16.mxu0 %v1787
    %5298 = vmatpush1.bf16.msra.mxu0 %v1786
    %5299 = vmatprep.subr.bf16.mxu0 %v1795
    %5300 = vmatpush1.bf16.msra.mxu0 %v1794
    %5301 = vmatprep.subr.bf16.mxu0 %v1803
    %5302 = vmatpush1.bf16.msra.mxu0 %v1802
    %5303 = vmatprep.subr.bf16.mxu0 %v1811
    %5304 = vmatpush1.bf16.msra.mxu0 %v1810
    %5305 = vmatprep.subr.bf16.mxu0 %v1819
    %5306 = vmatpush1.bf16.msra.mxu0 %v1818
    %5307 = vmatprep.subr.bf16.mxu0 %v1827
    %5308 = vmatpush1.bf16.msra.mxu0 %v1826
    %5309 = vmatprep.subr.bf16.mxu0 %v1835
    %5310 = vmatpush1.bf16.msra.mxu0 %v1834
    %5311 = vmatprep.mubr.bf16.mxu0 %v5155
    %5312 = vmatmul.mubr.bf16.gmra.mrb[0].mxu0 %v5154
    %v5313 = vpop.f32.mrb[0].mxu0
    %v5314 = vadd.f32 0.0, %v5313
    %v5315 = vpop.f32.mrb[0].mxu0
    %v5316 = vadd.f32 0.0, %v5315
    %v5317 = vpop.f32.mrb[0].mxu0
    %v5318 = vpop.f32.mrb[0].mxu0
    %5319 = vdwg.mxu0
    %v5320 = vadd.f32 %v5146, %v5191
    %v5321 = vadd.f32 %v5147, %v5193
    %v5322 = vadd.f32 %v5148, %v5232
    %v5323 = vadd.f32 %v5149, %v5234
    %v5324 = vadd.f32 %v5150, %v5273
    %v5325 = vadd.f32 %v5151, %v5275
    %v5326 = vadd.f32 %v5152, %v5314
    %v5327 = vadd.f32 %v5153, %v5316
    %v5328 = vmul.f32 %v5320, 0.5
    %v5329 = vmul.f32 %v5321, 0.5
    %v5330 = vtanh.pop %v5328
    %v5331 = vtanh.pop %v5329
    %v5332 = vmul.f32 %v5330, 0.5
    %v5333 = vmul.f32 %v5331, 0.5
    %v5334 = vadd.f32 %v5332, 0.5
    %v5335 = vadd.f32 %v5333, 0.5
    %v5336 = vmul.f32 %v5322, 0.5
    %v5337 = vmul.f32 %v5323, 0.5
    %v5338 = vtanh.pop %v5336
    %v5339 = vtanh.pop %v5337
    %v5340 = vmul.f32 %v5338, 0.5
    %v5341 = vmul.f32 %v5339, 0.5
    %v5342 = vadd.f32 %v5340, 0.5
    %v5343 = vadd.f32 %v5341, 0.5
    %v5344 = vtanh.pop %v5324
    %v5345 = vtanh.pop %v5325
    %v5346 = vmul.f32 %v5326, 0.5
    %v5347 = vmul.f32 %v5327, 0.5
    %v5348 = vtanh.pop %v5346
    %v5349 = vtanh.pop %v5347
    %v5350 = vmul.f32 %v5348, 0.5
    %v5351 = vmul.f32 %v5349, 0.5
    %v5352 = vadd.f32 %v5350, 0.5
    %v5353 = vadd.f32 %v5351, 0.5
    %v5354 = vmul.f32 %v5342, %v5144
    %v5355 = vmul.f32 %v5343, %v5145
    %v5356 = vmul.f32 %v5334, %v5344
    %v5357 = vmul.f32 %v5335, %v5345
    %v5358 = vadd.f32 %v5354, %v5356
    %v5359 = vadd.f32 %v5355, %v5357
    %v5360 = vtanh.pop %v5358
    %v5361 = vtanh.pop %v5359
    %v5362 = vmul.f32 %v5352, %v5360
    %v5363 = vmul.f32 %v5353, %v5361
    %vm5364 = vcmp.gt.s32.totalorder %v117, 14
    %v5365 = vsel %vm5364, 1, 0
    %5366 = vset.pattern.permute.xlu0 0
    %5367 = vperm.xlu0 %5366, %v5365
    %v5368 = vpop.permute.xlu0 %5367
    %vm5369 = vcmp.eq.s32.totalorder %v5368, 1
    %v5370 = vsel %vm5369, %v5362, %v5142
    %v5371 = vsel %vm5369, %v5363, %v5143
    %v5372 = vsel %vm5369, %v5358, %v5144
    %v5373 = vsel %vm5369, %v5359, %v5145
    %v5374 = vld [vmem:[#allocation2 + $0x3c0] sm:$0xff]
    %v5375 = vld [vmem:[#allocation2 + $0x3c8] sm:$0xff]
    %v5376 = vld [vmem:[#allocation2 + $0x3d0] sm:$0xff]
    %v5377 = vld [vmem:[#allocation2 + $0x3d8] sm:$0xff]
    %v5378 = vld [vmem:[#allocation2 + $0x3e0] sm:$0xff]
    %v5379 = vld [vmem:[#allocation2 + $0x3e8] sm:$0xff]
    %v5380 = vld [vmem:[#allocation2 + $0x3f0] sm:$0xff]
    %v5381 = vld [vmem:[#allocation2 + $0x3f8] sm:$0xff]
    %v5382 = vpack.c.bf16 %v5370, %v5370
    %v5383 = vpack.c.bf16 %v5371, %v5371
    %5384 = vmatprep.subr.bf16.mxu0 %v1709
    %5385 = vmatpush1.bf16.msra.mxu0 %v1708
    %5386 = vmatprep.subr.bf16.mxu0 %v1717
    %5387 = vmatpush1.bf16.msra.mxu0 %v1716
    %5388 = vmatprep.subr.bf16.mxu0 %v1725
    %5389 = vmatpush1.bf16.msra.mxu0 %v1724
    %5390 = vmatprep.subr.bf16.mxu0 %v1733
    %5391 = vmatpush1.bf16.msra.mxu0 %v1732
    %5392 = vmatprep.subr.bf16.mxu0 %v1741
    %5393 = vmatpush1.bf16.msra.mxu0 %v1740
    %5394 = vmatprep.subr.bf16.mxu0 %v1749
    %5395 = vmatpush1.bf16.msra.mxu0 %v1748
    %5396 = vmatprep.subr.bf16.mxu0 %v1757
    %5397 = vmatpush1.bf16.msra.mxu0 %v1756
    %5398 = vmatprep.subr.bf16.mxu0 %v1765
    %5399 = vmatpush1.bf16.msra.mxu0 %v1764
    %5400 = vmatprep.subr.bf16.mxu0 %v1773
    %5401 = vmatpush1.bf16.msra.mxu0 %v1772
    %5402 = vmatprep.subr.bf16.mxu0 %v1781
    %5403 = vmatpush1.bf16.msra.mxu0 %v1780
    %5404 = vmatprep.subr.bf16.mxu0 %v1789
    %5405 = vmatpush1.bf16.msra.mxu0 %v1788
    %5406 = vmatprep.subr.bf16.mxu0 %v1797
    %5407 = vmatpush1.bf16.msra.mxu0 %v1796
    %5408 = vmatprep.subr.bf16.mxu0 %v1805
    %5409 = vmatpush1.bf16.msra.mxu0 %v1804
    %5410 = vmatprep.subr.bf16.mxu0 %v1813
    %5411 = vmatpush1.bf16.msra.mxu0 %v1812
    %5412 = vmatprep.subr.bf16.mxu0 %v1821
    %5413 = vmatpush1.bf16.msra.mxu0 %v1820
    %5414 = vmatprep.subr.bf16.mxu0 %v1829
    %5415 = vmatpush1.bf16.msra.mxu0 %v1828
    %5416 = vmatprep.mubr.bf16.mxu0 %v5383
    %5417 = vmatmul.mubr.bf16.gmra.mrb[0].mxu0 %v5382
    %v5418 = vpop.f32.mrb[0].mxu0
    %v5419 = vadd.f32 0.0, %v5418
    %v5420 = vpop.f32.mrb[0].mxu0
    %v5421 = vadd.f32 0.0, %v5420
    %v5422 = vpop.f32.mrb[0].mxu0
    %v5423 = vpop.f32.mrb[0].mxu0
    %5424 = vdwg.mxu0
    %5425 = vmatprep.subr.bf16.mxu0 %v1711
    %5426 = vmatpush1.bf16.msra.mxu0 %v1710
    %5427 = vmatprep.subr.bf16.mxu0 %v1719
    %5428 = vmatpush1.bf16.msra.mxu0 %v1718
    %5429 = vmatprep.subr.bf16.mxu0 %v1727
    %5430 = vmatpush1.bf16.msra.mxu0 %v1726
    %5431 = vmatprep.subr.bf16.mxu0 %v1735
    %5432 = vmatpush1.bf16.msra.mxu0 %v1734
    %5433 = vmatprep.subr.bf16.mxu0 %v1743
    %5434 = vmatpush1.bf16.msra.mxu0 %v1742
    %5435 = vmatprep.subr.bf16.mxu0 %v1751
    %5436 = vmatpush1.bf16.msra.mxu0 %v1750
    %5437 = vmatprep.subr.bf16.mxu0 %v1759
    %5438 = vmatpush1.bf16.msra.mxu0 %v1758
    %5439 = vmatprep.subr.bf16.mxu0 %v1767
    %5440 = vmatpush1.bf16.msra.mxu0 %v1766
    %5441 = vmatprep.subr.bf16.mxu0 %v1775
    %5442 = vmatpush1.bf16.msra.mxu0 %v1774
    %5443 = vmatprep.subr.bf16.mxu0 %v1783
    %5444 = vmatpush1.bf16.msra.mxu0 %v1782
    %5445 = vmatprep.subr.bf16.mxu0 %v1791
    %5446 = vmatpush1.bf16.msra.mxu0 %v1790
    %5447 = vmatprep.subr.bf16.mxu0 %v1799
    %5448 = vmatpush1.bf16.msra.mxu0 %v1798
    %5449 = vmatprep.subr.bf16.mxu0 %v1807
    %5450 = vmatpush1.bf16.msra.mxu0 %v1806
    %5451 = vmatprep.subr.bf16.mxu0 %v1815
    %5452 = vmatpush1.bf16.msra.mxu0 %v1814
    %5453 = vmatprep.subr.bf16.mxu0 %v1823
    %5454 = vmatpush1.bf16.msra.mxu0 %v1822
    %5455 = vmatprep.subr.bf16.mxu0 %v1831
    %5456 = vmatpush1.bf16.msra.mxu0 %v1830
    %5457 = vmatprep.mubr.bf16.mxu0 %v5383
    %5458 = vmatmul.mubr.bf16.gmra.mrb[0].mxu0 %v5382
    %v5459 = vpop.f32.mrb[0].mxu0
    %v5460 = vadd.f32 0.0, %v5459
    %v5461 = vpop.f32.mrb[0].mxu0
    %v5462 = vadd.f32 0.0, %v5461
    %v5463 = vpop.f32.mrb[0].mxu0
    %v5464 = vpop.f32.mrb[0].mxu0
    %5465 = vdwg.mxu0
    %5466 = vmatprep.subr.bf16.mxu0 %v1713
    %5467 = vmatpush1.bf16.msra.mxu0 %v1712
    %5468 = vmatprep.subr.bf16.mxu0 %v1721
    %5469 = vmatpush1.bf16.msra.mxu0 %v1720
    %5470 = vmatprep.subr.bf16.mxu0 %v1729
    %5471 = vmatpush1.bf16.msra.mxu0 %v1728
    %5472 = vmatprep.subr.bf16.mxu0 %v1737
    %5473 = vmatpush1.bf16.msra.mxu0 %v1736
    %5474 = vmatprep.subr.bf16.mxu0 %v1745
    %5475 = vmatpush1.bf16.msra.mxu0 %v1744
    %5476 = vmatprep.subr.bf16.mxu0 %v1753
    %5477 = vmatpush1.bf16.msra.mxu0 %v1752
    %5478 = vmatprep.subr.bf16.mxu0 %v1761
    %5479 = vmatpush1.bf16.msra.mxu0 %v1760
    %5480 = vmatprep.subr.bf16.mxu0 %v1769
    %5481 = vmatpush1.bf16.msra.mxu0 %v1768
    %5482 = vmatprep.subr.bf16.mxu0 %v1777
    %5483 = vmatpush1.bf16.msra.mxu0 %v1776
    %5484 = vmatprep.subr.bf16.mxu0 %v1785
    %5485 = vmatpush1.bf16.msra.mxu0 %v1784
    %5486 = vmatprep.subr.bf16.mxu0 %v1793
    %5487 = vmatpush1.bf16.msra.mxu0 %v1792
    %5488 = vmatprep.subr.bf16.mxu0 %v1801
    %5489 = vmatpush1.bf16.msra.mxu0 %v1800
    %5490 = vmatprep.subr.bf16.mxu0 %v1809
    %5491 = vmatpush1.bf16.msra.mxu0 %v1808
    %5492 = vmatprep.subr.bf16.mxu0 %v1817
    %5493 = vmatpush1.bf16.msra.mxu0 %v1816
    %5494 = vmatprep.subr.bf16.mxu0 %v1825
    %5495 = vmatpush1.bf16.msra.mxu0 %v1824
    %5496 = vmatprep.subr.bf16.mxu0 %v1833
    %5497 = vmatpush1.bf16.msra.mxu0 %v1832
    %5498 = vmatprep.mubr.bf16.mxu0 %v5383
    %5499 = vmatmul.mubr.bf16.gmra.mrb[0].mxu0 %v5382
    %v5500 = vpop.f32.mrb[0].mxu0
    %v5501 = vadd.f32 0.0, %v5500
    %v5502 = vpop.f32.mrb[0].mxu0
    %v5503 = vadd.f32 0.0, %v5502
    %v5504 = vpop.f32.mrb[0].mxu0
    %v5505 = vpop.f32.mrb[0].mxu0
    %5506 = vdwg.mxu0
    %5507 = vmatprep.subr.bf16.mxu0 %v1715
    %5508 = vmatpush1.bf16.msra.mxu0 %v1714
    %5509 = vmatprep.subr.bf16.mxu0 %v1723
    %5510 = vmatpush1.bf16.msra.mxu0 %v1722
    %5511 = vmatprep.subr.bf16.mxu0 %v1731
    %5512 = vmatpush1.bf16.msra.mxu0 %v1730
    %5513 = vmatprep.subr.bf16.mxu0 %v1739
    %5514 = vmatpush1.bf16.msra.mxu0 %v1738
    %5515 = vmatprep.subr.bf16.mxu0 %v1747
    %5516 = vmatpush1.bf16.msra.mxu0 %v1746
    %5517 = vmatprep.subr.bf16.mxu0 %v1755
    %5518 = vmatpush1.bf16.msra.mxu0 %v1754
    %5519 = vmatprep.subr.bf16.mxu0 %v1763
    %5520 = vmatpush1.bf16.msra.mxu0 %v1762
    %5521 = vmatprep.subr.bf16.mxu0 %v1771
    %5522 = vmatpush1.bf16.msra.mxu0 %v1770
    %5523 = vmatprep.subr.bf16.mxu0 %v1779
    %5524 = vmatpush1.bf16.msra.mxu0 %v1778
    %5525 = vmatprep.subr.bf16.mxu0 %v1787
    %5526 = vmatpush1.bf16.msra.mxu0 %v1786
    %5527 = vmatprep.subr.bf16.mxu0 %v1795
    %5528 = vmatpush1.bf16.msra.mxu0 %v1794
    %5529 = vmatprep.subr.bf16.mxu0 %v1803
    %5530 = vmatpush1.bf16.msra.mxu0 %v1802
    %5531 = vmatprep.subr.bf16.mxu0 %v1811
    %5532 = vmatpush1.bf16.msra.mxu0 %v1810
    %5533 = vmatprep.subr.bf16.mxu0 %v1819
    %5534 = vmatpush1.bf16.msra.mxu0 %v1818
    %5535 = vmatprep.subr.bf16.mxu0 %v1827
    %5536 = vmatpush1.bf16.msra.mxu0 %v1826
    %5537 = vmatprep.subr.bf16.mxu0 %v1835
    %5538 = vmatpush1.bf16.msra.mxu0 %v1834
    %5539 = vmatprep.mubr.bf16.mxu0 %v5383
    %5540 = vmatmul.mubr.bf16.gmra.mrb[0].mxu0 %v5382
    %v5541 = vpop.f32.mrb[0].mxu0
    %v5542 = vadd.f32 0.0, %v5541
    %v5543 = vpop.f32.mrb[0].mxu0
    %v5544 = vadd.f32 0.0, %v5543
    %v5545 = vpop.f32.mrb[0].mxu0
    %v5546 = vpop.f32.mrb[0].mxu0
    %5547 = vdwg.mxu0
    %v5548 = vadd.f32 %v5374, %v5419
    %v5549 = vadd.f32 %v5375, %v5421
    %v5550 = vadd.f32 %v5376, %v5460
    %v5551 = vadd.f32 %v5377, %v5462
    %v5552 = vadd.f32 %v5378, %v5501
    %v5553 = vadd.f32 %v5379, %v5503
    %v5554 = vadd.f32 %v5380, %v5542
    %v5555 = vadd.f32 %v5381, %v5544
    %v5556 = vmul.f32 %v5548, 0.5
    %v5557 = vmul.f32 %v5549, 0.5
    %v5558 = vtanh.pop %v5556
    %v5559 = vtanh.pop %v5557
    %v5560 = vmul.f32 %v5558, 0.5
    %v5561 = vmul.f32 %v5559, 0.5
    %v5562 = vadd.f32 %v5560, 0.5
    %v5563 = vadd.f32 %v5561, 0.5
    %v5564 = vmul.f32 %v5550, 0.5
    %v5565 = vmul.f32 %v5551, 0.5
    %v5566 = vtanh.pop %v5564
    %v5567 = vtanh.pop %v5565
    %v5568 = vmul.f32 %v5566, 0.5
    %v5569 = vmul.f32 %v5567, 0.5
    %v5570 = vadd.f32 %v5568, 0.5
    %v5571 = vadd.f32 %v5569, 0.5
    %v5572 = vtanh.pop %v5552
    %v5573 = vtanh.pop %v5553
    %v5574 = vmul.f32 %v5554, 0.5
    %v5575 = vmul.f32 %v5555, 0.5
    %v5576 = vtanh.pop %v5574
    %v5577 = vtanh.pop %v5575
    %v5578 = vmul.f32 %v5576, 0.5
    %v5579 = vmul.f32 %v5577, 0.5
    %v5580 = vadd.f32 %v5578, 0.5
    %v5581 = vadd.f32 %v5579, 0.5
    %v5582 = vmul.f32 %v5570, %v5372
    %v5583 = vmul.f32 %v5571, %v5373
    %v5584 = vmul.f32 %v5562, %v5572
    %v5585 = vmul.f32 %v5563, %v5573
    %v5586 = vadd.f32 %v5582, %v5584
    %v5587 = vadd.f32 %v5583, %v5585
    %v5588 = vtanh.pop %v5586
    %v5589 = vtanh.pop %v5587
    %v5590 = vmul.f32 %v5580, %v5588
    %v5591 = vmul.f32 %v5581, %v5589
    %vm5592 = vcmp.gt.s32.totalorder %v117, 15
    %v5593 = vsel %vm5592, 1, 0
    %5594 = vset.pattern.permute.xlu0 0
    %5595 = vperm.xlu0 %5594, %v5593
    %v5596 = vpop.permute.xlu0 %5595
    %vm5597 = vcmp.eq.s32.totalorder %v5596, 1
    %v5598 = vsel %vm5597, %v5590, %v5370
    %v5599 = vsel %vm5597, %v5591, %v5371
    %v5600 = vmax.f32 %v5598, 0.0
    %v5601 = vmax.f32 %v5599, 0.0
    %v5602 = vpack.c.bf16 %v5600, %v5600
    %v5603 = vpack.c.bf16 %v5601, %v5601
    %v5604 = vld [vmem:[#allocation12] sm:$0xf]
    %v5605 = vld [vmem:[#allocation12 + $0x4] sm:$0xf]
    %v5606 = vld [vmem:[#allocation12 + $0x8] sm:$0xf]
    %v5607 = vld [vmem:[#allocation12 + $0xc] sm:$0xf]
    %v5608 = vld [vmem:[#allocation12 + $0x10] sm:$0xf]
    %v5609 = vld [vmem:[#allocation12 + $0x14] sm:$0xf]
    %v5610 = vld [vmem:[#allocation12 + $0x18] sm:$0xf]
    %v5611 = vld [vmem:[#allocation12 + $0x1c] sm:$0xf]
    %v5612 = vld [vmem:[#allocation12 + $0x20] sm:$0xf]
    %v5613 = vld [vmem:[#allocation12 + $0x24] sm:$0xf]
    %v5614 = vld [vmem:[#allocation12 + $0x28] sm:$0xf]
    %v5615 = vld [vmem:[#allocation12 + $0x2c] sm:$0xf]
    %v5616 = vld [vmem:[#allocation12 + $0x30] sm:$0xf]
    %v5617 = vld [vmem:[#allocation12 + $0x34] sm:$0xf]
    %v5618 = vld [vmem:[#allocation12 + $0x38] sm:$0xf]
    %v5619 = vld [vmem:[#allocation12 + $0x3c] sm:$0xf]
    %v5620 = vld [vmem:[#allocation12 + $0x40] sm:$0xf]
    %v5621 = vld [vmem:[#allocation12 + $0x44] sm:$0xf]
    %v5622 = vld [vmem:[#allocation12 + $0x48] sm:$0xf]
    %v5623 = vld [vmem:[#allocation12 + $0x4c] sm:$0xf]
    %v5624 = vld [vmem:[#allocation12 + $0x50] sm:$0xf]
    %v5625 = vld [vmem:[#allocation12 + $0x54] sm:$0xf]
    %v5626 = vld [vmem:[#allocation12 + $0x58] sm:$0xf]
    %v5627 = vld [vmem:[#allocation12 + $0x5c] sm:$0xf]
    %v5628 = vld [vmem:[#allocation12 + $0x60] sm:$0xf]
    %v5629 = vld [vmem:[#allocation12 + $0x64] sm:$0xf]
    %v5630 = vld [vmem:[#allocation12 + $0x68] sm:$0xf]
    %v5631 = vld [vmem:[#allocation12 + $0x6c] sm:$0xf]
    %v5632 = vld [vmem:[#allocation12 + $0x70] sm:$0xf]
    %v5633 = vld [vmem:[#allocation12 + $0x74] sm:$0xf]
    %v5634 = vld [vmem:[#allocation12 + $0x78] sm:$0xf]
    %v5635 = vld [vmem:[#allocation12 + $0x7c] sm:$0xf]
    %v5636 = vld [vmem:[#allocation14] sm:$0x1]
    %v5638 = vlaneseq
    %v5639 = vshrl.u32 %v5638, 7
    %v5640 = vsub.s32 0, %v5639
    %v5641 = vrot.slane %v5636, %v5640
    %v5675 = vunpack.c.l.b16 %v5604
    %v5676 = vunpack.c.l.b16 %v5605
    %v5677 = vunpack.c.l.b16 %v5606
    %v5678 = vunpack.c.l.b16 %v5607
    %v5679 = vunpack.c.l.b16 %v5608
    %v5680 = vunpack.c.l.b16 %v5609
    %v5681 = vunpack.c.l.b16 %v5610
    %v5682 = vunpack.c.l.b16 %v5611
    %v5683 = vunpack.c.l.b16 %v5612
    %v5684 = vunpack.c.l.b16 %v5613
    %v5685 = vunpack.c.l.b16 %v5614
    %v5686 = vunpack.c.l.b16 %v5615
    %v5687 = vunpack.c.l.b16 %v5616
    %v5688 = vunpack.c.l.b16 %v5617
    %v5689 = vunpack.c.l.b16 %v5618
    %v5690 = vunpack.c.l.b16 %v5619
    %v5691 = vunpack.c.l.b16 %v5620
    %v5692 = vunpack.c.l.b16 %v5621
    %v5693 = vunpack.c.l.b16 %v5622
    %v5694 = vunpack.c.l.b16 %v5623
    %v5695 = vunpack.c.l.b16 %v5624
    %v5696 = vunpack.c.l.b16 %v5625
    %v5697 = vunpack.c.l.b16 %v5626
    %v5698 = vunpack.c.l.b16 %v5627
    %v5699 = vunpack.c.l.b16 %v5628
    %v5700 = vunpack.c.l.b16 %v5629
    %v5701 = vunpack.c.l.b16 %v5630
    %v5702 = vunpack.c.l.b16 %v5631
    %v5703 = vunpack.c.l.b16 %v5632
    %v5704 = vunpack.c.l.b16 %v5633
    %v5705 = vunpack.c.l.b16 %v5634
    %v5706 = vunpack.c.l.b16 %v5635
    %v5707 = vpack.c.b16 %v5676, %v5675
    %v5708 = vpack.c.b16 %v5678, %v5677
    %v5709 = vpack.c.b16 %v5680, %v5679
    %v5710 = vpack.c.b16 %v5682, %v5681
    %v5711 = vpack.c.b16 %v5684, %v5683
    %v5712 = vpack.c.b16 %v5686, %v5685
    %v5713 = vpack.c.b16 %v5688, %v5687
    %v5714 = vpack.c.b16 %v5690, %v5689
    %v5715 = vpack.c.b16 %v5692, %v5691
    %v5716 = vpack.c.b16 %v5694, %v5693
    %v5717 = vpack.c.b16 %v5696, %v5695
    %v5718 = vpack.c.b16 %v5698, %v5697
    %v5719 = vpack.c.b16 %v5700, %v5699
    %v5720 = vpack.c.b16 %v5702, %v5701
    %v5721 = vpack.c.b16 %v5704, %v5703
    %v5722 = vpack.c.b16 %v5706, %v5705
    %5739 = vmatprep.subr.bf16.mxu0 0
    %5740 = vmatpush1.bf16.msra.mxu0 %v5707
    %5741 = vmatprep.subr.bf16.mxu0 0
    %5742 = vmatpush1.bf16.msra.mxu0 %v5708
    %5743 = vmatprep.subr.bf16.mxu0 0
    %5744 = vmatpush1.bf16.msra.mxu0 %v5709
    %5745 = vmatprep.subr.bf16.mxu0 0
    %5746 = vmatpush1.bf16.msra.mxu0 %v5710
    %5747 = vmatprep.subr.bf16.mxu0 0
    %5748 = vmatpush1.bf16.msra.mxu0 %v5711
    %5749 = vmatprep.subr.bf16.mxu0 0
    %5750 = vmatpush1.bf16.msra.mxu0 %v5712
    %5751 = vmatprep.subr.bf16.mxu0 0
    %5752 = vmatpush1.bf16.msra.mxu0 %v5713
    %5753 = vmatprep.subr.bf16.mxu0 0
    %5754 = vmatpush1.bf16.msra.mxu0 %v5714
    %5755 = vmatprep.subr.bf16.mxu0 0
    %5756 = vmatpush1.bf16.msra.mxu0 %v5715
    %5757 = vmatprep.subr.bf16.mxu0 0
    %5758 = vmatpush1.bf16.msra.mxu0 %v5716
    %5759 = vmatprep.subr.bf16.mxu0 0
    %5760 = vmatpush1.bf16.msra.mxu0 %v5717
    %5761 = vmatprep.subr.bf16.mxu0 0
    %5762 = vmatpush1.bf16.msra.mxu0 %v5718
    %5763 = vmatprep.subr.bf16.mxu0 0
    %5764 = vmatpush1.bf16.msra.mxu0 %v5719
    %5765 = vmatprep.subr.bf16.mxu0 0
    %5766 = vmatpush1.bf16.msra.mxu0 %v5720
    %5767 = vmatprep.subr.bf16.mxu0 0
    %5768 = vmatpush1.bf16.msra.mxu0 %v5721
    %5769 = vmatprep.subr.bf16.mxu0 0
    %5770 = vmatpush1.bf16.msra.mxu0 %v5722
    %5771 = vmatprep.mubr.bf16.mxu0 %v5603
    %5772 = vmatmul.mubr.bf16.gmra.mrb[0].mxu0 %v5602
    %v5773 = vpop.f32.mrb[0].mxu0
    %v5774 = vadd.f32 %v5641, %v5773
    %v5775 = vpop.f32.mrb[0].mxu0
    %v5776 = vpop.f32.mrb[0].mxu0
    %v5777 = vpop.f32.mrb[0].mxu0
    %5778 = vdwg.mxu0
    %5779 = vst [vmem:[#allocation15] sm:$0xff] %v5774
    // Predicated region
    $region58: #{sat1_lstm_forward.1} parent=1 // pred_check
      _
    $region59: #{sat1_lstm_forward.1} parent=1 // pred_check_branch
      %5781 = sbr.rel (0) target = $region61
    $region60: #{sat1_lstm_forward.1} parent=1 // pred_region
      %s5783 = ssub.s32 128, 128
      %5784 = vsyncadd [#allocation5], %s5783
      %s5786 = sshll.u32 [#allocation15], 4
      %s5787 = int_to_ptr.vmem [resolvable:$true] %s5786
      %5789 = dma.vmem_to_hbm [thread:$0]  %s5787, 128, %s7, [#allocation5]
    $region61: #{sat1_lstm_forward.1} parent=1 // pred_fallthru
      _
    // Predicated region
    $region62: #{sat1_lstm_forward.1} parent=1 // pred_check
      _
    $region63: #{sat1_lstm_forward.1} parent=1 // pred_check_branch
      %5791 = sbr.rel (0) target = $region65
    $region64: #{sat1_lstm_forward.1} parent=1 // pred_region
      %5792 = dma.done [#allocation5], 128
    $region65: #{sat1_lstm_forward.1} parent=1 // pred_fallthru
      _
    %5793 = vsyncpa [#allocation4], 1
    %5794 = vsyncpa [#allocation7], 1
    %5795 = vsyncpa [#allocation10], 1
    %5796 = vsyncpa [#allocation13], 1
    %5797 = vsyncpa [#allocation5], 1

</llo_original>
